<compile_context>
chip_gen: v5e
topology: v5e:2x2
jax: 0.10.0
libtpu: 0.0.40
codegen_flags: <defaults>
</compile_context>

<pallas_src>
import jax
import jax.numpy as jnp
from jax.experimental import pallas as pl
from jax.experimental.pallas import tpu as pltpu

LANE = 128


def basic_block_res_kernel(x_ref, w1_ref, w2_ref, b1_ref, b2_ref,
                           out_ref, pad_scr, cols_scr):
    """One batch element per grid step.

    x_ref    : (1, H, W, Cp) f32   input image (NHWC, channels padded to 128);
                                   also the residual branch
    w1_ref   : (9*Cp, Cp) bf16     conv1 weights, BN1 scale folded, im2col layout
    w2_ref   : (9*Cp, Cp) bf16     conv2 weights, BN2 scale folded, im2col layout
    b1_ref   : (1, Cp)    f32      folded BN1 bias (padded cols are 0)
    b2_ref   : (1, Cp)    f32      folded BN2 bias (padded cols are 0)
    out_ref  : (1, H, W, Cp)
    pad_scr  : VMEM (H+2, W+2, Cp) bf16   zero-halo padded activation
    cols_scr : VMEM (H*W, 9*Cp)    bf16   im2col slab (reused by both convs)
    """
    H, W, Cp = out_ref.shape[1], out_ref.shape[2], out_ref.shape[3]

    # Zero only the 1-pixel halo border; the interior is fully rewritten below.
    # Done every step (cheap) so it stays correct if the "parallel" batch axis
    # is split across TensorCores.
    zrow = jnp.zeros((1, W + 2, Cp), jnp.bfloat16)
    pad_scr[0:1, :, :] = zrow
    pad_scr[H + 1:H + 2, :, :] = zrow
    zcol = jnp.zeros((H + 2, 1, Cp), jnp.bfloat16)
    pad_scr[:, 0:1, :] = zcol
    pad_scr[:, W + 1:W + 2, :] = zcol

    def conv3x3(w_ref):
        # im2col: gather the 9 shifted taps (already bf16) into one
        # (H*W, 9*Cp) slab; every destination slice starts at a lane offset
        # that is a multiple of 128 -> unmasked lane-dense stores.  The conv
        # is then a single K=9*Cp MXU matmul (bf16 x bf16 -> f32 accumulate).
        for kh in range(3):
            for kw in range(3):
                i = kh * 3 + kw
                tap = pad_scr[kh:kh + H, kw:kw + W, :]          # (H, W, Cp) bf16
                cols_scr[:, i * Cp:(i + 1) * Cp] = tap.reshape(H * W, Cp)
        return jnp.dot(cols_scr[...], w_ref[...],
                       preferred_element_type=jnp.float32)      # (H*W, Cp) f32

    # ---- conv1 (BN1 scale pre-folded into w1) + bias + ReLU
    pad_scr[1:H + 1, 1:W + 1, :] = x_ref[0].astype(jnp.bfloat16)
    h1 = jnp.maximum(conv3x3(w1_ref) + b1_ref[...], 0.0)        # (H*W, Cp) f32

    # ---- conv2 (BN2 scale pre-folded into w2) + bias + residual + ReLU
    pad_scr[1:H + 1, 1:W + 1, :] = h1.reshape(H, W, Cp).astype(jnp.bfloat16)
    h2 = conv3x3(w2_ref) + b2_ref[...]
    # Residual read straight from the VMEM-resident x block (full f32 precision).
    h2 = h2 + x_ref[0].reshape(H * W, Cp)
    out_ref[0] = jnp.maximum(h2, 0.0).reshape(H, W, Cp).astype(out_ref.dtype)


def basic_block_res(x_nchw, w1_oihw, w2_oihw, bn1, bn2, eps=1e-5):
    """x_nchw: (N, C, H, W).  downsample is None -> inplanes == planes, stride 1."""
    N, C, H, W = x_nchw.shape
    P = w1_oihw.shape[0]
    assert w1_oihw.shape[1] == C and P == C, "downsample=None requires inplanes==planes"

    # Pad channels to a multiple of 128 so the lane axis is fully dense.
    Cp = ((C + LANE - 1) // LANE) * LANE

    x = jnp.transpose(x_nchw, (0, 2, 3, 1))                     # NHWC (N, H, W, C)
    if Cp != C:
        x = jnp.pad(x, ((0, 0), (0, 0), (0, 0), (0, Cp - C)))

    def fold(w_oihw, bn):
        gamma, beta, mean, var = bn
        scale = (gamma / jnp.sqrt(var + eps)).astype(jnp.float32)       # (P,)
        bias = (beta - mean * scale).astype(jnp.float32)
        w = jnp.transpose(w_oihw, (2, 3, 1, 0)).astype(jnp.float32)     # HWIO (3,3,Cin,P)
        w = w * scale[None, None, None, :]                              # fold BN scale
        # zero-pad Cin -> Cp and P -> Cp (padded rows/cols contribute zeros)
        w = jnp.pad(w, ((0, 0), (0, 0), (0, Cp - C), (0, Cp - P)))
        w = w.reshape(9 * Cp, Cp).astype(jnp.bfloat16)                  # (9*Cp, Cp)
        b = jnp.pad(bias, (0, Cp - P)).reshape(1, Cp)
        return w, b

    w1f, b1 = fold(w1_oihw, bn1)
    w2f, b2 = fold(w2_oihw, bn2)

    out_nhwc = pl.pallas_call(
        basic_block_res_kernel,
        out_shape=jax.ShapeDtypeStruct((N, H, W, Cp), x.dtype),
        grid_spec=pltpu.PrefetchScalarGridSpec(
            num_scalar_prefetch=0,
            grid=(N,),
            in_specs=[
                pl.BlockSpec((1, H, W, Cp), lambda n: (n, 0, 0, 0)),
                pl.BlockSpec((9 * Cp, Cp), lambda n: (0, 0)),
                pl.BlockSpec((9 * Cp, Cp), lambda n: (0, 0)),
                pl.BlockSpec((1, Cp), lambda n: (0, 0)),
                pl.BlockSpec((1, Cp), lambda n: (0, 0)),
            ],
            out_specs=pl.BlockSpec((1, H, W, Cp), lambda n: (n, 0, 0, 0)),
            scratch_shapes=[
                pltpu.VMEM((H + 2, W + 2, Cp), jnp.bfloat16),   # padded activation
                pltpu.VMEM((H * W, 9 * Cp), jnp.bfloat16),      # im2col slab
            ],
        ),
        compiler_params=pltpu.CompilerParams(
            dimension_semantics=("parallel",)),
    )(x, w1f, w2f, b1, b2)

    out = jnp.transpose(out_nhwc, (0, 3, 1, 2))                 # back to NCHW
    return out[:, :P, :, :]                                     # drop padded channels


def reference(x, w1, w2, bn1, bn2, eps=1e-5):
    """Plain-JAX NCHW reference matching the PyTorch forward (eval-mode BN)."""
    def conv(a, w):
        return jax.lax.conv_general_dilated(
            a, w, window_strides=(1, 1), padding=((1, 1), (1, 1)),
            dimension_numbers=("NCHW", "OIHW", "NCHW"))

    def bn(a, p):
        gamma, beta, mean, var = (t[None, :, None, None] for t in p)
        return (a - mean) / jnp.sqrt(var + eps) * gamma + beta

    out = jax.nn.relu(bn(conv(x, w1), bn1))
    out = bn(conv(out, w2), bn2)
    return jax.nn.relu(out + x)


if __name__ == "__main__":
    key = jax.random.PRNGKey(0)
    N, C, H, W = 2, 8, 16, 16          # inplanes == planes == 8 (downsample=None)
    planes = C
    ks = jax.random.split(key, 12)

    x = jax.random.normal(ks[0], (N, C, H, W), jnp.float32)

    fan_in = C * 3 * 3
    bound = 1.0 / (fan_in ** 0.5)
    w1 = jax.random.uniform(ks[1], (planes, C, 3, 3), jnp.float32, -bound, bound)
    w2 = jax.random.uniform(ks[2], (planes, planes, 3, 3), jnp.float32, -bound, bound)

    bn1 = (1.0 + 0.1 * jax.random.normal(ks[3], (planes,), jnp.float32),    # gamma
           0.1 * jax.random.normal(ks[4], (planes,), jnp.float32),           # beta
           0.05 * jax.random.normal(ks[5], (planes,), jnp.float32),          # running_mean
           1.0 + 0.1 * jnp.abs(jax.random.normal(ks[6], (planes,), jnp.float32)))  # running_var
    bn2 = (1.0 + 0.1 * jax.random.normal(ks[7], (planes,), jnp.float32),
           0.1 * jax.random.normal(ks[8], (planes,), jnp.float32),
           0.05 * jax.random.normal(ks[9], (planes,), jnp.float32),
           1.0 + 0.1 * jnp.abs(jax.random.normal(ks[10], (planes,), jnp.float32)))

    out = basic_block_res(x, w1, w2, bn1, bn2)
    out = jax.block_until_ready(out)

    ref = jax.block_until_ready(reference(x, w1, w2, bn1, bn2))
    assert out.shape == (N, C, H, W)
    # bf16 MXU operands (f32 accumulation) -> loosen tolerance vs the f32 ref.
    err = float(jnp.abs(out - ref).max())
    assert jnp.allclose(out, ref, atol=5e-2, rtol=5e-2), err

    print("KERNEL_OK")
</pallas_src>

<mosaic_0001>
module attributes {stable_mosaic.version = 11 : i64} {
  func.func @basic_block_res_kernel(%arg0: i32, %arg1: memref<1x16x16x128xf32, #tpu.memory_space<vmem>>, %arg2: memref<1152x128xbf16, #tpu.memory_space<vmem>>, %arg3: memref<1152x128xbf16, #tpu.memory_space<vmem>>, %arg4: memref<1x128xf32, #tpu.memory_space<vmem>>, %arg5: memref<1x128xf32, #tpu.memory_space<vmem>>, %arg6: memref<1x16x16x128xf32, #tpu.memory_space<vmem>>, %arg7: memref<18x18x128xbf16, #tpu.memory_space<vmem>>, %arg8: memref<256x1152xbf16, #tpu.memory_space<vmem>>) attributes {dimension_semantics = [#tpu.dimension_semantics<parallel>], iteration_bounds = array<i64: 2>, scalar_prefetch = 0 : i64, scratch_operands = 2 : i64, tpu.core_type = #tpu.core_type<tc>, window_params = [{transform_indices = @transform_0, window_bounds = array<i64: 1, 16, 16, 128>}, {pipeline_mode = #tpu.pipeline_mode<synchronous>, transform_indices = @transform_1, window_bounds = array<i64: 1152, 128>}, {pipeline_mode = #tpu.pipeline_mode<synchronous>, transform_indices = @transform_2, window_bounds = array<i64: 1152, 128>}, {pipeline_mode = #tpu.pipeline_mode<synchronous>, transform_indices = @transform_3, window_bounds = array<i64: 1, 128>}, {pipeline_mode = #tpu.pipeline_mode<synchronous>, transform_indices = @transform_4, window_bounds = array<i64: 1, 128>}, {transform_indices = @transform_5, window_bounds = array<i64: 1, 16, 16, 128>}]} {
    %cst = arith.constant 0.000000e+00 : bf16
    %0 = vector.broadcast %cst : bf16 to vector<1x18x128xbf16>
    %c0 = arith.constant 0 : index
    %c0_0 = arith.constant 0 : index
    %c0_1 = arith.constant 0 : index
    %1 = vector.load %arg7[%c0, %c0_0, %c0_1] : memref<18x18x128xbf16, #tpu.memory_space<vmem>>, vector<1x18x128xbf16>
    tpu.vector_store %arg7[%c0, %c0_0, %c0_1], %0 {strides = array<i32>} : memref<18x18x128xbf16, #tpu.memory_space<vmem>>, vector<1x18x128xbf16>,
    %c17 = arith.constant 17 : index
    %c0_2 = arith.constant 0 : index
    %c0_3 = arith.constant 0 : index
    %2 = vector.load %arg7[%c17, %c0_2, %c0_3] : memref<18x18x128xbf16, #tpu.memory_space<vmem>>, vector<1x18x128xbf16>
    tpu.vector_store %arg7[%c17, %c0_2, %c0_3], %0 {strides = array<i32>} : memref<18x18x128xbf16, #tpu.memory_space<vmem>>, vector<1x18x128xbf16>,
    %cst_4 = arith.constant 0.000000e+00 : bf16
    %3 = vector.broadcast %cst_4 : bf16 to vector<18x1x128xbf16>
    %c0_5 = arith.constant 0 : index
    %c0_6 = arith.constant 0 : index
    %c0_7 = arith.constant 0 : index
    %4 = vector.load %arg7[%c0_5, %c0_6, %c0_7] : memref<18x18x128xbf16, #tpu.memory_space<vmem>>, vector<18x1x128xbf16>
    tpu.vector_store %arg7[%c0_5, %c0_6, %c0_7], %3 {strides = array<i32>} : memref<18x18x128xbf16, #tpu.memory_space<vmem>>, vector<18x1x128xbf16>,
    %c0_8 = arith.constant 0 : index
    %c17_9 = arith.constant 17 : index
    %c0_10 = arith.constant 0 : index
    %5 = vector.load %arg7[%c0_8, %c17_9, %c0_10] : memref<18x18x128xbf16, #tpu.memory_space<vmem>>, vector<18x1x128xbf16>
    tpu.vector_store %arg7[%c0_8, %c17_9, %c0_10], %3 {strides = array<i32>} : memref<18x18x128xbf16, #tpu.memory_space<vmem>>, vector<18x1x128xbf16>,
    %c0_11 = arith.constant 0 : index
    %c0_12 = arith.constant 0 : index
    %c0_13 = arith.constant 0 : index
    %c0_14 = arith.constant 0 : index
    %6 = vector.load %arg1[%c0_11, %c0_12, %c0_13, %c0_14] : memref<1x16x16x128xf32, #tpu.memory_space<vmem>>, vector<1x16x16x128xf32>
    %7 = vector.shape_cast %6 : vector<1x16x16x128xf32> to vector<16x16x128xf32>
    %8 = arith.truncf %7 : vector<16x16x128xf32> to vector<16x16x128xbf16>
    %c1 = arith.constant 1 : index
    %c1_15 = arith.constant 1 : index
    %c0_16 = arith.constant 0 : index
    %9 = vector.load %arg7[%c1, %c1_15, %c0_16] : memref<18x18x128xbf16, #tpu.memory_space<vmem>>, vector<16x16x128xbf16>
    tpu.vector_store %arg7[%c1, %c1_15, %c0_16], %8 {strides = array<i32>} : memref<18x18x128xbf16, #tpu.memory_space<vmem>>, vector<16x16x128xbf16>,
    %c0_17 = arith.constant 0 : index
    %c0_18 = arith.constant 0 : index
    %c0_19 = arith.constant 0 : index
    %10 = vector.load %arg7[%c0_17, %c0_18, %c0_19] : memref<18x18x128xbf16, #tpu.memory_space<vmem>>, vector<16x16x128xbf16>
    %11 = vector.shape_cast %10 : vector<16x16x128xbf16> to vector<256x128xbf16>
    %c0_20 = arith.constant 0 : index
    %c0_21 = arith.constant 0 : index
    %12 = vector.load %arg8[%c0_20, %c0_21] : memref<256x1152xbf16, #tpu.memory_space<vmem>>, vector<256x128xbf16>
    tpu.vector_store %arg8[%c0_20, %c0_21], %11 {strides = array<i32>} : memref<256x1152xbf16, #tpu.memory_space<vmem>>, vector<256x128xbf16>,
    %c0_22 = arith.constant 0 : index
    %c1_23 = arith.constant 1 : index
    %c0_24 = arith.constant 0 : index
    %13 = vector.load %arg7[%c0_22, %c1_23, %c0_24] : memref<18x18x128xbf16, #tpu.memory_space<vmem>>, vector<16x16x128xbf16>
    %14 = vector.shape_cast %13 : vector<16x16x128xbf16> to vector<256x128xbf16>
    %c0_25 = arith.constant 0 : index
    %c128 = arith.constant 128 : index
    %15 = vector.load %arg8[%c0_25, %c128] : memref<256x1152xbf16, #tpu.memory_space<vmem>>, vector<256x128xbf16>
    tpu.vector_store %arg8[%c0_25, %c128], %14 {strides = array<i32>} : memref<256x1152xbf16, #tpu.memory_space<vmem>>, vector<256x128xbf16>,
    %c0_26 = arith.constant 0 : index
    %c2 = arith.constant 2 : index
    %c0_27 = arith.constant 0 : index
    %16 = vector.load %arg7[%c0_26, %c2, %c0_27] : memref<18x18x128xbf16, #tpu.memory_space<vmem>>, vector<16x16x128xbf16>
    %17 = vector.shape_cast %16 : vector<16x16x128xbf16> to vector<256x128xbf16>
    %c0_28 = arith.constant 0 : index
    %c256 = arith.constant 256 : index
    %18 = vector.load %arg8[%c0_28, %c256] : memref<256x1152xbf16, #tpu.memory_space<vmem>>, vector<256x128xbf16>
    tpu.vector_store %arg8[%c0_28, %c256], %17 {strides = array<i32>} : memref<256x1152xbf16, #tpu.memory_space<vmem>>, vector<256x128xbf16>,
    %c1_29 = arith.constant 1 : index
    %c0_30 = arith.constant 0 : index
    %c0_31 = arith.constant 0 : index
    %19 = vector.load %arg7[%c1_29, %c0_30, %c0_31] : memref<18x18x128xbf16, #tpu.memory_space<vmem>>, vector<16x16x128xbf16>
    %20 = vector.shape_cast %19 : vector<16x16x128xbf16> to vector<256x128xbf16>
    %c0_32 = arith.constant 0 : index
    %c384 = arith.constant 384 : index
    %21 = vector.load %arg8[%c0_32, %c384] : memref<256x1152xbf16, #tpu.memory_space<vmem>>, vector<256x128xbf16>
    tpu.vector_store %arg8[%c0_32, %c384], %20 {strides = array<i32>} : memref<256x1152xbf16, #tpu.memory_space<vmem>>, vector<256x128xbf16>,
    %c1_33 = arith.constant 1 : index
    %c1_34 = arith.constant 1 : index
    %c0_35 = arith.constant 0 : index
    %22 = vector.load %arg7[%c1_33, %c1_34, %c0_35] : memref<18x18x128xbf16, #tpu.memory_space<vmem>>, vector<16x16x128xbf16>
    %23 = vector.shape_cast %22 : vector<16x16x128xbf16> to vector<256x128xbf16>
    %c0_36 = arith.constant 0 : index
    %c512 = arith.constant 512 : index
    %24 = vector.load %arg8[%c0_36, %c512] : memref<256x1152xbf16, #tpu.memory_space<vmem>>, vector<256x128xbf16>
    tpu.vector_store %arg8[%c0_36, %c512], %23 {strides = array<i32>} : memref<256x1152xbf16, #tpu.memory_space<vmem>>, vector<256x128xbf16>,
    %c1_37 = arith.constant 1 : index
    %c2_38 = arith.constant 2 : index
    %c0_39 = arith.constant 0 : index
    %25 = vector.load %arg7[%c1_37, %c2_38, %c0_39] : memref<18x18x128xbf16, #tpu.memory_space<vmem>>, vector<16x16x128xbf16>
    %26 = vector.shape_cast %25 : vector<16x16x128xbf16> to vector<256x128xbf16>
    %c0_40 = arith.constant 0 : index
    %c640 = arith.constant 640 : index
    %27 = vector.load %arg8[%c0_40, %c640] : memref<256x1152xbf16, #tpu.memory_space<vmem>>, vector<256x128xbf16>
    tpu.vector_store %arg8[%c0_40, %c640], %26 {strides = array<i32>} : memref<256x1152xbf16, #tpu.memory_space<vmem>>, vector<256x128xbf16>,
    %c2_41 = arith.constant 2 : index
    %c0_42 = arith.constant 0 : index
    %c0_43 = arith.constant 0 : index
    %28 = vector.load %arg7[%c2_41, %c0_42, %c0_43] : memref<18x18x128xbf16, #tpu.memory_space<vmem>>, vector<16x16x128xbf16>
    %29 = vector.shape_cast %28 : vector<16x16x128xbf16> to vector<256x128xbf16>
    %c0_44 = arith.constant 0 : index
    %c768 = arith.constant 768 : index
    %30 = vector.load %arg8[%c0_44, %c768] : memref<256x1152xbf16, #tpu.memory_space<vmem>>, vector<256x128xbf16>
    tpu.vector_store %arg8[%c0_44, %c768], %29 {strides = array<i32>} : memref<256x1152xbf16, #tpu.memory_space<vmem>>, vector<256x128xbf16>,
    %c2_45 = arith.constant 2 : index
    %c1_46 = arith.constant 1 : index
    %c0_47 = arith.constant 0 : index
    %31 = vector.load %arg7[%c2_45, %c1_46, %c0_47] : memref<18x18x128xbf16, #tpu.memory_space<vmem>>, vector<16x16x128xbf16>
    %32 = vector.shape_cast %31 : vector<16x16x128xbf16> to vector<256x128xbf16>
    %c0_48 = arith.constant 0 : index
    %c896 = arith.constant 896 : index
    %33 = vector.load %arg8[%c0_48, %c896] : memref<256x1152xbf16, #tpu.memory_space<vmem>>, vector<256x128xbf16>
    tpu.vector_store %arg8[%c0_48, %c896], %32 {strides = array<i32>} : memref<256x1152xbf16, #tpu.memory_space<vmem>>, vector<256x128xbf16>,
    %c2_49 = arith.constant 2 : index
    %c2_50 = arith.constant 2 : index
    %c0_51 = arith.constant 0 : index
    %34 = vector.load %arg7[%c2_49, %c2_50, %c0_51] : memref<18x18x128xbf16, #tpu.memory_space<vmem>>, vector<16x16x128xbf16>
    %35 = vector.shape_cast %34 : vector<16x16x128xbf16> to vector<256x128xbf16>
    %c0_52 = arith.constant 0 : index
    %c1024 = arith.constant 1024 : index
    %36 = vector.load %arg8[%c0_52, %c1024] : memref<256x1152xbf16, #tpu.memory_space<vmem>>, vector<256x128xbf16>
    tpu.vector_store %arg8[%c0_52, %c1024], %35 {strides = array<i32>} : memref<256x1152xbf16, #tpu.memory_space<vmem>>, vector<256x128xbf16>,
    %c0_53 = arith.constant 0 : index
    %c0_54 = arith.constant 0 : index
    %37 = vector.load %arg8[%c0_53, %c0_54] : memref<256x1152xbf16, #tpu.memory_space<vmem>>, vector<256x1152xbf16>
    %c0_55 = arith.constant 0 : index
    %c0_56 = arith.constant 0 : index
    %38 = vector.load %arg2[%c0_55, %c0_56] : memref<1152x128xbf16, #tpu.memory_space<vmem>>, vector<1152x128xbf16>
    %cst_57 = arith.constant dense<0.000000e+00> : vector<256x128xf32>
    %39 = tpu.matmul %37, %38, %cst_57 {dimension_numbers = #tpu.dot_dimension_numbers<[1], [0], [0], [1], [0, 0, 1, 1], [], []>} : vector<256x1152xbf16>, vector<1152x128xbf16>, vector<256x128xf32> -> vector<256x128xf32>
    %c0_58 = arith.constant 0 : index
    %c0_59 = arith.constant 0 : index
    %40 = vector.load %arg4[%c0_58, %c0_59] : memref<1x128xf32, #tpu.memory_space<vmem>>, vector<1x128xf32>
    %41 = vector.broadcast %40 : vector<1x128xf32> to vector<256x128xf32>
    %42 = arith.addf %39, %41 : vector<256x128xf32>
    %cst_60 = arith.constant 0.000000e+00 : f32
    %43 = vector.broadcast %cst_60 : f32 to vector<256x128xf32>
    %44 = arith.maximumf %42, %43 : vector<256x128xf32>
    %45 = vector.shape_cast %44 : vector<256x128xf32> to vector<16x16x128xf32>
    %46 = arith.truncf %45 : vector<16x16x128xf32> to vector<16x16x128xbf16>
    %c1_61 = arith.constant 1 : index
    %c1_62 = arith.constant 1 : index
    %c0_63 = arith.constant 0 : index
    %47 = vector.load %arg7[%c1_61, %c1_62, %c0_63] : memref<18x18x128xbf16, #tpu.memory_space<vmem>>, vector<16x16x128xbf16>
    tpu.vector_store %arg7[%c1_61, %c1_62, %c0_63], %46 {strides = array<i32>} : memref<18x18x128xbf16, #tpu.memory_space<vmem>>, vector<16x16x128xbf16>,
    %c0_64 = arith.constant 0 : index
    %c0_65 = arith.constant 0 : index
    %c0_66 = arith.constant 0 : index
    %48 = vector.load %arg7[%c0_64, %c0_65, %c0_66] : memref<18x18x128xbf16, #tpu.memory_space<vmem>>, vector<16x16x128xbf16>
    %49 = vector.shape_cast %48 : vector<16x16x128xbf16> to vector<256x128xbf16>
    %c0_67 = arith.constant 0 : index
    %c0_68 = arith.constant 0 : index
    %50 = vector.load %arg8[%c0_67, %c0_68] : memref<256x1152xbf16, #tpu.memory_space<vmem>>, vector<256x128xbf16>
    tpu.vector_store %arg8[%c0_67, %c0_68], %49 {strides = array<i32>} : memref<256x1152xbf16, #tpu.memory_space<vmem>>, vector<256x128xbf16>,
    %c0_69 = arith.constant 0 : index
    %c1_70 = arith.constant 1 : index
    %c0_71 = arith.constant 0 : index
    %51 = vector.load %arg7[%c0_69, %c1_70, %c0_71] : memref<18x18x128xbf16, #tpu.memory_space<vmem>>, vector<16x16x128xbf16>
    %52 = vector.shape_cast %51 : vector<16x16x128xbf16> to vector<256x128xbf16>
    %c0_72 = arith.constant 0 : index
    %c128_73 = arith.constant 128 : index
    %53 = vector.load %arg8[%c0_72, %c128_73] : memref<256x1152xbf16, #tpu.memory_space<vmem>>, vector<256x128xbf16>
    tpu.vector_store %arg8[%c0_72, %c128_73], %52 {strides = array<i32>} : memref<256x1152xbf16, #tpu.memory_space<vmem>>, vector<256x128xbf16>,
    %c0_74 = arith.constant 0 : index
    %c2_75 = arith.constant 2 : index
    %c0_76 = arith.constant 0 : index
    %54 = vector.load %arg7[%c0_74, %c2_75, %c0_76] : memref<18x18x128xbf16, #tpu.memory_space<vmem>>, vector<16x16x128xbf16>
    %55 = vector.shape_cast %54 : vector<16x16x128xbf16> to vector<256x128xbf16>
    %c0_77 = arith.constant 0 : index
    %c256_78 = arith.constant 256 : index
    %56 = vector.load %arg8[%c0_77, %c256_78] : memref<256x1152xbf16, #tpu.memory_space<vmem>>, vector<256x128xbf16>
    tpu.vector_store %arg8[%c0_77, %c256_78], %55 {strides = array<i32>} : memref<256x1152xbf16, #tpu.memory_space<vmem>>, vector<256x128xbf16>,
    %c1_79 = arith.constant 1 : index
    %c0_80 = arith.constant 0 : index
    %c0_81 = arith.constant 0 : index
    %57 = vector.load %arg7[%c1_79, %c0_80, %c0_81] : memref<18x18x128xbf16, #tpu.memory_space<vmem>>, vector<16x16x128xbf16>
    %58 = vector.shape_cast %57 : vector<16x16x128xbf16> to vector<256x128xbf16>
    %c0_82 = arith.constant 0 : index
    %c384_83 = arith.constant 384 : index
    %59 = vector.load %arg8[%c0_82, %c384_83] : memref<256x1152xbf16, #tpu.memory_space<vmem>>, vector<256x128xbf16>
    tpu.vector_store %arg8[%c0_82, %c384_83], %58 {strides = array<i32>} : memref<256x1152xbf16, #tpu.memory_space<vmem>>, vector<256x128xbf16>,
    %c1_84 = arith.constant 1 : index
    %c1_85 = arith.constant 1 : index
    %c0_86 = arith.constant 0 : index
    %60 = vector.load %arg7[%c1_84, %c1_85, %c0_86] : memref<18x18x128xbf16, #tpu.memory_space<vmem>>, vector<16x16x128xbf16>
    %61 = vector.shape_cast %60 : vector<16x16x128xbf16> to vector<256x128xbf16>
    %c0_87 = arith.constant 0 : index
    %c512_88 = arith.constant 512 : index
    %62 = vector.load %arg8[%c0_87, %c512_88] : memref<256x1152xbf16, #tpu.memory_space<vmem>>, vector<256x128xbf16>
    tpu.vector_store %arg8[%c0_87, %c512_88], %61 {strides = array<i32>} : memref<256x1152xbf16, #tpu.memory_space<vmem>>, vector<256x128xbf16>,
    %c1_89 = arith.constant 1 : index
    %c2_90 = arith.constant 2 : index
    %c0_91 = arith.constant 0 : index
    %63 = vector.load %arg7[%c1_89, %c2_90, %c0_91] : memref<18x18x128xbf16, #tpu.memory_space<vmem>>, vector<16x16x128xbf16>
    %64 = vector.shape_cast %63 : vector<16x16x128xbf16> to vector<256x128xbf16>
    %c0_92 = arith.constant 0 : index
    %c640_93 = arith.constant 640 : index
    %65 = vector.load %arg8[%c0_92, %c640_93] : memref<256x1152xbf16, #tpu.memory_space<vmem>>, vector<256x128xbf16>
    tpu.vector_store %arg8[%c0_92, %c640_93], %64 {strides = array<i32>} : memref<256x1152xbf16, #tpu.memory_space<vmem>>, vector<256x128xbf16>,
    %c2_94 = arith.constant 2 : index
    %c0_95 = arith.constant 0 : index
    %c0_96 = arith.constant 0 : index
    %66 = vector.load %arg7[%c2_94, %c0_95, %c0_96] : memref<18x18x128xbf16, #tpu.memory_space<vmem>>, vector<16x16x128xbf16>
    %67 = vector.shape_cast %66 : vector<16x16x128xbf16> to vector<256x128xbf16>
    %c0_97 = arith.constant 0 : index
    %c768_98 = arith.constant 768 : index
    %68 = vector.load %arg8[%c0_97, %c768_98] : memref<256x1152xbf16, #tpu.memory_space<vmem>>, vector<256x128xbf16>
    tpu.vector_store %arg8[%c0_97, %c768_98], %67 {strides = array<i32>} : memref<256x1152xbf16, #tpu.memory_space<vmem>>, vector<256x128xbf16>,
    %c2_99 = arith.constant 2 : index
    %c1_100 = arith.constant 1 : index
    %c0_101 = arith.constant 0 : index
    %69 = vector.load %arg7[%c2_99, %c1_100, %c0_101] : memref<18x18x128xbf16, #tpu.memory_space<vmem>>, vector<16x16x128xbf16>
    %70 = vector.shape_cast %69 : vector<16x16x128xbf16> to vector<256x128xbf16>
    %c0_102 = arith.constant 0 : index
    %c896_103 = arith.constant 896 : index
    %71 = vector.load %arg8[%c0_102, %c896_103] : memref<256x1152xbf16, #tpu.memory_space<vmem>>, vector<256x128xbf16>
    tpu.vector_store %arg8[%c0_102, %c896_103], %70 {strides = array<i32>} : memref<256x1152xbf16, #tpu.memory_space<vmem>>, vector<256x128xbf16>,
    %c2_104 = arith.constant 2 : index
    %c2_105 = arith.constant 2 : index
    %c0_106 = arith.constant 0 : index
    %72 = vector.load %arg7[%c2_104, %c2_105, %c0_106] : memref<18x18x128xbf16, #tpu.memory_space<vmem>>, vector<16x16x128xbf16>
    %73 = vector.shape_cast %72 : vector<16x16x128xbf16> to vector<256x128xbf16>
    %c0_107 = arith.constant 0 : index
    %c1024_108 = arith.constant 1024 : index
    %74 = vector.load %arg8[%c0_107, %c1024_108] : memref<256x1152xbf16, #tpu.memory_space<vmem>>, vector<256x128xbf16>
    tpu.vector_store %arg8[%c0_107, %c1024_108], %73 {strides = array<i32>} : memref<256x1152xbf16, #tpu.memory_space<vmem>>, vector<256x128xbf16>,
    %c0_109 = arith.constant 0 : index
    %c0_110 = arith.constant 0 : index
    %75 = vector.load %arg8[%c0_109, %c0_110] : memref<256x1152xbf16, #tpu.memory_space<vmem>>, vector<256x1152xbf16>
    %c0_111 = arith.constant 0 : index
    %c0_112 = arith.constant 0 : index
    %76 = vector.load %arg3[%c0_111, %c0_112] : memref<1152x128xbf16, #tpu.memory_space<vmem>>, vector<1152x128xbf16>
    %cst_113 = arith.constant dense<0.000000e+00> : vector<256x128xf32>
    %77 = tpu.matmul %75, %76, %cst_113 {dimension_numbers = #tpu.dot_dimension_numbers<[1], [0], [0], [1], [0, 0, 1, 1], [], []>} : vector<256x1152xbf16>, vector<1152x128xbf16>, vector<256x128xf32> -> vector<256x128xf32>
    %c0_114 = arith.constant 0 : index
    %c0_115 = arith.constant 0 : index
    %78 = vector.load %arg5[%c0_114, %c0_115] : memref<1x128xf32, #tpu.memory_space<vmem>>, vector<1x128xf32>
    %79 = vector.broadcast %78 : vector<1x128xf32> to vector<256x128xf32>
    %80 = arith.addf %77, %79 : vector<256x128xf32>
    %c0_116 = arith.constant 0 : index
    %c0_117 = arith.constant 0 : index
    %c0_118 = arith.constant 0 : index
    %c0_119 = arith.constant 0 : index
    %81 = vector.load %arg1[%c0_116, %c0_117, %c0_118, %c0_119] : memref<1x16x16x128xf32, #tpu.memory_space<vmem>>, vector<1x16x16x128xf32>
    %82 = vector.shape_cast %81 : vector<1x16x16x128xf32> to vector<16x16x128xf32>
    %83 = vector.shape_cast %82 : vector<16x16x128xf32> to vector<256x128xf32>
    %84 = arith.addf %80, %83 : vector<256x128xf32>
    %cst_120 = arith.constant 0.000000e+00 : f32
    %85 = vector.broadcast %cst_120 : f32 to vector<256x128xf32>
    %86 = arith.maximumf %84, %85 : vector<256x128xf32>
    %87 = vector.shape_cast %86 : vector<256x128xf32> to vector<16x16x128xf32>
    %c0_121 = arith.constant 0 : index
    %c0_122 = arith.constant 0 : index
    %c0_123 = arith.constant 0 : index
    %c0_124 = arith.constant 0 : index
    %88 = vector.load %arg6[%c0_121, %c0_122, %c0_123, %c0_124] : memref<1x16x16x128xf32, #tpu.memory_space<vmem>>, vector<1x16x16x128xf32>
    %89 = vector.shape_cast %88 : vector<1x16x16x128xf32> to vector<16x16x128xf32>
    %90 = vector.shape_cast %87 : vector<16x16x128xf32> to vector<1x16x16x128xf32>
    tpu.vector_store %arg6[%c0_121, %c0_122, %c0_123, %c0_124], %90 {strides = array<i32>} : memref<1x16x16x128xf32, #tpu.memory_space<vmem>>, vector<1x16x16x128xf32>,
    return
  }
  func.func @transform_0(%arg0: i32) -> (i32, i32, i32, i32) {
    %c0_i32 = arith.constant 0 : i32
    %c0_i32_0 = arith.constant 0 : i32
    %c0_i32_1 = arith.constant 0 : i32
    %c0_i32_2 = arith.constant 0 : i32
    return %arg0, %c0_i32, %c0_i32_0, %c0_i32_1 : i32, i32, i32, i32
  }
  func.func @transform_1(%arg0: i32) -> (i32, i32) {
    %c0_i32 = arith.constant 0 : i32
    %c0_i32_0 = arith.constant 0 : i32
    %c0_i32_1 = arith.constant 0 : i32
    return %c0_i32, %c0_i32_0 : i32, i32
  }
  func.func @transform_2(%arg0: i32) -> (i32, i32) {
    %c0_i32 = arith.constant 0 : i32
    %c0_i32_0 = arith.constant 0 : i32
    %c0_i32_1 = arith.constant 0 : i32
    return %c0_i32, %c0_i32_0 : i32, i32
  }
  func.func @transform_3(%arg0: i32) -> (i32, i32) {
    %c0_i32 = arith.constant 0 : i32
    %c0_i32_0 = arith.constant 0 : i32
    %c0_i32_1 = arith.constant 0 : i32
    return %c0_i32, %c0_i32_0 : i32, i32
  }
  func.func @transform_4(%arg0: i32) -> (i32, i32) {
    %c0_i32 = arith.constant 0 : i32
    %c0_i32_0 = arith.constant 0 : i32
    %c0_i32_1 = arith.constant 0 : i32
    return %c0_i32, %c0_i32_0 : i32, i32
  }
  func.func @transform_5(%arg0: i32) -> (i32, i32, i32, i32) {
    %c0_i32 = arith.constant 0 : i32
    %c0_i32_0 = arith.constant 0 : i32
    %c0_i32_1 = arith.constant 0 : i32
    %c0_i32_2 = arith.constant 0 : i32
    return %arg0, %c0_i32, %c0_i32_0, %c0_i32_1 : i32, i32, i32, i32
  }
}

</mosaic_0001>

<llo_original>
// kernel: tpu_custom_call.1
$region0: #{tpu_custom_call.1}
  #allocation0 [shape = 'u32[]', space=smem, size = 0x4, offset = 0x4, fixed_abs, tag = 'smem constant byte address 0x4 - core index']
  #allocation1 [shape = 'u32[72,128]{1,0:T(1,128)}', space=vmem, size = 0x9000, scoped, tag = 'internal scratch']
  #allocation2 [shape = 'bf16[18,18,128]{2,1,0:T(8,128)(2,1)}', space=vmem, size = 0x1b000, scoped, tag = 'scratch operand']
  #allocation3 [shape = 'bf16[256,1152]{1,0:T(8,128)(2,1)}', space=vmem, size = 0x90000, scoped, tag = 'scratch operand']
  %s0 = inlined_call_operand.hbm [shape: f32[2,16,16,128], index: 0, kind: input, shape index: {}]
  %s1 = inlined_call_operand.hbm [shape: bf16[1152,128], index: 1, kind: input, shape index: {}]
  %s2 = inlined_call_operand.hbm [shape: bf16[1152,128], index: 2, kind: input, shape index: {}]
  %s3 = inlined_call_operand.vmem [shape: f32[1,128], index: 3, kind: input, shape index: {}]
  %s4 = inlined_call_operand.vmem [shape: f32[1,128], index: 4, kind: input, shape index: {}]
  %s5 = inlined_call_operand.hbm [shape: f32[2,16,16,128], index: 5, kind: output, shape index: {}]
  %s6 = sld [smem:[#allocation0]]
  $region65: #{tpu_custom_call.1} parent=0
    _
  %s8 = ssub.s32 1, %s6
  %s9 = scalar_select 0, %s8, %s6
  $region1: #{tpu_custom_call.1} parent=0
    #allocation4 [shape = 'u8[262144]{0}', space=vmem, size = 0x40000, scoped, tag = 'input window, operand 0']
    #allocation5 [shape = 's32[2]{0}', space=sflag, size = 0x8, scoped, tag = 'scoped memory for tpu_custom_call.1']
    #allocation6 [shape = 's32[2]{0}', space=sflag, size = 0x8, scoped, tag = 'scoped memory for tpu_custom_call.1']
    #allocation7 [shape = 'u8[294912]{0}', space=vmem, size = 0x48000, scoped, tag = 'input window, operand 1, single buffered']
    #allocation8 [shape = 's32[1]{0}', space=sflag, size = 0x4, scoped, tag = 'scoped memory for tpu_custom_call.1']
    #allocation9 [shape = 'u8[294912]{0}', space=vmem, size = 0x48000, scoped, tag = 'input window, operand 2, single buffered']
    #allocation10 [shape = 'u8[262144]{0}', space=vmem, size = 0x40000, scoped, tag = 'output window, operand 0']
    %10 = vsyncpa [#allocation5], 0
    %s11 = scalar_lea.sflag [#allocation5], 1
    %12 = vsyncpa %s11, 0
    %13 = vsyncpa [#allocation8], 0
    %14 = vsyncpa [#allocation6], 0
    %s15 = scalar_lea.sflag [#allocation6], 1
    %16 = vsyncpa %s15, 0
    loop: start=0, step=1, limit=4
    $region2: #{tpu_custom_call.1} parent=1 // loop_pre_header
      _
    $region3: #{tpu_custom_call.1} parent=1 // loop_header
      %s18 = sphi 0, %s22
      %p19 = scmp.ge.s32.totalorder %s18, 4
      %s28 = sphi 0, %s30
      %s31 = sphi 0, %s28
      %s32 = sphi 0, %s31
      %s48 = sphi 0, %s32
      %s52 = sphi 0, %s52
      %s54 = sphi 0, %s52
      %s55 = sphi 0, %s54
      %s69 = sphi 0, %s55
      %s73 = sphi 0, %s73
      %s75 = sphi 0, %s73
      %s76 = sphi 0, %s75
      %s90 = sphi 0, %s76
      %s94 = sphi 0, %s94
      %s96 = sphi 0, %s94
      %s97 = sphi 0, %s96
      %s111 = sphi 0, %s97
      %s115 = sphi 0, %s115
      %s117 = sphi 0, %s115
      %s118 = sphi 0, %s117
      %s132 = sphi 0, %s118
      %s138 = sphi 0, %s140
      %s141 = sphi 0, %s138
      %s142 = sphi 0, %s141
      %s158 = sphi 0, %s142
    $region4: #{tpu_custom_call.1} parent=1 // loop_header_branch
      %21 = sbr.rel (%p19) target = $region8
    $region5: #{tpu_custom_call.1} parent=1 // loop_body
      %s23 = ssub.s32 %s18, 1
      %s24 = ssub.s32 %s18, 2
      %s25 = sadd.s32 %s18, 1
      %s26 = ssub.s32 %s18, %s25
      %p27 = scmp.eq.s32.totalorder %s26, 0
      %s29 = sadd.s32 %s28, 1
      %s30 = scalar_select %p27, %s28, %s29
      %p33 = pneg %p27
      %p34 = scmp.eq.s32.totalorder %s18, 1
      %p35 = por %p33, %p34
      %p36 = scmp.ne.s32.totalorder %s28, %s31
      %p37 = scmp.eq.s32.totalorder %s18, 0
      %p38 = por %p36, %p37
      %p39 = scmp.ne.s32.totalorder %s28, %s31
      %p40 = scmp.eq.s32.totalorder %s23, 1
      %p41 = por %p39, %p40
      %p42 = scmp.ne.s32.totalorder %s31, %s32
      %p43 = scmp.eq.s32.totalorder %s23, 0
      %p44 = por %p42, %p43
      %p45 = scmp.ne.s32.totalorder %s31, %s32
      %p46 = scmp.eq.s32.totalorder %s24, 1
      %p47 = por %p45, %p46
      %p49 = scmp.ne.s32.totalorder %s32, %s48
      %p50 = scmp.eq.s32.totalorder %s24, 0
      %p51 = por %p49, %p50
      %s53 = sadd.s32 %s52, 1
      %p56 = scmp.eq.s32.totalorder %s18, 1
      %p57 = scmp.ne.s32.totalorder %s52, %s54
      %p58 = scmp.eq.s32.totalorder %s18, 0
      %p59 = por %p57, %p58
      %p60 = scmp.ne.s32.totalorder %s52, %s54
      %p61 = scmp.eq.s32.totalorder %s23, 1
      %p62 = por %p60, %p61
      %p63 = scmp.ne.s32.totalorder %s54, %s55
      %p64 = scmp.eq.s32.totalorder %s23, 0
      %p65 = por %p63, %p64
      %p66 = scmp.ne.s32.totalorder %s54, %s55
      %p67 = scmp.eq.s32.totalorder %s24, 1
      %p68 = por %p66, %p67
      %p70 = scmp.ne.s32.totalorder %s55, %s69
      %p71 = scmp.eq.s32.totalorder %s24, 0
      %p72 = por %p70, %p71
      %s74 = sadd.s32 %s73, 1
      %p77 = scmp.eq.s32.totalorder %s18, 1
      %p78 = scmp.ne.s32.totalorder %s73, %s75
      %p79 = scmp.eq.s32.totalorder %s18, 0
      %p80 = por %p78, %p79
      %p81 = scmp.ne.s32.totalorder %s73, %s75
      %p82 = scmp.eq.s32.totalorder %s23, 1
      %p83 = por %p81, %p82
      %p84 = scmp.ne.s32.totalorder %s75, %s76
      %p85 = scmp.eq.s32.totalorder %s23, 0
      %p86 = por %p84, %p85
      %p87 = scmp.ne.s32.totalorder %s75, %s76
      %p88 = scmp.eq.s32.totalorder %s24, 1
      %p89 = por %p87, %p88
      %p91 = scmp.ne.s32.totalorder %s76, %s90
      %p92 = scmp.eq.s32.totalorder %s24, 0
      %p93 = por %p91, %p92
      %s95 = sadd.s32 %s94, 1
      %p98 = scmp.eq.s32.totalorder %s18, 1
      %p99 = scmp.ne.s32.totalorder %s94, %s96
      %p100 = scmp.eq.s32.totalorder %s18, 0
      %p101 = por %p99, %p100
      %p102 = scmp.ne.s32.totalorder %s94, %s96
      %p103 = scmp.eq.s32.totalorder %s23, 1
      %p104 = por %p102, %p103
      %p105 = scmp.ne.s32.totalorder %s96, %s97
      %p106 = scmp.eq.s32.totalorder %s23, 0
      %p107 = por %p105, %p106
      %p108 = scmp.ne.s32.totalorder %s96, %s97
      %p109 = scmp.eq.s32.totalorder %s24, 1
      %p110 = por %p108, %p109
      %p112 = scmp.ne.s32.totalorder %s97, %s111
      %p113 = scmp.eq.s32.totalorder %s24, 0
      %p114 = por %p112, %p113
      %s116 = sadd.s32 %s115, 1
      %p119 = scmp.eq.s32.totalorder %s18, 1
      %p120 = scmp.ne.s32.totalorder %s115, %s117
      %p121 = scmp.eq.s32.totalorder %s18, 0
      %p122 = por %p120, %p121
      %p123 = scmp.ne.s32.totalorder %s115, %s117
      %p124 = scmp.eq.s32.totalorder %s23, 1
      %p125 = por %p123, %p124
      %p126 = scmp.ne.s32.totalorder %s117, %s118
      %p127 = scmp.eq.s32.totalorder %s23, 0
      %p128 = por %p126, %p127
      %p129 = scmp.ne.s32.totalorder %s117, %s118
      %p130 = scmp.eq.s32.totalorder %s24, 1
      %p131 = por %p129, %p130
      %p133 = scmp.ne.s32.totalorder %s118, %s132
      %p134 = scmp.eq.s32.totalorder %s24, 0
      %p135 = por %p133, %p134
      %s136 = ssub.s32 %s18, %s25
      %p137 = scmp.eq.s32.totalorder %s136, 0
      %s139 = sadd.s32 %s138, 1
      %s140 = scalar_select %p137, %s138, %s139
      %p143 = pneg %p137
      %p144 = scmp.eq.s32.totalorder %s18, 1
      %p145 = por %p143, %p144
      %p146 = scmp.ne.s32.totalorder %s138, %s141
      %p147 = scmp.eq.s32.totalorder %s18, 0
      %p148 = por %p146, %p147
      %p149 = scmp.ne.s32.totalorder %s138, %s141
      %p150 = scmp.eq.s32.totalorder %s23, 1
      %p151 = por %p149, %p150
      %p152 = scmp.ne.s32.totalorder %s141, %s142
      %p153 = scmp.eq.s32.totalorder %s23, 0
      %p154 = por %p152, %p153
      %p155 = scmp.ne.s32.totalorder %s141, %s142
      %p156 = scmp.eq.s32.totalorder %s24, 1
      %p157 = por %p155, %p156
      %p159 = scmp.ne.s32.totalorder %s142, %s158
      %p160 = scmp.eq.s32.totalorder %s24, 0
      %p161 = por %p159, %p160
      %p162 = scmp.le.s32.totalorder 1, %s18
      %p163 = scmp.lt.s32.totalorder %s18, 3
      %p164 = pnand %p162, %p163
      %p165 = pneg %p164
      // Predicated region
      $region9: #{tpu_custom_call.1} parent=5 // pred_check
        _
      $region10: #{tpu_custom_call.1} parent=5 // pred_check_branch
        %167 = sbr.rel (%p164) target = $region12
      $region11: #{tpu_custom_call.1} parent=5 // pred_region
        %s168 = ssub.s32 %s18, 1
        // Predicated region
        $region13: #{tpu_custom_call.1} parent=11 // pred_check
          %p169 = pneg %p65
        $region14: #{tpu_custom_call.1} parent=11 // pred_check_branch
          %171 = sbr.rel (%p169) target = $region16
        $region15: #{tpu_custom_call.1} parent=11 // pred_region
          %173 = vsyncadd [#allocation8], 0
          %s174 = sshll.u32 %s1, 4
          %s175 = int_to_ptr.hbm [resolvable:$true] %s174
          %s176 = sshll.u32 [#allocation7], 4
          %s177 = int_to_ptr.vmem [resolvable:$true] %s176
          %182 = dma.hbm_to_vmem [thread:$0]  %s175, 9216, %s177, [#allocation8], 64, 64, 4
        $region16: #{tpu_custom_call.1} parent=11 // pred_fallthru
          _
        // Predicated region
        $region17: #{tpu_custom_call.1} parent=11 // pred_check
          %p183 = pneg %p86
        $region18: #{tpu_custom_call.1} parent=11 // pred_check_branch
          %185 = sbr.rel (%p183) target = $region20
        $region19: #{tpu_custom_call.1} parent=11 // pred_region
          %187 = vsyncadd [#allocation8], 0
          %s188 = sshll.u32 %s2, 4
          %s189 = int_to_ptr.hbm [resolvable:$true] %s188
          %s190 = sshll.u32 [#allocation9], 4
          %s191 = int_to_ptr.vmem [resolvable:$true] %s190
          %196 = dma.hbm_to_vmem [thread:$0]  %s189, 9216, %s191, [#allocation8], 64, 64, 4
        $region20: #{tpu_custom_call.1} parent=11 // pred_fallthru
          _
        // Predicated region
        $region21: #{tpu_custom_call.1} parent=11 // pred_check
          %p197 = pneg %p107
        $region22: #{tpu_custom_call.1} parent=11 // pred_check_branch
          %199 = sbr.rel (%p197) target = $region24
        $region23: #{tpu_custom_call.1} parent=11 // pred_region
          _
        $region24: #{tpu_custom_call.1} parent=11 // pred_fallthru
          _
        // Predicated region
        $region25: #{tpu_custom_call.1} parent=11 // pred_check
          %p200 = pneg %p128
        $region26: #{tpu_custom_call.1} parent=11 // pred_check_branch
          %202 = sbr.rel (%p200) target = $region28
        $region27: #{tpu_custom_call.1} parent=11 // pred_region
          _
        $region28: #{tpu_custom_call.1} parent=11 // pred_fallthru
          _
      $region12: #{tpu_custom_call.1} parent=5 // pred_fallthru
        _
      %p203 = scmp.lt.s32.totalorder %s18, 2
      // Predicated region
      $region29: #{tpu_custom_call.1} parent=5 // pred_check
        %p204 = pneg %p203
      $region30: #{tpu_custom_call.1} parent=5 // pred_check_branch
        %206 = sbr.rel (%p204) target = $region32
      $region31: #{tpu_custom_call.1} parent=5 // pred_region
        // Predicated region
        $region33: #{tpu_custom_call.1} parent=31 // pred_check
          %p207 = pneg %p38
        $region34: #{tpu_custom_call.1} parent=31 // pred_check_branch
          %209 = sbr.rel (%p207) target = $region36
        $region35: #{tpu_custom_call.1} parent=31 // pred_region
          %s210 = sand.u32 %s28, 1
          %s211 = scalar_lea.sflag [#allocation5], %s210
          %s212 = sand.u32 %s28, 1
          %s213 = smul.addr %s212, 256
          %s214 = scalar_lea.vmem [#allocation4], %s213
          %216 = vsyncadd %s211, 0
          %s217 = smul.addr %s18, 32
          %s218 = smul.addr %s217, 8
          %s219 = scalar_lea.hbm %s0, %s218
          %s220 = sshll.u32 %s219, 4
          %s221 = int_to_ptr.hbm [resolvable:$true] %s220
          %s222 = sshll.u32 %s214, 4
          %s223 = int_to_ptr.vmem [resolvable:$true] %s222
          %228 = dma.hbm_to_vmem [thread:$0]  %s221, 4096, %s223, %s211, 128, 128, 8
        $region36: #{tpu_custom_call.1} parent=31 // pred_fallthru
          _
      $region32: #{tpu_custom_call.1} parent=5 // pred_fallthru
        _
      %p229 = scmp.le.s32.totalorder 1, %s18
      %p230 = scmp.lt.s32.totalorder %s18, 3
      %p231 = pnand %p229, %p230
      %p232 = pneg %p231
      // Predicated region
      $region37: #{tpu_custom_call.1} parent=5 // pred_check
        _
      $region38: #{tpu_custom_call.1} parent=5 // pred_check_branch
        %234 = sbr.rel (%p231) target = $region40
      $region39: #{tpu_custom_call.1} parent=5 // pred_region
        %s235 = ssub.s32 %s18, 1
        %s236 = sand.u32 %s31, 1
        %s237 = scalar_lea.sflag [#allocation5], %s236
        %s238 = sand.u32 %s31, 1
        %s239 = smul.addr %s238, 256
        %s240 = scalar_lea.vmem [#allocation4], %s239
        // Predicated region
        $region41: #{tpu_custom_call.1} parent=39 // pred_check
          %p241 = pneg %p44
        $region42: #{tpu_custom_call.1} parent=39 // pred_check_branch
          %243 = sbr.rel (%p241) target = $region44
        $region43: #{tpu_custom_call.1} parent=39 // pred_region
          %245 = dma.done %s237, 4096
        $region44: #{tpu_custom_call.1} parent=39 // pred_fallthru
          _
        // Predicated region
        $region45: #{tpu_custom_call.1} parent=39 // pred_check
          %p246 = pneg %p65
        $region46: #{tpu_custom_call.1} parent=39 // pred_check_branch
          %248 = sbr.rel (%p246) target = $region48
        $region47: #{tpu_custom_call.1} parent=39 // pred_region
          %250 = dma.done [#allocation8], 9216
        $region48: #{tpu_custom_call.1} parent=39 // pred_fallthru
          _
        // Predicated region
        $region49: #{tpu_custom_call.1} parent=39 // pred_check
          %p251 = pneg %p86
        $region50: #{tpu_custom_call.1} parent=39 // pred_check_branch
          %253 = sbr.rel (%p251) target = $region52
        $region51: #{tpu_custom_call.1} parent=39 // pred_region
          %255 = dma.done [#allocation8], 9216
        $region52: #{tpu_custom_call.1} parent=39 // pred_fallthru
          _
        %s256 = sand.u32 %s31, 1
        %s257 = scalar_lea.sflag [#allocation5], %s256
        %s258 = sand.u32 %s31, 1
        %s259 = smul.addr %s258, 256
        %s260 = scalar_lea.vmem [#allocation4], %s259
        %p261 = pneg %p44
        %p262 = pneg %p41
        %p263 = pneg %p65
        %p264 = pneg %p62
        %p265 = pneg %p86
        %p266 = pneg %p83
        %p267 = pneg %p107
        %p268 = pneg %p104
        %p269 = pneg %p128
        %p270 = pneg %p125
        %p271 = pneg %p154
        %p272 = pneg %p151
        %s273 = sand.u32 %s141, 1
        %s274 = scalar_lea.sflag [#allocation6], %s273
        %s275 = sand.u32 %s141, 1
        %s276 = smul.addr %s275, 256
        %s277 = scalar_lea.vmem [#allocation10], %s276
        %279 = vst [vmem:[#allocation2] sm:$0xf] 0
        %280 = vst [vmem:[#allocation2 + $0x4] sm:$0xf] 0
        %281 = vst [vmem:[#allocation2 + $0x8] sm:$0x1] 0
        %s282 = scalar_lea.vmem [#allocation2], 204
        %283 = vst [vmem:[%s282] sm:$0xf] 0
        %284 = vst [vmem:[%s282 + $0x4] sm:$0xf] 0
        %285 = vst [vmem:[%s282 + $0x8] sm:$0x1] 0
        %vm286 = vcmask 1040384
        %vm287 = vsmask.f32 256
        %vm288 = vmand %vm286, %vm287
        %v289 = vld [vmem:[#allocation2] sm:$0x1]
        %v290 = vsel %vm288, 0, %v289
        %291 = vst [vmem:[#allocation2] sm:$0x1] %v290
        %v292 = vld [vmem:[#allocation2 + $0xc] sm:$0x1]
        %v293 = vsel %vm288, 0, %v292
        %294 = vst [vmem:[#allocation2 + $0xc] sm:$0x1] %v293
        %v295 = vld [vmem:[#allocation2 + $0x18] sm:$0x1]
        %v296 = vsel %vm288, 0, %v295
        %297 = vst [vmem:[#allocation2 + $0x18] sm:$0x1] %v296
        %v298 = vld [vmem:[#allocation2 + $0x24] sm:$0x1]
        %v299 = vsel %vm288, 0, %v298
        %300 = vst [vmem:[#allocation2 + $0x24] sm:$0x1] %v299
        %v301 = vld [vmem:[#allocation2 + $0x30] sm:$0x1]
        %v302 = vsel %vm288, 0, %v301
        %303 = vst [vmem:[#allocation2 + $0x30] sm:$0x1] %v302
        %v304 = vld [vmem:[#allocation2 + $0x3c] sm:$0x1]
        %v305 = vsel %vm288, 0, %v304
        %306 = vst [vmem:[#allocation2 + $0x3c] sm:$0x1] %v305
        %v307 = vld [vmem:[#allocation2 + $0x48] sm:$0x1]
        %v308 = vsel %vm288, 0, %v307
        %309 = vst [vmem:[#allocation2 + $0x48] sm:$0x1] %v308
        %v310 = vld [vmem:[#allocation2 + $0x54] sm:$0x1]
        %v311 = vsel %vm288, 0, %v310
        %312 = vst [vmem:[#allocation2 + $0x54] sm:$0x1] %v311
        %v313 = vld [vmem:[#allocation2 + $0x60] sm:$0x1]
        %v314 = vsel %vm288, 0, %v313
        %315 = vst [vmem:[#allocation2 + $0x60] sm:$0x1] %v314
        %v316 = vld [vmem:[#allocation2 + $0x6c] sm:$0x1]
        %v317 = vsel %vm288, 0, %v316
        %318 = vst [vmem:[#allocation2 + $0x6c] sm:$0x1] %v317
        %v319 = vld [vmem:[#allocation2 + $0x78] sm:$0x1]
        %v320 = vsel %vm288, 0, %v319
        %321 = vst [vmem:[#allocation2 + $0x78] sm:$0x1] %v320
        %v322 = vld [vmem:[#allocation2 + $0x84] sm:$0x1]
        %v323 = vsel %vm288, 0, %v322
        %324 = vst [vmem:[#allocation2 + $0x84] sm:$0x1] %v323
        %v325 = vld [vmem:[#allocation2 + $0x90] sm:$0x1]
        %v326 = vsel %vm288, 0, %v325
        %327 = vst [vmem:[#allocation2 + $0x90] sm:$0x1] %v326
        %v328 = vld [vmem:[#allocation2 + $0x9c] sm:$0x1]
        %v329 = vsel %vm288, 0, %v328
        %330 = vst [vmem:[#allocation2 + $0x9c] sm:$0x1] %v329
        %v331 = vld [vmem:[#allocation2 + $0xa8] sm:$0x1]
        %v332 = vsel %vm288, 0, %v331
        %333 = vst [vmem:[#allocation2 + $0xa8] sm:$0x1] %v332
        %v334 = vld [vmem:[#allocation2 + $0xb4] sm:$0x1]
        %v335 = vsel %vm288, 0, %v334
        %336 = vst [vmem:[#allocation2 + $0xb4] sm:$0x1] %v335
        %v337 = vld [vmem:[#allocation2 + $0xc0] sm:$0x1]
        %v338 = vsel %vm288, 0, %v337
        %339 = vst [vmem:[#allocation2 + $0xc0] sm:$0x1] %v338
        %v340 = vld [vmem:[#allocation2 + $0xcc] sm:$0x1]
        %v341 = vsel %vm288, 0, %v340
        %342 = vst [vmem:[#allocation2 + $0xcc] sm:$0x1] %v341
        %vm343 = vsmask.f32 7938
        %vm344 = vmand %vm286, %vm343
        %v345 = vld [vmem:[#allocation2 + $0x8] sm:$0x1]
        %v346 = vsel %vm344, 0, %v345
        %347 = vst [vmem:[#allocation2 + $0x8] sm:$0x1] %v346
        %v348 = vld [vmem:[#allocation2 + $0x14] sm:$0x1]
        %v349 = vsel %vm344, 0, %v348
        %350 = vst [vmem:[#allocation2 + $0x14] sm:$0x1] %v349
        %v351 = vld [vmem:[#allocation2 + $0x20] sm:$0x1]
        %v352 = vsel %vm344, 0, %v351
        %353 = vst [vmem:[#allocation2 + $0x20] sm:$0x1] %v352
        %v354 = vld [vmem:[#allocation2 + $0x2c] sm:$0x1]
        %v355 = vsel %vm344, 0, %v354
        %356 = vst [vmem:[#allocation2 + $0x2c] sm:$0x1] %v355
        %v357 = vld [vmem:[#allocation2 + $0x38] sm:$0x1]
        %v358 = vsel %vm344, 0, %v357
        %359 = vst [vmem:[#allocation2 + $0x38] sm:$0x1] %v358
        %v360 = vld [vmem:[#allocation2 + $0x44] sm:$0x1]
        %v361 = vsel %vm344, 0, %v360
        %362 = vst [vmem:[#allocation2 + $0x44] sm:$0x1] %v361
        %v363 = vld [vmem:[#allocation2 + $0x50] sm:$0x1]
        %v364 = vsel %vm344, 0, %v363
        %365 = vst [vmem:[#allocation2 + $0x50] sm:$0x1] %v364
        %v366 = vld [vmem:[#allocation2 + $0x5c] sm:$0x1]
        %v367 = vsel %vm344, 0, %v366
        %368 = vst [vmem:[#allocation2 + $0x5c] sm:$0x1] %v367
        %v369 = vld [vmem:[#allocation2 + $0x68] sm:$0x1]
        %v370 = vsel %vm344, 0, %v369
        %371 = vst [vmem:[#allocation2 + $0x68] sm:$0x1] %v370
        %v372 = vld [vmem:[#allocation2 + $0x74] sm:$0x1]
        %v373 = vsel %vm344, 0, %v372
        %374 = vst [vmem:[#allocation2 + $0x74] sm:$0x1] %v373
        %v375 = vld [vmem:[#allocation2 + $0x80] sm:$0x1]
        %v376 = vsel %vm344, 0, %v375
        %377 = vst [vmem:[#allocation2 + $0x80] sm:$0x1] %v376
        %v378 = vld [vmem:[#allocation2 + $0x8c] sm:$0x1]
        %v379 = vsel %vm344, 0, %v378
        %380 = vst [vmem:[#allocation2 + $0x8c] sm:$0x1] %v379
        %v381 = vld [vmem:[#allocation2 + $0x98] sm:$0x1]
        %v382 = vsel %vm344, 0, %v381
        %383 = vst [vmem:[#allocation2 + $0x98] sm:$0x1] %v382
        %v384 = vld [vmem:[#allocation2 + $0xa4] sm:$0x1]
        %v385 = vsel %vm344, 0, %v384
        %386 = vst [vmem:[#allocation2 + $0xa4] sm:$0x1] %v385
        %v387 = vld [vmem:[#allocation2 + $0xb0] sm:$0x1]
        %v388 = vsel %vm344, 0, %v387
        %389 = vst [vmem:[#allocation2 + $0xb0] sm:$0x1] %v388
        %v390 = vld [vmem:[#allocation2 + $0xbc] sm:$0x1]
        %v391 = vsel %vm344, 0, %v390
        %392 = vst [vmem:[#allocation2 + $0xbc] sm:$0x1] %v391
        %v393 = vld [vmem:[#allocation2 + $0xc8] sm:$0x1]
        %v394 = vsel %vm344, 0, %v393
        %395 = vst [vmem:[#allocation2 + $0xc8] sm:$0x1] %v394
        %v396 = vld [vmem:[#allocation2 + $0xd4] sm:$0x1]
        %v397 = vsel %vm344, 0, %v396
        %398 = vst [vmem:[#allocation2 + $0xd4] sm:$0x1] %v397
        %v399 = vld [vmem:[%s240] sm:$0xff]
        %v400 = vld [vmem:[%s240 + $0x8] sm:$0xff]
        %v401 = vld [vmem:[%s240 + $0x10] sm:$0xff]
        %v402 = vld [vmem:[%s240 + $0x18] sm:$0xff]
        %v403 = vld [vmem:[%s240 + $0x20] sm:$0xff]
        %v404 = vld [vmem:[%s240 + $0x28] sm:$0xff]
        %v405 = vld [vmem:[%s240 + $0x30] sm:$0xff]
        %v406 = vld [vmem:[%s240 + $0x38] sm:$0xff]
        %v407 = vld [vmem:[%s240 + $0x40] sm:$0xff]
        %v408 = vld [vmem:[%s240 + $0x48] sm:$0xff]
        %v409 = vld [vmem:[%s240 + $0x50] sm:$0xff]
        %v410 = vld [vmem:[%s240 + $0x58] sm:$0xff]
        %v411 = vld [vmem:[%s240 + $0x60] sm:$0xff]
        %v412 = vld [vmem:[%s240 + $0x68] sm:$0xff]
        %v413 = vld [vmem:[%s240 + $0x70] sm:$0xff]
        %v414 = vld [vmem:[%s240 + $0x78] sm:$0xff]
        %v415 = vld [vmem:[%s240 + $0x80] sm:$0xff]
        %v416 = vld [vmem:[%s240 + $0x88] sm:$0xff]
        %v417 = vld [vmem:[%s240 + $0x90] sm:$0xff]
        %v418 = vld [vmem:[%s240 + $0x98] sm:$0xff]
        %v419 = vld [vmem:[%s240 + $0xa0] sm:$0xff]
        %v420 = vld [vmem:[%s240 + $0xa8] sm:$0xff]
        %v421 = vld [vmem:[%s240 + $0xb0] sm:$0xff]
        %v422 = vld [vmem:[%s240 + $0xb8] sm:$0xff]
        %v423 = vld [vmem:[%s240 + $0xc0] sm:$0xff]
        %v424 = vld [vmem:[%s240 + $0xc8] sm:$0xff]
        %v425 = vld [vmem:[%s240 + $0xd0] sm:$0xff]
        %v426 = vld [vmem:[%s240 + $0xd8] sm:$0xff]
        %v427 = vld [vmem:[%s240 + $0xe0] sm:$0xff]
        %v428 = vld [vmem:[%s240 + $0xe8] sm:$0xff]
        %v429 = vld [vmem:[%s240 + $0xf0] sm:$0xff]
        %v430 = vld [vmem:[%s240 + $0xf8] sm:$0xff]
        %v431 = vpack.c.bf16 %v399, %v399
        %v432 = vpack.c.bf16 %v400, %v400
        %v433 = vpack.c.bf16 %v401, %v401
        %v434 = vpack.c.bf16 %v402, %v402
        %v435 = vpack.c.bf16 %v403, %v403
        %v436 = vpack.c.bf16 %v404, %v404
        %v437 = vpack.c.bf16 %v405, %v405
        %v438 = vpack.c.bf16 %v406, %v406
        %v439 = vpack.c.bf16 %v407, %v407
        %v440 = vpack.c.bf16 %v408, %v408
        %v441 = vpack.c.bf16 %v409, %v409
        %v442 = vpack.c.bf16 %v410, %v410
        %v443 = vpack.c.bf16 %v411, %v411
        %v444 = vpack.c.bf16 %v412, %v412
        %v445 = vpack.c.bf16 %v413, %v413
        %v446 = vpack.c.bf16 %v414, %v414
        %v447 = vpack.c.bf16 %v415, %v415
        %v448 = vpack.c.bf16 %v416, %v416
        %v449 = vpack.c.bf16 %v417, %v417
        %v450 = vpack.c.bf16 %v418, %v418
        %v451 = vpack.c.bf16 %v419, %v419
        %v452 = vpack.c.bf16 %v420, %v420
        %v453 = vpack.c.bf16 %v421, %v421
        %v454 = vpack.c.bf16 %v422, %v422
        %v455 = vpack.c.bf16 %v423, %v423
        %v456 = vpack.c.bf16 %v424, %v424
        %v457 = vpack.c.bf16 %v425, %v425
        %v458 = vpack.c.bf16 %v426, %v426
        %v459 = vpack.c.bf16 %v427, %v427
        %v460 = vpack.c.bf16 %v428, %v428
        %v461 = vpack.c.bf16 %v429, %v429
        %v462 = vpack.c.bf16 %v430, %v430
        %vm463 = vsmask.f32 4368
        %vm464 = vmor %vm287, %vm463
        %v466 = vshrl.u32 %v431, 16
        %v468 = vrot.slane %v466, 7
        %v469 = vshll.u32 %v431, 16
        %v471 = vor.u32 %v468, %v469
        %v472 = vrot.slane %v468, 4
        %v474 = vshrl.u32 %v432, 16
        %v476 = vrot.slane %v474, 7
        %v477 = vshll.u32 %v432, 16
        %v479 = vor.u32 %v476, %v477
        %v480 = vsel %vm464, %v472, %v479
        %v481 = vrot.slane %v476, 4
        %v483 = vshrl.u32 %v433, 16
        %v485 = vrot.slane %v483, 7
        %v486 = vshll.u32 %v433, 16
        %v488 = vor.u32 %v485, %v486
        %v489 = vrot.slane %v485, 4
        %v491 = vshrl.u32 %v434, 16
        %v493 = vrot.slane %v491, 7
        %v494 = vshll.u32 %v434, 16
        %v496 = vor.u32 %v493, %v494
        %v497 = vsel %vm464, %v489, %v496
        %v498 = vrot.slane %v493, 4
        %v500 = vshrl.u32 %v435, 16
        %v502 = vrot.slane %v500, 7
        %v503 = vshll.u32 %v435, 16
        %v505 = vor.u32 %v502, %v503
        %v506 = vrot.slane %v502, 4
        %v508 = vshrl.u32 %v436, 16
        %v510 = vrot.slane %v508, 7
        %v511 = vshll.u32 %v436, 16
        %v513 = vor.u32 %v510, %v511
        %v514 = vsel %vm464, %v506, %v513
        %v515 = vrot.slane %v510, 4
        %v517 = vshrl.u32 %v437, 16
        %v519 = vrot.slane %v517, 7
        %v520 = vshll.u32 %v437, 16
        %v522 = vor.u32 %v519, %v520
        %v523 = vrot.slane %v519, 4
        %v525 = vshrl.u32 %v438, 16
        %v527 = vrot.slane %v525, 7
        %v528 = vshll.u32 %v438, 16
        %v530 = vor.u32 %v527, %v528
        %v531 = vsel %vm464, %v523, %v530
        %v532 = vrot.slane %v527, 4
        %v534 = vshrl.u32 %v439, 16
        %v536 = vrot.slane %v534, 7
        %v537 = vshll.u32 %v439, 16
        %v539 = vor.u32 %v536, %v537
        %v540 = vrot.slane %v536, 4
        %v542 = vshrl.u32 %v440, 16
        %v544 = vrot.slane %v542, 7
        %v545 = vshll.u32 %v440, 16
        %v547 = vor.u32 %v544, %v545
        %v548 = vsel %vm464, %v540, %v547
        %v549 = vrot.slane %v544, 4
        %v551 = vshrl.u32 %v441, 16
        %v553 = vrot.slane %v551, 7
        %v554 = vshll.u32 %v441, 16
        %v556 = vor.u32 %v553, %v554
        %v557 = vrot.slane %v553, 4
        %v559 = vshrl.u32 %v442, 16
        %v561 = vrot.slane %v559, 7
        %v562 = vshll.u32 %v442, 16
        %v564 = vor.u32 %v561, %v562
        %v565 = vsel %vm464, %v557, %v564
        %v566 = vrot.slane %v561, 4
        %v568 = vshrl.u32 %v443, 16
        %v570 = vrot.slane %v568, 7
        %v571 = vshll.u32 %v443, 16
        %v573 = vor.u32 %v570, %v571
        %v574 = vrot.slane %v570, 4
        %v576 = vshrl.u32 %v444, 16
        %v578 = vrot.slane %v576, 7
        %v579 = vshll.u32 %v444, 16
        %v581 = vor.u32 %v578, %v579
        %v582 = vsel %vm464, %v574, %v581
        %v583 = vrot.slane %v578, 4
        %v585 = vshrl.u32 %v445, 16
        %v587 = vrot.slane %v585, 7
        %v588 = vshll.u32 %v445, 16
        %v590 = vor.u32 %v587, %v588
        %v591 = vrot.slane %v587, 4
        %v593 = vshrl.u32 %v446, 16
        %v595 = vrot.slane %v593, 7
        %v596 = vshll.u32 %v446, 16
        %v598 = vor.u32 %v595, %v596
        %v599 = vsel %vm464, %v591, %v598
        %v600 = vrot.slane %v595, 4
        %v602 = vshrl.u32 %v447, 16
        %v604 = vrot.slane %v602, 7
        %v605 = vshll.u32 %v447, 16
        %v607 = vor.u32 %v604, %v605
        %v608 = vrot.slane %v604, 4
        %v610 = vshrl.u32 %v448, 16
        %v612 = vrot.slane %v610, 7
        %v613 = vshll.u32 %v448, 16
        %v615 = vor.u32 %v612, %v613
        %v616 = vsel %vm464, %v608, %v615
        %v617 = vrot.slane %v612, 4
        %v619 = vshrl.u32 %v449, 16
        %v621 = vrot.slane %v619, 7
        %v622 = vshll.u32 %v449, 16
        %v624 = vor.u32 %v621, %v622
        %v625 = vrot.slane %v621, 4
        %v627 = vshrl.u32 %v450, 16
        %v629 = vrot.slane %v627, 7
        %v630 = vshll.u32 %v450, 16
        %v632 = vor.u32 %v629, %v630
        %v633 = vsel %vm464, %v625, %v632
        %v634 = vrot.slane %v629, 4
        %v636 = vshrl.u32 %v451, 16
        %v638 = vrot.slane %v636, 7
        %v639 = vshll.u32 %v451, 16
        %v641 = vor.u32 %v638, %v639
        %v642 = vrot.slane %v638, 4
        %v644 = vshrl.u32 %v452, 16
        %v646 = vrot.slane %v644, 7
        %v647 = vshll.u32 %v452, 16
        %v649 = vor.u32 %v646, %v647
        %v650 = vsel %vm464, %v642, %v649
        %v651 = vrot.slane %v646, 4
        %v653 = vshrl.u32 %v453, 16
        %v655 = vrot.slane %v653, 7
        %v656 = vshll.u32 %v453, 16
        %v658 = vor.u32 %v655, %v656
        %v659 = vrot.slane %v655, 4
        %v661 = vshrl.u32 %v454, 16
        %v663 = vrot.slane %v661, 7
        %v664 = vshll.u32 %v454, 16
        %v666 = vor.u32 %v663, %v664
        %v667 = vsel %vm464, %v659, %v666
        %v668 = vrot.slane %v663, 4
        %v670 = vshrl.u32 %v455, 16
        %v672 = vrot.slane %v670, 7
        %v673 = vshll.u32 %v455, 16
        %v675 = vor.u32 %v672, %v673
        %v676 = vrot.slane %v672, 4
        %v678 = vshrl.u32 %v456, 16
        %v680 = vrot.slane %v678, 7
        %v681 = vshll.u32 %v456, 16
        %v683 = vor.u32 %v680, %v681
        %v684 = vsel %vm464, %v676, %v683
        %v685 = vrot.slane %v680, 4
        %v687 = vshrl.u32 %v457, 16
        %v689 = vrot.slane %v687, 7
        %v690 = vshll.u32 %v457, 16
        %v692 = vor.u32 %v689, %v690
        %v693 = vrot.slane %v689, 4
        %v695 = vshrl.u32 %v458, 16
        %v697 = vrot.slane %v695, 7
        %v698 = vshll.u32 %v458, 16
        %v700 = vor.u32 %v697, %v698
        %v701 = vsel %vm464, %v693, %v700
        %v702 = vrot.slane %v697, 4
        %v704 = vshrl.u32 %v459, 16
        %v706 = vrot.slane %v704, 7
        %v707 = vshll.u32 %v459, 16
        %v709 = vor.u32 %v706, %v707
        %v710 = vrot.slane %v706, 4
        %v712 = vshrl.u32 %v460, 16
        %v714 = vrot.slane %v712, 7
        %v715 = vshll.u32 %v460, 16
        %v717 = vor.u32 %v714, %v715
        %v718 = vsel %vm464, %v710, %v717
        %v719 = vrot.slane %v714, 4
        %v721 = vshrl.u32 %v461, 16
        %v723 = vrot.slane %v721, 7
        %v724 = vshll.u32 %v461, 16
        %v726 = vor.u32 %v723, %v724
        %v727 = vrot.slane %v723, 4
        %v729 = vshrl.u32 %v462, 16
        %v731 = vrot.slane %v729, 7
        %v732 = vshll.u32 %v462, 16
        %v734 = vor.u32 %v731, %v732
        %v735 = vsel %vm464, %v727, %v734
        %v736 = vrot.slane %v731, 4
        %s785 = scalar_lea.vmem [#allocation2], 12
        %vm786 = vcmask 1043456
        %vm787 = vmand %vm786, %vm343
        %v788 = vld [vmem:[%s785] sm:$0xf]
        %v789 = vsel %vm787, %v471, %v788
        %790 = vst [vmem:[%s785] sm:$0xf] %v789
        %791 = vst [vmem:[%s785 + $0x4] sm:$0xf] %v480
        %v792 = vld [vmem:[%s785 + $0x8] sm:$0x1]
        %v793 = vsel %vm288, %v481, %v792
        %794 = vst [vmem:[%s785 + $0x8] sm:$0x1] %v793
        %v795 = vld [vmem:[%s785 + $0xc] sm:$0xf]
        %v796 = vsel %vm787, %v488, %v795
        %797 = vst [vmem:[%s785 + $0xc] sm:$0xf] %v796
        %798 = vst [vmem:[%s785 + $0x10] sm:$0xf] %v497
        %v799 = vld [vmem:[%s785 + $0x14] sm:$0x1]
        %v800 = vsel %vm288, %v498, %v799
        %801 = vst [vmem:[%s785 + $0x14] sm:$0x1] %v800
        %v802 = vld [vmem:[%s785 + $0x18] sm:$0xf]
        %v803 = vsel %vm787, %v505, %v802
        %804 = vst [vmem:[%s785 + $0x18] sm:$0xf] %v803
        %805 = vst [vmem:[%s785 + $0x1c] sm:$0xf] %v514
        %v806 = vld [vmem:[%s785 + $0x20] sm:$0x1]
        %v807 = vsel %vm288, %v515, %v806
        %808 = vst [vmem:[%s785 + $0x20] sm:$0x1] %v807
        %v809 = vld [vmem:[%s785 + $0x24] sm:$0xf]
        %v810 = vsel %vm787, %v522, %v809
        %811 = vst [vmem:[%s785 + $0x24] sm:$0xf] %v810
        %812 = vst [vmem:[%s785 + $0x28] sm:$0xf] %v531
        %v813 = vld [vmem:[%s785 + $0x2c] sm:$0x1]
        %v814 = vsel %vm288, %v532, %v813
        %815 = vst [vmem:[%s785 + $0x2c] sm:$0x1] %v814
        %v816 = vld [vmem:[%s785 + $0x30] sm:$0xf]
        %v817 = vsel %vm787, %v539, %v816
        %818 = vst [vmem:[%s785 + $0x30] sm:$0xf] %v817
        %819 = vst [vmem:[%s785 + $0x34] sm:$0xf] %v548
        %v820 = vld [vmem:[%s785 + $0x38] sm:$0x1]
        %v821 = vsel %vm288, %v549, %v820
        %822 = vst [vmem:[%s785 + $0x38] sm:$0x1] %v821
        %v823 = vld [vmem:[%s785 + $0x3c] sm:$0xf]
        %v824 = vsel %vm787, %v556, %v823
        %825 = vst [vmem:[%s785 + $0x3c] sm:$0xf] %v824
        %826 = vst [vmem:[%s785 + $0x40] sm:$0xf] %v565
        %v827 = vld [vmem:[%s785 + $0x44] sm:$0x1]
        %v828 = vsel %vm288, %v566, %v827
        %829 = vst [vmem:[%s785 + $0x44] sm:$0x1] %v828
        %v830 = vld [vmem:[%s785 + $0x48] sm:$0xf]
        %v831 = vsel %vm787, %v573, %v830
        %832 = vst [vmem:[%s785 + $0x48] sm:$0xf] %v831
        %833 = vst [vmem:[%s785 + $0x4c] sm:$0xf] %v582
        %v834 = vld [vmem:[%s785 + $0x50] sm:$0x1]
        %v835 = vsel %vm288, %v583, %v834
        %836 = vst [vmem:[%s785 + $0x50] sm:$0x1] %v835
        %v837 = vld [vmem:[%s785 + $0x54] sm:$0xf]
        %v838 = vsel %vm787, %v590, %v837
        %839 = vst [vmem:[%s785 + $0x54] sm:$0xf] %v838
        %840 = vst [vmem:[%s785 + $0x58] sm:$0xf] %v599
        %v841 = vld [vmem:[%s785 + $0x5c] sm:$0x1]
        %v842 = vsel %vm288, %v600, %v841
        %843 = vst [vmem:[%s785 + $0x5c] sm:$0x1] %v842
        %v844 = vld [vmem:[%s785 + $0x60] sm:$0xf]
        %v845 = vsel %vm787, %v607, %v844
        %846 = vst [vmem:[%s785 + $0x60] sm:$0xf] %v845
        %847 = vst [vmem:[%s785 + $0x64] sm:$0xf] %v616
        %v848 = vld [vmem:[%s785 + $0x68] sm:$0x1]
        %v849 = vsel %vm288, %v617, %v848
        %850 = vst [vmem:[%s785 + $0x68] sm:$0x1] %v849
        %v851 = vld [vmem:[%s785 + $0x6c] sm:$0xf]
        %v852 = vsel %vm787, %v624, %v851
        %853 = vst [vmem:[%s785 + $0x6c] sm:$0xf] %v852
        %854 = vst [vmem:[%s785 + $0x70] sm:$0xf] %v633
        %v855 = vld [vmem:[%s785 + $0x74] sm:$0x1]
        %v856 = vsel %vm288, %v634, %v855
        %857 = vst [vmem:[%s785 + $0x74] sm:$0x1] %v856
        %v858 = vld [vmem:[%s785 + $0x78] sm:$0xf]
        %v859 = vsel %vm787, %v641, %v858
        %860 = vst [vmem:[%s785 + $0x78] sm:$0xf] %v859
        %861 = vst [vmem:[%s785 + $0x7c] sm:$0xf] %v650
        %v862 = vld [vmem:[%s785 + $0x80] sm:$0x1]
        %v863 = vsel %vm288, %v651, %v862
        %864 = vst [vmem:[%s785 + $0x80] sm:$0x1] %v863
        %v865 = vld [vmem:[%s785 + $0x84] sm:$0xf]
        %v866 = vsel %vm787, %v658, %v865
        %867 = vst [vmem:[%s785 + $0x84] sm:$0xf] %v866
        %868 = vst [vmem:[%s785 + $0x88] sm:$0xf] %v667
        %v869 = vld [vmem:[%s785 + $0x8c] sm:$0x1]
        %v870 = vsel %vm288, %v668, %v869
        %871 = vst [vmem:[%s785 + $0x8c] sm:$0x1] %v870
        %v872 = vld [vmem:[%s785 + $0x90] sm:$0xf]
        %v873 = vsel %vm787, %v675, %v872
        %874 = vst [vmem:[%s785 + $0x90] sm:$0xf] %v873
        %875 = vst [vmem:[%s785 + $0x94] sm:$0xf] %v684
        %v876 = vld [vmem:[%s785 + $0x98] sm:$0x1]
        %v877 = vsel %vm288, %v685, %v876
        %878 = vst [vmem:[%s785 + $0x98] sm:$0x1] %v877
        %v879 = vld [vmem:[%s785 + $0x9c] sm:$0xf]
        %v880 = vsel %vm787, %v692, %v879
        %881 = vst [vmem:[%s785 + $0x9c] sm:$0xf] %v880
        %882 = vst [vmem:[%s785 + $0xa0] sm:$0xf] %v701
        %v883 = vld [vmem:[%s785 + $0xa4] sm:$0x1]
        %v884 = vsel %vm288, %v702, %v883
        %885 = vst [vmem:[%s785 + $0xa4] sm:$0x1] %v884
        %v886 = vld [vmem:[%s785 + $0xa8] sm:$0xf]
        %v887 = vsel %vm787, %v709, %v886
        %888 = vst [vmem:[%s785 + $0xa8] sm:$0xf] %v887
        %889 = vst [vmem:[%s785 + $0xac] sm:$0xf] %v718
        %v890 = vld [vmem:[%s785 + $0xb0] sm:$0x1]
        %v891 = vsel %vm288, %v719, %v890
        %892 = vst [vmem:[%s785 + $0xb0] sm:$0x1] %v891
        %v893 = vld [vmem:[%s785 + $0xb4] sm:$0xf]
        %v894 = vsel %vm787, %v726, %v893
        %895 = vst [vmem:[%s785 + $0xb4] sm:$0xf] %v894
        %896 = vst [vmem:[%s785 + $0xb8] sm:$0xf] %v735
        %v897 = vld [vmem:[%s785 + $0xbc] sm:$0x1]
        %v898 = vsel %vm288, %v736, %v897
        %899 = vst [vmem:[%s785 + $0xbc] sm:$0x1] %v898
        %v900 = vld [vmem:[#allocation2] sm:$0xf]
        %v901 = vld [vmem:[#allocation2 + $0x4] sm:$0xf]
        %v902 = vld [vmem:[#allocation2 + $0xc] sm:$0xf]
        %v903 = vld [vmem:[#allocation2 + $0x10] sm:$0xf]
        %v904 = vld [vmem:[#allocation2 + $0x18] sm:$0xf]
        %v905 = vld [vmem:[#allocation2 + $0x1c] sm:$0xf]
        %v906 = vld [vmem:[#allocation2 + $0x24] sm:$0xf]
        %v907 = vld [vmem:[#allocation2 + $0x28] sm:$0xf]
        %v908 = vld [vmem:[#allocation2 + $0x30] sm:$0xf]
        %v909 = vld [vmem:[#allocation2 + $0x34] sm:$0xf]
        %v910 = vld [vmem:[#allocation2 + $0x3c] sm:$0xf]
        %v911 = vld [vmem:[#allocation2 + $0x40] sm:$0xf]
        %v912 = vld [vmem:[#allocation2 + $0x48] sm:$0xf]
        %v913 = vld [vmem:[#allocation2 + $0x4c] sm:$0xf]
        %v914 = vld [vmem:[#allocation2 + $0x54] sm:$0xf]
        %v915 = vld [vmem:[#allocation2 + $0x58] sm:$0xf]
        %v916 = vld [vmem:[#allocation2 + $0x60] sm:$0xf]
        %v917 = vld [vmem:[#allocation2 + $0x64] sm:$0xf]
        %v918 = vld [vmem:[#allocation2 + $0x6c] sm:$0xf]
        %v919 = vld [vmem:[#allocation2 + $0x70] sm:$0xf]
        %v920 = vld [vmem:[#allocation2 + $0x78] sm:$0xf]
        %v921 = vld [vmem:[#allocation2 + $0x7c] sm:$0xf]
        %v922 = vld [vmem:[#allocation2 + $0x84] sm:$0xf]
        %v923 = vld [vmem:[#allocation2 + $0x88] sm:$0xf]
        %v924 = vld [vmem:[#allocation2 + $0x90] sm:$0xf]
        %v925 = vld [vmem:[#allocation2 + $0x94] sm:$0xf]
        %v926 = vld [vmem:[#allocation2 + $0x9c] sm:$0xf]
        %v927 = vld [vmem:[#allocation2 + $0xa0] sm:$0xf]
        %v928 = vld [vmem:[#allocation2 + $0xa8] sm:$0xf]
        %v929 = vld [vmem:[#allocation2 + $0xac] sm:$0xf]
        %v930 = vld [vmem:[#allocation2 + $0xb4] sm:$0xf]
        %v931 = vld [vmem:[#allocation2 + $0xb8] sm:$0xf]
        %932 = vst [vmem:[#allocation3] sm:$0xf] %v900
        %933 = vst [vmem:[#allocation3 + $0x24] sm:$0xf] %v901
        %934 = vst [vmem:[#allocation3 + $0x48] sm:$0xf] %v902
        %935 = vst [vmem:[#allocation3 + $0x6c] sm:$0xf] %v903
        %936 = vst [vmem:[#allocation3 + $0x90] sm:$0xf] %v904
        %937 = vst [vmem:[#allocation3 + $0xb4] sm:$0xf] %v905
        %938 = vst [vmem:[#allocation3 + $0xd8] sm:$0xf] %v906
        %939 = vst [vmem:[#allocation3 + $0xfc] sm:$0xf] %v907
        %940 = vst [vmem:[#allocation3 + $0x120] sm:$0xf] %v908
        %941 = vst [vmem:[#allocation3 + $0x144] sm:$0xf] %v909
        %942 = vst [vmem:[#allocation3 + $0x168] sm:$0xf] %v910
        %943 = vst [vmem:[#allocation3 + $0x18c] sm:$0xf] %v911
        %944 = vst [vmem:[#allocation3 + $0x1b0] sm:$0xf] %v912
        %945 = vst [vmem:[#allocation3 + $0x1d4] sm:$0xf] %v913
        %946 = vst [vmem:[#allocation3 + $0x1f8] sm:$0xf] %v914
        %947 = vst [vmem:[#allocation3 + $0x21c] sm:$0xf] %v915
        %948 = vst [vmem:[#allocation3 + $0x240] sm:$0xf] %v916
        %949 = vst [vmem:[#allocation3 + $0x264] sm:$0xf] %v917
        %950 = vst [vmem:[#allocation3 + $0x288] sm:$0xf] %v918
        %951 = vst [vmem:[#allocation3 + $0x2ac] sm:$0xf] %v919
        %952 = vst [vmem:[#allocation3 + $0x2d0] sm:$0xf] %v920
        %953 = vst [vmem:[#allocation3 + $0x2f4] sm:$0xf] %v921
        %954 = vst [vmem:[#allocation3 + $0x318] sm:$0xf] %v922
        %955 = vst [vmem:[#allocation3 + $0x33c] sm:$0xf] %v923
        %956 = vst [vmem:[#allocation3 + $0x360] sm:$0xf] %v924
        %957 = vst [vmem:[#allocation3 + $0x384] sm:$0xf] %v925
        %958 = vst [vmem:[#allocation3 + $0x3a8] sm:$0xf] %v926
        %959 = vst [vmem:[#allocation3 + $0x3cc] sm:$0xf] %v927
        %960 = vst [vmem:[#allocation3 + $0x3f0] sm:$0xf] %v928
        %961 = vst [vmem:[#allocation3 + $0x414] sm:$0xf] %v929
        %962 = vst [vmem:[#allocation3 + $0x438] sm:$0xf] %v930
        %963 = vst [vmem:[#allocation3 + $0x45c] sm:$0xf] %v931
        %v964 = vld [vmem:[#allocation2] sm:$0xf]
        %v965 = vld [vmem:[#allocation2 + $0x4] sm:$0xf]
        %v966 = vld [vmem:[#allocation2 + $0x8] sm:$0x1]
        %v967 = vld [vmem:[#allocation2 + $0xc] sm:$0xf]
        %v968 = vld [vmem:[#allocation2 + $0x10] sm:$0xf]
        %v969 = vld [vmem:[#allocation2 + $0x14] sm:$0x1]
        %v970 = vld [vmem:[#allocation2 + $0x18] sm:$0xf]
        %v971 = vld [vmem:[#allocation2 + $0x1c] sm:$0xf]
        %v972 = vld [vmem:[#allocation2 + $0x20] sm:$0x1]
        %v973 = vld [vmem:[#allocation2 + $0x24] sm:$0xf]
        %v974 = vld [vmem:[#allocation2 + $0x28] sm:$0xf]
        %v975 = vld [vmem:[#allocation2 + $0x2c] sm:$0x1]
        %v976 = vld [vmem:[#allocation2 + $0x30] sm:$0xf]
        %v977 = vld [vmem:[#allocation2 + $0x34] sm:$0xf]
        %v978 = vld [vmem:[#allocation2 + $0x38] sm:$0x1]
        %v979 = vld [vmem:[#allocation2 + $0x3c] sm:$0xf]
        %v980 = vld [vmem:[#allocation2 + $0x40] sm:$0xf]
        %v981 = vld [vmem:[#allocation2 + $0x44] sm:$0x1]
        %v982 = vld [vmem:[#allocation2 + $0x48] sm:$0xf]
        %v983 = vld [vmem:[#allocation2 + $0x4c] sm:$0xf]
        %v984 = vld [vmem:[#allocation2 + $0x50] sm:$0x1]
        %v985 = vld [vmem:[#allocation2 + $0x54] sm:$0xf]
        %v986 = vld [vmem:[#allocation2 + $0x58] sm:$0xf]
        %v987 = vld [vmem:[#allocation2 + $0x5c] sm:$0x1]
        %v988 = vld [vmem:[#allocation2 + $0x60] sm:$0xf]
        %v989 = vld [vmem:[#allocation2 + $0x64] sm:$0xf]
        %v990 = vld [vmem:[#allocation2 + $0x68] sm:$0x1]
        %v991 = vld [vmem:[#allocation2 + $0x6c] sm:$0xf]
        %v992 = vld [vmem:[#allocation2 + $0x70] sm:$0xf]
        %v993 = vld [vmem:[#allocation2 + $0x74] sm:$0x1]
        %v994 = vld [vmem:[#allocation2 + $0x78] sm:$0xf]
        %v995 = vld [vmem:[#allocation2 + $0x7c] sm:$0xf]
        %v996 = vld [vmem:[#allocation2 + $0x80] sm:$0x1]
        %v997 = vld [vmem:[#allocation2 + $0x84] sm:$0xf]
        %v998 = vld [vmem:[#allocation2 + $0x88] sm:$0xf]
        %v999 = vld [vmem:[#allocation2 + $0x8c] sm:$0x1]
        %v1000 = vld [vmem:[#allocation2 + $0x90] sm:$0xf]
        %v1001 = vld [vmem:[#allocation2 + $0x94] sm:$0xf]
        %v1002 = vld [vmem:[#allocation2 + $0x98] sm:$0x1]
        %v1003 = vld [vmem:[#allocation2 + $0x9c] sm:$0xf]
        %v1004 = vld [vmem:[#allocation2 + $0xa0] sm:$0xf]
        %v1005 = vld [vmem:[#allocation2 + $0xa4] sm:$0x1]
        %v1006 = vld [vmem:[#allocation2 + $0xa8] sm:$0xf]
        %v1007 = vld [vmem:[#allocation2 + $0xac] sm:$0xf]
        %v1008 = vld [vmem:[#allocation2 + $0xb0] sm:$0x1]
        %v1009 = vld [vmem:[#allocation2 + $0xb4] sm:$0xf]
        %v1010 = vld [vmem:[#allocation2 + $0xb8] sm:$0xf]
        %v1011 = vld [vmem:[#allocation2 + $0xbc] sm:$0x1]
        %vm1012 = vsmask.f32 3328
        %vm1013 = vsmask.f32 7440
        %vm1014 = vmor %vm1012, %vm1013
        %v1016 = vshrl.u32 %v964, 16
        %v1018 = vrot.slane %v1016, 4
        %v1019 = vshll.u32 %v964, 16
        %v1021 = vrot.slane %v1019, 5
        %v1022 = vor.u32 %v1018, %v1021
        %v1023 = vrot.slane %v1022, 4
        %v1025 = vshll.u32 %v965, 16
        %v1027 = vrot.slane %v1025, 5
        %v1028 = vsel %vm1014, %v1023, %v1027
        %v1029 = vshrl.u32 %v965, 16
        %v1031 = vrot.slane %v1029, 4
        %v1032 = vor.u32 %v1031, %v1027
        %v1033 = vrot.slane %v1032, 4
        %v1035 = vshll.u32 %v966, 16
        %v1037 = vrot.slane %v1035, 5
        %v1038 = vsel %vm1014, %v1033, %v1037
        %v1040 = vshrl.u32 %v967, 16
        %v1042 = vrot.slane %v1040, 4
        %v1043 = vshll.u32 %v967, 16
        %v1045 = vrot.slane %v1043, 5
        %v1046 = vor.u32 %v1042, %v1045
        %v1047 = vrot.slane %v1046, 4
        %v1049 = vshll.u32 %v968, 16
        %v1051 = vrot.slane %v1049, 5
        %v1052 = vsel %vm1014, %v1047, %v1051
        %v1053 = vshrl.u32 %v968, 16
        %v1055 = vrot.slane %v1053, 4
        %v1056 = vor.u32 %v1055, %v1051
        %v1057 = vrot.slane %v1056, 4
        %v1059 = vshll.u32 %v969, 16
        %v1061 = vrot.slane %v1059, 5
        %v1062 = vsel %vm1014, %v1057, %v1061
        %v1064 = vshrl.u32 %v970, 16
        %v1066 = vrot.slane %v1064, 4
        %v1067 = vshll.u32 %v970, 16
        %v1069 = vrot.slane %v1067, 5
        %v1070 = vor.u32 %v1066, %v1069
        %v1071 = vrot.slane %v1070, 4
        %v1073 = vshll.u32 %v971, 16
        %v1075 = vrot.slane %v1073, 5
        %v1076 = vsel %vm1014, %v1071, %v1075
        %v1077 = vshrl.u32 %v971, 16
        %v1079 = vrot.slane %v1077, 4
        %v1080 = vor.u32 %v1079, %v1075
        %v1081 = vrot.slane %v1080, 4
        %v1083 = vshll.u32 %v972, 16
        %v1085 = vrot.slane %v1083, 5
        %v1086 = vsel %vm1014, %v1081, %v1085
        %v1088 = vshrl.u32 %v973, 16
        %v1090 = vrot.slane %v1088, 4
        %v1091 = vshll.u32 %v973, 16
        %v1093 = vrot.slane %v1091, 5
        %v1094 = vor.u32 %v1090, %v1093
        %v1095 = vrot.slane %v1094, 4
        %v1097 = vshll.u32 %v974, 16
        %v1099 = vrot.slane %v1097, 5
        %v1100 = vsel %vm1014, %v1095, %v1099
        %v1101 = vshrl.u32 %v974, 16
        %v1103 = vrot.slane %v1101, 4
        %v1104 = vor.u32 %v1103, %v1099
        %v1105 = vrot.slane %v1104, 4
        %v1107 = vshll.u32 %v975, 16
        %v1109 = vrot.slane %v1107, 5
        %v1110 = vsel %vm1014, %v1105, %v1109
        %v1112 = vshrl.u32 %v976, 16
        %v1114 = vrot.slane %v1112, 4
        %v1115 = vshll.u32 %v976, 16
        %v1117 = vrot.slane %v1115, 5
        %v1118 = vor.u32 %v1114, %v1117
        %v1119 = vrot.slane %v1118, 4
        %v1121 = vshll.u32 %v977, 16
        %v1123 = vrot.slane %v1121, 5
        %v1124 = vsel %vm1014, %v1119, %v1123
        %v1125 = vshrl.u32 %v977, 16
        %v1127 = vrot.slane %v1125, 4
        %v1128 = vor.u32 %v1127, %v1123
        %v1129 = vrot.slane %v1128, 4
        %v1131 = vshll.u32 %v978, 16
        %v1133 = vrot.slane %v1131, 5
        %v1134 = vsel %vm1014, %v1129, %v1133
        %v1136 = vshrl.u32 %v979, 16
        %v1138 = vrot.slane %v1136, 4
        %v1139 = vshll.u32 %v979, 16
        %v1141 = vrot.slane %v1139, 5
        %v1142 = vor.u32 %v1138, %v1141
        %v1143 = vrot.slane %v1142, 4
        %v1145 = vshll.u32 %v980, 16
        %v1147 = vrot.slane %v1145, 5
        %v1148 = vsel %vm1014, %v1143, %v1147
        %v1149 = vshrl.u32 %v980, 16
        %v1151 = vrot.slane %v1149, 4
        %v1152 = vor.u32 %v1151, %v1147
        %v1153 = vrot.slane %v1152, 4
        %v1155 = vshll.u32 %v981, 16
        %v1157 = vrot.slane %v1155, 5
        %v1158 = vsel %vm1014, %v1153, %v1157
        %v1160 = vshrl.u32 %v982, 16
        %v1162 = vrot.slane %v1160, 4
        %v1163 = vshll.u32 %v982, 16
        %v1165 = vrot.slane %v1163, 5
        %v1166 = vor.u32 %v1162, %v1165
        %v1167 = vrot.slane %v1166, 4
        %v1169 = vshll.u32 %v983, 16
        %v1171 = vrot.slane %v1169, 5
        %v1172 = vsel %vm1014, %v1167, %v1171
        %v1173 = vshrl.u32 %v983, 16
        %v1175 = vrot.slane %v1173, 4
        %v1176 = vor.u32 %v1175, %v1171
        %v1177 = vrot.slane %v1176, 4
        %v1179 = vshll.u32 %v984, 16
        %v1181 = vrot.slane %v1179, 5
        %v1182 = vsel %vm1014, %v1177, %v1181
        %v1184 = vshrl.u32 %v985, 16
        %v1186 = vrot.slane %v1184, 4
        %v1187 = vshll.u32 %v985, 16
        %v1189 = vrot.slane %v1187, 5
        %v1190 = vor.u32 %v1186, %v1189
        %v1191 = vrot.slane %v1190, 4
        %v1193 = vshll.u32 %v986, 16
        %v1195 = vrot.slane %v1193, 5
        %v1196 = vsel %vm1014, %v1191, %v1195
        %v1197 = vshrl.u32 %v986, 16
        %v1199 = vrot.slane %v1197, 4
        %v1200 = vor.u32 %v1199, %v1195
        %v1201 = vrot.slane %v1200, 4
        %v1203 = vshll.u32 %v987, 16
        %v1205 = vrot.slane %v1203, 5
        %v1206 = vsel %vm1014, %v1201, %v1205
        %v1208 = vshrl.u32 %v988, 16
        %v1210 = vrot.slane %v1208, 4
        %v1211 = vshll.u32 %v988, 16
        %v1213 = vrot.slane %v1211, 5
        %v1214 = vor.u32 %v1210, %v1213
        %v1215 = vrot.slane %v1214, 4
        %v1217 = vshll.u32 %v989, 16
        %v1219 = vrot.slane %v1217, 5
        %v1220 = vsel %vm1014, %v1215, %v1219
        %v1221 = vshrl.u32 %v989, 16
        %v1223 = vrot.slane %v1221, 4
        %v1224 = vor.u32 %v1223, %v1219
        %v1225 = vrot.slane %v1224, 4
        %v1227 = vshll.u32 %v990, 16
        %v1229 = vrot.slane %v1227, 5
        %v1230 = vsel %vm1014, %v1225, %v1229
        %v1232 = vshrl.u32 %v991, 16
        %v1234 = vrot.slane %v1232, 4
        %v1235 = vshll.u32 %v991, 16
        %v1237 = vrot.slane %v1235, 5
        %v1238 = vor.u32 %v1234, %v1237
        %v1239 = vrot.slane %v1238, 4
        %v1241 = vshll.u32 %v992, 16
        %v1243 = vrot.slane %v1241, 5
        %v1244 = vsel %vm1014, %v1239, %v1243
        %v1245 = vshrl.u32 %v992, 16
        %v1247 = vrot.slane %v1245, 4
        %v1248 = vor.u32 %v1247, %v1243
        %v1249 = vrot.slane %v1248, 4
        %v1251 = vshll.u32 %v993, 16
        %v1253 = vrot.slane %v1251, 5
        %v1254 = vsel %vm1014, %v1249, %v1253
        %v1256 = vshrl.u32 %v994, 16
        %v1258 = vrot.slane %v1256, 4
        %v1259 = vshll.u32 %v994, 16
        %v1261 = vrot.slane %v1259, 5
        %v1262 = vor.u32 %v1258, %v1261
        %v1263 = vrot.slane %v1262, 4
        %v1265 = vshll.u32 %v995, 16
        %v1267 = vrot.slane %v1265, 5
        %v1268 = vsel %vm1014, %v1263, %v1267
        %v1269 = vshrl.u32 %v995, 16
        %v1271 = vrot.slane %v1269, 4
        %v1272 = vor.u32 %v1271, %v1267
        %v1273 = vrot.slane %v1272, 4
        %v1275 = vshll.u32 %v996, 16
        %v1277 = vrot.slane %v1275, 5
        %v1278 = vsel %vm1014, %v1273, %v1277
        %v1280 = vshrl.u32 %v997, 16
        %v1282 = vrot.slane %v1280, 4
        %v1283 = vshll.u32 %v997, 16
        %v1285 = vrot.slane %v1283, 5
        %v1286 = vor.u32 %v1282, %v1285
        %v1287 = vrot.slane %v1286, 4
        %v1289 = vshll.u32 %v998, 16
        %v1291 = vrot.slane %v1289, 5
        %v1292 = vsel %vm1014, %v1287, %v1291
        %v1293 = vshrl.u32 %v998, 16
        %v1295 = vrot.slane %v1293, 4
        %v1296 = vor.u32 %v1295, %v1291
        %v1297 = vrot.slane %v1296, 4
        %v1299 = vshll.u32 %v999, 16
        %v1301 = vrot.slane %v1299, 5
        %v1302 = vsel %vm1014, %v1297, %v1301
        %v1304 = vshrl.u32 %v1000, 16
        %v1306 = vrot.slane %v1304, 4
        %v1307 = vshll.u32 %v1000, 16
        %v1309 = vrot.slane %v1307, 5
        %v1310 = vor.u32 %v1306, %v1309
        %v1311 = vrot.slane %v1310, 4
        %v1313 = vshll.u32 %v1001, 16
        %v1315 = vrot.slane %v1313, 5
        %v1316 = vsel %vm1014, %v1311, %v1315
        %v1317 = vshrl.u32 %v1001, 16
        %v1319 = vrot.slane %v1317, 4
        %v1320 = vor.u32 %v1319, %v1315
        %v1321 = vrot.slane %v1320, 4
        %v1323 = vshll.u32 %v1002, 16
        %v1325 = vrot.slane %v1323, 5
        %v1326 = vsel %vm1014, %v1321, %v1325
        %v1328 = vshrl.u32 %v1003, 16
        %v1330 = vrot.slane %v1328, 4
        %v1331 = vshll.u32 %v1003, 16
        %v1333 = vrot.slane %v1331, 5
        %v1334 = vor.u32 %v1330, %v1333
        %v1335 = vrot.slane %v1334, 4
        %v1337 = vshll.u32 %v1004, 16
        %v1339 = vrot.slane %v1337, 5
        %v1340 = vsel %vm1014, %v1335, %v1339
        %v1341 = vshrl.u32 %v1004, 16
        %v1343 = vrot.slane %v1341, 4
        %v1344 = vor.u32 %v1343, %v1339
        %v1345 = vrot.slane %v1344, 4
        %v1347 = vshll.u32 %v1005, 16
        %v1349 = vrot.slane %v1347, 5
        %v1350 = vsel %vm1014, %v1345, %v1349
        %v1352 = vshrl.u32 %v1006, 16
        %v1354 = vrot.slane %v1352, 4
        %v1355 = vshll.u32 %v1006, 16
        %v1357 = vrot.slane %v1355, 5
        %v1358 = vor.u32 %v1354, %v1357
        %v1359 = vrot.slane %v1358, 4
        %v1361 = vshll.u32 %v1007, 16
        %v1363 = vrot.slane %v1361, 5
        %v1364 = vsel %vm1014, %v1359, %v1363
        %v1365 = vshrl.u32 %v1007, 16
        %v1367 = vrot.slane %v1365, 4
        %v1368 = vor.u32 %v1367, %v1363
        %v1369 = vrot.slane %v1368, 4
        %v1371 = vshll.u32 %v1008, 16
        %v1373 = vrot.slane %v1371, 5
        %v1374 = vsel %vm1014, %v1369, %v1373
        %v1376 = vshrl.u32 %v1009, 16
        %v1378 = vrot.slane %v1376, 4
        %v1379 = vshll.u32 %v1009, 16
        %v1381 = vrot.slane %v1379, 5
        %v1382 = vor.u32 %v1378, %v1381
        %v1383 = vrot.slane %v1382, 4
        %v1385 = vshll.u32 %v1010, 16
        %v1387 = vrot.slane %v1385, 5
        %v1388 = vsel %vm1014, %v1383, %v1387
        %v1389 = vshrl.u32 %v1010, 16
        %v1391 = vrot.slane %v1389, 4
        %v1392 = vor.u32 %v1391, %v1387
        %v1393 = vrot.slane %v1392, 4
        %v1395 = vshll.u32 %v1011, 16
        %v1397 = vrot.slane %v1395, 5
        %v1398 = vsel %vm1014, %v1393, %v1397
        %1431 = vst [vmem:[#allocation3 + $0x4] sm:$0xf] %v1028
        %1432 = vst [vmem:[#allocation3 + $0x28] sm:$0xf] %v1038
        %1433 = vst [vmem:[#allocation3 + $0x4c] sm:$0xf] %v1052
        %1434 = vst [vmem:[#allocation3 + $0x70] sm:$0xf] %v1062
        %1435 = vst [vmem:[#allocation3 + $0x94] sm:$0xf] %v1076
        %1436 = vst [vmem:[#allocation3 + $0xb8] sm:$0xf] %v1086
        %1437 = vst [vmem:[#allocation3 + $0xdc] sm:$0xf] %v1100
        %1438 = vst [vmem:[#allocation3 + $0x100] sm:$0xf] %v1110
        %1439 = vst [vmem:[#allocation3 + $0x124] sm:$0xf] %v1124
        %1440 = vst [vmem:[#allocation3 + $0x148] sm:$0xf] %v1134
        %1441 = vst [vmem:[#allocation3 + $0x16c] sm:$0xf] %v1148
        %1442 = vst [vmem:[#allocation3 + $0x190] sm:$0xf] %v1158
        %1443 = vst [vmem:[#allocation3 + $0x1b4] sm:$0xf] %v1172
        %1444 = vst [vmem:[#allocation3 + $0x1d8] sm:$0xf] %v1182
        %1445 = vst [vmem:[#allocation3 + $0x1fc] sm:$0xf] %v1196
        %1446 = vst [vmem:[#allocation3 + $0x220] sm:$0xf] %v1206
        %1447 = vst [vmem:[#allocation3 + $0x244] sm:$0xf] %v1220
        %1448 = vst [vmem:[#allocation3 + $0x268] sm:$0xf] %v1230
        %1449 = vst [vmem:[#allocation3 + $0x28c] sm:$0xf] %v1244
        %1450 = vst [vmem:[#allocation3 + $0x2b0] sm:$0xf] %v1254
        %1451 = vst [vmem:[#allocation3 + $0x2d4] sm:$0xf] %v1268
        %1452 = vst [vmem:[#allocation3 + $0x2f8] sm:$0xf] %v1278
        %1453 = vst [vmem:[#allocation3 + $0x31c] sm:$0xf] %v1292
        %1454 = vst [vmem:[#allocation3 + $0x340] sm:$0xf] %v1302
        %1455 = vst [vmem:[#allocation3 + $0x364] sm:$0xf] %v1316
        %1456 = vst [vmem:[#allocation3 + $0x388] sm:$0xf] %v1326
        %1457 = vst [vmem:[#allocation3 + $0x3ac] sm:$0xf] %v1340
        %1458 = vst [vmem:[#allocation3 + $0x3d0] sm:$0xf] %v1350
        %1459 = vst [vmem:[#allocation3 + $0x3f4] sm:$0xf] %v1364
        %1460 = vst [vmem:[#allocation3 + $0x418] sm:$0xf] %v1374
        %1461 = vst [vmem:[#allocation3 + $0x43c] sm:$0xf] %v1388
        %1462 = vst [vmem:[#allocation3 + $0x460] sm:$0xf] %v1398
        %v1463 = vld [vmem:[#allocation2] sm:$0xe]
        %v1464 = vld [vmem:[#allocation2 + $0x4] sm:$0xf]
        %v1465 = vld [vmem:[#allocation2 + $0x8] sm:$0x1]
        %v1466 = vld [vmem:[#allocation2 + $0xc] sm:$0xe]
        %v1467 = vld [vmem:[#allocation2 + $0x10] sm:$0xf]
        %v1468 = vld [vmem:[#allocation2 + $0x14] sm:$0x1]
        %v1469 = vld [vmem:[#allocation2 + $0x18] sm:$0xe]
        %v1470 = vld [vmem:[#allocation2 + $0x1c] sm:$0xf]
        %v1471 = vld [vmem:[#allocation2 + $0x20] sm:$0x1]
        %v1472 = vld [vmem:[#allocation2 + $0x24] sm:$0xe]
        %v1473 = vld [vmem:[#allocation2 + $0x28] sm:$0xf]
        %v1474 = vld [vmem:[#allocation2 + $0x2c] sm:$0x1]
        %v1475 = vld [vmem:[#allocation2 + $0x30] sm:$0xe]
        %v1476 = vld [vmem:[#allocation2 + $0x34] sm:$0xf]
        %v1477 = vld [vmem:[#allocation2 + $0x38] sm:$0x1]
        %v1478 = vld [vmem:[#allocation2 + $0x3c] sm:$0xe]
        %v1479 = vld [vmem:[#allocation2 + $0x40] sm:$0xf]
        %v1480 = vld [vmem:[#allocation2 + $0x44] sm:$0x1]
        %v1481 = vld [vmem:[#allocation2 + $0x48] sm:$0xe]
        %v1482 = vld [vmem:[#allocation2 + $0x4c] sm:$0xf]
        %v1483 = vld [vmem:[#allocation2 + $0x50] sm:$0x1]
        %v1484 = vld [vmem:[#allocation2 + $0x54] sm:$0xe]
        %v1485 = vld [vmem:[#allocation2 + $0x58] sm:$0xf]
        %v1486 = vld [vmem:[#allocation2 + $0x5c] sm:$0x1]
        %v1487 = vld [vmem:[#allocation2 + $0x60] sm:$0xe]
        %v1488 = vld [vmem:[#allocation2 + $0x64] sm:$0xf]
        %v1489 = vld [vmem:[#allocation2 + $0x68] sm:$0x1]
        %v1490 = vld [vmem:[#allocation2 + $0x6c] sm:$0xe]
        %v1491 = vld [vmem:[#allocation2 + $0x70] sm:$0xf]
        %v1492 = vld [vmem:[#allocation2 + $0x74] sm:$0x1]
        %v1493 = vld [vmem:[#allocation2 + $0x78] sm:$0xe]
        %v1494 = vld [vmem:[#allocation2 + $0x7c] sm:$0xf]
        %v1495 = vld [vmem:[#allocation2 + $0x80] sm:$0x1]
        %v1496 = vld [vmem:[#allocation2 + $0x84] sm:$0xe]
        %v1497 = vld [vmem:[#allocation2 + $0x88] sm:$0xf]
        %v1498 = vld [vmem:[#allocation2 + $0x8c] sm:$0x1]
        %v1499 = vld [vmem:[#allocation2 + $0x90] sm:$0xe]
        %v1500 = vld [vmem:[#allocation2 + $0x94] sm:$0xf]
        %v1501 = vld [vmem:[#allocation2 + $0x98] sm:$0x1]
        %v1502 = vld [vmem:[#allocation2 + $0x9c] sm:$0xe]
        %v1503 = vld [vmem:[#allocation2 + $0xa0] sm:$0xf]
        %v1504 = vld [vmem:[#allocation2 + $0xa4] sm:$0x1]
        %v1505 = vld [vmem:[#allocation2 + $0xa8] sm:$0xe]
        %v1506 = vld [vmem:[#allocation2 + $0xac] sm:$0xf]
        %v1507 = vld [vmem:[#allocation2 + $0xb0] sm:$0x1]
        %v1508 = vld [vmem:[#allocation2 + $0xb4] sm:$0xe]
        %v1509 = vld [vmem:[#allocation2 + $0xb8] sm:$0xf]
        %v1510 = vld [vmem:[#allocation2 + $0xbc] sm:$0x1]
        %vm1559 = vcmask 1042432
        %vm1560 = vcmask 1046532
        %vm1561 = vmor %vm1559, %vm1560
        %v1562 = vrot.slane %v1463, 5
        %v1563 = vrot.slane %v1562, 4
        %v1564 = vrot.slane %v1464, 5
        %v1565 = vsel %vm1561, %v1563, %v1564
        %v1566 = vrot.slane %v1564, 4
        %v1567 = vrot.slane %v1465, 5
        %v1568 = vsel %vm1561, %v1566, %v1567
        %v1569 = vrot.slane %v1466, 5
        %v1570 = vrot.slane %v1569, 4
        %v1571 = vrot.slane %v1467, 5
        %v1572 = vsel %vm1561, %v1570, %v1571
        %v1573 = vrot.slane %v1571, 4
        %v1574 = vrot.slane %v1468, 5
        %v1575 = vsel %vm1561, %v1573, %v1574
        %v1576 = vrot.slane %v1469, 5
        %v1577 = vrot.slane %v1576, 4
        %v1578 = vrot.slane %v1470, 5
        %v1579 = vsel %vm1561, %v1577, %v1578
        %v1580 = vrot.slane %v1578, 4
        %v1581 = vrot.slane %v1471, 5
        %v1582 = vsel %vm1561, %v1580, %v1581
        %v1583 = vrot.slane %v1472, 5
        %v1584 = vrot.slane %v1583, 4
        %v1585 = vrot.slane %v1473, 5
        %v1586 = vsel %vm1561, %v1584, %v1585
        %v1587 = vrot.slane %v1585, 4
        %v1588 = vrot.slane %v1474, 5
        %v1589 = vsel %vm1561, %v1587, %v1588
        %v1590 = vrot.slane %v1475, 5
        %v1591 = vrot.slane %v1590, 4
        %v1592 = vrot.slane %v1476, 5
        %v1593 = vsel %vm1561, %v1591, %v1592
        %v1594 = vrot.slane %v1592, 4
        %v1595 = vrot.slane %v1477, 5
        %v1596 = vsel %vm1561, %v1594, %v1595
        %v1597 = vrot.slane %v1478, 5
        %v1598 = vrot.slane %v1597, 4
        %v1599 = vrot.slane %v1479, 5
        %v1600 = vsel %vm1561, %v1598, %v1599
        %v1601 = vrot.slane %v1599, 4
        %v1602 = vrot.slane %v1480, 5
        %v1603 = vsel %vm1561, %v1601, %v1602
        %v1604 = vrot.slane %v1481, 5
        %v1605 = vrot.slane %v1604, 4
        %v1606 = vrot.slane %v1482, 5
        %v1607 = vsel %vm1561, %v1605, %v1606
        %v1608 = vrot.slane %v1606, 4
        %v1609 = vrot.slane %v1483, 5
        %v1610 = vsel %vm1561, %v1608, %v1609
        %v1611 = vrot.slane %v1484, 5
        %v1612 = vrot.slane %v1611, 4
        %v1613 = vrot.slane %v1485, 5
        %v1614 = vsel %vm1561, %v1612, %v1613
        %v1615 = vrot.slane %v1613, 4
        %v1616 = vrot.slane %v1486, 5
        %v1617 = vsel %vm1561, %v1615, %v1616
        %v1618 = vrot.slane %v1487, 5
        %v1619 = vrot.slane %v1618, 4
        %v1620 = vrot.slane %v1488, 5
        %v1621 = vsel %vm1561, %v1619, %v1620
        %v1622 = vrot.slane %v1620, 4
        %v1623 = vrot.slane %v1489, 5
        %v1624 = vsel %vm1561, %v1622, %v1623
        %v1625 = vrot.slane %v1490, 5
        %v1626 = vrot.slane %v1625, 4
        %v1627 = vrot.slane %v1491, 5
        %v1628 = vsel %vm1561, %v1626, %v1627
        %v1629 = vrot.slane %v1627, 4
        %v1630 = vrot.slane %v1492, 5
        %v1631 = vsel %vm1561, %v1629, %v1630
        %v1632 = vrot.slane %v1493, 5
        %v1633 = vrot.slane %v1632, 4
        %v1634 = vrot.slane %v1494, 5
        %v1635 = vsel %vm1561, %v1633, %v1634
        %v1636 = vrot.slane %v1634, 4
        %v1637 = vrot.slane %v1495, 5
        %v1638 = vsel %vm1561, %v1636, %v1637
        %v1639 = vrot.slane %v1496, 5
        %v1640 = vrot.slane %v1639, 4
        %v1641 = vrot.slane %v1497, 5
        %v1642 = vsel %vm1561, %v1640, %v1641
        %v1643 = vrot.slane %v1641, 4
        %v1644 = vrot.slane %v1498, 5
        %v1645 = vsel %vm1561, %v1643, %v1644
        %v1646 = vrot.slane %v1499, 5
        %v1647 = vrot.slane %v1646, 4
        %v1648 = vrot.slane %v1500, 5
        %v1649 = vsel %vm1561, %v1647, %v1648
        %v1650 = vrot.slane %v1648, 4
        %v1651 = vrot.slane %v1501, 5
        %v1652 = vsel %vm1561, %v1650, %v1651
        %v1653 = vrot.slane %v1502, 5
        %v1654 = vrot.slane %v1653, 4
        %v1655 = vrot.slane %v1503, 5
        %v1656 = vsel %vm1561, %v1654, %v1655
        %v1657 = vrot.slane %v1655, 4
        %v1658 = vrot.slane %v1504, 5
        %v1659 = vsel %vm1561, %v1657, %v1658
        %v1660 = vrot.slane %v1505, 5
        %v1661 = vrot.slane %v1660, 4
        %v1662 = vrot.slane %v1506, 5
        %v1663 = vsel %vm1561, %v1661, %v1662
        %v1664 = vrot.slane %v1662, 4
        %v1665 = vrot.slane %v1507, 5
        %v1666 = vsel %vm1561, %v1664, %v1665
        %v1667 = vrot.slane %v1508, 5
        %v1668 = vrot.slane %v1667, 4
        %v1669 = vrot.slane %v1509, 5
        %v1670 = vsel %vm1561, %v1668, %v1669
        %v1671 = vrot.slane %v1669, 4
        %v1672 = vrot.slane %v1510, 5
        %v1673 = vsel %vm1561, %v1671, %v1672
        %1706 = vst [vmem:[#allocation3 + $0x8] sm:$0xf] %v1565
        %1707 = vst [vmem:[#allocation3 + $0x2c] sm:$0xf] %v1568
        %1708 = vst [vmem:[#allocation3 + $0x50] sm:$0xf] %v1572
        %1709 = vst [vmem:[#allocation3 + $0x74] sm:$0xf] %v1575
        %1710 = vst [vmem:[#allocation3 + $0x98] sm:$0xf] %v1579
        %1711 = vst [vmem:[#allocation3 + $0xbc] sm:$0xf] %v1582
        %1712 = vst [vmem:[#allocation3 + $0xe0] sm:$0xf] %v1586
        %1713 = vst [vmem:[#allocation3 + $0x104] sm:$0xf] %v1589
        %1714 = vst [vmem:[#allocation3 + $0x128] sm:$0xf] %v1593
        %1715 = vst [vmem:[#allocation3 + $0x14c] sm:$0xf] %v1596
        %1716 = vst [vmem:[#allocation3 + $0x170] sm:$0xf] %v1600
        %1717 = vst [vmem:[#allocation3 + $0x194] sm:$0xf] %v1603
        %1718 = vst [vmem:[#allocation3 + $0x1b8] sm:$0xf] %v1607
        %1719 = vst [vmem:[#allocation3 + $0x1dc] sm:$0xf] %v1610
        %1720 = vst [vmem:[#allocation3 + $0x200] sm:$0xf] %v1614
        %1721 = vst [vmem:[#allocation3 + $0x224] sm:$0xf] %v1617
        %1722 = vst [vmem:[#allocation3 + $0x248] sm:$0xf] %v1621
        %1723 = vst [vmem:[#allocation3 + $0x26c] sm:$0xf] %v1624
        %1724 = vst [vmem:[#allocation3 + $0x290] sm:$0xf] %v1628
        %1725 = vst [vmem:[#allocation3 + $0x2b4] sm:$0xf] %v1631
        %1726 = vst [vmem:[#allocation3 + $0x2d8] sm:$0xf] %v1635
        %1727 = vst [vmem:[#allocation3 + $0x2fc] sm:$0xf] %v1638
        %1728 = vst [vmem:[#allocation3 + $0x320] sm:$0xf] %v1642
        %1729 = vst [vmem:[#allocation3 + $0x344] sm:$0xf] %v1645
        %1730 = vst [vmem:[#allocation3 + $0x368] sm:$0xf] %v1649
        %1731 = vst [vmem:[#allocation3 + $0x38c] sm:$0xf] %v1652
        %1732 = vst [vmem:[#allocation3 + $0x3b0] sm:$0xf] %v1656
        %1733 = vst [vmem:[#allocation3 + $0x3d4] sm:$0xf] %v1659
        %1734 = vst [vmem:[#allocation3 + $0x3f8] sm:$0xf] %v1663
        %1735 = vst [vmem:[#allocation3 + $0x41c] sm:$0xf] %v1666
        %1736 = vst [vmem:[#allocation3 + $0x440] sm:$0xf] %v1670
        %1737 = vst [vmem:[#allocation3 + $0x464] sm:$0xf] %v1673
        %v1738 = vld [vmem:[%s785] sm:$0xf]
        %v1739 = vld [vmem:[%s785 + $0x4] sm:$0xf]
        %v1740 = vld [vmem:[%s785 + $0xc] sm:$0xf]
        %v1741 = vld [vmem:[%s785 + $0x10] sm:$0xf]
        %v1742 = vld [vmem:[%s785 + $0x18] sm:$0xf]
        %v1743 = vld [vmem:[%s785 + $0x1c] sm:$0xf]
        %v1744 = vld [vmem:[%s785 + $0x24] sm:$0xf]
        %v1745 = vld [vmem:[%s785 + $0x28] sm:$0xf]
        %v1746 = vld [vmem:[%s785 + $0x30] sm:$0xf]
        %v1747 = vld [vmem:[%s785 + $0x34] sm:$0xf]
        %v1748 = vld [vmem:[%s785 + $0x3c] sm:$0xf]
        %v1749 = vld [vmem:[%s785 + $0x40] sm:$0xf]
        %v1750 = vld [vmem:[%s785 + $0x48] sm:$0xf]
        %v1751 = vld [vmem:[%s785 + $0x4c] sm:$0xf]
        %v1752 = vld [vmem:[%s785 + $0x54] sm:$0xf]
        %v1753 = vld [vmem:[%s785 + $0x58] sm:$0xf]
        %v1754 = vld [vmem:[%s785 + $0x60] sm:$0xf]
        %v1755 = vld [vmem:[%s785 + $0x64] sm:$0xf]
        %v1756 = vld [vmem:[%s785 + $0x6c] sm:$0xf]
        %v1757 = vld [vmem:[%s785 + $0x70] sm:$0xf]
        %v1758 = vld [vmem:[%s785 + $0x78] sm:$0xf]
        %v1759 = vld [vmem:[%s785 + $0x7c] sm:$0xf]
        %v1760 = vld [vmem:[%s785 + $0x84] sm:$0xf]
        %v1761 = vld [vmem:[%s785 + $0x88] sm:$0xf]
        %v1762 = vld [vmem:[%s785 + $0x90] sm:$0xf]
        %v1763 = vld [vmem:[%s785 + $0x94] sm:$0xf]
        %v1764 = vld [vmem:[%s785 + $0x9c] sm:$0xf]
        %v1765 = vld [vmem:[%s785 + $0xa0] sm:$0xf]
        %v1766 = vld [vmem:[%s785 + $0xa8] sm:$0xf]
        %v1767 = vld [vmem:[%s785 + $0xac] sm:$0xf]
        %v1768 = vld [vmem:[%s785 + $0xb4] sm:$0xf]
        %v1769 = vld [vmem:[%s785 + $0xb8] sm:$0xf]
        %1770 = vst [vmem:[#allocation3 + $0xc] sm:$0xf] %v1738
        %1771 = vst [vmem:[#allocation3 + $0x30] sm:$0xf] %v1739
        %1772 = vst [vmem:[#allocation3 + $0x54] sm:$0xf] %v1740
        %1773 = vst [vmem:[#allocation3 + $0x78] sm:$0xf] %v1741
        %1774 = vst [vmem:[#allocation3 + $0x9c] sm:$0xf] %v1742
        %1775 = vst [vmem:[#allocation3 + $0xc0] sm:$0xf] %v1743
        %1776 = vst [vmem:[#allocation3 + $0xe4] sm:$0xf] %v1744
        %1777 = vst [vmem:[#allocation3 + $0x108] sm:$0xf] %v1745
        %1778 = vst [vmem:[#allocation3 + $0x12c] sm:$0xf] %v1746
        %1779 = vst [vmem:[#allocation3 + $0x150] sm:$0xf] %v1747
        %1780 = vst [vmem:[#allocation3 + $0x174] sm:$0xf] %v1748
        %1781 = vst [vmem:[#allocation3 + $0x198] sm:$0xf] %v1749
        %1782 = vst [vmem:[#allocation3 + $0x1bc] sm:$0xf] %v1750
        %1783 = vst [vmem:[#allocation3 + $0x1e0] sm:$0xf] %v1751
        %1784 = vst [vmem:[#allocation3 + $0x204] sm:$0xf] %v1752
        %1785 = vst [vmem:[#allocation3 + $0x228] sm:$0xf] %v1753
        %1786 = vst [vmem:[#allocation3 + $0x24c] sm:$0xf] %v1754
        %1787 = vst [vmem:[#allocation3 + $0x270] sm:$0xf] %v1755
        %1788 = vst [vmem:[#allocation3 + $0x294] sm:$0xf] %v1756
        %1789 = vst [vmem:[#allocation3 + $0x2b8] sm:$0xf] %v1757
        %1790 = vst [vmem:[#allocation3 + $0x2dc] sm:$0xf] %v1758
        %1791 = vst [vmem:[#allocation3 + $0x300] sm:$0xf] %v1759
        %1792 = vst [vmem:[#allocation3 + $0x324] sm:$0xf] %v1760
        %1793 = vst [vmem:[#allocation3 + $0x348] sm:$0xf] %v1761
        %1794 = vst [vmem:[#allocation3 + $0x36c] sm:$0xf] %v1762
        %1795 = vst [vmem:[#allocation3 + $0x390] sm:$0xf] %v1763
        %1796 = vst [vmem:[#allocation3 + $0x3b4] sm:$0xf] %v1764
        %1797 = vst [vmem:[#allocation3 + $0x3d8] sm:$0xf] %v1765
        %1798 = vst [vmem:[#allocation3 + $0x3fc] sm:$0xf] %v1766
        %1799 = vst [vmem:[#allocation3 + $0x420] sm:$0xf] %v1767
        %1800 = vst [vmem:[#allocation3 + $0x444] sm:$0xf] %v1768
        %1801 = vst [vmem:[#allocation3 + $0x468] sm:$0xf] %v1769
        %v1802 = vld [vmem:[%s785] sm:$0xf]
        %v1803 = vld [vmem:[%s785 + $0x4] sm:$0xf]
        %v1804 = vld [vmem:[%s785 + $0x8] sm:$0x1]
        %v1805 = vld [vmem:[%s785 + $0xc] sm:$0xf]
        %v1806 = vld [vmem:[%s785 + $0x10] sm:$0xf]
        %v1807 = vld [vmem:[%s785 + $0x14] sm:$0x1]
        %v1808 = vld [vmem:[%s785 + $0x18] sm:$0xf]
        %v1809 = vld [vmem:[%s785 + $0x1c] sm:$0xf]
        %v1810 = vld [vmem:[%s785 + $0x20] sm:$0x1]
        %v1811 = vld [vmem:[%s785 + $0x24] sm:$0xf]
        %v1812 = vld [vmem:[%s785 + $0x28] sm:$0xf]
        %v1813 = vld [vmem:[%s785 + $0x2c] sm:$0x1]
        %v1814 = vld [vmem:[%s785 + $0x30] sm:$0xf]
        %v1815 = vld [vmem:[%s785 + $0x34] sm:$0xf]
        %v1816 = vld [vmem:[%s785 + $0x38] sm:$0x1]
        %v1817 = vld [vmem:[%s785 + $0x3c] sm:$0xf]
        %v1818 = vld [vmem:[%s785 + $0x40] sm:$0xf]
        %v1819 = vld [vmem:[%s785 + $0x44] sm:$0x1]
        %v1820 = vld [vmem:[%s785 + $0x48] sm:$0xf]
        %v1821 = vld [vmem:[%s785 + $0x4c] sm:$0xf]
        %v1822 = vld [vmem:[%s785 + $0x50] sm:$0x1]
        %v1823 = vld [vmem:[%s785 + $0x54] sm:$0xf]
        %v1824 = vld [vmem:[%s785 + $0x58] sm:$0xf]
        %v1825 = vld [vmem:[%s785 + $0x5c] sm:$0x1]
        %v1826 = vld [vmem:[%s785 + $0x60] sm:$0xf]
        %v1827 = vld [vmem:[%s785 + $0x64] sm:$0xf]
        %v1828 = vld [vmem:[%s785 + $0x68] sm:$0x1]
        %v1829 = vld [vmem:[%s785 + $0x6c] sm:$0xf]
        %v1830 = vld [vmem:[%s785 + $0x70] sm:$0xf]
        %v1831 = vld [vmem:[%s785 + $0x74] sm:$0x1]
        %v1832 = vld [vmem:[%s785 + $0x78] sm:$0xf]
        %v1833 = vld [vmem:[%s785 + $0x7c] sm:$0xf]
        %v1834 = vld [vmem:[%s785 + $0x80] sm:$0x1]
        %v1835 = vld [vmem:[%s785 + $0x84] sm:$0xf]
        %v1836 = vld [vmem:[%s785 + $0x88] sm:$0xf]
        %v1837 = vld [vmem:[%s785 + $0x8c] sm:$0x1]
        %v1838 = vld [vmem:[%s785 + $0x90] sm:$0xf]
        %v1839 = vld [vmem:[%s785 + $0x94] sm:$0xf]
        %v1840 = vld [vmem:[%s785 + $0x98] sm:$0x1]
        %v1841 = vld [vmem:[%s785 + $0x9c] sm:$0xf]
        %v1842 = vld [vmem:[%s785 + $0xa0] sm:$0xf]
        %v1843 = vld [vmem:[%s785 + $0xa4] sm:$0x1]
        %v1844 = vld [vmem:[%s785 + $0xa8] sm:$0xf]
        %v1845 = vld [vmem:[%s785 + $0xac] sm:$0xf]
        %v1846 = vld [vmem:[%s785 + $0xb0] sm:$0x1]
        %v1847 = vld [vmem:[%s785 + $0xb4] sm:$0xf]
        %v1848 = vld [vmem:[%s785 + $0xb8] sm:$0xf]
        %v1849 = vld [vmem:[%s785 + $0xbc] sm:$0x1]
        %v1851 = vshrl.u32 %v1802, 16
        %v1853 = vrot.slane %v1851, 4
        %v1854 = vshll.u32 %v1802, 16
        %v1856 = vrot.slane %v1854, 5
        %v1857 = vor.u32 %v1853, %v1856
        %v1858 = vrot.slane %v1857, 4
        %v1860 = vshll.u32 %v1803, 16
        %v1862 = vrot.slane %v1860, 5
        %v1863 = vsel %vm1014, %v1858, %v1862
        %v1864 = vshrl.u32 %v1803, 16
        %v1866 = vrot.slane %v1864, 4
        %v1867 = vor.u32 %v1866, %v1862
        %v1868 = vrot.slane %v1867, 4
        %v1870 = vshll.u32 %v1804, 16
        %v1872 = vrot.slane %v1870, 5
        %v1873 = vsel %vm1014, %v1868, %v1872
        %v1875 = vshrl.u32 %v1805, 16
        %v1877 = vrot.slane %v1875, 4
        %v1878 = vshll.u32 %v1805, 16
        %v1880 = vrot.slane %v1878, 5
        %v1881 = vor.u32 %v1877, %v1880
        %v1882 = vrot.slane %v1881, 4
        %v1884 = vshll.u32 %v1806, 16
        %v1886 = vrot.slane %v1884, 5
        %v1887 = vsel %vm1014, %v1882, %v1886
        %v1888 = vshrl.u32 %v1806, 16
        %v1890 = vrot.slane %v1888, 4
        %v1891 = vor.u32 %v1890, %v1886
        %v1892 = vrot.slane %v1891, 4
        %v1894 = vshll.u32 %v1807, 16
        %v1896 = vrot.slane %v1894, 5
        %v1897 = vsel %vm1014, %v1892, %v1896
        %v1899 = vshrl.u32 %v1808, 16
        %v1901 = vrot.slane %v1899, 4
        %v1902 = vshll.u32 %v1808, 16
        %v1904 = vrot.slane %v1902, 5
        %v1905 = vor.u32 %v1901, %v1904
        %v1906 = vrot.slane %v1905, 4
        %v1908 = vshll.u32 %v1809, 16
        %v1910 = vrot.slane %v1908, 5
        %v1911 = vsel %vm1014, %v1906, %v1910
        %v1912 = vshrl.u32 %v1809, 16
        %v1914 = vrot.slane %v1912, 4
        %v1915 = vor.u32 %v1914, %v1910
        %v1916 = vrot.slane %v1915, 4
        %v1918 = vshll.u32 %v1810, 16
        %v1920 = vrot.slane %v1918, 5
        %v1921 = vsel %vm1014, %v1916, %v1920
        %v1923 = vshrl.u32 %v1811, 16
        %v1925 = vrot.slane %v1923, 4
        %v1926 = vshll.u32 %v1811, 16
        %v1928 = vrot.slane %v1926, 5
        %v1929 = vor.u32 %v1925, %v1928
        %v1930 = vrot.slane %v1929, 4
        %v1932 = vshll.u32 %v1812, 16
        %v1934 = vrot.slane %v1932, 5
        %v1935 = vsel %vm1014, %v1930, %v1934
        %v1936 = vshrl.u32 %v1812, 16
        %v1938 = vrot.slane %v1936, 4
        %v1939 = vor.u32 %v1938, %v1934
        %v1940 = vrot.slane %v1939, 4
        %v1942 = vshll.u32 %v1813, 16
        %v1944 = vrot.slane %v1942, 5
        %v1945 = vsel %vm1014, %v1940, %v1944
        %v1947 = vshrl.u32 %v1814, 16
        %v1949 = vrot.slane %v1947, 4
        %v1950 = vshll.u32 %v1814, 16
        %v1952 = vrot.slane %v1950, 5
        %v1953 = vor.u32 %v1949, %v1952
        %v1954 = vrot.slane %v1953, 4
        %v1956 = vshll.u32 %v1815, 16
        %v1958 = vrot.slane %v1956, 5
        %v1959 = vsel %vm1014, %v1954, %v1958
        %v1960 = vshrl.u32 %v1815, 16
        %v1962 = vrot.slane %v1960, 4
        %v1963 = vor.u32 %v1962, %v1958
        %v1964 = vrot.slane %v1963, 4
        %v1966 = vshll.u32 %v1816, 16
        %v1968 = vrot.slane %v1966, 5
        %v1969 = vsel %vm1014, %v1964, %v1968
        %v1971 = vshrl.u32 %v1817, 16
        %v1973 = vrot.slane %v1971, 4
        %v1974 = vshll.u32 %v1817, 16
        %v1976 = vrot.slane %v1974, 5
        %v1977 = vor.u32 %v1973, %v1976
        %v1978 = vrot.slane %v1977, 4
        %v1980 = vshll.u32 %v1818, 16
        %v1982 = vrot.slane %v1980, 5
        %v1983 = vsel %vm1014, %v1978, %v1982
        %v1984 = vshrl.u32 %v1818, 16
        %v1986 = vrot.slane %v1984, 4
        %v1987 = vor.u32 %v1986, %v1982
        %v1988 = vrot.slane %v1987, 4
        %v1990 = vshll.u32 %v1819, 16
        %v1992 = vrot.slane %v1990, 5
        %v1993 = vsel %vm1014, %v1988, %v1992
        %v1995 = vshrl.u32 %v1820, 16
        %v1997 = vrot.slane %v1995, 4
        %v1998 = vshll.u32 %v1820, 16
        %v2000 = vrot.slane %v1998, 5
        %v2001 = vor.u32 %v1997, %v2000
        %v2002 = vrot.slane %v2001, 4
        %v2004 = vshll.u32 %v1821, 16
        %v2006 = vrot.slane %v2004, 5
        %v2007 = vsel %vm1014, %v2002, %v2006
        %v2008 = vshrl.u32 %v1821, 16
        %v2010 = vrot.slane %v2008, 4
        %v2011 = vor.u32 %v2010, %v2006
        %v2012 = vrot.slane %v2011, 4
        %v2014 = vshll.u32 %v1822, 16
        %v2016 = vrot.slane %v2014, 5
        %v2017 = vsel %vm1014, %v2012, %v2016
        %v2019 = vshrl.u32 %v1823, 16
        %v2021 = vrot.slane %v2019, 4
        %v2022 = vshll.u32 %v1823, 16
        %v2024 = vrot.slane %v2022, 5
        %v2025 = vor.u32 %v2021, %v2024
        %v2026 = vrot.slane %v2025, 4
        %v2028 = vshll.u32 %v1824, 16
        %v2030 = vrot.slane %v2028, 5
        %v2031 = vsel %vm1014, %v2026, %v2030
        %v2032 = vshrl.u32 %v1824, 16
        %v2034 = vrot.slane %v2032, 4
        %v2035 = vor.u32 %v2034, %v2030
        %v2036 = vrot.slane %v2035, 4
        %v2038 = vshll.u32 %v1825, 16
        %v2040 = vrot.slane %v2038, 5
        %v2041 = vsel %vm1014, %v2036, %v2040
        %v2043 = vshrl.u32 %v1826, 16
        %v2045 = vrot.slane %v2043, 4
        %v2046 = vshll.u32 %v1826, 16
        %v2048 = vrot.slane %v2046, 5
        %v2049 = vor.u32 %v2045, %v2048
        %v2050 = vrot.slane %v2049, 4
        %v2052 = vshll.u32 %v1827, 16
        %v2054 = vrot.slane %v2052, 5
        %v2055 = vsel %vm1014, %v2050, %v2054
        %v2056 = vshrl.u32 %v1827, 16
        %v2058 = vrot.slane %v2056, 4
        %v2059 = vor.u32 %v2058, %v2054
        %v2060 = vrot.slane %v2059, 4
        %v2062 = vshll.u32 %v1828, 16
        %v2064 = vrot.slane %v2062, 5
        %v2065 = vsel %vm1014, %v2060, %v2064
        %v2067 = vshrl.u32 %v1829, 16
        %v2069 = vrot.slane %v2067, 4
        %v2070 = vshll.u32 %v1829, 16
        %v2072 = vrot.slane %v2070, 5
        %v2073 = vor.u32 %v2069, %v2072
        %v2074 = vrot.slane %v2073, 4
        %v2076 = vshll.u32 %v1830, 16
        %v2078 = vrot.slane %v2076, 5
        %v2079 = vsel %vm1014, %v2074, %v2078
        %v2080 = vshrl.u32 %v1830, 16
        %v2082 = vrot.slane %v2080, 4
        %v2083 = vor.u32 %v2082, %v2078
        %v2084 = vrot.slane %v2083, 4
        %v2086 = vshll.u32 %v1831, 16
        %v2088 = vrot.slane %v2086, 5
        %v2089 = vsel %vm1014, %v2084, %v2088
        %v2091 = vshrl.u32 %v1832, 16
        %v2093 = vrot.slane %v2091, 4
        %v2094 = vshll.u32 %v1832, 16
        %v2096 = vrot.slane %v2094, 5
        %v2097 = vor.u32 %v2093, %v2096
        %v2098 = vrot.slane %v2097, 4
        %v2100 = vshll.u32 %v1833, 16
        %v2102 = vrot.slane %v2100, 5
        %v2103 = vsel %vm1014, %v2098, %v2102
        %v2104 = vshrl.u32 %v1833, 16
        %v2106 = vrot.slane %v2104, 4
        %v2107 = vor.u32 %v2106, %v2102
        %v2108 = vrot.slane %v2107, 4
        %v2110 = vshll.u32 %v1834, 16
        %v2112 = vrot.slane %v2110, 5
        %v2113 = vsel %vm1014, %v2108, %v2112
        %v2115 = vshrl.u32 %v1835, 16
        %v2117 = vrot.slane %v2115, 4
        %v2118 = vshll.u32 %v1835, 16
        %v2120 = vrot.slane %v2118, 5
        %v2121 = vor.u32 %v2117, %v2120
        %v2122 = vrot.slane %v2121, 4
        %v2124 = vshll.u32 %v1836, 16
        %v2126 = vrot.slane %v2124, 5
        %v2127 = vsel %vm1014, %v2122, %v2126
        %v2128 = vshrl.u32 %v1836, 16
        %v2130 = vrot.slane %v2128, 4
        %v2131 = vor.u32 %v2130, %v2126
        %v2132 = vrot.slane %v2131, 4
        %v2134 = vshll.u32 %v1837, 16
        %v2136 = vrot.slane %v2134, 5
        %v2137 = vsel %vm1014, %v2132, %v2136
        %v2139 = vshrl.u32 %v1838, 16
        %v2141 = vrot.slane %v2139, 4
        %v2142 = vshll.u32 %v1838, 16
        %v2144 = vrot.slane %v2142, 5
        %v2145 = vor.u32 %v2141, %v2144
        %v2146 = vrot.slane %v2145, 4
        %v2148 = vshll.u32 %v1839, 16
        %v2150 = vrot.slane %v2148, 5
        %v2151 = vsel %vm1014, %v2146, %v2150
        %v2152 = vshrl.u32 %v1839, 16
        %v2154 = vrot.slane %v2152, 4
        %v2155 = vor.u32 %v2154, %v2150
        %v2156 = vrot.slane %v2155, 4
        %v2158 = vshll.u32 %v1840, 16
        %v2160 = vrot.slane %v2158, 5
        %v2161 = vsel %vm1014, %v2156, %v2160
        %v2163 = vshrl.u32 %v1841, 16
        %v2165 = vrot.slane %v2163, 4
        %v2166 = vshll.u32 %v1841, 16
        %v2168 = vrot.slane %v2166, 5
        %v2169 = vor.u32 %v2165, %v2168
        %v2170 = vrot.slane %v2169, 4
        %v2172 = vshll.u32 %v1842, 16
        %v2174 = vrot.slane %v2172, 5
        %v2175 = vsel %vm1014, %v2170, %v2174
        %v2176 = vshrl.u32 %v1842, 16
        %v2178 = vrot.slane %v2176, 4
        %v2179 = vor.u32 %v2178, %v2174
        %v2180 = vrot.slane %v2179, 4
        %v2182 = vshll.u32 %v1843, 16
        %v2184 = vrot.slane %v2182, 5
        %v2185 = vsel %vm1014, %v2180, %v2184
        %v2187 = vshrl.u32 %v1844, 16
        %v2189 = vrot.slane %v2187, 4
        %v2190 = vshll.u32 %v1844, 16
        %v2192 = vrot.slane %v2190, 5
        %v2193 = vor.u32 %v2189, %v2192
        %v2194 = vrot.slane %v2193, 4
        %v2196 = vshll.u32 %v1845, 16
        %v2198 = vrot.slane %v2196, 5
        %v2199 = vsel %vm1014, %v2194, %v2198
        %v2200 = vshrl.u32 %v1845, 16
        %v2202 = vrot.slane %v2200, 4
        %v2203 = vor.u32 %v2202, %v2198
        %v2204 = vrot.slane %v2203, 4
        %v2206 = vshll.u32 %v1846, 16
        %v2208 = vrot.slane %v2206, 5
        %v2209 = vsel %vm1014, %v2204, %v2208
        %v2211 = vshrl.u32 %v1847, 16
        %v2213 = vrot.slane %v2211, 4
        %v2214 = vshll.u32 %v1847, 16
        %v2216 = vrot.slane %v2214, 5
        %v2217 = vor.u32 %v2213, %v2216
        %v2218 = vrot.slane %v2217, 4
        %v2220 = vshll.u32 %v1848, 16
        %v2222 = vrot.slane %v2220, 5
        %v2223 = vsel %vm1014, %v2218, %v2222
        %v2224 = vshrl.u32 %v1848, 16
        %v2226 = vrot.slane %v2224, 4
        %v2227 = vor.u32 %v2226, %v2222
        %v2228 = vrot.slane %v2227, 4
        %v2230 = vshll.u32 %v1849, 16
        %v2232 = vrot.slane %v2230, 5
        %v2233 = vsel %vm1014, %v2228, %v2232
        %2266 = vst [vmem:[#allocation3 + $0x10] sm:$0xf] %v1863
        %2267 = vst [vmem:[#allocation3 + $0x34] sm:$0xf] %v1873
        %2268 = vst [vmem:[#allocation3 + $0x58] sm:$0xf] %v1887
        %2269 = vst [vmem:[#allocation3 + $0x7c] sm:$0xf] %v1897
        %2270 = vst [vmem:[#allocation3 + $0xa0] sm:$0xf] %v1911
        %2271 = vst [vmem:[#allocation3 + $0xc4] sm:$0xf] %v1921
        %2272 = vst [vmem:[#allocation3 + $0xe8] sm:$0xf] %v1935
        %2273 = vst [vmem:[#allocation3 + $0x10c] sm:$0xf] %v1945
        %2274 = vst [vmem:[#allocation3 + $0x130] sm:$0xf] %v1959
        %2275 = vst [vmem:[#allocation3 + $0x154] sm:$0xf] %v1969
        %2276 = vst [vmem:[#allocation3 + $0x178] sm:$0xf] %v1983
        %2277 = vst [vmem:[#allocation3 + $0x19c] sm:$0xf] %v1993
        %2278 = vst [vmem:[#allocation3 + $0x1c0] sm:$0xf] %v2007
        %2279 = vst [vmem:[#allocation3 + $0x1e4] sm:$0xf] %v2017
        %2280 = vst [vmem:[#allocation3 + $0x208] sm:$0xf] %v2031
        %2281 = vst [vmem:[#allocation3 + $0x22c] sm:$0xf] %v2041
        %2282 = vst [vmem:[#allocation3 + $0x250] sm:$0xf] %v2055
        %2283 = vst [vmem:[#allocation3 + $0x274] sm:$0xf] %v2065
        %2284 = vst [vmem:[#allocation3 + $0x298] sm:$0xf] %v2079
        %2285 = vst [vmem:[#allocation3 + $0x2bc] sm:$0xf] %v2089
        %2286 = vst [vmem:[#allocation3 + $0x2e0] sm:$0xf] %v2103
        %2287 = vst [vmem:[#allocation3 + $0x304] sm:$0xf] %v2113
        %2288 = vst [vmem:[#allocation3 + $0x328] sm:$0xf] %v2127
        %2289 = vst [vmem:[#allocation3 + $0x34c] sm:$0xf] %v2137
        %2290 = vst [vmem:[#allocation3 + $0x370] sm:$0xf] %v2151
        %2291 = vst [vmem:[#allocation3 + $0x394] sm:$0xf] %v2161
        %2292 = vst [vmem:[#allocation3 + $0x3b8] sm:$0xf] %v2175
        %2293 = vst [vmem:[#allocation3 + $0x3dc] sm:$0xf] %v2185
        %2294 = vst [vmem:[#allocation3 + $0x400] sm:$0xf] %v2199
        %2295 = vst [vmem:[#allocation3 + $0x424] sm:$0xf] %v2209
        %2296 = vst [vmem:[#allocation3 + $0x448] sm:$0xf] %v2223
        %2297 = vst [vmem:[#allocation3 + $0x46c] sm:$0xf] %v2233
        %v2298 = vld [vmem:[%s785] sm:$0xe]
        %v2299 = vld [vmem:[%s785 + $0x4] sm:$0xf]
        %v2300 = vld [vmem:[%s785 + $0x8] sm:$0x1]
        %v2301 = vld [vmem:[%s785 + $0xc] sm:$0xe]
        %v2302 = vld [vmem:[%s785 + $0x10] sm:$0xf]
        %v2303 = vld [vmem:[%s785 + $0x14] sm:$0x1]
        %v2304 = vld [vmem:[%s785 + $0x18] sm:$0xe]
        %v2305 = vld [vmem:[%s785 + $0x1c] sm:$0xf]
        %v2306 = vld [vmem:[%s785 + $0x20] sm:$0x1]
        %v2307 = vld [vmem:[%s785 + $0x24] sm:$0xe]
        %v2308 = vld [vmem:[%s785 + $0x28] sm:$0xf]
        %v2309 = vld [vmem:[%s785 + $0x2c] sm:$0x1]
        %v2310 = vld [vmem:[%s785 + $0x30] sm:$0xe]
        %v2311 = vld [vmem:[%s785 + $0x34] sm:$0xf]
        %v2312 = vld [vmem:[%s785 + $0x38] sm:$0x1]
        %v2313 = vld [vmem:[%s785 + $0x3c] sm:$0xe]
        %v2314 = vld [vmem:[%s785 + $0x40] sm:$0xf]
        %v2315 = vld [vmem:[%s785 + $0x44] sm:$0x1]
        %v2316 = vld [vmem:[%s785 + $0x48] sm:$0xe]
        %v2317 = vld [vmem:[%s785 + $0x4c] sm:$0xf]
        %v2318 = vld [vmem:[%s785 + $0x50] sm:$0x1]
        %v2319 = vld [vmem:[%s785 + $0x54] sm:$0xe]
        %v2320 = vld [vmem:[%s785 + $0x58] sm:$0xf]
        %v2321 = vld [vmem:[%s785 + $0x5c] sm:$0x1]
        %v2322 = vld [vmem:[%s785 + $0x60] sm:$0xe]
        %v2323 = vld [vmem:[%s785 + $0x64] sm:$0xf]
        %v2324 = vld [vmem:[%s785 + $0x68] sm:$0x1]
        %v2325 = vld [vmem:[%s785 + $0x6c] sm:$0xe]
        %v2326 = vld [vmem:[%s785 + $0x70] sm:$0xf]
        %v2327 = vld [vmem:[%s785 + $0x74] sm:$0x1]
        %v2328 = vld [vmem:[%s785 + $0x78] sm:$0xe]
        %v2329 = vld [vmem:[%s785 + $0x7c] sm:$0xf]
        %v2330 = vld [vmem:[%s785 + $0x80] sm:$0x1]
        %v2331 = vld [vmem:[%s785 + $0x84] sm:$0xe]
        %v2332 = vld [vmem:[%s785 + $0x88] sm:$0xf]
        %v2333 = vld [vmem:[%s785 + $0x8c] sm:$0x1]
        %v2334 = vld [vmem:[%s785 + $0x90] sm:$0xe]
        %v2335 = vld [vmem:[%s785 + $0x94] sm:$0xf]
        %v2336 = vld [vmem:[%s785 + $0x98] sm:$0x1]
        %v2337 = vld [vmem:[%s785 + $0x9c] sm:$0xe]
        %v2338 = vld [vmem:[%s785 + $0xa0] sm:$0xf]
        %v2339 = vld [vmem:[%s785 + $0xa4] sm:$0x1]
        %v2340 = vld [vmem:[%s785 + $0xa8] sm:$0xe]
        %v2341 = vld [vmem:[%s785 + $0xac] sm:$0xf]
        %v2342 = vld [vmem:[%s785 + $0xb0] sm:$0x1]
        %v2343 = vld [vmem:[%s785 + $0xb4] sm:$0xe]
        %v2344 = vld [vmem:[%s785 + $0xb8] sm:$0xf]
        %v2345 = vld [vmem:[%s785 + $0xbc] sm:$0x1]
        %v2394 = vrot.slane %v2298, 5
        %v2395 = vrot.slane %v2394, 4
        %v2396 = vrot.slane %v2299, 5
        %v2397 = vsel %vm1561, %v2395, %v2396
        %v2398 = vrot.slane %v2396, 4
        %v2399 = vrot.slane %v2300, 5
        %v2400 = vsel %vm1561, %v2398, %v2399
        %v2401 = vrot.slane %v2301, 5
        %v2402 = vrot.slane %v2401, 4
        %v2403 = vrot.slane %v2302, 5
        %v2404 = vsel %vm1561, %v2402, %v2403
        %v2405 = vrot.slane %v2403, 4
        %v2406 = vrot.slane %v2303, 5
        %v2407 = vsel %vm1561, %v2405, %v2406
        %v2408 = vrot.slane %v2304, 5
        %v2409 = vrot.slane %v2408, 4
        %v2410 = vrot.slane %v2305, 5
        %v2411 = vsel %vm1561, %v2409, %v2410
        %v2412 = vrot.slane %v2410, 4
        %v2413 = vrot.slane %v2306, 5
        %v2414 = vsel %vm1561, %v2412, %v2413
        %v2415 = vrot.slane %v2307, 5
        %v2416 = vrot.slane %v2415, 4
        %v2417 = vrot.slane %v2308, 5
        %v2418 = vsel %vm1561, %v2416, %v2417
        %v2419 = vrot.slane %v2417, 4
        %v2420 = vrot.slane %v2309, 5
        %v2421 = vsel %vm1561, %v2419, %v2420
        %v2422 = vrot.slane %v2310, 5
        %v2423 = vrot.slane %v2422, 4
        %v2424 = vrot.slane %v2311, 5
        %v2425 = vsel %vm1561, %v2423, %v2424
        %v2426 = vrot.slane %v2424, 4
        %v2427 = vrot.slane %v2312, 5
        %v2428 = vsel %vm1561, %v2426, %v2427
        %v2429 = vrot.slane %v2313, 5
        %v2430 = vrot.slane %v2429, 4
        %v2431 = vrot.slane %v2314, 5
        %v2432 = vsel %vm1561, %v2430, %v2431
        %v2433 = vrot.slane %v2431, 4
        %v2434 = vrot.slane %v2315, 5
        %v2435 = vsel %vm1561, %v2433, %v2434
        %v2436 = vrot.slane %v2316, 5
        %v2437 = vrot.slane %v2436, 4
        %v2438 = vrot.slane %v2317, 5
        %v2439 = vsel %vm1561, %v2437, %v2438
        %v2440 = vrot.slane %v2438, 4
        %v2441 = vrot.slane %v2318, 5
        %v2442 = vsel %vm1561, %v2440, %v2441
        %v2443 = vrot.slane %v2319, 5
        %v2444 = vrot.slane %v2443, 4
        %v2445 = vrot.slane %v2320, 5
        %v2446 = vsel %vm1561, %v2444, %v2445
        %v2447 = vrot.slane %v2445, 4
        %v2448 = vrot.slane %v2321, 5
        %v2449 = vsel %vm1561, %v2447, %v2448
        %v2450 = vrot.slane %v2322, 5
        %v2451 = vrot.slane %v2450, 4
        %v2452 = vrot.slane %v2323, 5
        %v2453 = vsel %vm1561, %v2451, %v2452
        %v2454 = vrot.slane %v2452, 4
        %v2455 = vrot.slane %v2324, 5
        %v2456 = vsel %vm1561, %v2454, %v2455
        %v2457 = vrot.slane %v2325, 5
        %v2458 = vrot.slane %v2457, 4
        %v2459 = vrot.slane %v2326, 5
        %v2460 = vsel %vm1561, %v2458, %v2459
        %v2461 = vrot.slane %v2459, 4
        %v2462 = vrot.slane %v2327, 5
        %v2463 = vsel %vm1561, %v2461, %v2462
        %v2464 = vrot.slane %v2328, 5
        %v2465 = vrot.slane %v2464, 4
        %v2466 = vrot.slane %v2329, 5
        %v2467 = vsel %vm1561, %v2465, %v2466
        %v2468 = vrot.slane %v2466, 4
        %v2469 = vrot.slane %v2330, 5
        %v2470 = vsel %vm1561, %v2468, %v2469
        %v2471 = vrot.slane %v2331, 5
        %v2472 = vrot.slane %v2471, 4
        %v2473 = vrot.slane %v2332, 5
        %v2474 = vsel %vm1561, %v2472, %v2473
        %v2475 = vrot.slane %v2473, 4
        %v2476 = vrot.slane %v2333, 5
        %v2477 = vsel %vm1561, %v2475, %v2476
        %v2478 = vrot.slane %v2334, 5
        %v2479 = vrot.slane %v2478, 4
        %v2480 = vrot.slane %v2335, 5
        %v2481 = vsel %vm1561, %v2479, %v2480
        %v2482 = vrot.slane %v2480, 4
        %v2483 = vrot.slane %v2336, 5
        %v2484 = vsel %vm1561, %v2482, %v2483
        %v2485 = vrot.slane %v2337, 5
        %v2486 = vrot.slane %v2485, 4
        %v2487 = vrot.slane %v2338, 5
        %v2488 = vsel %vm1561, %v2486, %v2487
        %v2489 = vrot.slane %v2487, 4
        %v2490 = vrot.slane %v2339, 5
        %v2491 = vsel %vm1561, %v2489, %v2490
        %v2492 = vrot.slane %v2340, 5
        %v2493 = vrot.slane %v2492, 4
        %v2494 = vrot.slane %v2341, 5
        %v2495 = vsel %vm1561, %v2493, %v2494
        %v2496 = vrot.slane %v2494, 4
        %v2497 = vrot.slane %v2342, 5
        %v2498 = vsel %vm1561, %v2496, %v2497
        %v2499 = vrot.slane %v2343, 5
        %v2500 = vrot.slane %v2499, 4
        %v2501 = vrot.slane %v2344, 5
        %v2502 = vsel %vm1561, %v2500, %v2501
        %v2503 = vrot.slane %v2501, 4
        %v2504 = vrot.slane %v2345, 5
        %v2505 = vsel %vm1561, %v2503, %v2504
        %2538 = vst [vmem:[#allocation3 + $0x14] sm:$0xf] %v2397
        %2539 = vst [vmem:[#allocation3 + $0x38] sm:$0xf] %v2400
        %2540 = vst [vmem:[#allocation3 + $0x5c] sm:$0xf] %v2404
        %2541 = vst [vmem:[#allocation3 + $0x80] sm:$0xf] %v2407
        %2542 = vst [vmem:[#allocation3 + $0xa4] sm:$0xf] %v2411
        %2543 = vst [vmem:[#allocation3 + $0xc8] sm:$0xf] %v2414
        %2544 = vst [vmem:[#allocation3 + $0xec] sm:$0xf] %v2418
        %2545 = vst [vmem:[#allocation3 + $0x110] sm:$0xf] %v2421
        %2546 = vst [vmem:[#allocation3 + $0x134] sm:$0xf] %v2425
        %2547 = vst [vmem:[#allocation3 + $0x158] sm:$0xf] %v2428
        %2548 = vst [vmem:[#allocation3 + $0x17c] sm:$0xf] %v2432
        %2549 = vst [vmem:[#allocation3 + $0x1a0] sm:$0xf] %v2435
        %2550 = vst [vmem:[#allocation3 + $0x1c4] sm:$0xf] %v2439
        %2551 = vst [vmem:[#allocation3 + $0x1e8] sm:$0xf] %v2442
        %2552 = vst [vmem:[#allocation3 + $0x20c] sm:$0xf] %v2446
        %2553 = vst [vmem:[#allocation3 + $0x230] sm:$0xf] %v2449
        %2554 = vst [vmem:[#allocation3 + $0x254] sm:$0xf] %v2453
        %2555 = vst [vmem:[#allocation3 + $0x278] sm:$0xf] %v2456
        %2556 = vst [vmem:[#allocation3 + $0x29c] sm:$0xf] %v2460
        %2557 = vst [vmem:[#allocation3 + $0x2c0] sm:$0xf] %v2463
        %2558 = vst [vmem:[#allocation3 + $0x2e4] sm:$0xf] %v2467
        %2559 = vst [vmem:[#allocation3 + $0x308] sm:$0xf] %v2470
        %2560 = vst [vmem:[#allocation3 + $0x32c] sm:$0xf] %v2474
        %2561 = vst [vmem:[#allocation3 + $0x350] sm:$0xf] %v2477
        %2562 = vst [vmem:[#allocation3 + $0x374] sm:$0xf] %v2481
        %2563 = vst [vmem:[#allocation3 + $0x398] sm:$0xf] %v2484
        %2564 = vst [vmem:[#allocation3 + $0x3bc] sm:$0xf] %v2488
        %2565 = vst [vmem:[#allocation3 + $0x3e0] sm:$0xf] %v2491
        %2566 = vst [vmem:[#allocation3 + $0x404] sm:$0xf] %v2495
        %2567 = vst [vmem:[#allocation3 + $0x428] sm:$0xf] %v2498
        %2568 = vst [vmem:[#allocation3 + $0x44c] sm:$0xf] %v2502
        %2569 = vst [vmem:[#allocation3 + $0x470] sm:$0xf] %v2505
        %s2570 = scalar_lea.vmem [#allocation2], 24
        %v2571 = vld [vmem:[%s2570] sm:$0xf]
        %v2572 = vld [vmem:[%s2570 + $0x4] sm:$0xf]
        %v2573 = vld [vmem:[%s2570 + $0xc] sm:$0xf]
        %v2574 = vld [vmem:[%s2570 + $0x10] sm:$0xf]
        %v2575 = vld [vmem:[%s2570 + $0x18] sm:$0xf]
        %v2576 = vld [vmem:[%s2570 + $0x1c] sm:$0xf]
        %v2577 = vld [vmem:[%s2570 + $0x24] sm:$0xf]
        %v2578 = vld [vmem:[%s2570 + $0x28] sm:$0xf]
        %v2579 = vld [vmem:[%s2570 + $0x30] sm:$0xf]
        %v2580 = vld [vmem:[%s2570 + $0x34] sm:$0xf]
        %v2581 = vld [vmem:[%s2570 + $0x3c] sm:$0xf]
        %v2582 = vld [vmem:[%s2570 + $0x40] sm:$0xf]
        %v2583 = vld [vmem:[%s2570 + $0x48] sm:$0xf]
        %v2584 = vld [vmem:[%s2570 + $0x4c] sm:$0xf]
        %v2585 = vld [vmem:[%s2570 + $0x54] sm:$0xf]
        %v2586 = vld [vmem:[%s2570 + $0x58] sm:$0xf]
        %v2587 = vld [vmem:[%s2570 + $0x60] sm:$0xf]
        %v2588 = vld [vmem:[%s2570 + $0x64] sm:$0xf]
        %v2589 = vld [vmem:[%s2570 + $0x6c] sm:$0xf]
        %v2590 = vld [vmem:[%s2570 + $0x70] sm:$0xf]
        %v2591 = vld [vmem:[%s2570 + $0x78] sm:$0xf]
        %v2592 = vld [vmem:[%s2570 + $0x7c] sm:$0xf]
        %v2593 = vld [vmem:[%s2570 + $0x84] sm:$0xf]
        %v2594 = vld [vmem:[%s2570 + $0x88] sm:$0xf]
        %v2595 = vld [vmem:[%s2570 + $0x90] sm:$0xf]
        %v2596 = vld [vmem:[%s2570 + $0x94] sm:$0xf]
        %v2597 = vld [vmem:[%s2570 + $0x9c] sm:$0xf]
        %v2598 = vld [vmem:[%s2570 + $0xa0] sm:$0xf]
        %v2599 = vld [vmem:[%s2570 + $0xa8] sm:$0xf]
        %v2600 = vld [vmem:[%s2570 + $0xac] sm:$0xf]
        %v2601 = vld [vmem:[%s2570 + $0xb4] sm:$0xf]
        %v2602 = vld [vmem:[%s2570 + $0xb8] sm:$0xf]
        %2603 = vst [vmem:[#allocation3 + $0x18] sm:$0xf] %v2571
        %2604 = vst [vmem:[#allocation3 + $0x3c] sm:$0xf] %v2572
        %2605 = vst [vmem:[#allocation3 + $0x60] sm:$0xf] %v2573
        %2606 = vst [vmem:[#allocation3 + $0x84] sm:$0xf] %v2574
        %2607 = vst [vmem:[#allocation3 + $0xa8] sm:$0xf] %v2575
        %2608 = vst [vmem:[#allocation3 + $0xcc] sm:$0xf] %v2576
        %2609 = vst [vmem:[#allocation3 + $0xf0] sm:$0xf] %v2577
        %2610 = vst [vmem:[#allocation3 + $0x114] sm:$0xf] %v2578
        %2611 = vst [vmem:[#allocation3 + $0x138] sm:$0xf] %v2579
        %2612 = vst [vmem:[#allocation3 + $0x15c] sm:$0xf] %v2580
        %2613 = vst [vmem:[#allocation3 + $0x180] sm:$0xf] %v2581
        %2614 = vst [vmem:[#allocation3 + $0x1a4] sm:$0xf] %v2582
        %2615 = vst [vmem:[#allocation3 + $0x1c8] sm:$0xf] %v2583
        %2616 = vst [vmem:[#allocation3 + $0x1ec] sm:$0xf] %v2584
        %2617 = vst [vmem:[#allocation3 + $0x210] sm:$0xf] %v2585
        %2618 = vst [vmem:[#allocation3 + $0x234] sm:$0xf] %v2586
        %2619 = vst [vmem:[#allocation3 + $0x258] sm:$0xf] %v2587
        %2620 = vst [vmem:[#allocation3 + $0x27c] sm:$0xf] %v2588
        %2621 = vst [vmem:[#allocation3 + $0x2a0] sm:$0xf] %v2589
        %2622 = vst [vmem:[#allocation3 + $0x2c4] sm:$0xf] %v2590
        %2623 = vst [vmem:[#allocation3 + $0x2e8] sm:$0xf] %v2591
        %2624 = vst [vmem:[#allocation3 + $0x30c] sm:$0xf] %v2592
        %2625 = vst [vmem:[#allocation3 + $0x330] sm:$0xf] %v2593
        %2626 = vst [vmem:[#allocation3 + $0x354] sm:$0xf] %v2594
        %2627 = vst [vmem:[#allocation3 + $0x378] sm:$0xf] %v2595
        %2628 = vst [vmem:[#allocation3 + $0x39c] sm:$0xf] %v2596
        %2629 = vst [vmem:[#allocation3 + $0x3c0] sm:$0xf] %v2597
        %2630 = vst [vmem:[#allocation3 + $0x3e4] sm:$0xf] %v2598
        %2631 = vst [vmem:[#allocation3 + $0x408] sm:$0xf] %v2599
        %2632 = vst [vmem:[#allocation3 + $0x42c] sm:$0xf] %v2600
        %2633 = vst [vmem:[#allocation3 + $0x450] sm:$0xf] %v2601
        %2634 = vst [vmem:[#allocation3 + $0x474] sm:$0xf] %v2602
        %v2635 = vld [vmem:[%s2570] sm:$0xf]
        %v2636 = vld [vmem:[%s2570 + $0x4] sm:$0xf]
        %v2637 = vld [vmem:[%s2570 + $0x8] sm:$0x1]
        %v2638 = vld [vmem:[%s2570 + $0xc] sm:$0xf]
        %v2639 = vld [vmem:[%s2570 + $0x10] sm:$0xf]
        %v2640 = vld [vmem:[%s2570 + $0x14] sm:$0x1]
        %v2641 = vld [vmem:[%s2570 + $0x18] sm:$0xf]
        %v2642 = vld [vmem:[%s2570 + $0x1c] sm:$0xf]
        %v2643 = vld [vmem:[%s2570 + $0x20] sm:$0x1]
        %v2644 = vld [vmem:[%s2570 + $0x24] sm:$0xf]
        %v2645 = vld [vmem:[%s2570 + $0x28] sm:$0xf]
        %v2646 = vld [vmem:[%s2570 + $0x2c] sm:$0x1]
        %v2647 = vld [vmem:[%s2570 + $0x30] sm:$0xf]
        %v2648 = vld [vmem:[%s2570 + $0x34] sm:$0xf]
        %v2649 = vld [vmem:[%s2570 + $0x38] sm:$0x1]
        %v2650 = vld [vmem:[%s2570 + $0x3c] sm:$0xf]
        %v2651 = vld [vmem:[%s2570 + $0x40] sm:$0xf]
        %v2652 = vld [vmem:[%s2570 + $0x44] sm:$0x1]
        %v2653 = vld [vmem:[%s2570 + $0x48] sm:$0xf]
        %v2654 = vld [vmem:[%s2570 + $0x4c] sm:$0xf]
        %v2655 = vld [vmem:[%s2570 + $0x50] sm:$0x1]
        %v2656 = vld [vmem:[%s2570 + $0x54] sm:$0xf]
        %v2657 = vld [vmem:[%s2570 + $0x58] sm:$0xf]
        %v2658 = vld [vmem:[%s2570 + $0x5c] sm:$0x1]
        %v2659 = vld [vmem:[%s2570 + $0x60] sm:$0xf]
        %v2660 = vld [vmem:[%s2570 + $0x64] sm:$0xf]
        %v2661 = vld [vmem:[%s2570 + $0x68] sm:$0x1]
        %v2662 = vld [vmem:[%s2570 + $0x6c] sm:$0xf]
        %v2663 = vld [vmem:[%s2570 + $0x70] sm:$0xf]
        %v2664 = vld [vmem:[%s2570 + $0x74] sm:$0x1]
        %v2665 = vld [vmem:[%s2570 + $0x78] sm:$0xf]
        %v2666 = vld [vmem:[%s2570 + $0x7c] sm:$0xf]
        %v2667 = vld [vmem:[%s2570 + $0x80] sm:$0x1]
        %v2668 = vld [vmem:[%s2570 + $0x84] sm:$0xf]
        %v2669 = vld [vmem:[%s2570 + $0x88] sm:$0xf]
        %v2670 = vld [vmem:[%s2570 + $0x8c] sm:$0x1]
        %v2671 = vld [vmem:[%s2570 + $0x90] sm:$0xf]
        %v2672 = vld [vmem:[%s2570 + $0x94] sm:$0xf]
        %v2673 = vld [vmem:[%s2570 + $0x98] sm:$0x1]
        %v2674 = vld [vmem:[%s2570 + $0x9c] sm:$0xf]
        %v2675 = vld [vmem:[%s2570 + $0xa0] sm:$0xf]
        %v2676 = vld [vmem:[%s2570 + $0xa4] sm:$0x1]
        %v2677 = vld [vmem:[%s2570 + $0xa8] sm:$0xf]
        %v2678 = vld [vmem:[%s2570 + $0xac] sm:$0xf]
        %v2679 = vld [vmem:[%s2570 + $0xb0] sm:$0x1]
        %v2680 = vld [vmem:[%s2570 + $0xb4] sm:$0xf]
        %v2681 = vld [vmem:[%s2570 + $0xb8] sm:$0xf]
        %v2682 = vld [vmem:[%s2570 + $0xbc] sm:$0x1]
        %v2684 = vshrl.u32 %v2635, 16
        %v2686 = vrot.slane %v2684, 4
        %v2687 = vshll.u32 %v2635, 16
        %v2689 = vrot.slane %v2687, 5
        %v2690 = vor.u32 %v2686, %v2689
        %v2691 = vrot.slane %v2690, 4
        %v2693 = vshll.u32 %v2636, 16
        %v2695 = vrot.slane %v2693, 5
        %v2696 = vsel %vm1014, %v2691, %v2695
        %v2697 = vshrl.u32 %v2636, 16
        %v2699 = vrot.slane %v2697, 4
        %v2700 = vor.u32 %v2699, %v2695
        %v2701 = vrot.slane %v2700, 4
        %v2703 = vshll.u32 %v2637, 16
        %v2705 = vrot.slane %v2703, 5
        %v2706 = vsel %vm1014, %v2701, %v2705
        %v2708 = vshrl.u32 %v2638, 16
        %v2710 = vrot.slane %v2708, 4
        %v2711 = vshll.u32 %v2638, 16
        %v2713 = vrot.slane %v2711, 5
        %v2714 = vor.u32 %v2710, %v2713
        %v2715 = vrot.slane %v2714, 4
        %v2717 = vshll.u32 %v2639, 16
        %v2719 = vrot.slane %v2717, 5
        %v2720 = vsel %vm1014, %v2715, %v2719
        %v2721 = vshrl.u32 %v2639, 16
        %v2723 = vrot.slane %v2721, 4
        %v2724 = vor.u32 %v2723, %v2719
        %v2725 = vrot.slane %v2724, 4
        %v2727 = vshll.u32 %v2640, 16
        %v2729 = vrot.slane %v2727, 5
        %v2730 = vsel %vm1014, %v2725, %v2729
        %v2732 = vshrl.u32 %v2641, 16
        %v2734 = vrot.slane %v2732, 4
        %v2735 = vshll.u32 %v2641, 16
        %v2737 = vrot.slane %v2735, 5
        %v2738 = vor.u32 %v2734, %v2737
        %v2739 = vrot.slane %v2738, 4
        %v2741 = vshll.u32 %v2642, 16
        %v2743 = vrot.slane %v2741, 5
        %v2744 = vsel %vm1014, %v2739, %v2743
        %v2745 = vshrl.u32 %v2642, 16
        %v2747 = vrot.slane %v2745, 4
        %v2748 = vor.u32 %v2747, %v2743
        %v2749 = vrot.slane %v2748, 4
        %v2751 = vshll.u32 %v2643, 16
        %v2753 = vrot.slane %v2751, 5
        %v2754 = vsel %vm1014, %v2749, %v2753
        %v2756 = vshrl.u32 %v2644, 16
        %v2758 = vrot.slane %v2756, 4
        %v2759 = vshll.u32 %v2644, 16
        %v2761 = vrot.slane %v2759, 5
        %v2762 = vor.u32 %v2758, %v2761
        %v2763 = vrot.slane %v2762, 4
        %v2765 = vshll.u32 %v2645, 16
        %v2767 = vrot.slane %v2765, 5
        %v2768 = vsel %vm1014, %v2763, %v2767
        %v2769 = vshrl.u32 %v2645, 16
        %v2771 = vrot.slane %v2769, 4
        %v2772 = vor.u32 %v2771, %v2767
        %v2773 = vrot.slane %v2772, 4
        %v2775 = vshll.u32 %v2646, 16
        %v2777 = vrot.slane %v2775, 5
        %v2778 = vsel %vm1014, %v2773, %v2777
        %v2780 = vshrl.u32 %v2647, 16
        %v2782 = vrot.slane %v2780, 4
        %v2783 = vshll.u32 %v2647, 16
        %v2785 = vrot.slane %v2783, 5
        %v2786 = vor.u32 %v2782, %v2785
        %v2787 = vrot.slane %v2786, 4
        %v2789 = vshll.u32 %v2648, 16
        %v2791 = vrot.slane %v2789, 5
        %v2792 = vsel %vm1014, %v2787, %v2791
        %v2793 = vshrl.u32 %v2648, 16
        %v2795 = vrot.slane %v2793, 4
        %v2796 = vor.u32 %v2795, %v2791
        %v2797 = vrot.slane %v2796, 4
        %v2799 = vshll.u32 %v2649, 16
        %v2801 = vrot.slane %v2799, 5
        %v2802 = vsel %vm1014, %v2797, %v2801
        %v2804 = vshrl.u32 %v2650, 16
        %v2806 = vrot.slane %v2804, 4
        %v2807 = vshll.u32 %v2650, 16
        %v2809 = vrot.slane %v2807, 5
        %v2810 = vor.u32 %v2806, %v2809
        %v2811 = vrot.slane %v2810, 4
        %v2813 = vshll.u32 %v2651, 16
        %v2815 = vrot.slane %v2813, 5
        %v2816 = vsel %vm1014, %v2811, %v2815
        %v2817 = vshrl.u32 %v2651, 16
        %v2819 = vrot.slane %v2817, 4
        %v2820 = vor.u32 %v2819, %v2815
        %v2821 = vrot.slane %v2820, 4
        %v2823 = vshll.u32 %v2652, 16
        %v2825 = vrot.slane %v2823, 5
        %v2826 = vsel %vm1014, %v2821, %v2825
        %v2828 = vshrl.u32 %v2653, 16
        %v2830 = vrot.slane %v2828, 4
        %v2831 = vshll.u32 %v2653, 16
        %v2833 = vrot.slane %v2831, 5
        %v2834 = vor.u32 %v2830, %v2833
        %v2835 = vrot.slane %v2834, 4
        %v2837 = vshll.u32 %v2654, 16
        %v2839 = vrot.slane %v2837, 5
        %v2840 = vsel %vm1014, %v2835, %v2839
        %v2841 = vshrl.u32 %v2654, 16
        %v2843 = vrot.slane %v2841, 4
        %v2844 = vor.u32 %v2843, %v2839
        %v2845 = vrot.slane %v2844, 4
        %v2847 = vshll.u32 %v2655, 16
        %v2849 = vrot.slane %v2847, 5
        %v2850 = vsel %vm1014, %v2845, %v2849
        %v2852 = vshrl.u32 %v2656, 16
        %v2854 = vrot.slane %v2852, 4
        %v2855 = vshll.u32 %v2656, 16
        %v2857 = vrot.slane %v2855, 5
        %v2858 = vor.u32 %v2854, %v2857
        %v2859 = vrot.slane %v2858, 4
        %v2861 = vshll.u32 %v2657, 16
        %v2863 = vrot.slane %v2861, 5
        %v2864 = vsel %vm1014, %v2859, %v2863
        %v2865 = vshrl.u32 %v2657, 16
        %v2867 = vrot.slane %v2865, 4
        %v2868 = vor.u32 %v2867, %v2863
        %v2869 = vrot.slane %v2868, 4
        %v2871 = vshll.u32 %v2658, 16
        %v2873 = vrot.slane %v2871, 5
        %v2874 = vsel %vm1014, %v2869, %v2873
        %v2876 = vshrl.u32 %v2659, 16
        %v2878 = vrot.slane %v2876, 4
        %v2879 = vshll.u32 %v2659, 16
        %v2881 = vrot.slane %v2879, 5
        %v2882 = vor.u32 %v2878, %v2881
        %v2883 = vrot.slane %v2882, 4
        %v2885 = vshll.u32 %v2660, 16
        %v2887 = vrot.slane %v2885, 5
        %v2888 = vsel %vm1014, %v2883, %v2887
        %v2889 = vshrl.u32 %v2660, 16
        %v2891 = vrot.slane %v2889, 4
        %v2892 = vor.u32 %v2891, %v2887
        %v2893 = vrot.slane %v2892, 4
        %v2895 = vshll.u32 %v2661, 16
        %v2897 = vrot.slane %v2895, 5
        %v2898 = vsel %vm1014, %v2893, %v2897
        %v2900 = vshrl.u32 %v2662, 16
        %v2902 = vrot.slane %v2900, 4
        %v2903 = vshll.u32 %v2662, 16
        %v2905 = vrot.slane %v2903, 5
        %v2906 = vor.u32 %v2902, %v2905
        %v2907 = vrot.slane %v2906, 4
        %v2909 = vshll.u32 %v2663, 16
        %v2911 = vrot.slane %v2909, 5
        %v2912 = vsel %vm1014, %v2907, %v2911
        %v2913 = vshrl.u32 %v2663, 16
        %v2915 = vrot.slane %v2913, 4
        %v2916 = vor.u32 %v2915, %v2911
        %v2917 = vrot.slane %v2916, 4
        %v2919 = vshll.u32 %v2664, 16
        %v2921 = vrot.slane %v2919, 5
        %v2922 = vsel %vm1014, %v2917, %v2921
        %v2924 = vshrl.u32 %v2665, 16
        %v2926 = vrot.slane %v2924, 4
        %v2927 = vshll.u32 %v2665, 16
        %v2929 = vrot.slane %v2927, 5
        %v2930 = vor.u32 %v2926, %v2929
        %v2931 = vrot.slane %v2930, 4
        %v2933 = vshll.u32 %v2666, 16
        %v2935 = vrot.slane %v2933, 5
        %v2936 = vsel %vm1014, %v2931, %v2935
        %v2937 = vshrl.u32 %v2666, 16
        %v2939 = vrot.slane %v2937, 4
        %v2940 = vor.u32 %v2939, %v2935
        %v2941 = vrot.slane %v2940, 4
        %v2943 = vshll.u32 %v2667, 16
        %v2945 = vrot.slane %v2943, 5
        %v2946 = vsel %vm1014, %v2941, %v2945
        %v2948 = vshrl.u32 %v2668, 16
        %v2950 = vrot.slane %v2948, 4
        %v2951 = vshll.u32 %v2668, 16
        %v2953 = vrot.slane %v2951, 5
        %v2954 = vor.u32 %v2950, %v2953
        %v2955 = vrot.slane %v2954, 4
        %v2957 = vshll.u32 %v2669, 16
        %v2959 = vrot.slane %v2957, 5
        %v2960 = vsel %vm1014, %v2955, %v2959
        %v2961 = vshrl.u32 %v2669, 16
        %v2963 = vrot.slane %v2961, 4
        %v2964 = vor.u32 %v2963, %v2959
        %v2965 = vrot.slane %v2964, 4
        %v2967 = vshll.u32 %v2670, 16
        %v2969 = vrot.slane %v2967, 5
        %v2970 = vsel %vm1014, %v2965, %v2969
        %v2972 = vshrl.u32 %v2671, 16
        %v2974 = vrot.slane %v2972, 4
        %v2975 = vshll.u32 %v2671, 16
        %v2977 = vrot.slane %v2975, 5
        %v2978 = vor.u32 %v2974, %v2977
        %v2979 = vrot.slane %v2978, 4
        %v2981 = vshll.u32 %v2672, 16
        %v2983 = vrot.slane %v2981, 5
        %v2984 = vsel %vm1014, %v2979, %v2983
        %v2985 = vshrl.u32 %v2672, 16
        %v2987 = vrot.slane %v2985, 4
        %v2988 = vor.u32 %v2987, %v2983
        %v2989 = vrot.slane %v2988, 4
        %v2991 = vshll.u32 %v2673, 16
        %v2993 = vrot.slane %v2991, 5
        %v2994 = vsel %vm1014, %v2989, %v2993
        %v2996 = vshrl.u32 %v2674, 16
        %v2998 = vrot.slane %v2996, 4
        %v2999 = vshll.u32 %v2674, 16
        %v3001 = vrot.slane %v2999, 5
        %v3002 = vor.u32 %v2998, %v3001
        %v3003 = vrot.slane %v3002, 4
        %v3005 = vshll.u32 %v2675, 16
        %v3007 = vrot.slane %v3005, 5
        %v3008 = vsel %vm1014, %v3003, %v3007
        %v3009 = vshrl.u32 %v2675, 16
        %v3011 = vrot.slane %v3009, 4
        %v3012 = vor.u32 %v3011, %v3007
        %v3013 = vrot.slane %v3012, 4
        %v3015 = vshll.u32 %v2676, 16
        %v3017 = vrot.slane %v3015, 5
        %v3018 = vsel %vm1014, %v3013, %v3017
        %v3020 = vshrl.u32 %v2677, 16
        %v3022 = vrot.slane %v3020, 4
        %v3023 = vshll.u32 %v2677, 16
        %v3025 = vrot.slane %v3023, 5
        %v3026 = vor.u32 %v3022, %v3025
        %v3027 = vrot.slane %v3026, 4
        %v3029 = vshll.u32 %v2678, 16
        %v3031 = vrot.slane %v3029, 5
        %v3032 = vsel %vm1014, %v3027, %v3031
        %v3033 = vshrl.u32 %v2678, 16
        %v3035 = vrot.slane %v3033, 4
        %v3036 = vor.u32 %v3035, %v3031
        %v3037 = vrot.slane %v3036, 4
        %v3039 = vshll.u32 %v2679, 16
        %v3041 = vrot.slane %v3039, 5
        %v3042 = vsel %vm1014, %v3037, %v3041
        %v3044 = vshrl.u32 %v2680, 16
        %v3046 = vrot.slane %v3044, 4
        %v3047 = vshll.u32 %v2680, 16
        %v3049 = vrot.slane %v3047, 5
        %v3050 = vor.u32 %v3046, %v3049
        %v3051 = vrot.slane %v3050, 4
        %v3053 = vshll.u32 %v2681, 16
        %v3055 = vrot.slane %v3053, 5
        %v3056 = vsel %vm1014, %v3051, %v3055
        %v3057 = vshrl.u32 %v2681, 16
        %v3059 = vrot.slane %v3057, 4
        %v3060 = vor.u32 %v3059, %v3055
        %v3061 = vrot.slane %v3060, 4
        %v3063 = vshll.u32 %v2682, 16
        %v3065 = vrot.slane %v3063, 5
        %v3066 = vsel %vm1014, %v3061, %v3065
        %3099 = vst [vmem:[#allocation3 + $0x1c] sm:$0xf] %v2696
        %3100 = vst [vmem:[#allocation3 + $0x40] sm:$0xf] %v2706
        %3101 = vst [vmem:[#allocation3 + $0x64] sm:$0xf] %v2720
        %3102 = vst [vmem:[#allocation3 + $0x88] sm:$0xf] %v2730
        %3103 = vst [vmem:[#allocation3 + $0xac] sm:$0xf] %v2744
        %3104 = vst [vmem:[#allocation3 + $0xd0] sm:$0xf] %v2754
        %3105 = vst [vmem:[#allocation3 + $0xf4] sm:$0xf] %v2768
        %3106 = vst [vmem:[#allocation3 + $0x118] sm:$0xf] %v2778
        %3107 = vst [vmem:[#allocation3 + $0x13c] sm:$0xf] %v2792
        %3108 = vst [vmem:[#allocation3 + $0x160] sm:$0xf] %v2802
        %3109 = vst [vmem:[#allocation3 + $0x184] sm:$0xf] %v2816
        %3110 = vst [vmem:[#allocation3 + $0x1a8] sm:$0xf] %v2826
        %3111 = vst [vmem:[#allocation3 + $0x1cc] sm:$0xf] %v2840
        %3112 = vst [vmem:[#allocation3 + $0x1f0] sm:$0xf] %v2850
        %3113 = vst [vmem:[#allocation3 + $0x214] sm:$0xf] %v2864
        %3114 = vst [vmem:[#allocation3 + $0x238] sm:$0xf] %v2874
        %3115 = vst [vmem:[#allocation3 + $0x25c] sm:$0xf] %v2888
        %3116 = vst [vmem:[#allocation3 + $0x280] sm:$0xf] %v2898
        %3117 = vst [vmem:[#allocation3 + $0x2a4] sm:$0xf] %v2912
        %3118 = vst [vmem:[#allocation3 + $0x2c8] sm:$0xf] %v2922
        %3119 = vst [vmem:[#allocation3 + $0x2ec] sm:$0xf] %v2936
        %3120 = vst [vmem:[#allocation3 + $0x310] sm:$0xf] %v2946
        %3121 = vst [vmem:[#allocation3 + $0x334] sm:$0xf] %v2960
        %3122 = vst [vmem:[#allocation3 + $0x358] sm:$0xf] %v2970
        %3123 = vst [vmem:[#allocation3 + $0x37c] sm:$0xf] %v2984
        %3124 = vst [vmem:[#allocation3 + $0x3a0] sm:$0xf] %v2994
        %3125 = vst [vmem:[#allocation3 + $0x3c4] sm:$0xf] %v3008
        %3126 = vst [vmem:[#allocation3 + $0x3e8] sm:$0xf] %v3018
        %3127 = vst [vmem:[#allocation3 + $0x40c] sm:$0xf] %v3032
        %3128 = vst [vmem:[#allocation3 + $0x430] sm:$0xf] %v3042
        %3129 = vst [vmem:[#allocation3 + $0x454] sm:$0xf] %v3056
        %3130 = vst [vmem:[#allocation3 + $0x478] sm:$0xf] %v3066
        %v3131 = vld [vmem:[%s2570] sm:$0xe]
        %v3132 = vld [vmem:[%s2570 + $0x4] sm:$0xf]
        %v3133 = vld [vmem:[%s2570 + $0x8] sm:$0x1]
        %v3134 = vld [vmem:[%s2570 + $0xc] sm:$0xe]
        %v3135 = vld [vmem:[%s2570 + $0x10] sm:$0xf]
        %v3136 = vld [vmem:[%s2570 + $0x14] sm:$0x1]
        %v3137 = vld [vmem:[%s2570 + $0x18] sm:$0xe]
        %v3138 = vld [vmem:[%s2570 + $0x1c] sm:$0xf]
        %v3139 = vld [vmem:[%s2570 + $0x20] sm:$0x1]
        %v3140 = vld [vmem:[%s2570 + $0x24] sm:$0xe]
        %v3141 = vld [vmem:[%s2570 + $0x28] sm:$0xf]
        %v3142 = vld [vmem:[%s2570 + $0x2c] sm:$0x1]
        %v3143 = vld [vmem:[%s2570 + $0x30] sm:$0xe]
        %v3144 = vld [vmem:[%s2570 + $0x34] sm:$0xf]
        %v3145 = vld [vmem:[%s2570 + $0x38] sm:$0x1]
        %v3146 = vld [vmem:[%s2570 + $0x3c] sm:$0xe]
        %v3147 = vld [vmem:[%s2570 + $0x40] sm:$0xf]
        %v3148 = vld [vmem:[%s2570 + $0x44] sm:$0x1]
        %v3149 = vld [vmem:[%s2570 + $0x48] sm:$0xe]
        %v3150 = vld [vmem:[%s2570 + $0x4c] sm:$0xf]
        %v3151 = vld [vmem:[%s2570 + $0x50] sm:$0x1]
        %v3152 = vld [vmem:[%s2570 + $0x54] sm:$0xe]
        %v3153 = vld [vmem:[%s2570 + $0x58] sm:$0xf]
        %v3154 = vld [vmem:[%s2570 + $0x5c] sm:$0x1]
        %v3155 = vld [vmem:[%s2570 + $0x60] sm:$0xe]
        %v3156 = vld [vmem:[%s2570 + $0x64] sm:$0xf]
        %v3157 = vld [vmem:[%s2570 + $0x68] sm:$0x1]
        %v3158 = vld [vmem:[%s2570 + $0x6c] sm:$0xe]
        %v3159 = vld [vmem:[%s2570 + $0x70] sm:$0xf]
        %v3160 = vld [vmem:[%s2570 + $0x74] sm:$0x1]
        %v3161 = vld [vmem:[%s2570 + $0x78] sm:$0xe]
        %v3162 = vld [vmem:[%s2570 + $0x7c] sm:$0xf]
        %v3163 = vld [vmem:[%s2570 + $0x80] sm:$0x1]
        %v3164 = vld [vmem:[%s2570 + $0x84] sm:$0xe]
        %v3165 = vld [vmem:[%s2570 + $0x88] sm:$0xf]
        %v3166 = vld [vmem:[%s2570 + $0x8c] sm:$0x1]
        %v3167 = vld [vmem:[%s2570 + $0x90] sm:$0xe]
        %v3168 = vld [vmem:[%s2570 + $0x94] sm:$0xf]
        %v3169 = vld [vmem:[%s2570 + $0x98] sm:$0x1]
        %v3170 = vld [vmem:[%s2570 + $0x9c] sm:$0xe]
        %v3171 = vld [vmem:[%s2570 + $0xa0] sm:$0xf]
        %v3172 = vld [vmem:[%s2570 + $0xa4] sm:$0x1]
        %v3173 = vld [vmem:[%s2570 + $0xa8] sm:$0xe]
        %v3174 = vld [vmem:[%s2570 + $0xac] sm:$0xf]
        %v3175 = vld [vmem:[%s2570 + $0xb0] sm:$0x1]
        %v3176 = vld [vmem:[%s2570 + $0xb4] sm:$0xe]
        %v3177 = vld [vmem:[%s2570 + $0xb8] sm:$0xf]
        %v3178 = vld [vmem:[%s2570 + $0xbc] sm:$0x1]
        %v3227 = vrot.slane %v3131, 5
        %v3228 = vrot.slane %v3227, 4
        %v3229 = vrot.slane %v3132, 5
        %v3230 = vsel %vm1561, %v3228, %v3229
        %v3231 = vrot.slane %v3229, 4
        %v3232 = vrot.slane %v3133, 5
        %v3233 = vsel %vm1561, %v3231, %v3232
        %v3234 = vrot.slane %v3134, 5
        %v3235 = vrot.slane %v3234, 4
        %v3236 = vrot.slane %v3135, 5
        %v3237 = vsel %vm1561, %v3235, %v3236
        %v3238 = vrot.slane %v3236, 4
        %v3239 = vrot.slane %v3136, 5
        %v3240 = vsel %vm1561, %v3238, %v3239
        %v3241 = vrot.slane %v3137, 5
        %v3242 = vrot.slane %v3241, 4
        %v3243 = vrot.slane %v3138, 5
        %v3244 = vsel %vm1561, %v3242, %v3243
        %v3245 = vrot.slane %v3243, 4
        %v3246 = vrot.slane %v3139, 5
        %v3247 = vsel %vm1561, %v3245, %v3246
        %v3248 = vrot.slane %v3140, 5
        %v3249 = vrot.slane %v3248, 4
        %v3250 = vrot.slane %v3141, 5
        %v3251 = vsel %vm1561, %v3249, %v3250
        %v3252 = vrot.slane %v3250, 4
        %v3253 = vrot.slane %v3142, 5
        %v3254 = vsel %vm1561, %v3252, %v3253
        %v3255 = vrot.slane %v3143, 5
        %v3256 = vrot.slane %v3255, 4
        %v3257 = vrot.slane %v3144, 5
        %v3258 = vsel %vm1561, %v3256, %v3257
        %v3259 = vrot.slane %v3257, 4
        %v3260 = vrot.slane %v3145, 5
        %v3261 = vsel %vm1561, %v3259, %v3260
        %v3262 = vrot.slane %v3146, 5
        %v3263 = vrot.slane %v3262, 4
        %v3264 = vrot.slane %v3147, 5
        %v3265 = vsel %vm1561, %v3263, %v3264
        %v3266 = vrot.slane %v3264, 4
        %v3267 = vrot.slane %v3148, 5
        %v3268 = vsel %vm1561, %v3266, %v3267
        %v3269 = vrot.slane %v3149, 5
        %v3270 = vrot.slane %v3269, 4
        %v3271 = vrot.slane %v3150, 5
        %v3272 = vsel %vm1561, %v3270, %v3271
        %v3273 = vrot.slane %v3271, 4
        %v3274 = vrot.slane %v3151, 5
        %v3275 = vsel %vm1561, %v3273, %v3274
        %v3276 = vrot.slane %v3152, 5
        %v3277 = vrot.slane %v3276, 4
        %v3278 = vrot.slane %v3153, 5
        %v3279 = vsel %vm1561, %v3277, %v3278
        %v3280 = vrot.slane %v3278, 4
        %v3281 = vrot.slane %v3154, 5
        %v3282 = vsel %vm1561, %v3280, %v3281
        %v3283 = vrot.slane %v3155, 5
        %v3284 = vrot.slane %v3283, 4
        %v3285 = vrot.slane %v3156, 5
        %v3286 = vsel %vm1561, %v3284, %v3285
        %v3287 = vrot.slane %v3285, 4
        %v3288 = vrot.slane %v3157, 5
        %v3289 = vsel %vm1561, %v3287, %v3288
        %v3290 = vrot.slane %v3158, 5
        %v3291 = vrot.slane %v3290, 4
        %v3292 = vrot.slane %v3159, 5
        %v3293 = vsel %vm1561, %v3291, %v3292
        %v3294 = vrot.slane %v3292, 4
        %v3295 = vrot.slane %v3160, 5
        %v3296 = vsel %vm1561, %v3294, %v3295
        %v3297 = vrot.slane %v3161, 5
        %v3298 = vrot.slane %v3297, 4
        %v3299 = vrot.slane %v3162, 5
        %v3300 = vsel %vm1561, %v3298, %v3299
        %v3301 = vrot.slane %v3299, 4
        %v3302 = vrot.slane %v3163, 5
        %v3303 = vsel %vm1561, %v3301, %v3302
        %v3304 = vrot.slane %v3164, 5
        %v3305 = vrot.slane %v3304, 4
        %v3306 = vrot.slane %v3165, 5
        %v3307 = vsel %vm1561, %v3305, %v3306
        %v3308 = vrot.slane %v3306, 4
        %v3309 = vrot.slane %v3166, 5
        %v3310 = vsel %vm1561, %v3308, %v3309
        %v3311 = vrot.slane %v3167, 5
        %v3312 = vrot.slane %v3311, 4
        %v3313 = vrot.slane %v3168, 5
        %v3314 = vsel %vm1561, %v3312, %v3313
        %v3315 = vrot.slane %v3313, 4
        %v3316 = vrot.slane %v3169, 5
        %v3317 = vsel %vm1561, %v3315, %v3316
        %v3318 = vrot.slane %v3170, 5
        %v3319 = vrot.slane %v3318, 4
        %v3320 = vrot.slane %v3171, 5
        %v3321 = vsel %vm1561, %v3319, %v3320
        %v3322 = vrot.slane %v3320, 4
        %v3323 = vrot.slane %v3172, 5
        %v3324 = vsel %vm1561, %v3322, %v3323
        %v3325 = vrot.slane %v3173, 5
        %v3326 = vrot.slane %v3325, 4
        %v3327 = vrot.slane %v3174, 5
        %v3328 = vsel %vm1561, %v3326, %v3327
        %v3329 = vrot.slane %v3327, 4
        %v3330 = vrot.slane %v3175, 5
        %v3331 = vsel %vm1561, %v3329, %v3330
        %v3332 = vrot.slane %v3176, 5
        %v3333 = vrot.slane %v3332, 4
        %v3334 = vrot.slane %v3177, 5
        %v3335 = vsel %vm1561, %v3333, %v3334
        %v3336 = vrot.slane %v3334, 4
        %v3337 = vrot.slane %v3178, 5
        %v3338 = vsel %vm1561, %v3336, %v3337
        %3371 = vst [vmem:[#allocation3 + $0x20] sm:$0xf] %v3230
        %3372 = vst [vmem:[#allocation3 + $0x44] sm:$0xf] %v3233
        %3373 = vst [vmem:[#allocation3 + $0x68] sm:$0xf] %v3237
        %3374 = vst [vmem:[#allocation3 + $0x8c] sm:$0xf] %v3240
        %3375 = vst [vmem:[#allocation3 + $0xb0] sm:$0xf] %v3244
        %3376 = vst [vmem:[#allocation3 + $0xd4] sm:$0xf] %v3247
        %3377 = vst [vmem:[#allocation3 + $0xf8] sm:$0xf] %v3251
        %3378 = vst [vmem:[#allocation3 + $0x11c] sm:$0xf] %v3254
        %3379 = vst [vmem:[#allocation3 + $0x140] sm:$0xf] %v3258
        %3380 = vst [vmem:[#allocation3 + $0x164] sm:$0xf] %v3261
        %3381 = vst [vmem:[#allocation3 + $0x188] sm:$0xf] %v3265
        %3382 = vst [vmem:[#allocation3 + $0x1ac] sm:$0xf] %v3268
        %3383 = vst [vmem:[#allocation3 + $0x1d0] sm:$0xf] %v3272
        %3384 = vst [vmem:[#allocation3 + $0x1f4] sm:$0xf] %v3275
        %3385 = vst [vmem:[#allocation3 + $0x218] sm:$0xf] %v3279
        %3386 = vst [vmem:[#allocation3 + $0x23c] sm:$0xf] %v3282
        %3387 = vst [vmem:[#allocation3 + $0x260] sm:$0xf] %v3286
        %3388 = vst [vmem:[#allocation3 + $0x284] sm:$0xf] %v3289
        %3389 = vst [vmem:[#allocation3 + $0x2a8] sm:$0xf] %v3293
        %3390 = vst [vmem:[#allocation3 + $0x2cc] sm:$0xf] %v3296
        %3391 = vst [vmem:[#allocation3 + $0x2f0] sm:$0xf] %v3300
        %3392 = vst [vmem:[#allocation3 + $0x314] sm:$0xf] %v3303
        %3393 = vst [vmem:[#allocation3 + $0x338] sm:$0xf] %v3307
        %3394 = vst [vmem:[#allocation3 + $0x35c] sm:$0xf] %v3310
        %3395 = vst [vmem:[#allocation3 + $0x380] sm:$0xf] %v3314
        %3396 = vst [vmem:[#allocation3 + $0x3a4] sm:$0xf] %v3317
        %3397 = vst [vmem:[#allocation3 + $0x3c8] sm:$0xf] %v3321
        %3398 = vst [vmem:[#allocation3 + $0x3ec] sm:$0xf] %v3324
        %3399 = vst [vmem:[#allocation3 + $0x410] sm:$0xf] %v3328
        %3400 = vst [vmem:[#allocation3 + $0x434] sm:$0xf] %v3331
        %3401 = vst [vmem:[#allocation3 + $0x458] sm:$0xf] %v3335
        %3402 = vst [vmem:[#allocation3 + $0x47c] sm:$0xf] %v3338
        %v3403 = vld [vmem:[#allocation3] sm:$0xff]
        %v3404 = vld [vmem:[#allocation3 + $0x8] sm:$0xff]
        %v3405 = vld [vmem:[#allocation3 + $0x10] sm:$0xff]
        %v3406 = vld [vmem:[#allocation3 + $0x18] sm:$0xff]
        %v3407 = vld [vmem:[#allocation3 + $0x20] sm:$0xf]
        %v3408 = vld [vmem:[#allocation3 + $0x24] sm:$0xff]
        %v3409 = vld [vmem:[#allocation3 + $0x2c] sm:$0xff]
        %v3410 = vld [vmem:[#allocation3 + $0x34] sm:$0xff]
        %v3411 = vld [vmem:[#allocation3 + $0x3c] sm:$0xff]
        %v3412 = vld [vmem:[#allocation3 + $0x44] sm:$0xf]
        %v3413 = vld [vmem:[#allocation3 + $0x48] sm:$0xff]
        %v3414 = vld [vmem:[#allocation3 + $0x50] sm:$0xff]
        %v3415 = vld [vmem:[#allocation3 + $0x58] sm:$0xff]
        %v3416 = vld [vmem:[#allocation3 + $0x60] sm:$0xff]
        %v3417 = vld [vmem:[#allocation3 + $0x68] sm:$0xf]
        %v3418 = vld [vmem:[#allocation3 + $0x6c] sm:$0xff]
        %v3419 = vld [vmem:[#allocation3 + $0x74] sm:$0xff]
        %v3420 = vld [vmem:[#allocation3 + $0x7c] sm:$0xff]
        %v3421 = vld [vmem:[#allocation3 + $0x84] sm:$0xff]
        %v3422 = vld [vmem:[#allocation3 + $0x8c] sm:$0xf]
        %v3423 = vld [vmem:[#allocation3 + $0x90] sm:$0xff]
        %v3424 = vld [vmem:[#allocation3 + $0x98] sm:$0xff]
        %v3425 = vld [vmem:[#allocation3 + $0xa0] sm:$0xff]
        %v3426 = vld [vmem:[#allocation3 + $0xa8] sm:$0xff]
        %v3427 = vld [vmem:[#allocation3 + $0xb0] sm:$0xf]
        %v3428 = vld [vmem:[#allocation3 + $0xb4] sm:$0xff]
        %v3429 = vld [vmem:[#allocation3 + $0xbc] sm:$0xff]
        %v3430 = vld [vmem:[#allocation3 + $0xc4] sm:$0xff]
        %v3431 = vld [vmem:[#allocation3 + $0xcc] sm:$0xff]
        %v3432 = vld [vmem:[#allocation3 + $0xd4] sm:$0xf]
        %v3433 = vld [vmem:[#allocation3 + $0xd8] sm:$0xff]
        %v3434 = vld [vmem:[#allocation3 + $0xe0] sm:$0xff]
        %v3435 = vld [vmem:[#allocation3 + $0xe8] sm:$0xff]
        %v3436 = vld [vmem:[#allocation3 + $0xf0] sm:$0xff]
        %v3437 = vld [vmem:[#allocation3 + $0xf8] sm:$0xf]
        %v3438 = vld [vmem:[#allocation3 + $0xfc] sm:$0xff]
        %v3439 = vld [vmem:[#allocation3 + $0x104] sm:$0xff]
        %v3440 = vld [vmem:[#allocation3 + $0x10c] sm:$0xff]
        %v3441 = vld [vmem:[#allocation3 + $0x114] sm:$0xff]
        %v3442 = vld [vmem:[#allocation3 + $0x11c] sm:$0xf]
        %v3443 = vld [vmem:[#allocation3 + $0x120] sm:$0xff]
        %v3444 = vld [vmem:[#allocation3 + $0x128] sm:$0xff]
        %v3445 = vld [vmem:[#allocation3 + $0x130] sm:$0xff]
        %v3446 = vld [vmem:[#allocation3 + $0x138] sm:$0xff]
        %v3447 = vld [vmem:[#allocation3 + $0x140] sm:$0xf]
        %v3448 = vld [vmem:[#allocation3 + $0x144] sm:$0xff]
        %v3449 = vld [vmem:[#allocation3 + $0x14c] sm:$0xff]
        %v3450 = vld [vmem:[#allocation3 + $0x154] sm:$0xff]
        %v3451 = vld [vmem:[#allocation3 + $0x15c] sm:$0xff]
        %v3452 = vld [vmem:[#allocation3 + $0x164] sm:$0xf]
        %v3453 = vld [vmem:[#allocation3 + $0x168] sm:$0xff]
        %v3454 = vld [vmem:[#allocation3 + $0x170] sm:$0xff]
        %v3455 = vld [vmem:[#allocation3 + $0x178] sm:$0xff]
        %v3456 = vld [vmem:[#allocation3 + $0x180] sm:$0xff]
        %v3457 = vld [vmem:[#allocation3 + $0x188] sm:$0xf]
        %v3458 = vld [vmem:[#allocation3 + $0x18c] sm:$0xff]
        %v3459 = vld [vmem:[#allocation3 + $0x194] sm:$0xff]
        %v3460 = vld [vmem:[#allocation3 + $0x19c] sm:$0xff]
        %v3461 = vld [vmem:[#allocation3 + $0x1a4] sm:$0xff]
        %v3462 = vld [vmem:[#allocation3 + $0x1ac] sm:$0xf]
        %v3463 = vld [vmem:[#allocation3 + $0x1b0] sm:$0xff]
        %v3464 = vld [vmem:[#allocation3 + $0x1b8] sm:$0xff]
        %v3465 = vld [vmem:[#allocation3 + $0x1c0] sm:$0xff]
        %v3466 = vld [vmem:[#allocation3 + $0x1c8] sm:$0xff]
        %v3467 = vld [vmem:[#allocation3 + $0x1d0] sm:$0xf]
        %v3468 = vld [vmem:[#allocation3 + $0x1d4] sm:$0xff]
        %v3469 = vld [vmem:[#allocation3 + $0x1dc] sm:$0xff]
        %v3470 = vld [vmem:[#allocation3 + $0x1e4] sm:$0xff]
        %v3471 = vld [vmem:[#allocation3 + $0x1ec] sm:$0xff]
        %v3472 = vld [vmem:[#allocation3 + $0x1f4] sm:$0xf]
        %v3473 = vld [vmem:[#allocation3 + $0x1f8] sm:$0xff]
        %v3474 = vld [vmem:[#allocation3 + $0x200] sm:$0xff]
        %v3475 = vld [vmem:[#allocation3 + $0x208] sm:$0xff]
        %v3476 = vld [vmem:[#allocation3 + $0x210] sm:$0xff]
        %v3477 = vld [vmem:[#allocation3 + $0x218] sm:$0xf]
        %v3478 = vld [vmem:[#allocation3 + $0x21c] sm:$0xff]
        %v3479 = vld [vmem:[#allocation3 + $0x224] sm:$0xff]
        %v3480 = vld [vmem:[#allocation3 + $0x22c] sm:$0xff]
        %v3481 = vld [vmem:[#allocation3 + $0x234] sm:$0xff]
        %v3482 = vld [vmem:[#allocation3 + $0x23c] sm:$0xf]
        %v3483 = vld [vmem:[#allocation3 + $0x240] sm:$0xff]
        %v3484 = vld [vmem:[#allocation3 + $0x248] sm:$0xff]
        %v3485 = vld [vmem:[#allocation3 + $0x250] sm:$0xff]
        %v3486 = vld [vmem:[#allocation3 + $0x258] sm:$0xff]
        %v3487 = vld [vmem:[#allocation3 + $0x260] sm:$0xf]
        %v3488 = vld [vmem:[#allocation3 + $0x264] sm:$0xff]
        %v3489 = vld [vmem:[#allocation3 + $0x26c] sm:$0xff]
        %v3490 = vld [vmem:[#allocation3 + $0x274] sm:$0xff]
        %v3491 = vld [vmem:[#allocation3 + $0x27c] sm:$0xff]
        %v3492 = vld [vmem:[#allocation3 + $0x284] sm:$0xf]
        %v3493 = vld [vmem:[#allocation3 + $0x288] sm:$0xff]
        %v3494 = vld [vmem:[#allocation3 + $0x290] sm:$0xff]
        %v3495 = vld [vmem:[#allocation3 + $0x298] sm:$0xff]
        %v3496 = vld [vmem:[#allocation3 + $0x2a0] sm:$0xff]
        %v3497 = vld [vmem:[#allocation3 + $0x2a8] sm:$0xf]
        %v3498 = vld [vmem:[#allocation3 + $0x2ac] sm:$0xff]
        %v3499 = vld [vmem:[#allocation3 + $0x2b4] sm:$0xff]
        %v3500 = vld [vmem:[#allocation3 + $0x2bc] sm:$0xff]
        %v3501 = vld [vmem:[#allocation3 + $0x2c4] sm:$0xff]
        %v3502 = vld [vmem:[#allocation3 + $0x2cc] sm:$0xf]
        %v3503 = vld [vmem:[#allocation3 + $0x2d0] sm:$0xff]
        %v3504 = vld [vmem:[#allocation3 + $0x2d8] sm:$0xff]
        %v3505 = vld [vmem:[#allocation3 + $0x2e0] sm:$0xff]
        %v3506 = vld [vmem:[#allocation3 + $0x2e8] sm:$0xff]
        %v3507 = vld [vmem:[#allocation3 + $0x2f0] sm:$0xf]
        %v3508 = vld [vmem:[#allocation3 + $0x2f4] sm:$0xff]
        %v3509 = vld [vmem:[#allocation3 + $0x2fc] sm:$0xff]
        %v3510 = vld [vmem:[#allocation3 + $0x304] sm:$0xff]
        %v3511 = vld [vmem:[#allocation3 + $0x30c] sm:$0xff]
        %v3512 = vld [vmem:[#allocation3 + $0x314] sm:$0xf]
        %v3513 = vld [vmem:[#allocation3 + $0x318] sm:$0xff]
        %v3514 = vld [vmem:[#allocation3 + $0x320] sm:$0xff]
        %v3515 = vld [vmem:[#allocation3 + $0x328] sm:$0xff]
        %v3516 = vld [vmem:[#allocation3 + $0x330] sm:$0xff]
        %v3517 = vld [vmem:[#allocation3 + $0x338] sm:$0xf]
        %v3518 = vld [vmem:[#allocation3 + $0x33c] sm:$0xff]
        %v3519 = vld [vmem:[#allocation3 + $0x344] sm:$0xff]
        %v3520 = vld [vmem:[#allocation3 + $0x34c] sm:$0xff]
        %v3521 = vld [vmem:[#allocation3 + $0x354] sm:$0xff]
        %v3522 = vld [vmem:[#allocation3 + $0x35c] sm:$0xf]
        %v3523 = vld [vmem:[#allocation3 + $0x360] sm:$0xff]
        %v3524 = vld [vmem:[#allocation3 + $0x368] sm:$0xff]
        %v3525 = vld [vmem:[#allocation3 + $0x370] sm:$0xff]
        %v3526 = vld [vmem:[#allocation3 + $0x378] sm:$0xff]
        %v3527 = vld [vmem:[#allocation3 + $0x380] sm:$0xf]
        %v3528 = vld [vmem:[#allocation3 + $0x384] sm:$0xff]
        %v3529 = vld [vmem:[#allocation3 + $0x38c] sm:$0xff]
        %v3530 = vld [vmem:[#allocation3 + $0x394] sm:$0xff]
        %v3531 = vld [vmem:[#allocation3 + $0x39c] sm:$0xff]
        %v3532 = vld [vmem:[#allocation3 + $0x3a4] sm:$0xf]
        %v3533 = vld [vmem:[#allocation3 + $0x3a8] sm:$0xff]
        %v3534 = vld [vmem:[#allocation3 + $0x3b0] sm:$0xff]
        %v3535 = vld [vmem:[#allocation3 + $0x3b8] sm:$0xff]
        %v3536 = vld [vmem:[#allocation3 + $0x3c0] sm:$0xff]
        %v3537 = vld [vmem:[#allocation3 + $0x3c8] sm:$0xf]
        %v3538 = vld [vmem:[#allocation3 + $0x3cc] sm:$0xff]
        %v3539 = vld [vmem:[#allocation3 + $0x3d4] sm:$0xff]
        %v3540 = vld [vmem:[#allocation3 + $0x3dc] sm:$0xff]
        %v3541 = vld [vmem:[#allocation3 + $0x3e4] sm:$0xff]
        %v3542 = vld [vmem:[#allocation3 + $0x3ec] sm:$0xf]
        %v3543 = vld [vmem:[#allocation3 + $0x3f0] sm:$0xff]
        %v3544 = vld [vmem:[#allocation3 + $0x3f8] sm:$0xff]
        %v3545 = vld [vmem:[#allocation3 + $0x400] sm:$0xff]
        %v3546 = vld [vmem:[#allocation3 + $0x408] sm:$0xff]
        %v3547 = vld [vmem:[#allocation3 + $0x410] sm:$0xf]
        %v3548 = vld [vmem:[#allocation3 + $0x414] sm:$0xff]
        %v3549 = vld [vmem:[#allocation3 + $0x41c] sm:$0xff]
        %v3550 = vld [vmem:[#allocation3 + $0x424] sm:$0xff]
        %v3551 = vld [vmem:[#allocation3 + $0x42c] sm:$0xff]
        %v3552 = vld [vmem:[#allocation3 + $0x434] sm:$0xf]
        %v3553 = vld [vmem:[#allocation3 + $0x438] sm:$0xff]
        %v3554 = vld [vmem:[#allocation3 + $0x440] sm:$0xff]
        %v3555 = vld [vmem:[#allocation3 + $0x448] sm:$0xff]
        %v3556 = vld [vmem:[#allocation3 + $0x450] sm:$0xff]
        %v3557 = vld [vmem:[#allocation3 + $0x458] sm:$0xf]
        %v3558 = vld [vmem:[#allocation3 + $0x45c] sm:$0xff]
        %v3559 = vld [vmem:[#allocation3 + $0x464] sm:$0xff]
        %v3560 = vld [vmem:[#allocation3 + $0x46c] sm:$0xff]
        %v3561 = vld [vmem:[#allocation3 + $0x474] sm:$0xff]
        %v3562 = vld [vmem:[#allocation3 + $0x47c] sm:$0xf]
        %v3563 = vld [vmem:[#allocation7] sm:$0xf]
        %v3564 = vld [vmem:[#allocation7 + $0x4] sm:$0xf]
        %v3565 = vld [vmem:[#allocation7 + $0x8] sm:$0xf]
        %v3566 = vld [vmem:[#allocation7 + $0xc] sm:$0xf]
        %v3567 = vld [vmem:[#allocation7 + $0x10] sm:$0xf]
        %v3568 = vld [vmem:[#allocation7 + $0x14] sm:$0xf]
        %v3569 = vld [vmem:[#allocation7 + $0x18] sm:$0xf]
        %v3570 = vld [vmem:[#allocation7 + $0x1c] sm:$0xf]
        %v3571 = vld [vmem:[#allocation7 + $0x20] sm:$0xf]
        %v3572 = vld [vmem:[#allocation7 + $0x24] sm:$0xf]
        %v3573 = vld [vmem:[#allocation7 + $0x28] sm:$0xf]
        %v3574 = vld [vmem:[#allocation7 + $0x2c] sm:$0xf]
        %v3575 = vld [vmem:[#allocation7 + $0x30] sm:$0xf]
        %v3576 = vld [vmem:[#allocation7 + $0x34] sm:$0xf]
        %v3577 = vld [vmem:[#allocation7 + $0x38] sm:$0xf]
        %v3578 = vld [vmem:[#allocation7 + $0x3c] sm:$0xf]
        %v3579 = vld [vmem:[#allocation7 + $0x40] sm:$0xf]
        %v3580 = vld [vmem:[#allocation7 + $0x44] sm:$0xf]
        %v3581 = vld [vmem:[#allocation7 + $0x48] sm:$0xf]
        %v3582 = vld [vmem:[#allocation7 + $0x4c] sm:$0xf]
        %v3583 = vld [vmem:[#allocation7 + $0x50] sm:$0xf]
        %v3584 = vld [vmem:[#allocation7 + $0x54] sm:$0xf]
        %v3585 = vld [vmem:[#allocation7 + $0x58] sm:$0xf]
        %v3586 = vld [vmem:[#allocation7 + $0x5c] sm:$0xf]
        %v3587 = vld [vmem:[#allocation7 + $0x60] sm:$0xf]
        %v3588 = vld [vmem:[#allocation7 + $0x64] sm:$0xf]
        %v3589 = vld [vmem:[#allocation7 + $0x68] sm:$0xf]
        %v3590 = vld [vmem:[#allocation7 + $0x6c] sm:$0xf]
        %v3591 = vld [vmem:[#allocation7 + $0x70] sm:$0xf]
        %v3592 = vld [vmem:[#allocation7 + $0x74] sm:$0xf]
        %v3593 = vld [vmem:[#allocation7 + $0x78] sm:$0xf]
        %v3594 = vld [vmem:[#allocation7 + $0x7c] sm:$0xf]
        %v3595 = vld [vmem:[#allocation7 + $0x80] sm:$0xf]
        %v3596 = vld [vmem:[#allocation7 + $0x84] sm:$0xf]
        %v3597 = vld [vmem:[#allocation7 + $0x88] sm:$0xf]
        %v3598 = vld [vmem:[#allocation7 + $0x8c] sm:$0xf]
        %v3599 = vld [vmem:[#allocation7 + $0x90] sm:$0xf]
        %v3600 = vld [vmem:[#allocation7 + $0x94] sm:$0xf]
        %v3601 = vld [vmem:[#allocation7 + $0x98] sm:$0xf]
        %v3602 = vld [vmem:[#allocation7 + $0x9c] sm:$0xf]
        %v3603 = vld [vmem:[#allocation7 + $0xa0] sm:$0xf]
        %v3604 = vld [vmem:[#allocation7 + $0xa4] sm:$0xf]
        %v3605 = vld [vmem:[#allocation7 + $0xa8] sm:$0xf]
        %v3606 = vld [vmem:[#allocation7 + $0xac] sm:$0xf]
        %v3607 = vld [vmem:[#allocation7 + $0xb0] sm:$0xf]
        %v3608 = vld [vmem:[#allocation7 + $0xb4] sm:$0xf]
        %v3609 = vld [vmem:[#allocation7 + $0xb8] sm:$0xf]
        %v3610 = vld [vmem:[#allocation7 + $0xbc] sm:$0xf]
        %v3611 = vld [vmem:[#allocation7 + $0xc0] sm:$0xf]
        %v3612 = vld [vmem:[#allocation7 + $0xc4] sm:$0xf]
        %v3613 = vld [vmem:[#allocation7 + $0xc8] sm:$0xf]
        %v3614 = vld [vmem:[#allocation7 + $0xcc] sm:$0xf]
        %v3615 = vld [vmem:[#allocation7 + $0xd0] sm:$0xf]
        %v3616 = vld [vmem:[#allocation7 + $0xd4] sm:$0xf]
        %v3617 = vld [vmem:[#allocation7 + $0xd8] sm:$0xf]
        %v3618 = vld [vmem:[#allocation7 + $0xdc] sm:$0xf]
        %v3619 = vld [vmem:[#allocation7 + $0xe0] sm:$0xf]
        %v3620 = vld [vmem:[#allocation7 + $0xe4] sm:$0xf]
        %v3621 = vld [vmem:[#allocation7 + $0xe8] sm:$0xf]
        %v3622 = vld [vmem:[#allocation7 + $0xec] sm:$0xf]
        %v3623 = vld [vmem:[#allocation7 + $0xf0] sm:$0xf]
        %v3624 = vld [vmem:[#allocation7 + $0xf4] sm:$0xf]
        %v3625 = vld [vmem:[#allocation7 + $0xf8] sm:$0xf]
        %v3626 = vld [vmem:[#allocation7 + $0xfc] sm:$0xf]
        %v3627 = vld [vmem:[#allocation7 + $0x100] sm:$0xf]
        %v3628 = vld [vmem:[#allocation7 + $0x104] sm:$0xf]
        %v3629 = vld [vmem:[#allocation7 + $0x108] sm:$0xf]
        %v3630 = vld [vmem:[#allocation7 + $0x10c] sm:$0xf]
        %v3631 = vld [vmem:[#allocation7 + $0x110] sm:$0xf]
        %v3632 = vld [vmem:[#allocation7 + $0x114] sm:$0xf]
        %v3633 = vld [vmem:[#allocation7 + $0x118] sm:$0xf]
        %v3634 = vld [vmem:[#allocation7 + $0x11c] sm:$0xf]
        %v3635 = vld [vmem:[#allocation7 + $0x120] sm:$0xf]
        %v3636 = vld [vmem:[#allocation7 + $0x124] sm:$0xf]
        %v3637 = vld [vmem:[#allocation7 + $0x128] sm:$0xf]
        %v3638 = vld [vmem:[#allocation7 + $0x12c] sm:$0xf]
        %v3639 = vld [vmem:[#allocation7 + $0x130] sm:$0xf]
        %v3640 = vld [vmem:[#allocation7 + $0x134] sm:$0xf]
        %v3641 = vld [vmem:[#allocation7 + $0x138] sm:$0xf]
        %v3642 = vld [vmem:[#allocation7 + $0x13c] sm:$0xf]
        %v3643 = vld [vmem:[#allocation7 + $0x140] sm:$0xf]
        %v3644 = vld [vmem:[#allocation7 + $0x144] sm:$0xf]
        %v3645 = vld [vmem:[#allocation7 + $0x148] sm:$0xf]
        %v3646 = vld [vmem:[#allocation7 + $0x14c] sm:$0xf]
        %v3647 = vld [vmem:[#allocation7 + $0x150] sm:$0xf]
        %v3648 = vld [vmem:[#allocation7 + $0x154] sm:$0xf]
        %v3649 = vld [vmem:[#allocation7 + $0x158] sm:$0xf]
        %v3650 = vld [vmem:[#allocation7 + $0x15c] sm:$0xf]
        %v3651 = vld [vmem:[#allocation7 + $0x160] sm:$0xf]
        %v3652 = vld [vmem:[#allocation7 + $0x164] sm:$0xf]
        %v3653 = vld [vmem:[#allocation7 + $0x168] sm:$0xf]
        %v3654 = vld [vmem:[#allocation7 + $0x16c] sm:$0xf]
        %v3655 = vld [vmem:[#allocation7 + $0x170] sm:$0xf]
        %v3656 = vld [vmem:[#allocation7 + $0x174] sm:$0xf]
        %v3657 = vld [vmem:[#allocation7 + $0x178] sm:$0xf]
        %v3658 = vld [vmem:[#allocation7 + $0x17c] sm:$0xf]
        %v3659 = vld [vmem:[#allocation7 + $0x180] sm:$0xf]
        %v3660 = vld [vmem:[#allocation7 + $0x184] sm:$0xf]
        %v3661 = vld [vmem:[#allocation7 + $0x188] sm:$0xf]
        %v3662 = vld [vmem:[#allocation7 + $0x18c] sm:$0xf]
        %v3663 = vld [vmem:[#allocation7 + $0x190] sm:$0xf]
        %v3664 = vld [vmem:[#allocation7 + $0x194] sm:$0xf]
        %v3665 = vld [vmem:[#allocation7 + $0x198] sm:$0xf]
        %v3666 = vld [vmem:[#allocation7 + $0x19c] sm:$0xf]
        %v3667 = vld [vmem:[#allocation7 + $0x1a0] sm:$0xf]
        %v3668 = vld [vmem:[#allocation7 + $0x1a4] sm:$0xf]
        %v3669 = vld [vmem:[#allocation7 + $0x1a8] sm:$0xf]
        %v3670 = vld [vmem:[#allocation7 + $0x1ac] sm:$0xf]
        %v3671 = vld [vmem:[#allocation7 + $0x1b0] sm:$0xf]
        %v3672 = vld [vmem:[#allocation7 + $0x1b4] sm:$0xf]
        %v3673 = vld [vmem:[#allocation7 + $0x1b8] sm:$0xf]
        %v3674 = vld [vmem:[#allocation7 + $0x1bc] sm:$0xf]
        %v3675 = vld [vmem:[#allocation7 + $0x1c0] sm:$0xf]
        %v3676 = vld [vmem:[#allocation7 + $0x1c4] sm:$0xf]
        %v3677 = vld [vmem:[#allocation7 + $0x1c8] sm:$0xf]
        %v3678 = vld [vmem:[#allocation7 + $0x1cc] sm:$0xf]
        %v3679 = vld [vmem:[#allocation7 + $0x1d0] sm:$0xf]
        %v3680 = vld [vmem:[#allocation7 + $0x1d4] sm:$0xf]
        %v3681 = vld [vmem:[#allocation7 + $0x1d8] sm:$0xf]
        %v3682 = vld [vmem:[#allocation7 + $0x1dc] sm:$0xf]
        %v3683 = vld [vmem:[#allocation7 + $0x1e0] sm:$0xf]
        %v3684 = vld [vmem:[#allocation7 + $0x1e4] sm:$0xf]
        %v3685 = vld [vmem:[#allocation7 + $0x1e8] sm:$0xf]
        %v3686 = vld [vmem:[#allocation7 + $0x1ec] sm:$0xf]
        %v3687 = vld [vmem:[#allocation7 + $0x1f0] sm:$0xf]
        %v3688 = vld [vmem:[#allocation7 + $0x1f4] sm:$0xf]
        %v3689 = vld [vmem:[#allocation7 + $0x1f8] sm:$0xf]
        %v3690 = vld [vmem:[#allocation7 + $0x1fc] sm:$0xf]
        %v3691 = vld [vmem:[#allocation7 + $0x200] sm:$0xf]
        %v3692 = vld [vmem:[#allocation7 + $0x204] sm:$0xf]
        %v3693 = vld [vmem:[#allocation7 + $0x208] sm:$0xf]
        %v3694 = vld [vmem:[#allocation7 + $0x20c] sm:$0xf]
        %v3695 = vld [vmem:[#allocation7 + $0x210] sm:$0xf]
        %v3696 = vld [vmem:[#allocation7 + $0x214] sm:$0xf]
        %v3697 = vld [vmem:[#allocation7 + $0x218] sm:$0xf]
        %v3698 = vld [vmem:[#allocation7 + $0x21c] sm:$0xf]
        %v3699 = vld [vmem:[#allocation7 + $0x220] sm:$0xf]
        %v3700 = vld [vmem:[#allocation7 + $0x224] sm:$0xf]
        %v3701 = vld [vmem:[#allocation7 + $0x228] sm:$0xf]
        %v3702 = vld [vmem:[#allocation7 + $0x22c] sm:$0xf]
        %v3703 = vld [vmem:[#allocation7 + $0x230] sm:$0xf]
        %v3704 = vld [vmem:[#allocation7 + $0x234] sm:$0xf]
        %v3705 = vld [vmem:[#allocation7 + $0x238] sm:$0xf]
        %v3706 = vld [vmem:[#allocation7 + $0x23c] sm:$0xf]
        %v3707 = vld [vmem:[%s3] sm:$0x1]
        %v3709 = vperm.slane %v3707, 0
        %v3871 = vunpack.c.l.b16 %v3403
        %v3872 = vunpack.c.h.b16 %v3403
        %v3873 = vunpack.c.l.b16 %v3404
        %v3874 = vunpack.c.h.b16 %v3404
        %v3875 = vunpack.c.l.b16 %v3405
        %v3876 = vunpack.c.h.b16 %v3405
        %v3877 = vunpack.c.l.b16 %v3406
        %v3878 = vunpack.c.h.b16 %v3406
        %v3879 = vunpack.c.l.b16 %v3407
        %v3880 = vunpack.c.l.b16 %v3408
        %v3881 = vunpack.c.h.b16 %v3408
        %v3882 = vunpack.c.l.b16 %v3409
        %v3883 = vunpack.c.h.b16 %v3409
        %v3884 = vunpack.c.l.b16 %v3410
        %v3885 = vunpack.c.h.b16 %v3410
        %v3886 = vunpack.c.l.b16 %v3411
        %v3887 = vunpack.c.h.b16 %v3411
        %v3888 = vunpack.c.l.b16 %v3412
        %v3889 = vunpack.c.l.b16 %v3413
        %v3890 = vunpack.c.h.b16 %v3413
        %v3891 = vunpack.c.l.b16 %v3414
        %v3892 = vunpack.c.h.b16 %v3414
        %v3893 = vunpack.c.l.b16 %v3415
        %v3894 = vunpack.c.h.b16 %v3415
        %v3895 = vunpack.c.l.b16 %v3416
        %v3896 = vunpack.c.h.b16 %v3416
        %v3897 = vunpack.c.l.b16 %v3417
        %v3898 = vunpack.c.l.b16 %v3418
        %v3899 = vunpack.c.h.b16 %v3418
        %v3900 = vunpack.c.l.b16 %v3419
        %v3901 = vunpack.c.h.b16 %v3419
        %v3902 = vunpack.c.l.b16 %v3420
        %v3903 = vunpack.c.h.b16 %v3420
        %v3904 = vunpack.c.l.b16 %v3421
        %v3905 = vunpack.c.h.b16 %v3421
        %v3906 = vunpack.c.l.b16 %v3422
        %v3907 = vunpack.c.l.b16 %v3423
        %v3908 = vunpack.c.h.b16 %v3423
        %v3909 = vunpack.c.l.b16 %v3424
        %v3910 = vunpack.c.h.b16 %v3424
        %v3911 = vunpack.c.l.b16 %v3425
        %v3912 = vunpack.c.h.b16 %v3425
        %v3913 = vunpack.c.l.b16 %v3426
        %v3914 = vunpack.c.h.b16 %v3426
        %v3915 = vunpack.c.l.b16 %v3427
        %v3916 = vunpack.c.l.b16 %v3428
        %v3917 = vunpack.c.h.b16 %v3428
        %v3918 = vunpack.c.l.b16 %v3429
        %v3919 = vunpack.c.h.b16 %v3429
        %v3920 = vunpack.c.l.b16 %v3430
        %v3921 = vunpack.c.h.b16 %v3430
        %v3922 = vunpack.c.l.b16 %v3431
        %v3923 = vunpack.c.h.b16 %v3431
        %v3924 = vunpack.c.l.b16 %v3432
        %v3925 = vunpack.c.l.b16 %v3433
        %v3926 = vunpack.c.h.b16 %v3433
        %v3927 = vunpack.c.l.b16 %v3434
        %v3928 = vunpack.c.h.b16 %v3434
        %v3929 = vunpack.c.l.b16 %v3435
        %v3930 = vunpack.c.h.b16 %v3435
        %v3931 = vunpack.c.l.b16 %v3436
        %v3932 = vunpack.c.h.b16 %v3436
        %v3933 = vunpack.c.l.b16 %v3437
        %v3934 = vunpack.c.l.b16 %v3438
        %v3935 = vunpack.c.h.b16 %v3438
        %v3936 = vunpack.c.l.b16 %v3439
        %v3937 = vunpack.c.h.b16 %v3439
        %v3938 = vunpack.c.l.b16 %v3440
        %v3939 = vunpack.c.h.b16 %v3440
        %v3940 = vunpack.c.l.b16 %v3441
        %v3941 = vunpack.c.h.b16 %v3441
        %v3942 = vunpack.c.l.b16 %v3442
        %v3943 = vunpack.c.l.b16 %v3443
        %v3944 = vunpack.c.h.b16 %v3443
        %v3945 = vunpack.c.l.b16 %v3444
        %v3946 = vunpack.c.h.b16 %v3444
        %v3947 = vunpack.c.l.b16 %v3445
        %v3948 = vunpack.c.h.b16 %v3445
        %v3949 = vunpack.c.l.b16 %v3446
        %v3950 = vunpack.c.h.b16 %v3446
        %v3951 = vunpack.c.l.b16 %v3447
        %v3952 = vunpack.c.l.b16 %v3448
        %v3953 = vunpack.c.h.b16 %v3448
        %v3954 = vunpack.c.l.b16 %v3449
        %v3955 = vunpack.c.h.b16 %v3449
        %v3956 = vunpack.c.l.b16 %v3450
        %v3957 = vunpack.c.h.b16 %v3450
        %v3958 = vunpack.c.l.b16 %v3451
        %v3959 = vunpack.c.h.b16 %v3451
        %v3960 = vunpack.c.l.b16 %v3452
        %v3961 = vunpack.c.l.b16 %v3453
        %v3962 = vunpack.c.h.b16 %v3453
        %v3963 = vunpack.c.l.b16 %v3454
        %v3964 = vunpack.c.h.b16 %v3454
        %v3965 = vunpack.c.l.b16 %v3455
        %v3966 = vunpack.c.h.b16 %v3455
        %v3967 = vunpack.c.l.b16 %v3456
        %v3968 = vunpack.c.h.b16 %v3456
        %v3969 = vunpack.c.l.b16 %v3457
        %v3970 = vunpack.c.l.b16 %v3458
        %v3971 = vunpack.c.h.b16 %v3458
        %v3972 = vunpack.c.l.b16 %v3459
        %v3973 = vunpack.c.h.b16 %v3459
        %v3974 = vunpack.c.l.b16 %v3460
        %v3975 = vunpack.c.h.b16 %v3460
        %v3976 = vunpack.c.l.b16 %v3461
        %v3977 = vunpack.c.h.b16 %v3461
        %v3978 = vunpack.c.l.b16 %v3462
        %v3979 = vunpack.c.l.b16 %v3463
        %v3980 = vunpack.c.h.b16 %v3463
        %v3981 = vunpack.c.l.b16 %v3464
        %v3982 = vunpack.c.h.b16 %v3464
        %v3983 = vunpack.c.l.b16 %v3465
        %v3984 = vunpack.c.h.b16 %v3465
        %v3985 = vunpack.c.l.b16 %v3466
        %v3986 = vunpack.c.h.b16 %v3466
        %v3987 = vunpack.c.l.b16 %v3467
        %v3988 = vunpack.c.l.b16 %v3468
        %v3989 = vunpack.c.h.b16 %v3468
        %v3990 = vunpack.c.l.b16 %v3469
        %v3991 = vunpack.c.h.b16 %v3469
        %v3992 = vunpack.c.l.b16 %v3470
        %v3993 = vunpack.c.h.b16 %v3470
        %v3994 = vunpack.c.l.b16 %v3471
        %v3995 = vunpack.c.h.b16 %v3471
        %v3996 = vunpack.c.l.b16 %v3472
        %v3997 = vunpack.c.l.b16 %v3473
        %v3998 = vunpack.c.h.b16 %v3473
        %v3999 = vunpack.c.l.b16 %v3474
        %v4000 = vunpack.c.h.b16 %v3474
        %v4001 = vunpack.c.l.b16 %v3475
        %v4002 = vunpack.c.h.b16 %v3475
        %v4003 = vunpack.c.l.b16 %v3476
        %v4004 = vunpack.c.h.b16 %v3476
        %v4005 = vunpack.c.l.b16 %v3477
        %v4006 = vunpack.c.l.b16 %v3478
        %v4007 = vunpack.c.h.b16 %v3478
        %v4008 = vunpack.c.l.b16 %v3479
        %v4009 = vunpack.c.h.b16 %v3479
        %v4010 = vunpack.c.l.b16 %v3480
        %v4011 = vunpack.c.h.b16 %v3480
        %v4012 = vunpack.c.l.b16 %v3481
        %v4013 = vunpack.c.h.b16 %v3481
        %v4014 = vunpack.c.l.b16 %v3482
        %v4015 = vunpack.c.l.b16 %v3483
        %v4016 = vunpack.c.h.b16 %v3483
        %v4017 = vunpack.c.l.b16 %v3484
        %v4018 = vunpack.c.h.b16 %v3484
        %v4019 = vunpack.c.l.b16 %v3485
        %v4020 = vunpack.c.h.b16 %v3485
        %v4021 = vunpack.c.l.b16 %v3486
        %v4022 = vunpack.c.h.b16 %v3486
        %v4023 = vunpack.c.l.b16 %v3487
        %v4024 = vunpack.c.l.b16 %v3488
        %v4025 = vunpack.c.h.b16 %v3488
        %v4026 = vunpack.c.l.b16 %v3489
        %v4027 = vunpack.c.h.b16 %v3489
        %v4028 = vunpack.c.l.b16 %v3490
        %v4029 = vunpack.c.h.b16 %v3490
        %v4030 = vunpack.c.l.b16 %v3491
        %v4031 = vunpack.c.h.b16 %v3491
        %v4032 = vunpack.c.l.b16 %v3492
        %v4033 = vunpack.c.l.b16 %v3493
        %v4034 = vunpack.c.h.b16 %v3493
        %v4035 = vunpack.c.l.b16 %v3494
        %v4036 = vunpack.c.h.b16 %v3494
        %v4037 = vunpack.c.l.b16 %v3495
        %v4038 = vunpack.c.h.b16 %v3495
        %v4039 = vunpack.c.l.b16 %v3496
        %v4040 = vunpack.c.h.b16 %v3496
        %v4041 = vunpack.c.l.b16 %v3497
        %v4042 = vunpack.c.l.b16 %v3498
        %v4043 = vunpack.c.h.b16 %v3498
        %v4044 = vunpack.c.l.b16 %v3499
        %v4045 = vunpack.c.h.b16 %v3499
        %v4046 = vunpack.c.l.b16 %v3500
        %v4047 = vunpack.c.h.b16 %v3500
        %v4048 = vunpack.c.l.b16 %v3501
        %v4049 = vunpack.c.h.b16 %v3501
        %v4050 = vunpack.c.l.b16 %v3502
        %v4051 = vunpack.c.l.b16 %v3503
        %v4052 = vunpack.c.h.b16 %v3503
        %v4053 = vunpack.c.l.b16 %v3504
        %v4054 = vunpack.c.h.b16 %v3504
        %v4055 = vunpack.c.l.b16 %v3505
        %v4056 = vunpack.c.h.b16 %v3505
        %v4057 = vunpack.c.l.b16 %v3506
        %v4058 = vunpack.c.h.b16 %v3506
        %v4059 = vunpack.c.l.b16 %v3507
        %v4060 = vunpack.c.l.b16 %v3508
        %v4061 = vunpack.c.h.b16 %v3508
        %v4062 = vunpack.c.l.b16 %v3509
        %v4063 = vunpack.c.h.b16 %v3509
        %v4064 = vunpack.c.l.b16 %v3510
        %v4065 = vunpack.c.h.b16 %v3510
        %v4066 = vunpack.c.l.b16 %v3511
        %v4067 = vunpack.c.h.b16 %v3511
        %v4068 = vunpack.c.l.b16 %v3512
        %v4069 = vunpack.c.l.b16 %v3513
        %v4070 = vunpack.c.h.b16 %v3513
        %v4071 = vunpack.c.l.b16 %v3514
        %v4072 = vunpack.c.h.b16 %v3514
        %v4073 = vunpack.c.l.b16 %v3515
        %v4074 = vunpack.c.h.b16 %v3515
        %v4075 = vunpack.c.l.b16 %v3516
        %v4076 = vunpack.c.h.b16 %v3516
        %v4077 = vunpack.c.l.b16 %v3517
        %v4078 = vunpack.c.l.b16 %v3518
        %v4079 = vunpack.c.h.b16 %v3518
        %v4080 = vunpack.c.l.b16 %v3519
        %v4081 = vunpack.c.h.b16 %v3519
        %v4082 = vunpack.c.l.b16 %v3520
        %v4083 = vunpack.c.h.b16 %v3520
        %v4084 = vunpack.c.l.b16 %v3521
        %v4085 = vunpack.c.h.b16 %v3521
        %v4086 = vunpack.c.l.b16 %v3522
        %v4087 = vunpack.c.l.b16 %v3523
        %v4088 = vunpack.c.h.b16 %v3523
        %v4089 = vunpack.c.l.b16 %v3524
        %v4090 = vunpack.c.h.b16 %v3524
        %v4091 = vunpack.c.l.b16 %v3525
        %v4092 = vunpack.c.h.b16 %v3525
        %v4093 = vunpack.c.l.b16 %v3526
        %v4094 = vunpack.c.h.b16 %v3526
        %v4095 = vunpack.c.l.b16 %v3527
        %v4096 = vunpack.c.l.b16 %v3528
        %v4097 = vunpack.c.h.b16 %v3528
        %v4098 = vunpack.c.l.b16 %v3529
        %v4099 = vunpack.c.h.b16 %v3529
        %v4100 = vunpack.c.l.b16 %v3530
        %v4101 = vunpack.c.h.b16 %v3530
        %v4102 = vunpack.c.l.b16 %v3531
        %v4103 = vunpack.c.h.b16 %v3531
        %v4104 = vunpack.c.l.b16 %v3532
        %v4105 = vunpack.c.l.b16 %v3533
        %v4106 = vunpack.c.h.b16 %v3533
        %v4107 = vunpack.c.l.b16 %v3534
        %v4108 = vunpack.c.h.b16 %v3534
        %v4109 = vunpack.c.l.b16 %v3535
        %v4110 = vunpack.c.h.b16 %v3535
        %v4111 = vunpack.c.l.b16 %v3536
        %v4112 = vunpack.c.h.b16 %v3536
        %v4113 = vunpack.c.l.b16 %v3537
        %v4114 = vunpack.c.l.b16 %v3538
        %v4115 = vunpack.c.h.b16 %v3538
        %v4116 = vunpack.c.l.b16 %v3539
        %v4117 = vunpack.c.h.b16 %v3539
        %v4118 = vunpack.c.l.b16 %v3540
        %v4119 = vunpack.c.h.b16 %v3540
        %v4120 = vunpack.c.l.b16 %v3541
        %v4121 = vunpack.c.h.b16 %v3541
        %v4122 = vunpack.c.l.b16 %v3542
        %v4123 = vunpack.c.l.b16 %v3543
        %v4124 = vunpack.c.h.b16 %v3543
        %v4125 = vunpack.c.l.b16 %v3544
        %v4126 = vunpack.c.h.b16 %v3544
        %v4127 = vunpack.c.l.b16 %v3545
        %v4128 = vunpack.c.h.b16 %v3545
        %v4129 = vunpack.c.l.b16 %v3546
        %v4130 = vunpack.c.h.b16 %v3546
        %v4131 = vunpack.c.l.b16 %v3547
        %v4132 = vunpack.c.l.b16 %v3548
        %v4133 = vunpack.c.h.b16 %v3548
        %v4134 = vunpack.c.l.b16 %v3549
        %v4135 = vunpack.c.h.b16 %v3549
        %v4136 = vunpack.c.l.b16 %v3550
        %v4137 = vunpack.c.h.b16 %v3550
        %v4138 = vunpack.c.l.b16 %v3551
        %v4139 = vunpack.c.h.b16 %v3551
        %v4140 = vunpack.c.l.b16 %v3552
        %v4141 = vunpack.c.l.b16 %v3553
        %v4142 = vunpack.c.h.b16 %v3553
        %v4143 = vunpack.c.l.b16 %v3554
        %v4144 = vunpack.c.h.b16 %v3554
        %v4145 = vunpack.c.l.b16 %v3555
        %v4146 = vunpack.c.h.b16 %v3555
        %v4147 = vunpack.c.l.b16 %v3556
        %v4148 = vunpack.c.h.b16 %v3556
        %v4149 = vunpack.c.l.b16 %v3557
        %v4150 = vunpack.c.l.b16 %v3558
        %v4151 = vunpack.c.h.b16 %v3558
        %v4152 = vunpack.c.l.b16 %v3559
        %v4153 = vunpack.c.h.b16 %v3559
        %v4154 = vunpack.c.l.b16 %v3560
        %v4155 = vunpack.c.h.b16 %v3560
        %v4156 = vunpack.c.l.b16 %v3561
        %v4157 = vunpack.c.h.b16 %v3561
        %v4158 = vunpack.c.l.b16 %v3562
        %v4159 = vpack.c.b16 %v3880, %v3871
        %v4160 = vpack.c.b16 %v3881, %v3872
        %v4161 = vpack.c.b16 %v3882, %v3873
        %v4162 = vpack.c.b16 %v3883, %v3874
        %v4163 = vpack.c.b16 %v3884, %v3875
        %v4164 = vpack.c.b16 %v3885, %v3876
        %v4165 = vpack.c.b16 %v3886, %v3877
        %v4166 = vpack.c.b16 %v3887, %v3878
        %v4167 = vpack.c.b16 %v3888, %v3879
        %v4168 = vpack.c.b16 %v3898, %v3889
        %v4169 = vpack.c.b16 %v3899, %v3890
        %v4170 = vpack.c.b16 %v3900, %v3891
        %v4171 = vpack.c.b16 %v3901, %v3892
        %v4172 = vpack.c.b16 %v3902, %v3893
        %v4173 = vpack.c.b16 %v3903, %v3894
        %v4174 = vpack.c.b16 %v3904, %v3895
        %v4175 = vpack.c.b16 %v3905, %v3896
        %v4176 = vpack.c.b16 %v3906, %v3897
        %v4177 = vpack.c.b16 %v3916, %v3907
        %v4178 = vpack.c.b16 %v3917, %v3908
        %v4179 = vpack.c.b16 %v3918, %v3909
        %v4180 = vpack.c.b16 %v3919, %v3910
        %v4181 = vpack.c.b16 %v3920, %v3911
        %v4182 = vpack.c.b16 %v3921, %v3912
        %v4183 = vpack.c.b16 %v3922, %v3913
        %v4184 = vpack.c.b16 %v3923, %v3914
        %v4185 = vpack.c.b16 %v3924, %v3915
        %v4186 = vpack.c.b16 %v3934, %v3925
        %v4187 = vpack.c.b16 %v3935, %v3926
        %v4188 = vpack.c.b16 %v3936, %v3927
        %v4189 = vpack.c.b16 %v3937, %v3928
        %v4190 = vpack.c.b16 %v3938, %v3929
        %v4191 = vpack.c.b16 %v3939, %v3930
        %v4192 = vpack.c.b16 %v3940, %v3931
        %v4193 = vpack.c.b16 %v3941, %v3932
        %v4194 = vpack.c.b16 %v3942, %v3933
        %v4195 = vpack.c.b16 %v3952, %v3943
        %v4196 = vpack.c.b16 %v3953, %v3944
        %v4197 = vpack.c.b16 %v3954, %v3945
        %v4198 = vpack.c.b16 %v3955, %v3946
        %v4199 = vpack.c.b16 %v3956, %v3947
        %v4200 = vpack.c.b16 %v3957, %v3948
        %v4201 = vpack.c.b16 %v3958, %v3949
        %v4202 = vpack.c.b16 %v3959, %v3950
        %v4203 = vpack.c.b16 %v3960, %v3951
        %v4204 = vpack.c.b16 %v3970, %v3961
        %v4205 = vpack.c.b16 %v3971, %v3962
        %v4206 = vpack.c.b16 %v3972, %v3963
        %v4207 = vpack.c.b16 %v3973, %v3964
        %v4208 = vpack.c.b16 %v3974, %v3965
        %v4209 = vpack.c.b16 %v3975, %v3966
        %v4210 = vpack.c.b16 %v3976, %v3967
        %v4211 = vpack.c.b16 %v3977, %v3968
        %v4212 = vpack.c.b16 %v3978, %v3969
        %v4213 = vpack.c.b16 %v3988, %v3979
        %v4214 = vpack.c.b16 %v3989, %v3980
        %v4215 = vpack.c.b16 %v3990, %v3981
        %v4216 = vpack.c.b16 %v3991, %v3982
        %v4217 = vpack.c.b16 %v3992, %v3983
        %v4218 = vpack.c.b16 %v3993, %v3984
        %v4219 = vpack.c.b16 %v3994, %v3985
        %v4220 = vpack.c.b16 %v3995, %v3986
        %v4221 = vpack.c.b16 %v3996, %v3987
        %v4222 = vpack.c.b16 %v4006, %v3997
        %v4223 = vpack.c.b16 %v4007, %v3998
        %v4224 = vpack.c.b16 %v4008, %v3999
        %v4225 = vpack.c.b16 %v4009, %v4000
        %v4226 = vpack.c.b16 %v4010, %v4001
        %v4227 = vpack.c.b16 %v4011, %v4002
        %v4228 = vpack.c.b16 %v4012, %v4003
        %v4229 = vpack.c.b16 %v4013, %v4004
        %v4230 = vpack.c.b16 %v4014, %v4005
        %v4231 = vpack.c.b16 %v4024, %v4015
        %v4232 = vpack.c.b16 %v4025, %v4016
        %v4233 = vpack.c.b16 %v4026, %v4017
        %v4234 = vpack.c.b16 %v4027, %v4018
        %v4235 = vpack.c.b16 %v4028, %v4019
        %v4236 = vpack.c.b16 %v4029, %v4020
        %v4237 = vpack.c.b16 %v4030, %v4021
        %v4238 = vpack.c.b16 %v4031, %v4022
        %v4239 = vpack.c.b16 %v4032, %v4023
        %v4240 = vpack.c.b16 %v4042, %v4033
        %v4241 = vpack.c.b16 %v4043, %v4034
        %v4242 = vpack.c.b16 %v4044, %v4035
        %v4243 = vpack.c.b16 %v4045, %v4036
        %v4244 = vpack.c.b16 %v4046, %v4037
        %v4245 = vpack.c.b16 %v4047, %v4038
        %v4246 = vpack.c.b16 %v4048, %v4039
        %v4247 = vpack.c.b16 %v4049, %v4040
        %v4248 = vpack.c.b16 %v4050, %v4041
        %v4249 = vpack.c.b16 %v4060, %v4051
        %v4250 = vpack.c.b16 %v4061, %v4052
        %v4251 = vpack.c.b16 %v4062, %v4053
        %v4252 = vpack.c.b16 %v4063, %v4054
        %v4253 = vpack.c.b16 %v4064, %v4055
        %v4254 = vpack.c.b16 %v4065, %v4056
        %v4255 = vpack.c.b16 %v4066, %v4057
        %v4256 = vpack.c.b16 %v4067, %v4058
        %v4257 = vpack.c.b16 %v4068, %v4059
        %v4258 = vpack.c.b16 %v4078, %v4069
        %v4259 = vpack.c.b16 %v4079, %v4070
        %v4260 = vpack.c.b16 %v4080, %v4071
        %v4261 = vpack.c.b16 %v4081, %v4072
        %v4262 = vpack.c.b16 %v4082, %v4073
        %v4263 = vpack.c.b16 %v4083, %v4074
        %v4264 = vpack.c.b16 %v4084, %v4075
        %v4265 = vpack.c.b16 %v4085, %v4076
        %v4266 = vpack.c.b16 %v4086, %v4077
        %v4267 = vpack.c.b16 %v4096, %v4087
        %v4268 = vpack.c.b16 %v4097, %v4088
        %v4269 = vpack.c.b16 %v4098, %v4089
        %v4270 = vpack.c.b16 %v4099, %v4090
        %v4271 = vpack.c.b16 %v4100, %v4091
        %v4272 = vpack.c.b16 %v4101, %v4092
        %v4273 = vpack.c.b16 %v4102, %v4093
        %v4274 = vpack.c.b16 %v4103, %v4094
        %v4275 = vpack.c.b16 %v4104, %v4095
        %v4276 = vpack.c.b16 %v4114, %v4105
        %v4277 = vpack.c.b16 %v4115, %v4106
        %v4278 = vpack.c.b16 %v4116, %v4107
        %v4279 = vpack.c.b16 %v4117, %v4108
        %v4280 = vpack.c.b16 %v4118, %v4109
        %v4281 = vpack.c.b16 %v4119, %v4110
        %v4282 = vpack.c.b16 %v4120, %v4111
        %v4283 = vpack.c.b16 %v4121, %v4112
        %v4284 = vpack.c.b16 %v4122, %v4113
        %v4285 = vpack.c.b16 %v4132, %v4123
        %v4286 = vpack.c.b16 %v4133, %v4124
        %v4287 = vpack.c.b16 %v4134, %v4125
        %v4288 = vpack.c.b16 %v4135, %v4126
        %v4289 = vpack.c.b16 %v4136, %v4127
        %v4290 = vpack.c.b16 %v4137, %v4128
        %v4291 = vpack.c.b16 %v4138, %v4129
        %v4292 = vpack.c.b16 %v4139, %v4130
        %v4293 = vpack.c.b16 %v4140, %v4131
        %v4294 = vpack.c.b16 %v4150, %v4141
        %v4295 = vpack.c.b16 %v4151, %v4142
        %v4296 = vpack.c.b16 %v4152, %v4143
        %v4297 = vpack.c.b16 %v4153, %v4144
        %v4298 = vpack.c.b16 %v4154, %v4145
        %v4299 = vpack.c.b16 %v4155, %v4146
        %v4300 = vpack.c.b16 %v4156, %v4147
        %v4301 = vpack.c.b16 %v4157, %v4148
        %v4302 = vpack.c.b16 %v4158, %v4149
        %v4591 = vunpack.c.l.b16 %v3563
        %v4592 = vunpack.c.l.b16 %v3564
        %v4593 = vunpack.c.l.b16 %v3565
        %v4594 = vunpack.c.l.b16 %v3566
        %v4595 = vunpack.c.l.b16 %v3567
        %v4596 = vunpack.c.l.b16 %v3568
        %v4597 = vunpack.c.l.b16 %v3569
        %v4598 = vunpack.c.l.b16 %v3570
        %v4599 = vunpack.c.l.b16 %v3571
        %v4600 = vunpack.c.l.b16 %v3572
        %v4601 = vunpack.c.l.b16 %v3573
        %v4602 = vunpack.c.l.b16 %v3574
        %v4603 = vunpack.c.l.b16 %v3575
        %v4604 = vunpack.c.l.b16 %v3576
        %v4605 = vunpack.c.l.b16 %v3577
        %v4606 = vunpack.c.l.b16 %v3578
        %v4607 = vunpack.c.l.b16 %v3579
        %v4608 = vunpack.c.l.b16 %v3580
        %v4609 = vunpack.c.l.b16 %v3581
        %v4610 = vunpack.c.l.b16 %v3582
        %v4611 = vunpack.c.l.b16 %v3583
        %v4612 = vunpack.c.l.b16 %v3584
        %v4613 = vunpack.c.l.b16 %v3585
        %v4614 = vunpack.c.l.b16 %v3586
        %v4615 = vunpack.c.l.b16 %v3587
        %v4616 = vunpack.c.l.b16 %v3588
        %v4617 = vunpack.c.l.b16 %v3589
        %v4618 = vunpack.c.l.b16 %v3590
        %v4619 = vunpack.c.l.b16 %v3591
        %v4620 = vunpack.c.l.b16 %v3592
        %v4621 = vunpack.c.l.b16 %v3593
        %v4622 = vunpack.c.l.b16 %v3594
        %v4623 = vunpack.c.l.b16 %v3595
        %v4624 = vunpack.c.l.b16 %v3596
        %v4625 = vunpack.c.l.b16 %v3597
        %v4626 = vunpack.c.l.b16 %v3598
        %v4627 = vunpack.c.l.b16 %v3599
        %v4628 = vunpack.c.l.b16 %v3600
        %v4629 = vunpack.c.l.b16 %v3601
        %v4630 = vunpack.c.l.b16 %v3602
        %v4631 = vunpack.c.l.b16 %v3603
        %v4632 = vunpack.c.l.b16 %v3604
        %v4633 = vunpack.c.l.b16 %v3605
        %v4634 = vunpack.c.l.b16 %v3606
        %v4635 = vunpack.c.l.b16 %v3607
        %v4636 = vunpack.c.l.b16 %v3608
        %v4637 = vunpack.c.l.b16 %v3609
        %v4638 = vunpack.c.l.b16 %v3610
        %v4639 = vunpack.c.l.b16 %v3611
        %v4640 = vunpack.c.l.b16 %v3612
        %v4641 = vunpack.c.l.b16 %v3613
        %v4642 = vunpack.c.l.b16 %v3614
        %v4643 = vunpack.c.l.b16 %v3615
        %v4644 = vunpack.c.l.b16 %v3616
        %v4645 = vunpack.c.l.b16 %v3617
        %v4646 = vunpack.c.l.b16 %v3618
        %v4647 = vunpack.c.l.b16 %v3619
        %v4648 = vunpack.c.l.b16 %v3620
        %v4649 = vunpack.c.l.b16 %v3621
        %v4650 = vunpack.c.l.b16 %v3622
        %v4651 = vunpack.c.l.b16 %v3623
        %v4652 = vunpack.c.l.b16 %v3624
        %v4653 = vunpack.c.l.b16 %v3625
        %v4654 = vunpack.c.l.b16 %v3626
        %v4655 = vunpack.c.l.b16 %v3627
        %v4656 = vunpack.c.l.b16 %v3628
        %v4657 = vunpack.c.l.b16 %v3629
        %v4658 = vunpack.c.l.b16 %v3630
        %v4659 = vunpack.c.l.b16 %v3631
        %v4660 = vunpack.c.l.b16 %v3632
        %v4661 = vunpack.c.l.b16 %v3633
        %v4662 = vunpack.c.l.b16 %v3634
        %v4663 = vunpack.c.l.b16 %v3635
        %v4664 = vunpack.c.l.b16 %v3636
        %v4665 = vunpack.c.l.b16 %v3637
        %v4666 = vunpack.c.l.b16 %v3638
        %v4667 = vunpack.c.l.b16 %v3639
        %v4668 = vunpack.c.l.b16 %v3640
        %v4669 = vunpack.c.l.b16 %v3641
        %v4670 = vunpack.c.l.b16 %v3642
        %v4671 = vunpack.c.l.b16 %v3643
        %v4672 = vunpack.c.l.b16 %v3644
        %v4673 = vunpack.c.l.b16 %v3645
        %v4674 = vunpack.c.l.b16 %v3646
        %v4675 = vunpack.c.l.b16 %v3647
        %v4676 = vunpack.c.l.b16 %v3648
        %v4677 = vunpack.c.l.b16 %v3649
        %v4678 = vunpack.c.l.b16 %v3650
        %v4679 = vunpack.c.l.b16 %v3651
        %v4680 = vunpack.c.l.b16 %v3652
        %v4681 = vunpack.c.l.b16 %v3653
        %v4682 = vunpack.c.l.b16 %v3654
        %v4683 = vunpack.c.l.b16 %v3655
        %v4684 = vunpack.c.l.b16 %v3656
        %v4685 = vunpack.c.l.b16 %v3657
        %v4686 = vunpack.c.l.b16 %v3658
        %v4687 = vunpack.c.l.b16 %v3659
        %v4688 = vunpack.c.l.b16 %v3660
        %v4689 = vunpack.c.l.b16 %v3661
        %v4690 = vunpack.c.l.b16 %v3662
        %v4691 = vunpack.c.l.b16 %v3663
        %v4692 = vunpack.c.l.b16 %v3664
        %v4693 = vunpack.c.l.b16 %v3665
        %v4694 = vunpack.c.l.b16 %v3666
        %v4695 = vunpack.c.l.b16 %v3667
        %v4696 = vunpack.c.l.b16 %v3668
        %v4697 = vunpack.c.l.b16 %v3669
        %v4698 = vunpack.c.l.b16 %v3670
        %v4699 = vunpack.c.l.b16 %v3671
        %v4700 = vunpack.c.l.b16 %v3672
        %v4701 = vunpack.c.l.b16 %v3673
        %v4702 = vunpack.c.l.b16 %v3674
        %v4703 = vunpack.c.l.b16 %v3675
        %v4704 = vunpack.c.l.b16 %v3676
        %v4705 = vunpack.c.l.b16 %v3677
        %v4706 = vunpack.c.l.b16 %v3678
        %v4707 = vunpack.c.l.b16 %v3679
        %v4708 = vunpack.c.l.b16 %v3680
        %v4709 = vunpack.c.l.b16 %v3681
        %v4710 = vunpack.c.l.b16 %v3682
        %v4711 = vunpack.c.l.b16 %v3683
        %v4712 = vunpack.c.l.b16 %v3684
        %v4713 = vunpack.c.l.b16 %v3685
        %v4714 = vunpack.c.l.b16 %v3686
        %v4715 = vunpack.c.l.b16 %v3687
        %v4716 = vunpack.c.l.b16 %v3688
        %v4717 = vunpack.c.l.b16 %v3689
        %v4718 = vunpack.c.l.b16 %v3690
        %v4719 = vunpack.c.l.b16 %v3691
        %v4720 = vunpack.c.l.b16 %v3692
        %v4721 = vunpack.c.l.b16 %v3693
        %v4722 = vunpack.c.l.b16 %v3694
        %v4723 = vunpack.c.l.b16 %v3695
        %v4724 = vunpack.c.l.b16 %v3696
        %v4725 = vunpack.c.l.b16 %v3697
        %v4726 = vunpack.c.l.b16 %v3698
        %v4727 = vunpack.c.l.b16 %v3699
        %v4728 = vunpack.c.l.b16 %v3700
        %v4729 = vunpack.c.l.b16 %v3701
        %v4730 = vunpack.c.l.b16 %v3702
        %v4731 = vunpack.c.l.b16 %v3703
        %v4732 = vunpack.c.l.b16 %v3704
        %v4733 = vunpack.c.l.b16 %v3705
        %v4734 = vunpack.c.l.b16 %v3706
        %v4735 = vpack.c.b16 %v4592, %v4591
        %v4736 = vpack.c.b16 %v4594, %v4593
        %v4737 = vpack.c.b16 %v4596, %v4595
        %v4738 = vpack.c.b16 %v4598, %v4597
        %v4739 = vpack.c.b16 %v4600, %v4599
        %v4740 = vpack.c.b16 %v4602, %v4601
        %v4741 = vpack.c.b16 %v4604, %v4603
        %v4742 = vpack.c.b16 %v4606, %v4605
        %v4743 = vpack.c.b16 %v4608, %v4607
        %v4744 = vpack.c.b16 %v4610, %v4609
        %v4745 = vpack.c.b16 %v4612, %v4611
        %v4746 = vpack.c.b16 %v4614, %v4613
        %v4747 = vpack.c.b16 %v4616, %v4615
        %v4748 = vpack.c.b16 %v4618, %v4617
        %v4749 = vpack.c.b16 %v4620, %v4619
        %v4750 = vpack.c.b16 %v4622, %v4621
        %v4751 = vpack.c.b16 %v4624, %v4623
        %v4752 = vpack.c.b16 %v4626, %v4625
        %v4753 = vpack.c.b16 %v4628, %v4627
        %v4754 = vpack.c.b16 %v4630, %v4629
        %v4755 = vpack.c.b16 %v4632, %v4631
        %v4756 = vpack.c.b16 %v4634, %v4633
        %v4757 = vpack.c.b16 %v4636, %v4635
        %v4758 = vpack.c.b16 %v4638, %v4637
        %v4759 = vpack.c.b16 %v4640, %v4639
        %v4760 = vpack.c.b16 %v4642, %v4641
        %v4761 = vpack.c.b16 %v4644, %v4643
        %v4762 = vpack.c.b16 %v4646, %v4645
        %v4763 = vpack.c.b16 %v4648, %v4647
        %v4764 = vpack.c.b16 %v4650, %v4649
        %v4765 = vpack.c.b16 %v4652, %v4651
        %v4766 = vpack.c.b16 %v4654, %v4653
        %v4767 = vpack.c.b16 %v4656, %v4655
        %v4768 = vpack.c.b16 %v4658, %v4657
        %v4769 = vpack.c.b16 %v4660, %v4659
        %v4770 = vpack.c.b16 %v4662, %v4661
        %v4771 = vpack.c.b16 %v4664, %v4663
        %v4772 = vpack.c.b16 %v4666, %v4665
        %v4773 = vpack.c.b16 %v4668, %v4667
        %v4774 = vpack.c.b16 %v4670, %v4669
        %v4775 = vpack.c.b16 %v4672, %v4671
        %v4776 = vpack.c.b16 %v4674, %v4673
        %v4777 = vpack.c.b16 %v4676, %v4675
        %v4778 = vpack.c.b16 %v4678, %v4677
        %v4779 = vpack.c.b16 %v4680, %v4679
        %v4780 = vpack.c.b16 %v4682, %v4681
        %v4781 = vpack.c.b16 %v4684, %v4683
        %v4782 = vpack.c.b16 %v4686, %v4685
        %v4783 = vpack.c.b16 %v4688, %v4687
        %v4784 = vpack.c.b16 %v4690, %v4689
        %v4785 = vpack.c.b16 %v4692, %v4691
        %v4786 = vpack.c.b16 %v4694, %v4693
        %v4787 = vpack.c.b16 %v4696, %v4695
        %v4788 = vpack.c.b16 %v4698, %v4697
        %v4789 = vpack.c.b16 %v4700, %v4699
        %v4790 = vpack.c.b16 %v4702, %v4701
        %v4791 = vpack.c.b16 %v4704, %v4703
        %v4792 = vpack.c.b16 %v4706, %v4705
        %v4793 = vpack.c.b16 %v4708, %v4707
        %v4794 = vpack.c.b16 %v4710, %v4709
        %v4795 = vpack.c.b16 %v4712, %v4711
        %v4796 = vpack.c.b16 %v4714, %v4713
        %v4797 = vpack.c.b16 %v4716, %v4715
        %v4798 = vpack.c.b16 %v4718, %v4717
        %v4799 = vpack.c.b16 %v4720, %v4719
        %v4800 = vpack.c.b16 %v4722, %v4721
        %v4801 = vpack.c.b16 %v4724, %v4723
        %v4802 = vpack.c.b16 %v4726, %v4725
        %v4803 = vpack.c.b16 %v4728, %v4727
        %v4804 = vpack.c.b16 %v4730, %v4729
        %v4805 = vpack.c.b16 %v4732, %v4731
        %v4806 = vpack.c.b16 %v4734, %v4733
        %4879 = vmatpush.bf16.msra.mxu0 %v4742
        %4880 = vmatpush.bf16.msra.mxu0 %v4741
        %4881 = vmatpush.bf16.msra.mxu0 %v4740
        %4882 = vmatpush.bf16.msra.mxu0 %v4739
        %4883 = vmatpush.bf16.msra.mxu0 %v4738
        %4884 = vmatpush.bf16.msra.mxu0 %v4737
        %4885 = vmatpush.bf16.msra.mxu0 %v4736
        %4886 = vmatpush.bf16.msra.mxu0 %v4735
        %4887 = vmatmul.bf16.gmra.mxu0 %v4159
        %v4888 = vpop.f32.mrf.mxu0
        %v4889 = vadd.f32 %v3709, %v4888
        %v4890 = vpop.f32.mrf.mxu0
        %v4891 = vadd.f32 %v3709, %v4890
        %4892 = vmatmul.bf16.gmra.mxu0 %v4168
        %v4893 = vpop.f32.mrf.mxu0
        %v4894 = vadd.f32 %v3709, %v4893
        %v4895 = vpop.f32.mrf.mxu0
        %v4896 = vadd.f32 %v3709, %v4895
        %4897 = vmatmul.bf16.gmra.mxu0 %v4177
        %v4898 = vpop.f32.mrf.mxu0
        %v4899 = vadd.f32 %v3709, %v4898
        %v4900 = vpop.f32.mrf.mxu0
        %v4901 = vadd.f32 %v3709, %v4900
        %4902 = vmatmul.bf16.gmra.mxu0 %v4186
        %v4903 = vpop.f32.mrf.mxu0
        %v4904 = vadd.f32 %v3709, %v4903
        %v4905 = vpop.f32.mrf.mxu0
        %v4906 = vadd.f32 %v3709, %v4905
        %4907 = vmatmul.bf16.gmra.mxu0 %v4195
        %v4908 = vpop.f32.mrf.mxu0
        %v4909 = vadd.f32 %v3709, %v4908
        %v4910 = vpop.f32.mrf.mxu0
        %v4911 = vadd.f32 %v3709, %v4910
        %4912 = vmatmul.bf16.gmra.mxu0 %v4204
        %v4913 = vpop.f32.mrf.mxu0
        %v4914 = vadd.f32 %v3709, %v4913
        %v4915 = vpop.f32.mrf.mxu0
        %v4916 = vadd.f32 %v3709, %v4915
        %4917 = vmatmul.bf16.gmra.mxu0 %v4213
        %v4918 = vpop.f32.mrf.mxu0
        %v4919 = vadd.f32 %v3709, %v4918
        %v4920 = vpop.f32.mrf.mxu0
        %v4921 = vadd.f32 %v3709, %v4920
        %4922 = vmatmul.bf16.gmra.mxu0 %v4222
        %v4923 = vpop.f32.mrf.mxu0
        %v4924 = vadd.f32 %v3709, %v4923
        %v4925 = vpop.f32.mrf.mxu0
        %v4926 = vadd.f32 %v3709, %v4925
        %4927 = vmatmul.bf16.gmra.mxu0 %v4231
        %v4928 = vpop.f32.mrf.mxu0
        %v4929 = vadd.f32 %v3709, %v4928
        %v4930 = vpop.f32.mrf.mxu0
        %v4931 = vadd.f32 %v3709, %v4930
        %4932 = vmatmul.bf16.gmra.mxu0 %v4240
        %v4933 = vpop.f32.mrf.mxu0
        %v4934 = vadd.f32 %v3709, %v4933
        %v4935 = vpop.f32.mrf.mxu0
        %v4936 = vadd.f32 %v3709, %v4935
        %4937 = vmatmul.bf16.gmra.mxu0 %v4249
        %v4938 = vpop.f32.mrf.mxu0
        %v4939 = vadd.f32 %v3709, %v4938
        %v4940 = vpop.f32.mrf.mxu0
        %v4941 = vadd.f32 %v3709, %v4940
        %4942 = vmatmul.bf16.gmra.mxu0 %v4258
        %v4943 = vpop.f32.mrf.mxu0
        %v4944 = vadd.f32 %v3709, %v4943
        %v4945 = vpop.f32.mrf.mxu0
        %v4946 = vadd.f32 %v3709, %v4945
        %4947 = vmatmul.bf16.gmra.mxu0 %v4267
        %v4948 = vpop.f32.mrf.mxu0
        %v4949 = vadd.f32 %v3709, %v4948
        %v4950 = vpop.f32.mrf.mxu0
        %v4951 = vadd.f32 %v3709, %v4950
        %4952 = vmatmul.bf16.gmra.mxu0 %v4276
        %v4953 = vpop.f32.mrf.mxu0
        %v4954 = vadd.f32 %v3709, %v4953
        %v4955 = vpop.f32.mrf.mxu0
        %v4956 = vadd.f32 %v3709, %v4955
        %4957 = vmatmul.bf16.gmra.mxu0 %v4285
        %v4958 = vpop.f32.mrf.mxu0
        %v4959 = vadd.f32 %v3709, %v4958
        %v4960 = vpop.f32.mrf.mxu0
        %v4961 = vadd.f32 %v3709, %v4960
        %4962 = vmatmul.bf16.gmra.mxu0 %v4294
        %v4963 = vpop.f32.mrf.mxu0
        %v4964 = vadd.f32 %v3709, %v4963
        %v4965 = vpop.f32.mrf.mxu0
        %v4966 = vadd.f32 %v3709, %v4965
        %4967 = vdwg.mxu0
        %4968 = vmatpush.bf16.msra.mxu0 %v4750
        %4969 = vmatpush.bf16.msra.mxu0 %v4749
        %4970 = vmatpush.bf16.msra.mxu0 %v4748
        %4971 = vmatpush.bf16.msra.mxu0 %v4747
        %4972 = vmatpush.bf16.msra.mxu0 %v4746
        %4973 = vmatpush.bf16.msra.mxu0 %v4745
        %4974 = vmatpush.bf16.msra.mxu0 %v4744
        %4975 = vmatpush.bf16.msra.mxu0 %v4743
        %4976 = vmatmul.bf16.gmra.mxu0 %v4160
        %v4977 = vpop.f32.mrf.mxu0
        %v4978 = vadd.f32 %v4889, %v4977
        %v4979 = vpop.f32.mrf.mxu0
        %v4980 = vadd.f32 %v4891, %v4979
        %4981 = vmatmul.bf16.gmra.mxu0 %v4169
        %v4982 = vpop.f32.mrf.mxu0
        %v4983 = vadd.f32 %v4894, %v4982
        %v4984 = vpop.f32.mrf.mxu0
        %v4985 = vadd.f32 %v4896, %v4984
        %4986 = vmatmul.bf16.gmra.mxu0 %v4178
        %v4987 = vpop.f32.mrf.mxu0
        %v4988 = vadd.f32 %v4899, %v4987
        %v4989 = vpop.f32.mrf.mxu0
        %v4990 = vadd.f32 %v4901, %v4989
        %4991 = vmatmul.bf16.gmra.mxu0 %v4187
        %v4992 = vpop.f32.mrf.mxu0
        %v4993 = vadd.f32 %v4904, %v4992
        %v4994 = vpop.f32.mrf.mxu0
        %v4995 = vadd.f32 %v4906, %v4994
        %4996 = vmatmul.bf16.gmra.mxu0 %v4196
        %v4997 = vpop.f32.mrf.mxu0
        %v4998 = vadd.f32 %v4909, %v4997
        %v4999 = vpop.f32.mrf.mxu0
        %v5000 = vadd.f32 %v4911, %v4999
        %5001 = vmatmul.bf16.gmra.mxu0 %v4205
        %v5002 = vpop.f32.mrf.mxu0
        %v5003 = vadd.f32 %v4914, %v5002
        %v5004 = vpop.f32.mrf.mxu0
        %v5005 = vadd.f32 %v4916, %v5004
        %5006 = vmatmul.bf16.gmra.mxu0 %v4214
        %v5007 = vpop.f32.mrf.mxu0
        %v5008 = vadd.f32 %v4919, %v5007
        %v5009 = vpop.f32.mrf.mxu0
        %v5010 = vadd.f32 %v4921, %v5009
        %5011 = vmatmul.bf16.gmra.mxu0 %v4223
        %v5012 = vpop.f32.mrf.mxu0
        %v5013 = vadd.f32 %v4924, %v5012
        %v5014 = vpop.f32.mrf.mxu0
        %v5015 = vadd.f32 %v4926, %v5014
        %5016 = vmatmul.bf16.gmra.mxu0 %v4232
        %v5017 = vpop.f32.mrf.mxu0
        %v5018 = vadd.f32 %v4929, %v5017
        %v5019 = vpop.f32.mrf.mxu0
        %v5020 = vadd.f32 %v4931, %v5019
        %5021 = vmatmul.bf16.gmra.mxu0 %v4241
        %v5022 = vpop.f32.mrf.mxu0
        %v5023 = vadd.f32 %v4934, %v5022
        %v5024 = vpop.f32.mrf.mxu0
        %v5025 = vadd.f32 %v4936, %v5024
        %5026 = vmatmul.bf16.gmra.mxu0 %v4250
        %v5027 = vpop.f32.mrf.mxu0
        %v5028 = vadd.f32 %v4939, %v5027
        %v5029 = vpop.f32.mrf.mxu0
        %v5030 = vadd.f32 %v4941, %v5029
        %5031 = vmatmul.bf16.gmra.mxu0 %v4259
        %v5032 = vpop.f32.mrf.mxu0
        %v5033 = vadd.f32 %v4944, %v5032
        %v5034 = vpop.f32.mrf.mxu0
        %v5035 = vadd.f32 %v4946, %v5034
        %5036 = vmatmul.bf16.gmra.mxu0 %v4268
        %v5037 = vpop.f32.mrf.mxu0
        %v5038 = vadd.f32 %v4949, %v5037
        %v5039 = vpop.f32.mrf.mxu0
        %v5040 = vadd.f32 %v4951, %v5039
        %5041 = vmatmul.bf16.gmra.mxu0 %v4277
        %v5042 = vpop.f32.mrf.mxu0
        %v5043 = vadd.f32 %v4954, %v5042
        %v5044 = vpop.f32.mrf.mxu0
        %v5045 = vadd.f32 %v4956, %v5044
        %5046 = vmatmul.bf16.gmra.mxu0 %v4286
        %v5047 = vpop.f32.mrf.mxu0
        %v5048 = vadd.f32 %v4959, %v5047
        %v5049 = vpop.f32.mrf.mxu0
        %v5050 = vadd.f32 %v4961, %v5049
        %5051 = vmatmul.bf16.gmra.mxu0 %v4295
        %v5052 = vpop.f32.mrf.mxu0
        %v5053 = vadd.f32 %v4964, %v5052
        %v5054 = vpop.f32.mrf.mxu0
        %v5055 = vadd.f32 %v4966, %v5054
        %5056 = vdwg.mxu0
        %5057 = vmatpush.bf16.msra.mxu0 %v4758
        %5058 = vmatpush.bf16.msra.mxu0 %v4757
        %5059 = vmatpush.bf16.msra.mxu0 %v4756
        %5060 = vmatpush.bf16.msra.mxu0 %v4755
        %5061 = vmatpush.bf16.msra.mxu0 %v4754
        %5062 = vmatpush.bf16.msra.mxu0 %v4753
        %5063 = vmatpush.bf16.msra.mxu0 %v4752
        %5064 = vmatpush.bf16.msra.mxu0 %v4751
        %5065 = vmatmul.bf16.gmra.mxu0 %v4161
        %v5066 = vpop.f32.mrf.mxu0
        %v5067 = vadd.f32 %v4978, %v5066
        %v5068 = vpop.f32.mrf.mxu0
        %v5069 = vadd.f32 %v4980, %v5068
        %5070 = vmatmul.bf16.gmra.mxu0 %v4170
        %v5071 = vpop.f32.mrf.mxu0
        %v5072 = vadd.f32 %v4983, %v5071
        %v5073 = vpop.f32.mrf.mxu0
        %v5074 = vadd.f32 %v4985, %v5073
        %5075 = vmatmul.bf16.gmra.mxu0 %v4179
        %v5076 = vpop.f32.mrf.mxu0
        %v5077 = vadd.f32 %v4988, %v5076
        %v5078 = vpop.f32.mrf.mxu0
        %v5079 = vadd.f32 %v4990, %v5078
        %5080 = vmatmul.bf16.gmra.mxu0 %v4188
        %v5081 = vpop.f32.mrf.mxu0
        %v5082 = vadd.f32 %v4993, %v5081
        %v5083 = vpop.f32.mrf.mxu0
        %v5084 = vadd.f32 %v4995, %v5083
        %5085 = vmatmul.bf16.gmra.mxu0 %v4197
        %v5086 = vpop.f32.mrf.mxu0
        %v5087 = vadd.f32 %v4998, %v5086
        %v5088 = vpop.f32.mrf.mxu0
        %v5089 = vadd.f32 %v5000, %v5088
        %5090 = vmatmul.bf16.gmra.mxu0 %v4206
        %v5091 = vpop.f32.mrf.mxu0
        %v5092 = vadd.f32 %v5003, %v5091
        %v5093 = vpop.f32.mrf.mxu0
        %v5094 = vadd.f32 %v5005, %v5093
        %5095 = vmatmul.bf16.gmra.mxu0 %v4215
        %v5096 = vpop.f32.mrf.mxu0
        %v5097 = vadd.f32 %v5008, %v5096
        %v5098 = vpop.f32.mrf.mxu0
        %v5099 = vadd.f32 %v5010, %v5098
        %5100 = vmatmul.bf16.gmra.mxu0 %v4224
        %v5101 = vpop.f32.mrf.mxu0
        %v5102 = vadd.f32 %v5013, %v5101
        %v5103 = vpop.f32.mrf.mxu0
        %v5104 = vadd.f32 %v5015, %v5103
        %5105 = vmatmul.bf16.gmra.mxu0 %v4233
        %v5106 = vpop.f32.mrf.mxu0
        %v5107 = vadd.f32 %v5018, %v5106
        %v5108 = vpop.f32.mrf.mxu0
        %v5109 = vadd.f32 %v5020, %v5108
        %5110 = vmatmul.bf16.gmra.mxu0 %v4242
        %v5111 = vpop.f32.mrf.mxu0
        %v5112 = vadd.f32 %v5023, %v5111
        %v5113 = vpop.f32.mrf.mxu0
        %v5114 = vadd.f32 %v5025, %v5113
        %5115 = vmatmul.bf16.gmra.mxu0 %v4251
        %v5116 = vpop.f32.mrf.mxu0
        %v5117 = vadd.f32 %v5028, %v5116
        %v5118 = vpop.f32.mrf.mxu0
        %v5119 = vadd.f32 %v5030, %v5118
        %5120 = vmatmul.bf16.gmra.mxu0 %v4260
        %v5121 = vpop.f32.mrf.mxu0
        %v5122 = vadd.f32 %v5033, %v5121
        %v5123 = vpop.f32.mrf.mxu0
        %v5124 = vadd.f32 %v5035, %v5123
        %5125 = vmatmul.bf16.gmra.mxu0 %v4269
        %v5126 = vpop.f32.mrf.mxu0
        %v5127 = vadd.f32 %v5038, %v5126
        %v5128 = vpop.f32.mrf.mxu0
        %v5129 = vadd.f32 %v5040, %v5128
        %5130 = vmatmul.bf16.gmra.mxu0 %v4278
        %v5131 = vpop.f32.mrf.mxu0
        %v5132 = vadd.f32 %v5043, %v5131
        %v5133 = vpop.f32.mrf.mxu0
        %v5134 = vadd.f32 %v5045, %v5133
        %5135 = vmatmul.bf16.gmra.mxu0 %v4287
        %v5136 = vpop.f32.mrf.mxu0
        %v5137 = vadd.f32 %v5048, %v5136
        %v5138 = vpop.f32.mrf.mxu0
        %v5139 = vadd.f32 %v5050, %v5138
        %5140 = vmatmul.bf16.gmra.mxu0 %v4296
        %v5141 = vpop.f32.mrf.mxu0
        %v5142 = vadd.f32 %v5053, %v5141
        %v5143 = vpop.f32.mrf.mxu0
        %v5144 = vadd.f32 %v5055, %v5143
        %5145 = vdwg.mxu0
        %5146 = vmatpush.bf16.msra.mxu0 %v4766
        %5147 = vmatpush.bf16.msra.mxu0 %v4765
        %5148 = vmatpush.bf16.msra.mxu0 %v4764
        %5149 = vmatpush.bf16.msra.mxu0 %v4763
        %5150 = vmatpush.bf16.msra.mxu0 %v4762
        %5151 = vmatpush.bf16.msra.mxu0 %v4761
        %5152 = vmatpush.bf16.msra.mxu0 %v4760
        %5153 = vmatpush.bf16.msra.mxu0 %v4759
        %5154 = vmatmul.bf16.gmra.mxu0 %v4162
        %v5155 = vpop.f32.mrf.mxu0
        %v5156 = vadd.f32 %v5067, %v5155
        %v5157 = vpop.f32.mrf.mxu0
        %v5158 = vadd.f32 %v5069, %v5157
        %5159 = vmatmul.bf16.gmra.mxu0 %v4171
        %v5160 = vpop.f32.mrf.mxu0
        %v5161 = vadd.f32 %v5072, %v5160
        %v5162 = vpop.f32.mrf.mxu0
        %v5163 = vadd.f32 %v5074, %v5162
        %5164 = vmatmul.bf16.gmra.mxu0 %v4180
        %v5165 = vpop.f32.mrf.mxu0
        %v5166 = vadd.f32 %v5077, %v5165
        %v5167 = vpop.f32.mrf.mxu0
        %v5168 = vadd.f32 %v5079, %v5167
        %5169 = vmatmul.bf16.gmra.mxu0 %v4189
        %v5170 = vpop.f32.mrf.mxu0
        %v5171 = vadd.f32 %v5082, %v5170
        %v5172 = vpop.f32.mrf.mxu0
        %v5173 = vadd.f32 %v5084, %v5172
        %5174 = vmatmul.bf16.gmra.mxu0 %v4198
        %v5175 = vpop.f32.mrf.mxu0
        %v5176 = vadd.f32 %v5087, %v5175
        %v5177 = vpop.f32.mrf.mxu0
        %v5178 = vadd.f32 %v5089, %v5177
        %5179 = vmatmul.bf16.gmra.mxu0 %v4207
        %v5180 = vpop.f32.mrf.mxu0
        %v5181 = vadd.f32 %v5092, %v5180
        %v5182 = vpop.f32.mrf.mxu0
        %v5183 = vadd.f32 %v5094, %v5182
        %5184 = vmatmul.bf16.gmra.mxu0 %v4216
        %v5185 = vpop.f32.mrf.mxu0
        %v5186 = vadd.f32 %v5097, %v5185
        %v5187 = vpop.f32.mrf.mxu0
        %v5188 = vadd.f32 %v5099, %v5187
        %5189 = vmatmul.bf16.gmra.mxu0 %v4225
        %v5190 = vpop.f32.mrf.mxu0
        %v5191 = vadd.f32 %v5102, %v5190
        %v5192 = vpop.f32.mrf.mxu0
        %v5193 = vadd.f32 %v5104, %v5192
        %5194 = vmatmul.bf16.gmra.mxu0 %v4234
        %v5195 = vpop.f32.mrf.mxu0
        %v5196 = vadd.f32 %v5107, %v5195
        %v5197 = vpop.f32.mrf.mxu0
        %v5198 = vadd.f32 %v5109, %v5197
        %5199 = vmatmul.bf16.gmra.mxu0 %v4243
        %v5200 = vpop.f32.mrf.mxu0
        %v5201 = vadd.f32 %v5112, %v5200
        %v5202 = vpop.f32.mrf.mxu0
        %v5203 = vadd.f32 %v5114, %v5202
        %5204 = vmatmul.bf16.gmra.mxu0 %v4252
        %v5205 = vpop.f32.mrf.mxu0
        %v5206 = vadd.f32 %v5117, %v5205
        %v5207 = vpop.f32.mrf.mxu0
        %v5208 = vadd.f32 %v5119, %v5207
        %5209 = vmatmul.bf16.gmra.mxu0 %v4261
        %v5210 = vpop.f32.mrf.mxu0
        %v5211 = vadd.f32 %v5122, %v5210
        %v5212 = vpop.f32.mrf.mxu0
        %v5213 = vadd.f32 %v5124, %v5212
        %5214 = vmatmul.bf16.gmra.mxu0 %v4270
        %v5215 = vpop.f32.mrf.mxu0
        %v5216 = vadd.f32 %v5127, %v5215
        %v5217 = vpop.f32.mrf.mxu0
        %v5218 = vadd.f32 %v5129, %v5217
        %5219 = vmatmul.bf16.gmra.mxu0 %v4279
        %v5220 = vpop.f32.mrf.mxu0
        %v5221 = vadd.f32 %v5132, %v5220
        %v5222 = vpop.f32.mrf.mxu0
        %v5223 = vadd.f32 %v5134, %v5222
        %5224 = vmatmul.bf16.gmra.mxu0 %v4288
        %v5225 = vpop.f32.mrf.mxu0
        %v5226 = vadd.f32 %v5137, %v5225
        %v5227 = vpop.f32.mrf.mxu0
        %v5228 = vadd.f32 %v5139, %v5227
        %5229 = vmatmul.bf16.gmra.mxu0 %v4297
        %v5230 = vpop.f32.mrf.mxu0
        %v5231 = vadd.f32 %v5142, %v5230
        %v5232 = vpop.f32.mrf.mxu0
        %v5233 = vadd.f32 %v5144, %v5232
        %5234 = vdwg.mxu0
        %5235 = vmatpush.bf16.msra.mxu0 %v4774
        %5236 = vmatpush.bf16.msra.mxu0 %v4773
        %5237 = vmatpush.bf16.msra.mxu0 %v4772
        %5238 = vmatpush.bf16.msra.mxu0 %v4771
        %5239 = vmatpush.bf16.msra.mxu0 %v4770
        %5240 = vmatpush.bf16.msra.mxu0 %v4769
        %5241 = vmatpush.bf16.msra.mxu0 %v4768
        %5242 = vmatpush.bf16.msra.mxu0 %v4767
        %5243 = vmatmul.bf16.gmra.mxu0 %v4163
        %v5244 = vpop.f32.mrf.mxu0
        %v5245 = vadd.f32 %v5156, %v5244
        %v5246 = vpop.f32.mrf.mxu0
        %v5247 = vadd.f32 %v5158, %v5246
        %5248 = vmatmul.bf16.gmra.mxu0 %v4172
        %v5249 = vpop.f32.mrf.mxu0
        %v5250 = vadd.f32 %v5161, %v5249
        %v5251 = vpop.f32.mrf.mxu0
        %v5252 = vadd.f32 %v5163, %v5251
        %5253 = vmatmul.bf16.gmra.mxu0 %v4181
        %v5254 = vpop.f32.mrf.mxu0
        %v5255 = vadd.f32 %v5166, %v5254
        %v5256 = vpop.f32.mrf.mxu0
        %v5257 = vadd.f32 %v5168, %v5256
        %5258 = vmatmul.bf16.gmra.mxu0 %v4190
        %v5259 = vpop.f32.mrf.mxu0
        %v5260 = vadd.f32 %v5171, %v5259
        %v5261 = vpop.f32.mrf.mxu0
        %v5262 = vadd.f32 %v5173, %v5261
        %5263 = vmatmul.bf16.gmra.mxu0 %v4199
        %v5264 = vpop.f32.mrf.mxu0
        %v5265 = vadd.f32 %v5176, %v5264
        %v5266 = vpop.f32.mrf.mxu0
        %v5267 = vadd.f32 %v5178, %v5266
        %5268 = vmatmul.bf16.gmra.mxu0 %v4208
        %v5269 = vpop.f32.mrf.mxu0
        %v5270 = vadd.f32 %v5181, %v5269
        %v5271 = vpop.f32.mrf.mxu0
        %v5272 = vadd.f32 %v5183, %v5271
        %5273 = vmatmul.bf16.gmra.mxu0 %v4217
        %v5274 = vpop.f32.mrf.mxu0
        %v5275 = vadd.f32 %v5186, %v5274
        %v5276 = vpop.f32.mrf.mxu0
        %v5277 = vadd.f32 %v5188, %v5276
        %5278 = vmatmul.bf16.gmra.mxu0 %v4226
        %v5279 = vpop.f32.mrf.mxu0
        %v5280 = vadd.f32 %v5191, %v5279
        %v5281 = vpop.f32.mrf.mxu0
        %v5282 = vadd.f32 %v5193, %v5281
        %5283 = vmatmul.bf16.gmra.mxu0 %v4235
        %v5284 = vpop.f32.mrf.mxu0
        %v5285 = vadd.f32 %v5196, %v5284
        %v5286 = vpop.f32.mrf.mxu0
        %v5287 = vadd.f32 %v5198, %v5286
        %5288 = vmatmul.bf16.gmra.mxu0 %v4244
        %v5289 = vpop.f32.mrf.mxu0
        %v5290 = vadd.f32 %v5201, %v5289
        %v5291 = vpop.f32.mrf.mxu0
        %v5292 = vadd.f32 %v5203, %v5291
        %5293 = vmatmul.bf16.gmra.mxu0 %v4253
        %v5294 = vpop.f32.mrf.mxu0
        %v5295 = vadd.f32 %v5206, %v5294
        %v5296 = vpop.f32.mrf.mxu0
        %v5297 = vadd.f32 %v5208, %v5296
        %5298 = vmatmul.bf16.gmra.mxu0 %v4262
        %v5299 = vpop.f32.mrf.mxu0
        %v5300 = vadd.f32 %v5211, %v5299
        %v5301 = vpop.f32.mrf.mxu0
        %v5302 = vadd.f32 %v5213, %v5301
        %5303 = vmatmul.bf16.gmra.mxu0 %v4271
        %v5304 = vpop.f32.mrf.mxu0
        %v5305 = vadd.f32 %v5216, %v5304
        %v5306 = vpop.f32.mrf.mxu0
        %v5307 = vadd.f32 %v5218, %v5306
        %5308 = vmatmul.bf16.gmra.mxu0 %v4280
        %v5309 = vpop.f32.mrf.mxu0
        %v5310 = vadd.f32 %v5221, %v5309
        %v5311 = vpop.f32.mrf.mxu0
        %v5312 = vadd.f32 %v5223, %v5311
        %5313 = vmatmul.bf16.gmra.mxu0 %v4289
        %v5314 = vpop.f32.mrf.mxu0
        %v5315 = vadd.f32 %v5226, %v5314
        %v5316 = vpop.f32.mrf.mxu0
        %v5317 = vadd.f32 %v5228, %v5316
        %5318 = vmatmul.bf16.gmra.mxu0 %v4298
        %v5319 = vpop.f32.mrf.mxu0
        %v5320 = vadd.f32 %v5231, %v5319
        %v5321 = vpop.f32.mrf.mxu0
        %v5322 = vadd.f32 %v5233, %v5321
        %5323 = vdwg.mxu0
        %5324 = vmatpush.bf16.msra.mxu0 %v4782
        %5325 = vmatpush.bf16.msra.mxu0 %v4781
        %5326 = vmatpush.bf16.msra.mxu0 %v4780
        %5327 = vmatpush.bf16.msra.mxu0 %v4779
        %5328 = vmatpush.bf16.msra.mxu0 %v4778
        %5329 = vmatpush.bf16.msra.mxu0 %v4777
        %5330 = vmatpush.bf16.msra.mxu0 %v4776
        %5331 = vmatpush.bf16.msra.mxu0 %v4775
        %5332 = vmatmul.bf16.gmra.mxu0 %v4164
        %v5333 = vpop.f32.mrf.mxu0
        %v5334 = vadd.f32 %v5245, %v5333
        %v5335 = vpop.f32.mrf.mxu0
        %v5336 = vadd.f32 %v5247, %v5335
        %5337 = vmatmul.bf16.gmra.mxu0 %v4173
        %v5338 = vpop.f32.mrf.mxu0
        %v5339 = vadd.f32 %v5250, %v5338
        %v5340 = vpop.f32.mrf.mxu0
        %v5341 = vadd.f32 %v5252, %v5340
        %5342 = vmatmul.bf16.gmra.mxu0 %v4182
        %v5343 = vpop.f32.mrf.mxu0
        %v5344 = vadd.f32 %v5255, %v5343
        %v5345 = vpop.f32.mrf.mxu0
        %v5346 = vadd.f32 %v5257, %v5345
        %5347 = vmatmul.bf16.gmra.mxu0 %v4191
        %v5348 = vpop.f32.mrf.mxu0
        %v5349 = vadd.f32 %v5260, %v5348
        %v5350 = vpop.f32.mrf.mxu0
        %v5351 = vadd.f32 %v5262, %v5350
        %5352 = vmatmul.bf16.gmra.mxu0 %v4200
        %v5353 = vpop.f32.mrf.mxu0
        %v5354 = vadd.f32 %v5265, %v5353
        %v5355 = vpop.f32.mrf.mxu0
        %v5356 = vadd.f32 %v5267, %v5355
        %5357 = vmatmul.bf16.gmra.mxu0 %v4209
        %v5358 = vpop.f32.mrf.mxu0
        %v5359 = vadd.f32 %v5270, %v5358
        %v5360 = vpop.f32.mrf.mxu0
        %v5361 = vadd.f32 %v5272, %v5360
        %5362 = vmatmul.bf16.gmra.mxu0 %v4218
        %v5363 = vpop.f32.mrf.mxu0
        %v5364 = vadd.f32 %v5275, %v5363
        %v5365 = vpop.f32.mrf.mxu0
        %v5366 = vadd.f32 %v5277, %v5365
        %5367 = vmatmul.bf16.gmra.mxu0 %v4227
        %v5368 = vpop.f32.mrf.mxu0
        %v5369 = vadd.f32 %v5280, %v5368
        %v5370 = vpop.f32.mrf.mxu0
        %v5371 = vadd.f32 %v5282, %v5370
        %5372 = vmatmul.bf16.gmra.mxu0 %v4236
        %v5373 = vpop.f32.mrf.mxu0
        %v5374 = vadd.f32 %v5285, %v5373
        %v5375 = vpop.f32.mrf.mxu0
        %v5376 = vadd.f32 %v5287, %v5375
        %5377 = vmatmul.bf16.gmra.mxu0 %v4245
        %v5378 = vpop.f32.mrf.mxu0
        %v5379 = vadd.f32 %v5290, %v5378
        %v5380 = vpop.f32.mrf.mxu0
        %v5381 = vadd.f32 %v5292, %v5380
        %5382 = vmatmul.bf16.gmra.mxu0 %v4254
        %v5383 = vpop.f32.mrf.mxu0
        %v5384 = vadd.f32 %v5295, %v5383
        %v5385 = vpop.f32.mrf.mxu0
        %v5386 = vadd.f32 %v5297, %v5385
        %5387 = vmatmul.bf16.gmra.mxu0 %v4263
        %v5388 = vpop.f32.mrf.mxu0
        %v5389 = vadd.f32 %v5300, %v5388
        %v5390 = vpop.f32.mrf.mxu0
        %v5391 = vadd.f32 %v5302, %v5390
        %5392 = vmatmul.bf16.gmra.mxu0 %v4272
        %v5393 = vpop.f32.mrf.mxu0
        %v5394 = vadd.f32 %v5305, %v5393
        %v5395 = vpop.f32.mrf.mxu0
        %v5396 = vadd.f32 %v5307, %v5395
        %5397 = vmatmul.bf16.gmra.mxu0 %v4281
        %v5398 = vpop.f32.mrf.mxu0
        %v5399 = vadd.f32 %v5310, %v5398
        %v5400 = vpop.f32.mrf.mxu0
        %v5401 = vadd.f32 %v5312, %v5400
        %5402 = vmatmul.bf16.gmra.mxu0 %v4290
        %v5403 = vpop.f32.mrf.mxu0
        %v5404 = vadd.f32 %v5315, %v5403
        %v5405 = vpop.f32.mrf.mxu0
        %v5406 = vadd.f32 %v5317, %v5405
        %5407 = vmatmul.bf16.gmra.mxu0 %v4299
        %v5408 = vpop.f32.mrf.mxu0
        %v5409 = vadd.f32 %v5320, %v5408
        %v5410 = vpop.f32.mrf.mxu0
        %v5411 = vadd.f32 %v5322, %v5410
        %5412 = vdwg.mxu0
        %5413 = vmatpush.bf16.msra.mxu0 %v4790
        %5414 = vmatpush.bf16.msra.mxu0 %v4789
        %5415 = vmatpush.bf16.msra.mxu0 %v4788
        %5416 = vmatpush.bf16.msra.mxu0 %v4787
        %5417 = vmatpush.bf16.msra.mxu0 %v4786
        %5418 = vmatpush.bf16.msra.mxu0 %v4785
        %5419 = vmatpush.bf16.msra.mxu0 %v4784
        %5420 = vmatpush.bf16.msra.mxu0 %v4783
        %5421 = vmatmul.bf16.gmra.mxu0 %v4165
        %v5422 = vpop.f32.mrf.mxu0
        %v5423 = vadd.f32 %v5334, %v5422
        %v5424 = vpop.f32.mrf.mxu0
        %v5425 = vadd.f32 %v5336, %v5424
        %5426 = vmatmul.bf16.gmra.mxu0 %v4174
        %v5427 = vpop.f32.mrf.mxu0
        %v5428 = vadd.f32 %v5339, %v5427
        %v5429 = vpop.f32.mrf.mxu0
        %v5430 = vadd.f32 %v5341, %v5429
        %5431 = vmatmul.bf16.gmra.mxu0 %v4183
        %v5432 = vpop.f32.mrf.mxu0
        %v5433 = vadd.f32 %v5344, %v5432
        %v5434 = vpop.f32.mrf.mxu0
        %v5435 = vadd.f32 %v5346, %v5434
        %5436 = vmatmul.bf16.gmra.mxu0 %v4192
        %v5437 = vpop.f32.mrf.mxu0
        %v5438 = vadd.f32 %v5349, %v5437
        %v5439 = vpop.f32.mrf.mxu0
        %v5440 = vadd.f32 %v5351, %v5439
        %5441 = vmatmul.bf16.gmra.mxu0 %v4201
        %v5442 = vpop.f32.mrf.mxu0
        %v5443 = vadd.f32 %v5354, %v5442
        %v5444 = vpop.f32.mrf.mxu0
        %v5445 = vadd.f32 %v5356, %v5444
        %5446 = vmatmul.bf16.gmra.mxu0 %v4210
        %v5447 = vpop.f32.mrf.mxu0
        %v5448 = vadd.f32 %v5359, %v5447
        %v5449 = vpop.f32.mrf.mxu0
        %v5450 = vadd.f32 %v5361, %v5449
        %5451 = vmatmul.bf16.gmra.mxu0 %v4219
        %v5452 = vpop.f32.mrf.mxu0
        %v5453 = vadd.f32 %v5364, %v5452
        %v5454 = vpop.f32.mrf.mxu0
        %v5455 = vadd.f32 %v5366, %v5454
        %5456 = vmatmul.bf16.gmra.mxu0 %v4228
        %v5457 = vpop.f32.mrf.mxu0
        %v5458 = vadd.f32 %v5369, %v5457
        %v5459 = vpop.f32.mrf.mxu0
        %v5460 = vadd.f32 %v5371, %v5459
        %5461 = vmatmul.bf16.gmra.mxu0 %v4237
        %v5462 = vpop.f32.mrf.mxu0
        %v5463 = vadd.f32 %v5374, %v5462
        %v5464 = vpop.f32.mrf.mxu0
        %v5465 = vadd.f32 %v5376, %v5464
        %5466 = vmatmul.bf16.gmra.mxu0 %v4246
        %v5467 = vpop.f32.mrf.mxu0
        %v5468 = vadd.f32 %v5379, %v5467
        %v5469 = vpop.f32.mrf.mxu0
        %v5470 = vadd.f32 %v5381, %v5469
        %5471 = vmatmul.bf16.gmra.mxu0 %v4255
        %v5472 = vpop.f32.mrf.mxu0
        %v5473 = vadd.f32 %v5384, %v5472
        %v5474 = vpop.f32.mrf.mxu0
        %v5475 = vadd.f32 %v5386, %v5474
        %5476 = vmatmul.bf16.gmra.mxu0 %v4264
        %v5477 = vpop.f32.mrf.mxu0
        %v5478 = vadd.f32 %v5389, %v5477
        %v5479 = vpop.f32.mrf.mxu0
        %v5480 = vadd.f32 %v5391, %v5479
        %5481 = vmatmul.bf16.gmra.mxu0 %v4273
        %v5482 = vpop.f32.mrf.mxu0
        %v5483 = vadd.f32 %v5394, %v5482
        %v5484 = vpop.f32.mrf.mxu0
        %v5485 = vadd.f32 %v5396, %v5484
        %5486 = vmatmul.bf16.gmra.mxu0 %v4282
        %v5487 = vpop.f32.mrf.mxu0
        %v5488 = vadd.f32 %v5399, %v5487
        %v5489 = vpop.f32.mrf.mxu0
        %v5490 = vadd.f32 %v5401, %v5489
        %5491 = vmatmul.bf16.gmra.mxu0 %v4291
        %v5492 = vpop.f32.mrf.mxu0
        %v5493 = vadd.f32 %v5404, %v5492
        %v5494 = vpop.f32.mrf.mxu0
        %v5495 = vadd.f32 %v5406, %v5494
        %5496 = vmatmul.bf16.gmra.mxu0 %v4300
        %v5497 = vpop.f32.mrf.mxu0
        %v5498 = vadd.f32 %v5409, %v5497
        %v5499 = vpop.f32.mrf.mxu0
        %v5500 = vadd.f32 %v5411, %v5499
        %5501 = vdwg.mxu0
        %5502 = vmatpush.bf16.msra.mxu0 %v4798
        %5503 = vmatpush.bf16.msra.mxu0 %v4797
        %5504 = vmatpush.bf16.msra.mxu0 %v4796
        %5505 = vmatpush.bf16.msra.mxu0 %v4795
        %5506 = vmatpush.bf16.msra.mxu0 %v4794
        %5507 = vmatpush.bf16.msra.mxu0 %v4793
        %5508 = vmatpush.bf16.msra.mxu0 %v4792
        %5509 = vmatpush.bf16.msra.mxu0 %v4791
        %5510 = vmatmul.bf16.gmra.mxu0 %v4166
        %v5511 = vpop.f32.mrf.mxu0
        %v5512 = vadd.f32 %v5423, %v5511
        %v5513 = vpop.f32.mrf.mxu0
        %v5514 = vadd.f32 %v5425, %v5513
        %5515 = vmatmul.bf16.gmra.mxu0 %v4175
        %v5516 = vpop.f32.mrf.mxu0
        %v5517 = vadd.f32 %v5428, %v5516
        %v5518 = vpop.f32.mrf.mxu0
        %v5519 = vadd.f32 %v5430, %v5518
        %5520 = vmatmul.bf16.gmra.mxu0 %v4184
        %v5521 = vpop.f32.mrf.mxu0
        %v5522 = vadd.f32 %v5433, %v5521
        %v5523 = vpop.f32.mrf.mxu0
        %v5524 = vadd.f32 %v5435, %v5523
        %5525 = vmatmul.bf16.gmra.mxu0 %v4193
        %v5526 = vpop.f32.mrf.mxu0
        %v5527 = vadd.f32 %v5438, %v5526
        %v5528 = vpop.f32.mrf.mxu0
        %v5529 = vadd.f32 %v5440, %v5528
        %5530 = vmatmul.bf16.gmra.mxu0 %v4202
        %v5531 = vpop.f32.mrf.mxu0
        %v5532 = vadd.f32 %v5443, %v5531
        %v5533 = vpop.f32.mrf.mxu0
        %v5534 = vadd.f32 %v5445, %v5533
        %5535 = vmatmul.bf16.gmra.mxu0 %v4211
        %v5536 = vpop.f32.mrf.mxu0
        %v5537 = vadd.f32 %v5448, %v5536
        %v5538 = vpop.f32.mrf.mxu0
        %v5539 = vadd.f32 %v5450, %v5538
        %5540 = vmatmul.bf16.gmra.mxu0 %v4220
        %v5541 = vpop.f32.mrf.mxu0
        %v5542 = vadd.f32 %v5453, %v5541
        %v5543 = vpop.f32.mrf.mxu0
        %v5544 = vadd.f32 %v5455, %v5543
        %5545 = vmatmul.bf16.gmra.mxu0 %v4229
        %v5546 = vpop.f32.mrf.mxu0
        %v5547 = vadd.f32 %v5458, %v5546
        %v5548 = vpop.f32.mrf.mxu0
        %v5549 = vadd.f32 %v5460, %v5548
        %5550 = vmatmul.bf16.gmra.mxu0 %v4238
        %v5551 = vpop.f32.mrf.mxu0
        %v5552 = vadd.f32 %v5463, %v5551
        %v5553 = vpop.f32.mrf.mxu0
        %v5554 = vadd.f32 %v5465, %v5553
        %5555 = vmatmul.bf16.gmra.mxu0 %v4247
        %v5556 = vpop.f32.mrf.mxu0
        %v5557 = vadd.f32 %v5468, %v5556
        %v5558 = vpop.f32.mrf.mxu0
        %v5559 = vadd.f32 %v5470, %v5558
        %5560 = vmatmul.bf16.gmra.mxu0 %v4256
        %v5561 = vpop.f32.mrf.mxu0
        %v5562 = vadd.f32 %v5473, %v5561
        %v5563 = vpop.f32.mrf.mxu0
        %v5564 = vadd.f32 %v5475, %v5563
        %5565 = vmatmul.bf16.gmra.mxu0 %v4265
        %v5566 = vpop.f32.mrf.mxu0
        %v5567 = vadd.f32 %v5478, %v5566
        %v5568 = vpop.f32.mrf.mxu0
        %v5569 = vadd.f32 %v5480, %v5568
        %5570 = vmatmul.bf16.gmra.mxu0 %v4274
        %v5571 = vpop.f32.mrf.mxu0
        %v5572 = vadd.f32 %v5483, %v5571
        %v5573 = vpop.f32.mrf.mxu0
        %v5574 = vadd.f32 %v5485, %v5573
        %5575 = vmatmul.bf16.gmra.mxu0 %v4283
        %v5576 = vpop.f32.mrf.mxu0
        %v5577 = vadd.f32 %v5488, %v5576
        %v5578 = vpop.f32.mrf.mxu0
        %v5579 = vadd.f32 %v5490, %v5578
        %5580 = vmatmul.bf16.gmra.mxu0 %v4292
        %v5581 = vpop.f32.mrf.mxu0
        %v5582 = vadd.f32 %v5493, %v5581
        %v5583 = vpop.f32.mrf.mxu0
        %v5584 = vadd.f32 %v5495, %v5583
        %5585 = vmatmul.bf16.gmra.mxu0 %v4301
        %v5586 = vpop.f32.mrf.mxu0
        %v5587 = vadd.f32 %v5498, %v5586
        %v5588 = vpop.f32.mrf.mxu0
        %v5589 = vadd.f32 %v5500, %v5588
        %5590 = vdwg.mxu0
        %5591 = vmatpush.bf16.msra.mxu0 %v4806
        %5592 = vmatpush.bf16.msra.mxu0 %v4805
        %5593 = vmatpush.bf16.msra.mxu0 %v4804
        %5594 = vmatpush.bf16.msra.mxu0 %v4803
        %5595 = vmatpush.bf16.msra.mxu0 %v4802
        %5596 = vmatpush.bf16.msra.mxu0 %v4801
        %5597 = vmatpush.bf16.msra.mxu0 %v4800
        %5598 = vmatpush.bf16.msra.mxu0 %v4799
        %5599 = vmatmul.bf16.gmra.mxu0 %v4167
        %v5600 = vpop.f32.mrf.mxu0
        %v5601 = vadd.f32 %v5512, %v5600
        %v5602 = vpop.f32.mrf.mxu0
        %v5603 = vadd.f32 %v5514, %v5602
        %5604 = vmatmul.bf16.gmra.mxu0 %v4176
        %v5605 = vpop.f32.mrf.mxu0
        %v5606 = vadd.f32 %v5517, %v5605
        %v5607 = vpop.f32.mrf.mxu0
        %v5608 = vadd.f32 %v5519, %v5607
        %5609 = vmatmul.bf16.gmra.mxu0 %v4185
        %v5610 = vpop.f32.mrf.mxu0
        %v5611 = vadd.f32 %v5522, %v5610
        %v5612 = vpop.f32.mrf.mxu0
        %v5613 = vadd.f32 %v5524, %v5612
        %5614 = vmatmul.bf16.gmra.mxu0 %v4194
        %v5615 = vpop.f32.mrf.mxu0
        %v5616 = vadd.f32 %v5527, %v5615
        %v5617 = vpop.f32.mrf.mxu0
        %v5618 = vadd.f32 %v5529, %v5617
        %5619 = vmatmul.bf16.gmra.mxu0 %v4203
        %v5620 = vpop.f32.mrf.mxu0
        %v5621 = vadd.f32 %v5532, %v5620
        %v5622 = vpop.f32.mrf.mxu0
        %v5623 = vadd.f32 %v5534, %v5622
        %5624 = vmatmul.bf16.gmra.mxu0 %v4212
        %v5625 = vpop.f32.mrf.mxu0
        %v5626 = vadd.f32 %v5537, %v5625
        %v5627 = vpop.f32.mrf.mxu0
        %v5628 = vadd.f32 %v5539, %v5627
        %5629 = vmatmul.bf16.gmra.mxu0 %v4221
        %v5630 = vpop.f32.mrf.mxu0
        %v5631 = vadd.f32 %v5542, %v5630
        %v5632 = vpop.f32.mrf.mxu0
        %v5633 = vadd.f32 %v5544, %v5632
        %5634 = vmatmul.bf16.gmra.mxu0 %v4230
        %v5635 = vpop.f32.mrf.mxu0
        %v5636 = vadd.f32 %v5547, %v5635
        %v5637 = vpop.f32.mrf.mxu0
        %v5638 = vadd.f32 %v5549, %v5637
        %5639 = vmatmul.bf16.gmra.mxu0 %v4239
        %v5640 = vpop.f32.mrf.mxu0
        %v5641 = vadd.f32 %v5552, %v5640
        %v5642 = vpop.f32.mrf.mxu0
        %v5643 = vadd.f32 %v5554, %v5642
        %5644 = vmatmul.bf16.gmra.mxu0 %v4248
        %v5645 = vpop.f32.mrf.mxu0
        %v5646 = vadd.f32 %v5557, %v5645
        %v5647 = vpop.f32.mrf.mxu0
        %v5648 = vadd.f32 %v5559, %v5647
        %5649 = vmatmul.bf16.gmra.mxu0 %v4257
        %v5650 = vpop.f32.mrf.mxu0
        %v5651 = vadd.f32 %v5562, %v5650
        %v5652 = vpop.f32.mrf.mxu0
        %v5653 = vadd.f32 %v5564, %v5652
        %5654 = vmatmul.bf16.gmra.mxu0 %v4266
        %v5655 = vpop.f32.mrf.mxu0
        %v5656 = vadd.f32 %v5567, %v5655
        %v5657 = vpop.f32.mrf.mxu0
        %v5658 = vadd.f32 %v5569, %v5657
        %5659 = vmatmul.bf16.gmra.mxu0 %v4275
        %v5660 = vpop.f32.mrf.mxu0
        %v5661 = vadd.f32 %v5572, %v5660
        %v5662 = vpop.f32.mrf.mxu0
        %v5663 = vadd.f32 %v5574, %v5662
        %5664 = vmatmul.bf16.gmra.mxu0 %v4284
        %v5665 = vpop.f32.mrf.mxu0
        %v5666 = vadd.f32 %v5577, %v5665
        %v5667 = vpop.f32.mrf.mxu0
        %v5668 = vadd.f32 %v5579, %v5667
        %5669 = vmatmul.bf16.gmra.mxu0 %v4293
        %v5670 = vpop.f32.mrf.mxu0
        %v5671 = vadd.f32 %v5582, %v5670
        %v5672 = vpop.f32.mrf.mxu0
        %v5673 = vadd.f32 %v5584, %v5672
        %5674 = vmatmul.bf16.gmra.mxu0 %v4302
        %v5675 = vpop.f32.mrf.mxu0
        %v5676 = vadd.f32 %v5587, %v5675
        %v5677 = vpop.f32.mrf.mxu0
        %v5678 = vadd.f32 %v5589, %v5677
        %5679 = vdwg.mxu0
        %v5680 = vmax.f32 %v5601, 0.0
        %v5681 = vmax.f32 %v5603, 0.0
        %v5682 = vmax.f32 %v5606, 0.0
        %v5683 = vmax.f32 %v5608, 0.0
        %v5684 = vmax.f32 %v5611, 0.0
        %v5685 = vmax.f32 %v5613, 0.0
        %v5686 = vmax.f32 %v5616, 0.0
        %v5687 = vmax.f32 %v5618, 0.0
        %v5688 = vmax.f32 %v5621, 0.0
        %v5689 = vmax.f32 %v5623, 0.0
        %v5690 = vmax.f32 %v5626, 0.0
        %v5691 = vmax.f32 %v5628, 0.0
        %v5692 = vmax.f32 %v5631, 0.0
        %v5693 = vmax.f32 %v5633, 0.0
        %v5694 = vmax.f32 %v5636, 0.0
        %v5695 = vmax.f32 %v5638, 0.0
        %v5696 = vmax.f32 %v5641, 0.0
        %v5697 = vmax.f32 %v5643, 0.0
        %v5698 = vmax.f32 %v5646, 0.0
        %v5699 = vmax.f32 %v5648, 0.0
        %v5700 = vmax.f32 %v5651, 0.0
        %v5701 = vmax.f32 %v5653, 0.0
        %v5702 = vmax.f32 %v5656, 0.0
        %v5703 = vmax.f32 %v5658, 0.0
        %v5704 = vmax.f32 %v5661, 0.0
        %v5705 = vmax.f32 %v5663, 0.0
        %v5706 = vmax.f32 %v5666, 0.0
        %v5707 = vmax.f32 %v5668, 0.0
        %v5708 = vmax.f32 %v5671, 0.0
        %v5709 = vmax.f32 %v5673, 0.0
        %v5710 = vmax.f32 %v5676, 0.0
        %v5711 = vmax.f32 %v5678, 0.0
        %v5712 = vpack.c.bf16 %v5680, %v5680
        %v5713 = vpack.c.bf16 %v5681, %v5681
        %v5714 = vpack.c.bf16 %v5682, %v5682
        %v5715 = vpack.c.bf16 %v5683, %v5683
        %v5716 = vpack.c.bf16 %v5684, %v5684
        %v5717 = vpack.c.bf16 %v5685, %v5685
        %v5718 = vpack.c.bf16 %v5686, %v5686
        %v5719 = vpack.c.bf16 %v5687, %v5687
        %v5720 = vpack.c.bf16 %v5688, %v5688
        %v5721 = vpack.c.bf16 %v5689, %v5689
        %v5722 = vpack.c.bf16 %v5690, %v5690
        %v5723 = vpack.c.bf16 %v5691, %v5691
        %v5724 = vpack.c.bf16 %v5692, %v5692
        %v5725 = vpack.c.bf16 %v5693, %v5693
        %v5726 = vpack.c.bf16 %v5694, %v5694
        %v5727 = vpack.c.bf16 %v5695, %v5695
        %v5728 = vpack.c.bf16 %v5696, %v5696
        %v5729 = vpack.c.bf16 %v5697, %v5697
        %v5730 = vpack.c.bf16 %v5698, %v5698
        %v5731 = vpack.c.bf16 %v5699, %v5699
        %v5732 = vpack.c.bf16 %v5700, %v5700
        %v5733 = vpack.c.bf16 %v5701, %v5701
        %v5734 = vpack.c.bf16 %v5702, %v5702
        %v5735 = vpack.c.bf16 %v5703, %v5703
        %v5736 = vpack.c.bf16 %v5704, %v5704
        %v5737 = vpack.c.bf16 %v5705, %v5705
        %v5738 = vpack.c.bf16 %v5706, %v5706
        %v5739 = vpack.c.bf16 %v5707, %v5707
        %v5740 = vpack.c.bf16 %v5708, %v5708
        %v5741 = vpack.c.bf16 %v5709, %v5709
        %v5742 = vpack.c.bf16 %v5710, %v5710
        %v5743 = vpack.c.bf16 %v5711, %v5711
        %v5745 = vshrl.u32 %v5712, 16
        %v5747 = vrot.slane %v5745, 7
        %v5748 = vshll.u32 %v5712, 16
        %v5750 = vor.u32 %v5747, %v5748
        %v5751 = vrot.slane %v5747, 4
        %v5753 = vshrl.u32 %v5713, 16
        %v5755 = vrot.slane %v5753, 7
        %v5756 = vshll.u32 %v5713, 16
        %v5758 = vor.u32 %v5755, %v5756
        %v5759 = vsel %vm464, %v5751, %v5758
        %v5760 = vrot.slane %v5755, 4
        %v5762 = vshrl.u32 %v5714, 16
        %v5764 = vrot.slane %v5762, 7
        %v5765 = vshll.u32 %v5714, 16
        %v5767 = vor.u32 %v5764, %v5765
        %v5768 = vrot.slane %v5764, 4
        %v5770 = vshrl.u32 %v5715, 16
        %v5772 = vrot.slane %v5770, 7
        %v5773 = vshll.u32 %v5715, 16
        %v5775 = vor.u32 %v5772, %v5773
        %v5776 = vsel %vm464, %v5768, %v5775
        %v5777 = vrot.slane %v5772, 4
        %v5779 = vshrl.u32 %v5716, 16
        %v5781 = vrot.slane %v5779, 7
        %v5782 = vshll.u32 %v5716, 16
        %v5784 = vor.u32 %v5781, %v5782
        %v5785 = vrot.slane %v5781, 4
        %v5787 = vshrl.u32 %v5717, 16
        %v5789 = vrot.slane %v5787, 7
        %v5790 = vshll.u32 %v5717, 16
        %v5792 = vor.u32 %v5789, %v5790
        %v5793 = vsel %vm464, %v5785, %v5792
        %v5794 = vrot.slane %v5789, 4
        %v5796 = vshrl.u32 %v5718, 16
        %v5798 = vrot.slane %v5796, 7
        %v5799 = vshll.u32 %v5718, 16
        %v5801 = vor.u32 %v5798, %v5799
        %v5802 = vrot.slane %v5798, 4
        %v5804 = vshrl.u32 %v5719, 16
        %v5806 = vrot.slane %v5804, 7
        %v5807 = vshll.u32 %v5719, 16
        %v5809 = vor.u32 %v5806, %v5807
        %v5810 = vsel %vm464, %v5802, %v5809
        %v5811 = vrot.slane %v5806, 4
        %v5813 = vshrl.u32 %v5720, 16
        %v5815 = vrot.slane %v5813, 7
        %v5816 = vshll.u32 %v5720, 16
        %v5818 = vor.u32 %v5815, %v5816
        %v5819 = vrot.slane %v5815, 4
        %v5821 = vshrl.u32 %v5721, 16
        %v5823 = vrot.slane %v5821, 7
        %v5824 = vshll.u32 %v5721, 16
        %v5826 = vor.u32 %v5823, %v5824
        %v5827 = vsel %vm464, %v5819, %v5826
        %v5828 = vrot.slane %v5823, 4
        %v5830 = vshrl.u32 %v5722, 16
        %v5832 = vrot.slane %v5830, 7
        %v5833 = vshll.u32 %v5722, 16
        %v5835 = vor.u32 %v5832, %v5833
        %v5836 = vrot.slane %v5832, 4
        %v5838 = vshrl.u32 %v5723, 16
        %v5840 = vrot.slane %v5838, 7
        %v5841 = vshll.u32 %v5723, 16
        %v5843 = vor.u32 %v5840, %v5841
        %v5844 = vsel %vm464, %v5836, %v5843
        %v5845 = vrot.slane %v5840, 4
        %v5847 = vshrl.u32 %v5724, 16
        %v5849 = vrot.slane %v5847, 7
        %v5850 = vshll.u32 %v5724, 16
        %v5852 = vor.u32 %v5849, %v5850
        %v5853 = vrot.slane %v5849, 4
        %v5855 = vshrl.u32 %v5725, 16
        %v5857 = vrot.slane %v5855, 7
        %v5858 = vshll.u32 %v5725, 16
        %v5860 = vor.u32 %v5857, %v5858
        %v5861 = vsel %vm464, %v5853, %v5860
        %v5862 = vrot.slane %v5857, 4
        %v5864 = vshrl.u32 %v5726, 16
        %v5866 = vrot.slane %v5864, 7
        %v5867 = vshll.u32 %v5726, 16
        %v5869 = vor.u32 %v5866, %v5867
        %v5870 = vrot.slane %v5866, 4
        %v5872 = vshrl.u32 %v5727, 16
        %v5874 = vrot.slane %v5872, 7
        %v5875 = vshll.u32 %v5727, 16
        %v5877 = vor.u32 %v5874, %v5875
        %v5878 = vsel %vm464, %v5870, %v5877
        %v5879 = vrot.slane %v5874, 4
        %v5881 = vshrl.u32 %v5728, 16
        %v5883 = vrot.slane %v5881, 7
        %v5884 = vshll.u32 %v5728, 16
        %v5886 = vor.u32 %v5883, %v5884
        %v5887 = vrot.slane %v5883, 4
        %v5889 = vshrl.u32 %v5729, 16
        %v5891 = vrot.slane %v5889, 7
        %v5892 = vshll.u32 %v5729, 16
        %v5894 = vor.u32 %v5891, %v5892
        %v5895 = vsel %vm464, %v5887, %v5894
        %v5896 = vrot.slane %v5891, 4
        %v5898 = vshrl.u32 %v5730, 16
        %v5900 = vrot.slane %v5898, 7
        %v5901 = vshll.u32 %v5730, 16
        %v5903 = vor.u32 %v5900, %v5901
        %v5904 = vrot.slane %v5900, 4
        %v5906 = vshrl.u32 %v5731, 16
        %v5908 = vrot.slane %v5906, 7
        %v5909 = vshll.u32 %v5731, 16
        %v5911 = vor.u32 %v5908, %v5909
        %v5912 = vsel %vm464, %v5904, %v5911
        %v5913 = vrot.slane %v5908, 4
        %v5915 = vshrl.u32 %v5732, 16
        %v5917 = vrot.slane %v5915, 7
        %v5918 = vshll.u32 %v5732, 16
        %v5920 = vor.u32 %v5917, %v5918
        %v5921 = vrot.slane %v5917, 4
        %v5923 = vshrl.u32 %v5733, 16
        %v5925 = vrot.slane %v5923, 7
        %v5926 = vshll.u32 %v5733, 16
        %v5928 = vor.u32 %v5925, %v5926
        %v5929 = vsel %vm464, %v5921, %v5928
        %v5930 = vrot.slane %v5925, 4
        %v5932 = vshrl.u32 %v5734, 16
        %v5934 = vrot.slane %v5932, 7
        %v5935 = vshll.u32 %v5734, 16
        %v5937 = vor.u32 %v5934, %v5935
        %v5938 = vrot.slane %v5934, 4
        %v5940 = vshrl.u32 %v5735, 16
        %v5942 = vrot.slane %v5940, 7
        %v5943 = vshll.u32 %v5735, 16
        %v5945 = vor.u32 %v5942, %v5943
        %v5946 = vsel %vm464, %v5938, %v5945
        %v5947 = vrot.slane %v5942, 4
        %v5949 = vshrl.u32 %v5736, 16
        %v5951 = vrot.slane %v5949, 7
        %v5952 = vshll.u32 %v5736, 16
        %v5954 = vor.u32 %v5951, %v5952
        %v5955 = vrot.slane %v5951, 4
        %v5957 = vshrl.u32 %v5737, 16
        %v5959 = vrot.slane %v5957, 7
        %v5960 = vshll.u32 %v5737, 16
        %v5962 = vor.u32 %v5959, %v5960
        %v5963 = vsel %vm464, %v5955, %v5962
        %v5964 = vrot.slane %v5959, 4
        %v5966 = vshrl.u32 %v5738, 16
        %v5968 = vrot.slane %v5966, 7
        %v5969 = vshll.u32 %v5738, 16
        %v5971 = vor.u32 %v5968, %v5969
        %v5972 = vrot.slane %v5968, 4
        %v5974 = vshrl.u32 %v5739, 16
        %v5976 = vrot.slane %v5974, 7
        %v5977 = vshll.u32 %v5739, 16
        %v5979 = vor.u32 %v5976, %v5977
        %v5980 = vsel %vm464, %v5972, %v5979
        %v5981 = vrot.slane %v5976, 4
        %v5983 = vshrl.u32 %v5740, 16
        %v5985 = vrot.slane %v5983, 7
        %v5986 = vshll.u32 %v5740, 16
        %v5988 = vor.u32 %v5985, %v5986
        %v5989 = vrot.slane %v5985, 4
        %v5991 = vshrl.u32 %v5741, 16
        %v5993 = vrot.slane %v5991, 7
        %v5994 = vshll.u32 %v5741, 16
        %v5996 = vor.u32 %v5993, %v5994
        %v5997 = vsel %vm464, %v5989, %v5996
        %v5998 = vrot.slane %v5993, 4
        %v6000 = vshrl.u32 %v5742, 16
        %v6002 = vrot.slane %v6000, 7
        %v6003 = vshll.u32 %v5742, 16
        %v6005 = vor.u32 %v6002, %v6003
        %v6006 = vrot.slane %v6002, 4
        %v6008 = vshrl.u32 %v5743, 16
        %v6010 = vrot.slane %v6008, 7
        %v6011 = vshll.u32 %v5743, 16
        %v6013 = vor.u32 %v6010, %v6011
        %v6014 = vsel %vm464, %v6006, %v6013
        %v6015 = vrot.slane %v6010, 4
        %v6064 = vld [vmem:[%s785] sm:$0xf]
        %v6065 = vsel %vm787, %v5750, %v6064
        %6066 = vst [vmem:[%s785] sm:$0xf] %v6065
        %6067 = vst [vmem:[%s785 + $0x4] sm:$0xf] %v5759
        %v6068 = vld [vmem:[%s785 + $0x8] sm:$0x1]
        %v6069 = vsel %vm288, %v5760, %v6068
        %6070 = vst [vmem:[%s785 + $0x8] sm:$0x1] %v6069
        %v6071 = vld [vmem:[%s785 + $0xc] sm:$0xf]
        %v6072 = vsel %vm787, %v5767, %v6071
        %6073 = vst [vmem:[%s785 + $0xc] sm:$0xf] %v6072
        %6074 = vst [vmem:[%s785 + $0x10] sm:$0xf] %v5776
        %v6075 = vld [vmem:[%s785 + $0x14] sm:$0x1]
        %v6076 = vsel %vm288, %v5777, %v6075
        %6077 = vst [vmem:[%s785 + $0x14] sm:$0x1] %v6076
        %v6078 = vld [vmem:[%s785 + $0x18] sm:$0xf]
        %v6079 = vsel %vm787, %v5784, %v6078
        %6080 = vst [vmem:[%s785 + $0x18] sm:$0xf] %v6079
        %6081 = vst [vmem:[%s785 + $0x1c] sm:$0xf] %v5793
        %v6082 = vld [vmem:[%s785 + $0x20] sm:$0x1]
        %v6083 = vsel %vm288, %v5794, %v6082
        %6084 = vst [vmem:[%s785 + $0x20] sm:$0x1] %v6083
        %v6085 = vld [vmem:[%s785 + $0x24] sm:$0xf]
        %v6086 = vsel %vm787, %v5801, %v6085
        %6087 = vst [vmem:[%s785 + $0x24] sm:$0xf] %v6086
        %6088 = vst [vmem:[%s785 + $0x28] sm:$0xf] %v5810
        %v6089 = vld [vmem:[%s785 + $0x2c] sm:$0x1]
        %v6090 = vsel %vm288, %v5811, %v6089
        %6091 = vst [vmem:[%s785 + $0x2c] sm:$0x1] %v6090
        %v6092 = vld [vmem:[%s785 + $0x30] sm:$0xf]
        %v6093 = vsel %vm787, %v5818, %v6092
        %6094 = vst [vmem:[%s785 + $0x30] sm:$0xf] %v6093
        %6095 = vst [vmem:[%s785 + $0x34] sm:$0xf] %v5827
        %v6096 = vld [vmem:[%s785 + $0x38] sm:$0x1]
        %v6097 = vsel %vm288, %v5828, %v6096
        %6098 = vst [vmem:[%s785 + $0x38] sm:$0x1] %v6097
        %v6099 = vld [vmem:[%s785 + $0x3c] sm:$0xf]
        %v6100 = vsel %vm787, %v5835, %v6099
        %6101 = vst [vmem:[%s785 + $0x3c] sm:$0xf] %v6100
        %6102 = vst [vmem:[%s785 + $0x40] sm:$0xf] %v5844
        %v6103 = vld [vmem:[%s785 + $0x44] sm:$0x1]
        %v6104 = vsel %vm288, %v5845, %v6103
        %6105 = vst [vmem:[%s785 + $0x44] sm:$0x1] %v6104
        %v6106 = vld [vmem:[%s785 + $0x48] sm:$0xf]
        %v6107 = vsel %vm787, %v5852, %v6106
        %6108 = vst [vmem:[%s785 + $0x48] sm:$0xf] %v6107
        %6109 = vst [vmem:[%s785 + $0x4c] sm:$0xf] %v5861
        %v6110 = vld [vmem:[%s785 + $0x50] sm:$0x1]
        %v6111 = vsel %vm288, %v5862, %v6110
        %6112 = vst [vmem:[%s785 + $0x50] sm:$0x1] %v6111
        %v6113 = vld [vmem:[%s785 + $0x54] sm:$0xf]
        %v6114 = vsel %vm787, %v5869, %v6113
        %6115 = vst [vmem:[%s785 + $0x54] sm:$0xf] %v6114
        %6116 = vst [vmem:[%s785 + $0x58] sm:$0xf] %v5878
        %v6117 = vld [vmem:[%s785 + $0x5c] sm:$0x1]
        %v6118 = vsel %vm288, %v5879, %v6117
        %6119 = vst [vmem:[%s785 + $0x5c] sm:$0x1] %v6118
        %v6120 = vld [vmem:[%s785 + $0x60] sm:$0xf]
        %v6121 = vsel %vm787, %v5886, %v6120
        %6122 = vst [vmem:[%s785 + $0x60] sm:$0xf] %v6121
        %6123 = vst [vmem:[%s785 + $0x64] sm:$0xf] %v5895
        %v6124 = vld [vmem:[%s785 + $0x68] sm:$0x1]
        %v6125 = vsel %vm288, %v5896, %v6124
        %6126 = vst [vmem:[%s785 + $0x68] sm:$0x1] %v6125
        %v6127 = vld [vmem:[%s785 + $0x6c] sm:$0xf]
        %v6128 = vsel %vm787, %v5903, %v6127
        %6129 = vst [vmem:[%s785 + $0x6c] sm:$0xf] %v6128
        %6130 = vst [vmem:[%s785 + $0x70] sm:$0xf] %v5912
        %v6131 = vld [vmem:[%s785 + $0x74] sm:$0x1]
        %v6132 = vsel %vm288, %v5913, %v6131
        %6133 = vst [vmem:[%s785 + $0x74] sm:$0x1] %v6132
        %v6134 = vld [vmem:[%s785 + $0x78] sm:$0xf]
        %v6135 = vsel %vm787, %v5920, %v6134
        %6136 = vst [vmem:[%s785 + $0x78] sm:$0xf] %v6135
        %6137 = vst [vmem:[%s785 + $0x7c] sm:$0xf] %v5929
        %v6138 = vld [vmem:[%s785 + $0x80] sm:$0x1]
        %v6139 = vsel %vm288, %v5930, %v6138
        %6140 = vst [vmem:[%s785 + $0x80] sm:$0x1] %v6139
        %v6141 = vld [vmem:[%s785 + $0x84] sm:$0xf]
        %v6142 = vsel %vm787, %v5937, %v6141
        %6143 = vst [vmem:[%s785 + $0x84] sm:$0xf] %v6142
        %6144 = vst [vmem:[%s785 + $0x88] sm:$0xf] %v5946
        %v6145 = vld [vmem:[%s785 + $0x8c] sm:$0x1]
        %v6146 = vsel %vm288, %v5947, %v6145
        %6147 = vst [vmem:[%s785 + $0x8c] sm:$0x1] %v6146
        %v6148 = vld [vmem:[%s785 + $0x90] sm:$0xf]
        %v6149 = vsel %vm787, %v5954, %v6148
        %6150 = vst [vmem:[%s785 + $0x90] sm:$0xf] %v6149
        %6151 = vst [vmem:[%s785 + $0x94] sm:$0xf] %v5963
        %v6152 = vld [vmem:[%s785 + $0x98] sm:$0x1]
        %v6153 = vsel %vm288, %v5964, %v6152
        %6154 = vst [vmem:[%s785 + $0x98] sm:$0x1] %v6153
        %v6155 = vld [vmem:[%s785 + $0x9c] sm:$0xf]
        %v6156 = vsel %vm787, %v5971, %v6155
        %6157 = vst [vmem:[%s785 + $0x9c] sm:$0xf] %v6156
        %6158 = vst [vmem:[%s785 + $0xa0] sm:$0xf] %v5980
        %v6159 = vld [vmem:[%s785 + $0xa4] sm:$0x1]
        %v6160 = vsel %vm288, %v5981, %v6159
        %6161 = vst [vmem:[%s785 + $0xa4] sm:$0x1] %v6160
        %v6162 = vld [vmem:[%s785 + $0xa8] sm:$0xf]
        %v6163 = vsel %vm787, %v5988, %v6162
        %6164 = vst [vmem:[%s785 + $0xa8] sm:$0xf] %v6163
        %6165 = vst [vmem:[%s785 + $0xac] sm:$0xf] %v5997
        %v6166 = vld [vmem:[%s785 + $0xb0] sm:$0x1]
        %v6167 = vsel %vm288, %v5998, %v6166
        %6168 = vst [vmem:[%s785 + $0xb0] sm:$0x1] %v6167
        %v6169 = vld [vmem:[%s785 + $0xb4] sm:$0xf]
        %v6170 = vsel %vm787, %v6005, %v6169
        %6171 = vst [vmem:[%s785 + $0xb4] sm:$0xf] %v6170
        %6172 = vst [vmem:[%s785 + $0xb8] sm:$0xf] %v6014
        %v6173 = vld [vmem:[%s785 + $0xbc] sm:$0x1]
        %v6174 = vsel %vm288, %v6015, %v6173
        %6175 = vst [vmem:[%s785 + $0xbc] sm:$0x1] %v6174
        %v6176 = vld [vmem:[#allocation2] sm:$0xf]
        %v6177 = vld [vmem:[#allocation2 + $0x4] sm:$0xf]
        %v6178 = vld [vmem:[#allocation2 + $0xc] sm:$0xf]
        %v6179 = vld [vmem:[#allocation2 + $0x10] sm:$0xf]
        %v6180 = vld [vmem:[#allocation2 + $0x18] sm:$0xf]
        %v6181 = vld [vmem:[#allocation2 + $0x1c] sm:$0xf]
        %v6182 = vld [vmem:[#allocation2 + $0x24] sm:$0xf]
        %v6183 = vld [vmem:[#allocation2 + $0x28] sm:$0xf]
        %v6184 = vld [vmem:[#allocation2 + $0x30] sm:$0xf]
        %v6185 = vld [vmem:[#allocation2 + $0x34] sm:$0xf]
        %v6186 = vld [vmem:[#allocation2 + $0x3c] sm:$0xf]
        %v6187 = vld [vmem:[#allocation2 + $0x40] sm:$0xf]
        %v6188 = vld [vmem:[#allocation2 + $0x48] sm:$0xf]
        %v6189 = vld [vmem:[#allocation2 + $0x4c] sm:$0xf]
        %v6190 = vld [vmem:[#allocation2 + $0x54] sm:$0xf]
        %v6191 = vld [vmem:[#allocation2 + $0x58] sm:$0xf]
        %v6192 = vld [vmem:[#allocation2 + $0x60] sm:$0xf]
        %v6193 = vld [vmem:[#allocation2 + $0x64] sm:$0xf]
        %v6194 = vld [vmem:[#allocation2 + $0x6c] sm:$0xf]
        %v6195 = vld [vmem:[#allocation2 + $0x70] sm:$0xf]
        %v6196 = vld [vmem:[#allocation2 + $0x78] sm:$0xf]
        %v6197 = vld [vmem:[#allocation2 + $0x7c] sm:$0xf]
        %v6198 = vld [vmem:[#allocation2 + $0x84] sm:$0xf]
        %v6199 = vld [vmem:[#allocation2 + $0x88] sm:$0xf]
        %v6200 = vld [vmem:[#allocation2 + $0x90] sm:$0xf]
        %v6201 = vld [vmem:[#allocation2 + $0x94] sm:$0xf]
        %v6202 = vld [vmem:[#allocation2 + $0x9c] sm:$0xf]
        %v6203 = vld [vmem:[#allocation2 + $0xa0] sm:$0xf]
        %v6204 = vld [vmem:[#allocation2 + $0xa8] sm:$0xf]
        %v6205 = vld [vmem:[#allocation2 + $0xac] sm:$0xf]
        %v6206 = vld [vmem:[#allocation2 + $0xb4] sm:$0xf]
        %v6207 = vld [vmem:[#allocation2 + $0xb8] sm:$0xf]
        %6208 = vst [vmem:[#allocation3] sm:$0xf] %v6176
        %6209 = vst [vmem:[#allocation3 + $0x24] sm:$0xf] %v6177
        %6210 = vst [vmem:[#allocation3 + $0x48] sm:$0xf] %v6178
        %6211 = vst [vmem:[#allocation3 + $0x6c] sm:$0xf] %v6179
        %6212 = vst [vmem:[#allocation3 + $0x90] sm:$0xf] %v6180
        %6213 = vst [vmem:[#allocation3 + $0xb4] sm:$0xf] %v6181
        %6214 = vst [vmem:[#allocation3 + $0xd8] sm:$0xf] %v6182
        %6215 = vst [vmem:[#allocation3 + $0xfc] sm:$0xf] %v6183
        %6216 = vst [vmem:[#allocation3 + $0x120] sm:$0xf] %v6184
        %6217 = vst [vmem:[#allocation3 + $0x144] sm:$0xf] %v6185
        %6218 = vst [vmem:[#allocation3 + $0x168] sm:$0xf] %v6186
        %6219 = vst [vmem:[#allocation3 + $0x18c] sm:$0xf] %v6187
        %6220 = vst [vmem:[#allocation3 + $0x1b0] sm:$0xf] %v6188
        %6221 = vst [vmem:[#allocation3 + $0x1d4] sm:$0xf] %v6189
        %6222 = vst [vmem:[#allocation3 + $0x1f8] sm:$0xf] %v6190
        %6223 = vst [vmem:[#allocation3 + $0x21c] sm:$0xf] %v6191
        %6224 = vst [vmem:[#allocation3 + $0x240] sm:$0xf] %v6192
        %6225 = vst [vmem:[#allocation3 + $0x264] sm:$0xf] %v6193
        %6226 = vst [vmem:[#allocation3 + $0x288] sm:$0xf] %v6194
        %6227 = vst [vmem:[#allocation3 + $0x2ac] sm:$0xf] %v6195
        %6228 = vst [vmem:[#allocation3 + $0x2d0] sm:$0xf] %v6196
        %6229 = vst [vmem:[#allocation3 + $0x2f4] sm:$0xf] %v6197
        %6230 = vst [vmem:[#allocation3 + $0x318] sm:$0xf] %v6198
        %6231 = vst [vmem:[#allocation3 + $0x33c] sm:$0xf] %v6199
        %6232 = vst [vmem:[#allocation3 + $0x360] sm:$0xf] %v6200
        %6233 = vst [vmem:[#allocation3 + $0x384] sm:$0xf] %v6201
        %6234 = vst [vmem:[#allocation3 + $0x3a8] sm:$0xf] %v6202
        %6235 = vst [vmem:[#allocation3 + $0x3cc] sm:$0xf] %v6203
        %6236 = vst [vmem:[#allocation3 + $0x3f0] sm:$0xf] %v6204
        %6237 = vst [vmem:[#allocation3 + $0x414] sm:$0xf] %v6205
        %6238 = vst [vmem:[#allocation3 + $0x438] sm:$0xf] %v6206
        %6239 = vst [vmem:[#allocation3 + $0x45c] sm:$0xf] %v6207
        %v6240 = vld [vmem:[#allocation2] sm:$0xf]
        %v6241 = vld [vmem:[#allocation2 + $0x4] sm:$0xf]
        %v6242 = vld [vmem:[#allocation2 + $0x8] sm:$0x1]
        %v6243 = vld [vmem:[#allocation2 + $0xc] sm:$0xf]
        %v6244 = vld [vmem:[#allocation2 + $0x10] sm:$0xf]
        %v6245 = vld [vmem:[#allocation2 + $0x14] sm:$0x1]
        %v6246 = vld [vmem:[#allocation2 + $0x18] sm:$0xf]
        %v6247 = vld [vmem:[#allocation2 + $0x1c] sm:$0xf]
        %v6248 = vld [vmem:[#allocation2 + $0x20] sm:$0x1]
        %v6249 = vld [vmem:[#allocation2 + $0x24] sm:$0xf]
        %v6250 = vld [vmem:[#allocation2 + $0x28] sm:$0xf]
        %v6251 = vld [vmem:[#allocation2 + $0x2c] sm:$0x1]
        %v6252 = vld [vmem:[#allocation2 + $0x30] sm:$0xf]
        %v6253 = vld [vmem:[#allocation2 + $0x34] sm:$0xf]
        %v6254 = vld [vmem:[#allocation2 + $0x38] sm:$0x1]
        %v6255 = vld [vmem:[#allocation2 + $0x3c] sm:$0xf]
        %v6256 = vld [vmem:[#allocation2 + $0x40] sm:$0xf]
        %v6257 = vld [vmem:[#allocation2 + $0x44] sm:$0x1]
        %v6258 = vld [vmem:[#allocation2 + $0x48] sm:$0xf]
        %v6259 = vld [vmem:[#allocation2 + $0x4c] sm:$0xf]
        %v6260 = vld [vmem:[#allocation2 + $0x50] sm:$0x1]
        %v6261 = vld [vmem:[#allocation2 + $0x54] sm:$0xf]
        %v6262 = vld [vmem:[#allocation2 + $0x58] sm:$0xf]
        %v6263 = vld [vmem:[#allocation2 + $0x5c] sm:$0x1]
        %v6264 = vld [vmem:[#allocation2 + $0x60] sm:$0xf]
        %v6265 = vld [vmem:[#allocation2 + $0x64] sm:$0xf]
        %v6266 = vld [vmem:[#allocation2 + $0x68] sm:$0x1]
        %v6267 = vld [vmem:[#allocation2 + $0x6c] sm:$0xf]
        %v6268 = vld [vmem:[#allocation2 + $0x70] sm:$0xf]
        %v6269 = vld [vmem:[#allocation2 + $0x74] sm:$0x1]
        %v6270 = vld [vmem:[#allocation2 + $0x78] sm:$0xf]
        %v6271 = vld [vmem:[#allocation2 + $0x7c] sm:$0xf]
        %v6272 = vld [vmem:[#allocation2 + $0x80] sm:$0x1]
        %v6273 = vld [vmem:[#allocation2 + $0x84] sm:$0xf]
        %v6274 = vld [vmem:[#allocation2 + $0x88] sm:$0xf]
        %v6275 = vld [vmem:[#allocation2 + $0x8c] sm:$0x1]
        %v6276 = vld [vmem:[#allocation2 + $0x90] sm:$0xf]
        %v6277 = vld [vmem:[#allocation2 + $0x94] sm:$0xf]
        %v6278 = vld [vmem:[#allocation2 + $0x98] sm:$0x1]
        %v6279 = vld [vmem:[#allocation2 + $0x9c] sm:$0xf]
        %v6280 = vld [vmem:[#allocation2 + $0xa0] sm:$0xf]
        %v6281 = vld [vmem:[#allocation2 + $0xa4] sm:$0x1]
        %v6282 = vld [vmem:[#allocation2 + $0xa8] sm:$0xf]
        %v6283 = vld [vmem:[#allocation2 + $0xac] sm:$0xf]
        %v6284 = vld [vmem:[#allocation2 + $0xb0] sm:$0x1]
        %v6285 = vld [vmem:[#allocation2 + $0xb4] sm:$0xf]
        %v6286 = vld [vmem:[#allocation2 + $0xb8] sm:$0xf]
        %v6287 = vld [vmem:[#allocation2 + $0xbc] sm:$0x1]
        %v6289 = vshrl.u32 %v6240, 16
        %v6291 = vrot.slane %v6289, 4
        %v6292 = vshll.u32 %v6240, 16
        %v6294 = vrot.slane %v6292, 5
        %v6295 = vor.u32 %v6291, %v6294
        %v6296 = vrot.slane %v6295, 4
        %v6298 = vshll.u32 %v6241, 16
        %v6300 = vrot.slane %v6298, 5
        %v6301 = vsel %vm1014, %v6296, %v6300
        %v6302 = vshrl.u32 %v6241, 16
        %v6304 = vrot.slane %v6302, 4
        %v6305 = vor.u32 %v6304, %v6300
        %v6306 = vrot.slane %v6305, 4
        %v6308 = vshll.u32 %v6242, 16
        %v6310 = vrot.slane %v6308, 5
        %v6311 = vsel %vm1014, %v6306, %v6310
        %v6313 = vshrl.u32 %v6243, 16
        %v6315 = vrot.slane %v6313, 4
        %v6316 = vshll.u32 %v6243, 16
        %v6318 = vrot.slane %v6316, 5
        %v6319 = vor.u32 %v6315, %v6318
        %v6320 = vrot.slane %v6319, 4
        %v6322 = vshll.u32 %v6244, 16
        %v6324 = vrot.slane %v6322, 5
        %v6325 = vsel %vm1014, %v6320, %v6324
        %v6326 = vshrl.u32 %v6244, 16
        %v6328 = vrot.slane %v6326, 4
        %v6329 = vor.u32 %v6328, %v6324
        %v6330 = vrot.slane %v6329, 4
        %v6332 = vshll.u32 %v6245, 16
        %v6334 = vrot.slane %v6332, 5
        %v6335 = vsel %vm1014, %v6330, %v6334
        %v6337 = vshrl.u32 %v6246, 16
        %v6339 = vrot.slane %v6337, 4
        %v6340 = vshll.u32 %v6246, 16
        %v6342 = vrot.slane %v6340, 5
        %v6343 = vor.u32 %v6339, %v6342
        %v6344 = vrot.slane %v6343, 4
        %v6346 = vshll.u32 %v6247, 16
        %v6348 = vrot.slane %v6346, 5
        %v6349 = vsel %vm1014, %v6344, %v6348
        %v6350 = vshrl.u32 %v6247, 16
        %v6352 = vrot.slane %v6350, 4
        %v6353 = vor.u32 %v6352, %v6348
        %v6354 = vrot.slane %v6353, 4
        %v6356 = vshll.u32 %v6248, 16
        %v6358 = vrot.slane %v6356, 5
        %v6359 = vsel %vm1014, %v6354, %v6358
        %v6361 = vshrl.u32 %v6249, 16
        %v6363 = vrot.slane %v6361, 4
        %v6364 = vshll.u32 %v6249, 16
        %v6366 = vrot.slane %v6364, 5
        %v6367 = vor.u32 %v6363, %v6366
        %v6368 = vrot.slane %v6367, 4
        %v6370 = vshll.u32 %v6250, 16
        %v6372 = vrot.slane %v6370, 5
        %v6373 = vsel %vm1014, %v6368, %v6372
        %v6374 = vshrl.u32 %v6250, 16
        %v6376 = vrot.slane %v6374, 4
        %v6377 = vor.u32 %v6376, %v6372
        %v6378 = vrot.slane %v6377, 4
        %v6380 = vshll.u32 %v6251, 16
        %v6382 = vrot.slane %v6380, 5
        %v6383 = vsel %vm1014, %v6378, %v6382
        %v6385 = vshrl.u32 %v6252, 16
        %v6387 = vrot.slane %v6385, 4
        %v6388 = vshll.u32 %v6252, 16
        %v6390 = vrot.slane %v6388, 5
        %v6391 = vor.u32 %v6387, %v6390
        %v6392 = vrot.slane %v6391, 4
        %v6394 = vshll.u32 %v6253, 16
        %v6396 = vrot.slane %v6394, 5
        %v6397 = vsel %vm1014, %v6392, %v6396
        %v6398 = vshrl.u32 %v6253, 16
        %v6400 = vrot.slane %v6398, 4
        %v6401 = vor.u32 %v6400, %v6396
        %v6402 = vrot.slane %v6401, 4
        %v6404 = vshll.u32 %v6254, 16
        %v6406 = vrot.slane %v6404, 5
        %v6407 = vsel %vm1014, %v6402, %v6406
        %v6409 = vshrl.u32 %v6255, 16
        %v6411 = vrot.slane %v6409, 4
        %v6412 = vshll.u32 %v6255, 16
        %v6414 = vrot.slane %v6412, 5
        %v6415 = vor.u32 %v6411, %v6414
        %v6416 = vrot.slane %v6415, 4
        %v6418 = vshll.u32 %v6256, 16
        %v6420 = vrot.slane %v6418, 5
        %v6421 = vsel %vm1014, %v6416, %v6420
        %v6422 = vshrl.u32 %v6256, 16
        %v6424 = vrot.slane %v6422, 4
        %v6425 = vor.u32 %v6424, %v6420
        %v6426 = vrot.slane %v6425, 4
        %v6428 = vshll.u32 %v6257, 16
        %v6430 = vrot.slane %v6428, 5
        %v6431 = vsel %vm1014, %v6426, %v6430
        %v6433 = vshrl.u32 %v6258, 16
        %v6435 = vrot.slane %v6433, 4
        %v6436 = vshll.u32 %v6258, 16
        %v6438 = vrot.slane %v6436, 5
        %v6439 = vor.u32 %v6435, %v6438
        %v6440 = vrot.slane %v6439, 4
        %v6442 = vshll.u32 %v6259, 16
        %v6444 = vrot.slane %v6442, 5
        %v6445 = vsel %vm1014, %v6440, %v6444
        %v6446 = vshrl.u32 %v6259, 16
        %v6448 = vrot.slane %v6446, 4
        %v6449 = vor.u32 %v6448, %v6444
        %v6450 = vrot.slane %v6449, 4
        %v6452 = vshll.u32 %v6260, 16
        %v6454 = vrot.slane %v6452, 5
        %v6455 = vsel %vm1014, %v6450, %v6454
        %v6457 = vshrl.u32 %v6261, 16
        %v6459 = vrot.slane %v6457, 4
        %v6460 = vshll.u32 %v6261, 16
        %v6462 = vrot.slane %v6460, 5
        %v6463 = vor.u32 %v6459, %v6462
        %v6464 = vrot.slane %v6463, 4
        %v6466 = vshll.u32 %v6262, 16
        %v6468 = vrot.slane %v6466, 5
        %v6469 = vsel %vm1014, %v6464, %v6468
        %v6470 = vshrl.u32 %v6262, 16
        %v6472 = vrot.slane %v6470, 4
        %v6473 = vor.u32 %v6472, %v6468
        %v6474 = vrot.slane %v6473, 4
        %v6476 = vshll.u32 %v6263, 16
        %v6478 = vrot.slane %v6476, 5
        %v6479 = vsel %vm1014, %v6474, %v6478
        %v6481 = vshrl.u32 %v6264, 16
        %v6483 = vrot.slane %v6481, 4
        %v6484 = vshll.u32 %v6264, 16
        %v6486 = vrot.slane %v6484, 5
        %v6487 = vor.u32 %v6483, %v6486
        %v6488 = vrot.slane %v6487, 4
        %v6490 = vshll.u32 %v6265, 16
        %v6492 = vrot.slane %v6490, 5
        %v6493 = vsel %vm1014, %v6488, %v6492
        %v6494 = vshrl.u32 %v6265, 16
        %v6496 = vrot.slane %v6494, 4
        %v6497 = vor.u32 %v6496, %v6492
        %v6498 = vrot.slane %v6497, 4
        %v6500 = vshll.u32 %v6266, 16
        %v6502 = vrot.slane %v6500, 5
        %v6503 = vsel %vm1014, %v6498, %v6502
        %v6505 = vshrl.u32 %v6267, 16
        %v6507 = vrot.slane %v6505, 4
        %v6508 = vshll.u32 %v6267, 16
        %v6510 = vrot.slane %v6508, 5
        %v6511 = vor.u32 %v6507, %v6510
        %v6512 = vrot.slane %v6511, 4
        %v6514 = vshll.u32 %v6268, 16
        %v6516 = vrot.slane %v6514, 5
        %v6517 = vsel %vm1014, %v6512, %v6516
        %v6518 = vshrl.u32 %v6268, 16
        %v6520 = vrot.slane %v6518, 4
        %v6521 = vor.u32 %v6520, %v6516
        %v6522 = vrot.slane %v6521, 4
        %v6524 = vshll.u32 %v6269, 16
        %v6526 = vrot.slane %v6524, 5
        %v6527 = vsel %vm1014, %v6522, %v6526
        %v6529 = vshrl.u32 %v6270, 16
        %v6531 = vrot.slane %v6529, 4
        %v6532 = vshll.u32 %v6270, 16
        %v6534 = vrot.slane %v6532, 5
        %v6535 = vor.u32 %v6531, %v6534
        %v6536 = vrot.slane %v6535, 4
        %v6538 = vshll.u32 %v6271, 16
        %v6540 = vrot.slane %v6538, 5
        %v6541 = vsel %vm1014, %v6536, %v6540
        %v6542 = vshrl.u32 %v6271, 16
        %v6544 = vrot.slane %v6542, 4
        %v6545 = vor.u32 %v6544, %v6540
        %v6546 = vrot.slane %v6545, 4
        %v6548 = vshll.u32 %v6272, 16
        %v6550 = vrot.slane %v6548, 5
        %v6551 = vsel %vm1014, %v6546, %v6550
        %v6553 = vshrl.u32 %v6273, 16
        %v6555 = vrot.slane %v6553, 4
        %v6556 = vshll.u32 %v6273, 16
        %v6558 = vrot.slane %v6556, 5
        %v6559 = vor.u32 %v6555, %v6558
        %v6560 = vrot.slane %v6559, 4
        %v6562 = vshll.u32 %v6274, 16
        %v6564 = vrot.slane %v6562, 5
        %v6565 = vsel %vm1014, %v6560, %v6564
        %v6566 = vshrl.u32 %v6274, 16
        %v6568 = vrot.slane %v6566, 4
        %v6569 = vor.u32 %v6568, %v6564
        %v6570 = vrot.slane %v6569, 4
        %v6572 = vshll.u32 %v6275, 16
        %v6574 = vrot.slane %v6572, 5
        %v6575 = vsel %vm1014, %v6570, %v6574
        %v6577 = vshrl.u32 %v6276, 16
        %v6579 = vrot.slane %v6577, 4
        %v6580 = vshll.u32 %v6276, 16
        %v6582 = vrot.slane %v6580, 5
        %v6583 = vor.u32 %v6579, %v6582
        %v6584 = vrot.slane %v6583, 4
        %v6586 = vshll.u32 %v6277, 16
        %v6588 = vrot.slane %v6586, 5
        %v6589 = vsel %vm1014, %v6584, %v6588
        %v6590 = vshrl.u32 %v6277, 16
        %v6592 = vrot.slane %v6590, 4
        %v6593 = vor.u32 %v6592, %v6588
        %v6594 = vrot.slane %v6593, 4
        %v6596 = vshll.u32 %v6278, 16
        %v6598 = vrot.slane %v6596, 5
        %v6599 = vsel %vm1014, %v6594, %v6598
        %v6601 = vshrl.u32 %v6279, 16
        %v6603 = vrot.slane %v6601, 4
        %v6604 = vshll.u32 %v6279, 16
        %v6606 = vrot.slane %v6604, 5
        %v6607 = vor.u32 %v6603, %v6606
        %v6608 = vrot.slane %v6607, 4
        %v6610 = vshll.u32 %v6280, 16
        %v6612 = vrot.slane %v6610, 5
        %v6613 = vsel %vm1014, %v6608, %v6612
        %v6614 = vshrl.u32 %v6280, 16
        %v6616 = vrot.slane %v6614, 4
        %v6617 = vor.u32 %v6616, %v6612
        %v6618 = vrot.slane %v6617, 4
        %v6620 = vshll.u32 %v6281, 16
        %v6622 = vrot.slane %v6620, 5
        %v6623 = vsel %vm1014, %v6618, %v6622
        %v6625 = vshrl.u32 %v6282, 16
        %v6627 = vrot.slane %v6625, 4
        %v6628 = vshll.u32 %v6282, 16
        %v6630 = vrot.slane %v6628, 5
        %v6631 = vor.u32 %v6627, %v6630
        %v6632 = vrot.slane %v6631, 4
        %v6634 = vshll.u32 %v6283, 16
        %v6636 = vrot.slane %v6634, 5
        %v6637 = vsel %vm1014, %v6632, %v6636
        %v6638 = vshrl.u32 %v6283, 16
        %v6640 = vrot.slane %v6638, 4
        %v6641 = vor.u32 %v6640, %v6636
        %v6642 = vrot.slane %v6641, 4
        %v6644 = vshll.u32 %v6284, 16
        %v6646 = vrot.slane %v6644, 5
        %v6647 = vsel %vm1014, %v6642, %v6646
        %v6649 = vshrl.u32 %v6285, 16
        %v6651 = vrot.slane %v6649, 4
        %v6652 = vshll.u32 %v6285, 16
        %v6654 = vrot.slane %v6652, 5
        %v6655 = vor.u32 %v6651, %v6654
        %v6656 = vrot.slane %v6655, 4
        %v6658 = vshll.u32 %v6286, 16
        %v6660 = vrot.slane %v6658, 5
        %v6661 = vsel %vm1014, %v6656, %v6660
        %v6662 = vshrl.u32 %v6286, 16
        %v6664 = vrot.slane %v6662, 4
        %v6665 = vor.u32 %v6664, %v6660
        %v6666 = vrot.slane %v6665, 4
        %v6668 = vshll.u32 %v6287, 16
        %v6670 = vrot.slane %v6668, 5
        %v6671 = vsel %vm1014, %v6666, %v6670
        %6704 = vst [vmem:[#allocation3 + $0x4] sm:$0xf] %v6301
        %6705 = vst [vmem:[#allocation3 + $0x28] sm:$0xf] %v6311
        %6706 = vst [vmem:[#allocation3 + $0x4c] sm:$0xf] %v6325
        %6707 = vst [vmem:[#allocation3 + $0x70] sm:$0xf] %v6335
        %6708 = vst [vmem:[#allocation3 + $0x94] sm:$0xf] %v6349
        %6709 = vst [vmem:[#allocation3 + $0xb8] sm:$0xf] %v6359
        %6710 = vst [vmem:[#allocation3 + $0xdc] sm:$0xf] %v6373
        %6711 = vst [vmem:[#allocation3 + $0x100] sm:$0xf] %v6383
        %6712 = vst [vmem:[#allocation3 + $0x124] sm:$0xf] %v6397
        %6713 = vst [vmem:[#allocation3 + $0x148] sm:$0xf] %v6407
        %6714 = vst [vmem:[#allocation3 + $0x16c] sm:$0xf] %v6421
        %6715 = vst [vmem:[#allocation3 + $0x190] sm:$0xf] %v6431
        %6716 = vst [vmem:[#allocation3 + $0x1b4] sm:$0xf] %v6445
        %6717 = vst [vmem:[#allocation3 + $0x1d8] sm:$0xf] %v6455
        %6718 = vst [vmem:[#allocation3 + $0x1fc] sm:$0xf] %v6469
        %6719 = vst [vmem:[#allocation3 + $0x220] sm:$0xf] %v6479
        %6720 = vst [vmem:[#allocation3 + $0x244] sm:$0xf] %v6493
        %6721 = vst [vmem:[#allocation3 + $0x268] sm:$0xf] %v6503
        %6722 = vst [vmem:[#allocation3 + $0x28c] sm:$0xf] %v6517
        %6723 = vst [vmem:[#allocation3 + $0x2b0] sm:$0xf] %v6527
        %6724 = vst [vmem:[#allocation3 + $0x2d4] sm:$0xf] %v6541
        %6725 = vst [vmem:[#allocation3 + $0x2f8] sm:$0xf] %v6551
        %6726 = vst [vmem:[#allocation3 + $0x31c] sm:$0xf] %v6565
        %6727 = vst [vmem:[#allocation3 + $0x340] sm:$0xf] %v6575
        %6728 = vst [vmem:[#allocation3 + $0x364] sm:$0xf] %v6589
        %6729 = vst [vmem:[#allocation3 + $0x388] sm:$0xf] %v6599
        %6730 = vst [vmem:[#allocation3 + $0x3ac] sm:$0xf] %v6613
        %6731 = vst [vmem:[#allocation3 + $0x3d0] sm:$0xf] %v6623
        %6732 = vst [vmem:[#allocation3 + $0x3f4] sm:$0xf] %v6637
        %6733 = vst [vmem:[#allocation3 + $0x418] sm:$0xf] %v6647
        %6734 = vst [vmem:[#allocation3 + $0x43c] sm:$0xf] %v6661
        %6735 = vst [vmem:[#allocation3 + $0x460] sm:$0xf] %v6671
        %v6736 = vld [vmem:[#allocation2] sm:$0xe]
        %v6737 = vld [vmem:[#allocation2 + $0x4] sm:$0xf]
        %v6738 = vld [vmem:[#allocation2 + $0x8] sm:$0x1]
        %v6739 = vld [vmem:[#allocation2 + $0xc] sm:$0xe]
        %v6740 = vld [vmem:[#allocation2 + $0x10] sm:$0xf]
        %v6741 = vld [vmem:[#allocation2 + $0x14] sm:$0x1]
        %v6742 = vld [vmem:[#allocation2 + $0x18] sm:$0xe]
        %v6743 = vld [vmem:[#allocation2 + $0x1c] sm:$0xf]
        %v6744 = vld [vmem:[#allocation2 + $0x20] sm:$0x1]
        %v6745 = vld [vmem:[#allocation2 + $0x24] sm:$0xe]
        %v6746 = vld [vmem:[#allocation2 + $0x28] sm:$0xf]
        %v6747 = vld [vmem:[#allocation2 + $0x2c] sm:$0x1]
        %v6748 = vld [vmem:[#allocation2 + $0x30] sm:$0xe]
        %v6749 = vld [vmem:[#allocation2 + $0x34] sm:$0xf]
        %v6750 = vld [vmem:[#allocation2 + $0x38] sm:$0x1]
        %v6751 = vld [vmem:[#allocation2 + $0x3c] sm:$0xe]
        %v6752 = vld [vmem:[#allocation2 + $0x40] sm:$0xf]
        %v6753 = vld [vmem:[#allocation2 + $0x44] sm:$0x1]
        %v6754 = vld [vmem:[#allocation2 + $0x48] sm:$0xe]
        %v6755 = vld [vmem:[#allocation2 + $0x4c] sm:$0xf]
        %v6756 = vld [vmem:[#allocation2 + $0x50] sm:$0x1]
        %v6757 = vld [vmem:[#allocation2 + $0x54] sm:$0xe]
        %v6758 = vld [vmem:[#allocation2 + $0x58] sm:$0xf]
        %v6759 = vld [vmem:[#allocation2 + $0x5c] sm:$0x1]
        %v6760 = vld [vmem:[#allocation2 + $0x60] sm:$0xe]
        %v6761 = vld [vmem:[#allocation2 + $0x64] sm:$0xf]
        %v6762 = vld [vmem:[#allocation2 + $0x68] sm:$0x1]
        %v6763 = vld [vmem:[#allocation2 + $0x6c] sm:$0xe]
        %v6764 = vld [vmem:[#allocation2 + $0x70] sm:$0xf]
        %v6765 = vld [vmem:[#allocation2 + $0x74] sm:$0x1]
        %v6766 = vld [vmem:[#allocation2 + $0x78] sm:$0xe]
        %v6767 = vld [vmem:[#allocation2 + $0x7c] sm:$0xf]
        %v6768 = vld [vmem:[#allocation2 + $0x80] sm:$0x1]
        %v6769 = vld [vmem:[#allocation2 + $0x84] sm:$0xe]
        %v6770 = vld [vmem:[#allocation2 + $0x88] sm:$0xf]
        %v6771 = vld [vmem:[#allocation2 + $0x8c] sm:$0x1]
        %v6772 = vld [vmem:[#allocation2 + $0x90] sm:$0xe]
        %v6773 = vld [vmem:[#allocation2 + $0x94] sm:$0xf]
        %v6774 = vld [vmem:[#allocation2 + $0x98] sm:$0x1]
        %v6775 = vld [vmem:[#allocation2 + $0x9c] sm:$0xe]
        %v6776 = vld [vmem:[#allocation2 + $0xa0] sm:$0xf]
        %v6777 = vld [vmem:[#allocation2 + $0xa4] sm:$0x1]
        %v6778 = vld [vmem:[#allocation2 + $0xa8] sm:$0xe]
        %v6779 = vld [vmem:[#allocation2 + $0xac] sm:$0xf]
        %v6780 = vld [vmem:[#allocation2 + $0xb0] sm:$0x1]
        %v6781 = vld [vmem:[#allocation2 + $0xb4] sm:$0xe]
        %v6782 = vld [vmem:[#allocation2 + $0xb8] sm:$0xf]
        %v6783 = vld [vmem:[#allocation2 + $0xbc] sm:$0x1]
        %v6832 = vrot.slane %v6736, 5
        %v6833 = vrot.slane %v6832, 4
        %v6834 = vrot.slane %v6737, 5
        %v6835 = vsel %vm1561, %v6833, %v6834
        %v6836 = vrot.slane %v6834, 4
        %v6837 = vrot.slane %v6738, 5
        %v6838 = vsel %vm1561, %v6836, %v6837
        %v6839 = vrot.slane %v6739, 5
        %v6840 = vrot.slane %v6839, 4
        %v6841 = vrot.slane %v6740, 5
        %v6842 = vsel %vm1561, %v6840, %v6841
        %v6843 = vrot.slane %v6841, 4
        %v6844 = vrot.slane %v6741, 5
        %v6845 = vsel %vm1561, %v6843, %v6844
        %v6846 = vrot.slane %v6742, 5
        %v6847 = vrot.slane %v6846, 4
        %v6848 = vrot.slane %v6743, 5
        %v6849 = vsel %vm1561, %v6847, %v6848
        %v6850 = vrot.slane %v6848, 4
        %v6851 = vrot.slane %v6744, 5
        %v6852 = vsel %vm1561, %v6850, %v6851
        %v6853 = vrot.slane %v6745, 5
        %v6854 = vrot.slane %v6853, 4
        %v6855 = vrot.slane %v6746, 5
        %v6856 = vsel %vm1561, %v6854, %v6855
        %v6857 = vrot.slane %v6855, 4
        %v6858 = vrot.slane %v6747, 5
        %v6859 = vsel %vm1561, %v6857, %v6858
        %v6860 = vrot.slane %v6748, 5
        %v6861 = vrot.slane %v6860, 4
        %v6862 = vrot.slane %v6749, 5
        %v6863 = vsel %vm1561, %v6861, %v6862
        %v6864 = vrot.slane %v6862, 4
        %v6865 = vrot.slane %v6750, 5
        %v6866 = vsel %vm1561, %v6864, %v6865
        %v6867 = vrot.slane %v6751, 5
        %v6868 = vrot.slane %v6867, 4
        %v6869 = vrot.slane %v6752, 5
        %v6870 = vsel %vm1561, %v6868, %v6869
        %v6871 = vrot.slane %v6869, 4
        %v6872 = vrot.slane %v6753, 5
        %v6873 = vsel %vm1561, %v6871, %v6872
        %v6874 = vrot.slane %v6754, 5
        %v6875 = vrot.slane %v6874, 4
        %v6876 = vrot.slane %v6755, 5
        %v6877 = vsel %vm1561, %v6875, %v6876
        %v6878 = vrot.slane %v6876, 4
        %v6879 = vrot.slane %v6756, 5
        %v6880 = vsel %vm1561, %v6878, %v6879
        %v6881 = vrot.slane %v6757, 5
        %v6882 = vrot.slane %v6881, 4
        %v6883 = vrot.slane %v6758, 5
        %v6884 = vsel %vm1561, %v6882, %v6883
        %v6885 = vrot.slane %v6883, 4
        %v6886 = vrot.slane %v6759, 5
        %v6887 = vsel %vm1561, %v6885, %v6886
        %v6888 = vrot.slane %v6760, 5
        %v6889 = vrot.slane %v6888, 4
        %v6890 = vrot.slane %v6761, 5
        %v6891 = vsel %vm1561, %v6889, %v6890
        %v6892 = vrot.slane %v6890, 4
        %v6893 = vrot.slane %v6762, 5
        %v6894 = vsel %vm1561, %v6892, %v6893
        %v6895 = vrot.slane %v6763, 5
        %v6896 = vrot.slane %v6895, 4
        %v6897 = vrot.slane %v6764, 5
        %v6898 = vsel %vm1561, %v6896, %v6897
        %v6899 = vrot.slane %v6897, 4
        %v6900 = vrot.slane %v6765, 5
        %v6901 = vsel %vm1561, %v6899, %v6900
        %v6902 = vrot.slane %v6766, 5
        %v6903 = vrot.slane %v6902, 4
        %v6904 = vrot.slane %v6767, 5
        %v6905 = vsel %vm1561, %v6903, %v6904
        %v6906 = vrot.slane %v6904, 4
        %v6907 = vrot.slane %v6768, 5
        %v6908 = vsel %vm1561, %v6906, %v6907
        %v6909 = vrot.slane %v6769, 5
        %v6910 = vrot.slane %v6909, 4
        %v6911 = vrot.slane %v6770, 5
        %v6912 = vsel %vm1561, %v6910, %v6911
        %v6913 = vrot.slane %v6911, 4
        %v6914 = vrot.slane %v6771, 5
        %v6915 = vsel %vm1561, %v6913, %v6914
        %v6916 = vrot.slane %v6772, 5
        %v6917 = vrot.slane %v6916, 4
        %v6918 = vrot.slane %v6773, 5
        %v6919 = vsel %vm1561, %v6917, %v6918
        %v6920 = vrot.slane %v6918, 4
        %v6921 = vrot.slane %v6774, 5
        %v6922 = vsel %vm1561, %v6920, %v6921
        %v6923 = vrot.slane %v6775, 5
        %v6924 = vrot.slane %v6923, 4
        %v6925 = vrot.slane %v6776, 5
        %v6926 = vsel %vm1561, %v6924, %v6925
        %v6927 = vrot.slane %v6925, 4
        %v6928 = vrot.slane %v6777, 5
        %v6929 = vsel %vm1561, %v6927, %v6928
        %v6930 = vrot.slane %v6778, 5
        %v6931 = vrot.slane %v6930, 4
        %v6932 = vrot.slane %v6779, 5
        %v6933 = vsel %vm1561, %v6931, %v6932
        %v6934 = vrot.slane %v6932, 4
        %v6935 = vrot.slane %v6780, 5
        %v6936 = vsel %vm1561, %v6934, %v6935
        %v6937 = vrot.slane %v6781, 5
        %v6938 = vrot.slane %v6937, 4
        %v6939 = vrot.slane %v6782, 5
        %v6940 = vsel %vm1561, %v6938, %v6939
        %v6941 = vrot.slane %v6939, 4
        %v6942 = vrot.slane %v6783, 5
        %v6943 = vsel %vm1561, %v6941, %v6942
        %6976 = vst [vmem:[#allocation3 + $0x8] sm:$0xf] %v6835
        %6977 = vst [vmem:[#allocation3 + $0x2c] sm:$0xf] %v6838
        %6978 = vst [vmem:[#allocation3 + $0x50] sm:$0xf] %v6842
        %6979 = vst [vmem:[#allocation3 + $0x74] sm:$0xf] %v6845
        %6980 = vst [vmem:[#allocation3 + $0x98] sm:$0xf] %v6849
        %6981 = vst [vmem:[#allocation3 + $0xbc] sm:$0xf] %v6852
        %6982 = vst [vmem:[#allocation3 + $0xe0] sm:$0xf] %v6856
        %6983 = vst [vmem:[#allocation3 + $0x104] sm:$0xf] %v6859
        %6984 = vst [vmem:[#allocation3 + $0x128] sm:$0xf] %v6863
        %6985 = vst [vmem:[#allocation3 + $0x14c] sm:$0xf] %v6866
        %6986 = vst [vmem:[#allocation3 + $0x170] sm:$0xf] %v6870
        %6987 = vst [vmem:[#allocation3 + $0x194] sm:$0xf] %v6873
        %6988 = vst [vmem:[#allocation3 + $0x1b8] sm:$0xf] %v6877
        %6989 = vst [vmem:[#allocation3 + $0x1dc] sm:$0xf] %v6880
        %6990 = vst [vmem:[#allocation3 + $0x200] sm:$0xf] %v6884
        %6991 = vst [vmem:[#allocation3 + $0x224] sm:$0xf] %v6887
        %6992 = vst [vmem:[#allocation3 + $0x248] sm:$0xf] %v6891
        %6993 = vst [vmem:[#allocation3 + $0x26c] sm:$0xf] %v6894
        %6994 = vst [vmem:[#allocation3 + $0x290] sm:$0xf] %v6898
        %6995 = vst [vmem:[#allocation3 + $0x2b4] sm:$0xf] %v6901
        %6996 = vst [vmem:[#allocation3 + $0x2d8] sm:$0xf] %v6905
        %6997 = vst [vmem:[#allocation3 + $0x2fc] sm:$0xf] %v6908
        %6998 = vst [vmem:[#allocation3 + $0x320] sm:$0xf] %v6912
        %6999 = vst [vmem:[#allocation3 + $0x344] sm:$0xf] %v6915
        %7000 = vst [vmem:[#allocation3 + $0x368] sm:$0xf] %v6919
        %7001 = vst [vmem:[#allocation3 + $0x38c] sm:$0xf] %v6922
        %7002 = vst [vmem:[#allocation3 + $0x3b0] sm:$0xf] %v6926
        %7003 = vst [vmem:[#allocation3 + $0x3d4] sm:$0xf] %v6929
        %7004 = vst [vmem:[#allocation3 + $0x3f8] sm:$0xf] %v6933
        %7005 = vst [vmem:[#allocation3 + $0x41c] sm:$0xf] %v6936
        %7006 = vst [vmem:[#allocation3 + $0x440] sm:$0xf] %v6940
        %7007 = vst [vmem:[#allocation3 + $0x464] sm:$0xf] %v6943
        %v7008 = vld [vmem:[%s785] sm:$0xf]
        %v7009 = vld [vmem:[%s785 + $0x4] sm:$0xf]
        %v7010 = vld [vmem:[%s785 + $0xc] sm:$0xf]
        %v7011 = vld [vmem:[%s785 + $0x10] sm:$0xf]
        %v7012 = vld [vmem:[%s785 + $0x18] sm:$0xf]
        %v7013 = vld [vmem:[%s785 + $0x1c] sm:$0xf]
        %v7014 = vld [vmem:[%s785 + $0x24] sm:$0xf]
        %v7015 = vld [vmem:[%s785 + $0x28] sm:$0xf]
        %v7016 = vld [vmem:[%s785 + $0x30] sm:$0xf]
        %v7017 = vld [vmem:[%s785 + $0x34] sm:$0xf]
        %v7018 = vld [vmem:[%s785 + $0x3c] sm:$0xf]
        %v7019 = vld [vmem:[%s785 + $0x40] sm:$0xf]
        %v7020 = vld [vmem:[%s785 + $0x48] sm:$0xf]
        %v7021 = vld [vmem:[%s785 + $0x4c] sm:$0xf]
        %v7022 = vld [vmem:[%s785 + $0x54] sm:$0xf]
        %v7023 = vld [vmem:[%s785 + $0x58] sm:$0xf]
        %v7024 = vld [vmem:[%s785 + $0x60] sm:$0xf]
        %v7025 = vld [vmem:[%s785 + $0x64] sm:$0xf]
        %v7026 = vld [vmem:[%s785 + $0x6c] sm:$0xf]
        %v7027 = vld [vmem:[%s785 + $0x70] sm:$0xf]
        %v7028 = vld [vmem:[%s785 + $0x78] sm:$0xf]
        %v7029 = vld [vmem:[%s785 + $0x7c] sm:$0xf]
        %v7030 = vld [vmem:[%s785 + $0x84] sm:$0xf]
        %v7031 = vld [vmem:[%s785 + $0x88] sm:$0xf]
        %v7032 = vld [vmem:[%s785 + $0x90] sm:$0xf]
        %v7033 = vld [vmem:[%s785 + $0x94] sm:$0xf]
        %v7034 = vld [vmem:[%s785 + $0x9c] sm:$0xf]
        %v7035 = vld [vmem:[%s785 + $0xa0] sm:$0xf]
        %v7036 = vld [vmem:[%s785 + $0xa8] sm:$0xf]
        %v7037 = vld [vmem:[%s785 + $0xac] sm:$0xf]
        %v7038 = vld [vmem:[%s785 + $0xb4] sm:$0xf]
        %v7039 = vld [vmem:[%s785 + $0xb8] sm:$0xf]
        %7040 = vst [vmem:[#allocation3 + $0xc] sm:$0xf] %v7008
        %7041 = vst [vmem:[#allocation3 + $0x30] sm:$0xf] %v7009
        %7042 = vst [vmem:[#allocation3 + $0x54] sm:$0xf] %v7010
        %7043 = vst [vmem:[#allocation3 + $0x78] sm:$0xf] %v7011
        %7044 = vst [vmem:[#allocation3 + $0x9c] sm:$0xf] %v7012
        %7045 = vst [vmem:[#allocation3 + $0xc0] sm:$0xf] %v7013
        %7046 = vst [vmem:[#allocation3 + $0xe4] sm:$0xf] %v7014
        %7047 = vst [vmem:[#allocation3 + $0x108] sm:$0xf] %v7015
        %7048 = vst [vmem:[#allocation3 + $0x12c] sm:$0xf] %v7016
        %7049 = vst [vmem:[#allocation3 + $0x150] sm:$0xf] %v7017
        %7050 = vst [vmem:[#allocation3 + $0x174] sm:$0xf] %v7018
        %7051 = vst [vmem:[#allocation3 + $0x198] sm:$0xf] %v7019
        %7052 = vst [vmem:[#allocation3 + $0x1bc] sm:$0xf] %v7020
        %7053 = vst [vmem:[#allocation3 + $0x1e0] sm:$0xf] %v7021
        %7054 = vst [vmem:[#allocation3 + $0x204] sm:$0xf] %v7022
        %7055 = vst [vmem:[#allocation3 + $0x228] sm:$0xf] %v7023
        %7056 = vst [vmem:[#allocation3 + $0x24c] sm:$0xf] %v7024
        %7057 = vst [vmem:[#allocation3 + $0x270] sm:$0xf] %v7025
        %7058 = vst [vmem:[#allocation3 + $0x294] sm:$0xf] %v7026
        %7059 = vst [vmem:[#allocation3 + $0x2b8] sm:$0xf] %v7027
        %7060 = vst [vmem:[#allocation3 + $0x2dc] sm:$0xf] %v7028
        %7061 = vst [vmem:[#allocation3 + $0x300] sm:$0xf] %v7029
        %7062 = vst [vmem:[#allocation3 + $0x324] sm:$0xf] %v7030
        %7063 = vst [vmem:[#allocation3 + $0x348] sm:$0xf] %v7031
        %7064 = vst [vmem:[#allocation3 + $0x36c] sm:$0xf] %v7032
        %7065 = vst [vmem:[#allocation3 + $0x390] sm:$0xf] %v7033
        %7066 = vst [vmem:[#allocation3 + $0x3b4] sm:$0xf] %v7034
        %7067 = vst [vmem:[#allocation3 + $0x3d8] sm:$0xf] %v7035
        %7068 = vst [vmem:[#allocation3 + $0x3fc] sm:$0xf] %v7036
        %7069 = vst [vmem:[#allocation3 + $0x420] sm:$0xf] %v7037
        %7070 = vst [vmem:[#allocation3 + $0x444] sm:$0xf] %v7038
        %7071 = vst [vmem:[#allocation3 + $0x468] sm:$0xf] %v7039
        %v7072 = vld [vmem:[%s785] sm:$0xf]
        %v7073 = vld [vmem:[%s785 + $0x4] sm:$0xf]
        %v7074 = vld [vmem:[%s785 + $0x8] sm:$0x1]
        %v7075 = vld [vmem:[%s785 + $0xc] sm:$0xf]
        %v7076 = vld [vmem:[%s785 + $0x10] sm:$0xf]
        %v7077 = vld [vmem:[%s785 + $0x14] sm:$0x1]
        %v7078 = vld [vmem:[%s785 + $0x18] sm:$0xf]
        %v7079 = vld [vmem:[%s785 + $0x1c] sm:$0xf]
        %v7080 = vld [vmem:[%s785 + $0x20] sm:$0x1]
        %v7081 = vld [vmem:[%s785 + $0x24] sm:$0xf]
        %v7082 = vld [vmem:[%s785 + $0x28] sm:$0xf]
        %v7083 = vld [vmem:[%s785 + $0x2c] sm:$0x1]
        %v7084 = vld [vmem:[%s785 + $0x30] sm:$0xf]
        %v7085 = vld [vmem:[%s785 + $0x34] sm:$0xf]
        %v7086 = vld [vmem:[%s785 + $0x38] sm:$0x1]
        %v7087 = vld [vmem:[%s785 + $0x3c] sm:$0xf]
        %v7088 = vld [vmem:[%s785 + $0x40] sm:$0xf]
        %v7089 = vld [vmem:[%s785 + $0x44] sm:$0x1]
        %v7090 = vld [vmem:[%s785 + $0x48] sm:$0xf]
        %v7091 = vld [vmem:[%s785 + $0x4c] sm:$0xf]
        %v7092 = vld [vmem:[%s785 + $0x50] sm:$0x1]
        %v7093 = vld [vmem:[%s785 + $0x54] sm:$0xf]
        %v7094 = vld [vmem:[%s785 + $0x58] sm:$0xf]
        %v7095 = vld [vmem:[%s785 + $0x5c] sm:$0x1]
        %v7096 = vld [vmem:[%s785 + $0x60] sm:$0xf]
        %v7097 = vld [vmem:[%s785 + $0x64] sm:$0xf]
        %v7098 = vld [vmem:[%s785 + $0x68] sm:$0x1]
        %v7099 = vld [vmem:[%s785 + $0x6c] sm:$0xf]
        %v7100 = vld [vmem:[%s785 + $0x70] sm:$0xf]
        %v7101 = vld [vmem:[%s785 + $0x74] sm:$0x1]
        %v7102 = vld [vmem:[%s785 + $0x78] sm:$0xf]
        %v7103 = vld [vmem:[%s785 + $0x7c] sm:$0xf]
        %v7104 = vld [vmem:[%s785 + $0x80] sm:$0x1]
        %v7105 = vld [vmem:[%s785 + $0x84] sm:$0xf]
        %v7106 = vld [vmem:[%s785 + $0x88] sm:$0xf]
        %v7107 = vld [vmem:[%s785 + $0x8c] sm:$0x1]
        %v7108 = vld [vmem:[%s785 + $0x90] sm:$0xf]
        %v7109 = vld [vmem:[%s785 + $0x94] sm:$0xf]
        %v7110 = vld [vmem:[%s785 + $0x98] sm:$0x1]
        %v7111 = vld [vmem:[%s785 + $0x9c] sm:$0xf]
        %v7112 = vld [vmem:[%s785 + $0xa0] sm:$0xf]
        %v7113 = vld [vmem:[%s785 + $0xa4] sm:$0x1]
        %v7114 = vld [vmem:[%s785 + $0xa8] sm:$0xf]
        %v7115 = vld [vmem:[%s785 + $0xac] sm:$0xf]
        %v7116 = vld [vmem:[%s785 + $0xb0] sm:$0x1]
        %v7117 = vld [vmem:[%s785 + $0xb4] sm:$0xf]
        %v7118 = vld [vmem:[%s785 + $0xb8] sm:$0xf]
        %v7119 = vld [vmem:[%s785 + $0xbc] sm:$0x1]
        %v7121 = vshrl.u32 %v7072, 16
        %v7123 = vrot.slane %v7121, 4
        %v7124 = vshll.u32 %v7072, 16
        %v7126 = vrot.slane %v7124, 5
        %v7127 = vor.u32 %v7123, %v7126
        %v7128 = vrot.slane %v7127, 4
        %v7130 = vshll.u32 %v7073, 16
        %v7132 = vrot.slane %v7130, 5
        %v7133 = vsel %vm1014, %v7128, %v7132
        %v7134 = vshrl.u32 %v7073, 16
        %v7136 = vrot.slane %v7134, 4
        %v7137 = vor.u32 %v7136, %v7132
        %v7138 = vrot.slane %v7137, 4
        %v7140 = vshll.u32 %v7074, 16
        %v7142 = vrot.slane %v7140, 5
        %v7143 = vsel %vm1014, %v7138, %v7142
        %v7145 = vshrl.u32 %v7075, 16
        %v7147 = vrot.slane %v7145, 4
        %v7148 = vshll.u32 %v7075, 16
        %v7150 = vrot.slane %v7148, 5
        %v7151 = vor.u32 %v7147, %v7150
        %v7152 = vrot.slane %v7151, 4
        %v7154 = vshll.u32 %v7076, 16
        %v7156 = vrot.slane %v7154, 5
        %v7157 = vsel %vm1014, %v7152, %v7156
        %v7158 = vshrl.u32 %v7076, 16
        %v7160 = vrot.slane %v7158, 4
        %v7161 = vor.u32 %v7160, %v7156
        %v7162 = vrot.slane %v7161, 4
        %v7164 = vshll.u32 %v7077, 16
        %v7166 = vrot.slane %v7164, 5
        %v7167 = vsel %vm1014, %v7162, %v7166
        %v7169 = vshrl.u32 %v7078, 16
        %v7171 = vrot.slane %v7169, 4
        %v7172 = vshll.u32 %v7078, 16
        %v7174 = vrot.slane %v7172, 5
        %v7175 = vor.u32 %v7171, %v7174
        %v7176 = vrot.slane %v7175, 4
        %v7178 = vshll.u32 %v7079, 16
        %v7180 = vrot.slane %v7178, 5
        %v7181 = vsel %vm1014, %v7176, %v7180
        %v7182 = vshrl.u32 %v7079, 16
        %v7184 = vrot.slane %v7182, 4
        %v7185 = vor.u32 %v7184, %v7180
        %v7186 = vrot.slane %v7185, 4
        %v7188 = vshll.u32 %v7080, 16
        %v7190 = vrot.slane %v7188, 5
        %v7191 = vsel %vm1014, %v7186, %v7190
        %v7193 = vshrl.u32 %v7081, 16
        %v7195 = vrot.slane %v7193, 4
        %v7196 = vshll.u32 %v7081, 16
        %v7198 = vrot.slane %v7196, 5
        %v7199 = vor.u32 %v7195, %v7198
        %v7200 = vrot.slane %v7199, 4
        %v7202 = vshll.u32 %v7082, 16
        %v7204 = vrot.slane %v7202, 5
        %v7205 = vsel %vm1014, %v7200, %v7204
        %v7206 = vshrl.u32 %v7082, 16
        %v7208 = vrot.slane %v7206, 4
        %v7209 = vor.u32 %v7208, %v7204
        %v7210 = vrot.slane %v7209, 4
        %v7212 = vshll.u32 %v7083, 16
        %v7214 = vrot.slane %v7212, 5
        %v7215 = vsel %vm1014, %v7210, %v7214
        %v7217 = vshrl.u32 %v7084, 16
        %v7219 = vrot.slane %v7217, 4
        %v7220 = vshll.u32 %v7084, 16
        %v7222 = vrot.slane %v7220, 5
        %v7223 = vor.u32 %v7219, %v7222
        %v7224 = vrot.slane %v7223, 4
        %v7226 = vshll.u32 %v7085, 16
        %v7228 = vrot.slane %v7226, 5
        %v7229 = vsel %vm1014, %v7224, %v7228
        %v7230 = vshrl.u32 %v7085, 16
        %v7232 = vrot.slane %v7230, 4
        %v7233 = vor.u32 %v7232, %v7228
        %v7234 = vrot.slane %v7233, 4
        %v7236 = vshll.u32 %v7086, 16
        %v7238 = vrot.slane %v7236, 5
        %v7239 = vsel %vm1014, %v7234, %v7238
        %v7241 = vshrl.u32 %v7087, 16
        %v7243 = vrot.slane %v7241, 4
        %v7244 = vshll.u32 %v7087, 16
        %v7246 = vrot.slane %v7244, 5
        %v7247 = vor.u32 %v7243, %v7246
        %v7248 = vrot.slane %v7247, 4
        %v7250 = vshll.u32 %v7088, 16
        %v7252 = vrot.slane %v7250, 5
        %v7253 = vsel %vm1014, %v7248, %v7252
        %v7254 = vshrl.u32 %v7088, 16
        %v7256 = vrot.slane %v7254, 4
        %v7257 = vor.u32 %v7256, %v7252
        %v7258 = vrot.slane %v7257, 4
        %v7260 = vshll.u32 %v7089, 16
        %v7262 = vrot.slane %v7260, 5
        %v7263 = vsel %vm1014, %v7258, %v7262
        %v7265 = vshrl.u32 %v7090, 16
        %v7267 = vrot.slane %v7265, 4
        %v7268 = vshll.u32 %v7090, 16
        %v7270 = vrot.slane %v7268, 5
        %v7271 = vor.u32 %v7267, %v7270
        %v7272 = vrot.slane %v7271, 4
        %v7274 = vshll.u32 %v7091, 16
        %v7276 = vrot.slane %v7274, 5
        %v7277 = vsel %vm1014, %v7272, %v7276
        %v7278 = vshrl.u32 %v7091, 16
        %v7280 = vrot.slane %v7278, 4
        %v7281 = vor.u32 %v7280, %v7276
        %v7282 = vrot.slane %v7281, 4
        %v7284 = vshll.u32 %v7092, 16
        %v7286 = vrot.slane %v7284, 5
        %v7287 = vsel %vm1014, %v7282, %v7286
        %v7289 = vshrl.u32 %v7093, 16
        %v7291 = vrot.slane %v7289, 4
        %v7292 = vshll.u32 %v7093, 16
        %v7294 = vrot.slane %v7292, 5
        %v7295 = vor.u32 %v7291, %v7294
        %v7296 = vrot.slane %v7295, 4
        %v7298 = vshll.u32 %v7094, 16
        %v7300 = vrot.slane %v7298, 5
        %v7301 = vsel %vm1014, %v7296, %v7300
        %v7302 = vshrl.u32 %v7094, 16
        %v7304 = vrot.slane %v7302, 4
        %v7305 = vor.u32 %v7304, %v7300
        %v7306 = vrot.slane %v7305, 4
        %v7308 = vshll.u32 %v7095, 16
        %v7310 = vrot.slane %v7308, 5
        %v7311 = vsel %vm1014, %v7306, %v7310
        %v7313 = vshrl.u32 %v7096, 16
        %v7315 = vrot.slane %v7313, 4
        %v7316 = vshll.u32 %v7096, 16
        %v7318 = vrot.slane %v7316, 5
        %v7319 = vor.u32 %v7315, %v7318
        %v7320 = vrot.slane %v7319, 4
        %v7322 = vshll.u32 %v7097, 16
        %v7324 = vrot.slane %v7322, 5
        %v7325 = vsel %vm1014, %v7320, %v7324
        %v7326 = vshrl.u32 %v7097, 16
        %v7328 = vrot.slane %v7326, 4
        %v7329 = vor.u32 %v7328, %v7324
        %v7330 = vrot.slane %v7329, 4
        %v7332 = vshll.u32 %v7098, 16
        %v7334 = vrot.slane %v7332, 5
        %v7335 = vsel %vm1014, %v7330, %v7334
        %v7337 = vshrl.u32 %v7099, 16
        %v7339 = vrot.slane %v7337, 4
        %v7340 = vshll.u32 %v7099, 16
        %v7342 = vrot.slane %v7340, 5
        %v7343 = vor.u32 %v7339, %v7342
        %v7344 = vrot.slane %v7343, 4
        %v7346 = vshll.u32 %v7100, 16
        %v7348 = vrot.slane %v7346, 5
        %v7349 = vsel %vm1014, %v7344, %v7348
        %v7350 = vshrl.u32 %v7100, 16
        %v7352 = vrot.slane %v7350, 4
        %v7353 = vor.u32 %v7352, %v7348
        %v7354 = vrot.slane %v7353, 4
        %v7356 = vshll.u32 %v7101, 16
        %v7358 = vrot.slane %v7356, 5
        %v7359 = vsel %vm1014, %v7354, %v7358
        %v7361 = vshrl.u32 %v7102, 16
        %v7363 = vrot.slane %v7361, 4
        %v7364 = vshll.u32 %v7102, 16
        %v7366 = vrot.slane %v7364, 5
        %v7367 = vor.u32 %v7363, %v7366
        %v7368 = vrot.slane %v7367, 4
        %v7370 = vshll.u32 %v7103, 16
        %v7372 = vrot.slane %v7370, 5
        %v7373 = vsel %vm1014, %v7368, %v7372
        %v7374 = vshrl.u32 %v7103, 16
        %v7376 = vrot.slane %v7374, 4
        %v7377 = vor.u32 %v7376, %v7372
        %v7378 = vrot.slane %v7377, 4
        %v7380 = vshll.u32 %v7104, 16
        %v7382 = vrot.slane %v7380, 5
        %v7383 = vsel %vm1014, %v7378, %v7382
        %v7385 = vshrl.u32 %v7105, 16
        %v7387 = vrot.slane %v7385, 4
        %v7388 = vshll.u32 %v7105, 16
        %v7390 = vrot.slane %v7388, 5
        %v7391 = vor.u32 %v7387, %v7390
        %v7392 = vrot.slane %v7391, 4
        %v7394 = vshll.u32 %v7106, 16
        %v7396 = vrot.slane %v7394, 5
        %v7397 = vsel %vm1014, %v7392, %v7396
        %v7398 = vshrl.u32 %v7106, 16
        %v7400 = vrot.slane %v7398, 4
        %v7401 = vor.u32 %v7400, %v7396
        %v7402 = vrot.slane %v7401, 4
        %v7404 = vshll.u32 %v7107, 16
        %v7406 = vrot.slane %v7404, 5
        %v7407 = vsel %vm1014, %v7402, %v7406
        %v7409 = vshrl.u32 %v7108, 16
        %v7411 = vrot.slane %v7409, 4
        %v7412 = vshll.u32 %v7108, 16
        %v7414 = vrot.slane %v7412, 5
        %v7415 = vor.u32 %v7411, %v7414
        %v7416 = vrot.slane %v7415, 4
        %v7418 = vshll.u32 %v7109, 16
        %v7420 = vrot.slane %v7418, 5
        %v7421 = vsel %vm1014, %v7416, %v7420
        %v7422 = vshrl.u32 %v7109, 16
        %v7424 = vrot.slane %v7422, 4
        %v7425 = vor.u32 %v7424, %v7420
        %v7426 = vrot.slane %v7425, 4
        %v7428 = vshll.u32 %v7110, 16
        %v7430 = vrot.slane %v7428, 5
        %v7431 = vsel %vm1014, %v7426, %v7430
        %v7433 = vshrl.u32 %v7111, 16
        %v7435 = vrot.slane %v7433, 4
        %v7436 = vshll.u32 %v7111, 16
        %v7438 = vrot.slane %v7436, 5
        %v7439 = vor.u32 %v7435, %v7438
        %v7440 = vrot.slane %v7439, 4
        %v7442 = vshll.u32 %v7112, 16
        %v7444 = vrot.slane %v7442, 5
        %v7445 = vsel %vm1014, %v7440, %v7444
        %v7446 = vshrl.u32 %v7112, 16
        %v7448 = vrot.slane %v7446, 4
        %v7449 = vor.u32 %v7448, %v7444
        %v7450 = vrot.slane %v7449, 4
        %v7452 = vshll.u32 %v7113, 16
        %v7454 = vrot.slane %v7452, 5
        %v7455 = vsel %vm1014, %v7450, %v7454
        %v7457 = vshrl.u32 %v7114, 16
        %v7459 = vrot.slane %v7457, 4
        %v7460 = vshll.u32 %v7114, 16
        %v7462 = vrot.slane %v7460, 5
        %v7463 = vor.u32 %v7459, %v7462
        %v7464 = vrot.slane %v7463, 4
        %v7466 = vshll.u32 %v7115, 16
        %v7468 = vrot.slane %v7466, 5
        %v7469 = vsel %vm1014, %v7464, %v7468
        %v7470 = vshrl.u32 %v7115, 16
        %v7472 = vrot.slane %v7470, 4
        %v7473 = vor.u32 %v7472, %v7468
        %v7474 = vrot.slane %v7473, 4
        %v7476 = vshll.u32 %v7116, 16
        %v7478 = vrot.slane %v7476, 5
        %v7479 = vsel %vm1014, %v7474, %v7478
        %v7481 = vshrl.u32 %v7117, 16
        %v7483 = vrot.slane %v7481, 4
        %v7484 = vshll.u32 %v7117, 16
        %v7486 = vrot.slane %v7484, 5
        %v7487 = vor.u32 %v7483, %v7486
        %v7488 = vrot.slane %v7487, 4
        %v7490 = vshll.u32 %v7118, 16
        %v7492 = vrot.slane %v7490, 5
        %v7493 = vsel %vm1014, %v7488, %v7492
        %v7494 = vshrl.u32 %v7118, 16
        %v7496 = vrot.slane %v7494, 4
        %v7497 = vor.u32 %v7496, %v7492
        %v7498 = vrot.slane %v7497, 4
        %v7500 = vshll.u32 %v7119, 16
        %v7502 = vrot.slane %v7500, 5
        %v7503 = vsel %vm1014, %v7498, %v7502
        %7536 = vst [vmem:[#allocation3 + $0x10] sm:$0xf] %v7133
        %7537 = vst [vmem:[#allocation3 + $0x34] sm:$0xf] %v7143
        %7538 = vst [vmem:[#allocation3 + $0x58] sm:$0xf] %v7157
        %7539 = vst [vmem:[#allocation3 + $0x7c] sm:$0xf] %v7167
        %7540 = vst [vmem:[#allocation3 + $0xa0] sm:$0xf] %v7181
        %7541 = vst [vmem:[#allocation3 + $0xc4] sm:$0xf] %v7191
        %7542 = vst [vmem:[#allocation3 + $0xe8] sm:$0xf] %v7205
        %7543 = vst [vmem:[#allocation3 + $0x10c] sm:$0xf] %v7215
        %7544 = vst [vmem:[#allocation3 + $0x130] sm:$0xf] %v7229
        %7545 = vst [vmem:[#allocation3 + $0x154] sm:$0xf] %v7239
        %7546 = vst [vmem:[#allocation3 + $0x178] sm:$0xf] %v7253
        %7547 = vst [vmem:[#allocation3 + $0x19c] sm:$0xf] %v7263
        %7548 = vst [vmem:[#allocation3 + $0x1c0] sm:$0xf] %v7277
        %7549 = vst [vmem:[#allocation3 + $0x1e4] sm:$0xf] %v7287
        %7550 = vst [vmem:[#allocation3 + $0x208] sm:$0xf] %v7301
        %7551 = vst [vmem:[#allocation3 + $0x22c] sm:$0xf] %v7311
        %7552 = vst [vmem:[#allocation3 + $0x250] sm:$0xf] %v7325
        %7553 = vst [vmem:[#allocation3 + $0x274] sm:$0xf] %v7335
        %7554 = vst [vmem:[#allocation3 + $0x298] sm:$0xf] %v7349
        %7555 = vst [vmem:[#allocation3 + $0x2bc] sm:$0xf] %v7359
        %7556 = vst [vmem:[#allocation3 + $0x2e0] sm:$0xf] %v7373
        %7557 = vst [vmem:[#allocation3 + $0x304] sm:$0xf] %v7383
        %7558 = vst [vmem:[#allocation3 + $0x328] sm:$0xf] %v7397
        %7559 = vst [vmem:[#allocation3 + $0x34c] sm:$0xf] %v7407
        %7560 = vst [vmem:[#allocation3 + $0x370] sm:$0xf] %v7421
        %7561 = vst [vmem:[#allocation3 + $0x394] sm:$0xf] %v7431
        %7562 = vst [vmem:[#allocation3 + $0x3b8] sm:$0xf] %v7445
        %7563 = vst [vmem:[#allocation3 + $0x3dc] sm:$0xf] %v7455
        %7564 = vst [vmem:[#allocation3 + $0x400] sm:$0xf] %v7469
        %7565 = vst [vmem:[#allocation3 + $0x424] sm:$0xf] %v7479
        %7566 = vst [vmem:[#allocation3 + $0x448] sm:$0xf] %v7493
        %7567 = vst [vmem:[#allocation3 + $0x46c] sm:$0xf] %v7503
        %v7568 = vld [vmem:[%s785] sm:$0xe]
        %v7569 = vld [vmem:[%s785 + $0x4] sm:$0xf]
        %v7570 = vld [vmem:[%s785 + $0x8] sm:$0x1]
        %v7571 = vld [vmem:[%s785 + $0xc] sm:$0xe]
        %v7572 = vld [vmem:[%s785 + $0x10] sm:$0xf]
        %v7573 = vld [vmem:[%s785 + $0x14] sm:$0x1]
        %v7574 = vld [vmem:[%s785 + $0x18] sm:$0xe]
        %v7575 = vld [vmem:[%s785 + $0x1c] sm:$0xf]
        %v7576 = vld [vmem:[%s785 + $0x20] sm:$0x1]
        %v7577 = vld [vmem:[%s785 + $0x24] sm:$0xe]
        %v7578 = vld [vmem:[%s785 + $0x28] sm:$0xf]
        %v7579 = vld [vmem:[%s785 + $0x2c] sm:$0x1]
        %v7580 = vld [vmem:[%s785 + $0x30] sm:$0xe]
        %v7581 = vld [vmem:[%s785 + $0x34] sm:$0xf]
        %v7582 = vld [vmem:[%s785 + $0x38] sm:$0x1]
        %v7583 = vld [vmem:[%s785 + $0x3c] sm:$0xe]
        %v7584 = vld [vmem:[%s785 + $0x40] sm:$0xf]
        %v7585 = vld [vmem:[%s785 + $0x44] sm:$0x1]
        %v7586 = vld [vmem:[%s785 + $0x48] sm:$0xe]
        %v7587 = vld [vmem:[%s785 + $0x4c] sm:$0xf]
        %v7588 = vld [vmem:[%s785 + $0x50] sm:$0x1]
        %v7589 = vld [vmem:[%s785 + $0x54] sm:$0xe]
        %v7590 = vld [vmem:[%s785 + $0x58] sm:$0xf]
        %v7591 = vld [vmem:[%s785 + $0x5c] sm:$0x1]
        %v7592 = vld [vmem:[%s785 + $0x60] sm:$0xe]
        %v7593 = vld [vmem:[%s785 + $0x64] sm:$0xf]
        %v7594 = vld [vmem:[%s785 + $0x68] sm:$0x1]
        %v7595 = vld [vmem:[%s785 + $0x6c] sm:$0xe]
        %v7596 = vld [vmem:[%s785 + $0x70] sm:$0xf]
        %v7597 = vld [vmem:[%s785 + $0x74] sm:$0x1]
        %v7598 = vld [vmem:[%s785 + $0x78] sm:$0xe]
        %v7599 = vld [vmem:[%s785 + $0x7c] sm:$0xf]
        %v7600 = vld [vmem:[%s785 + $0x80] sm:$0x1]
        %v7601 = vld [vmem:[%s785 + $0x84] sm:$0xe]
        %v7602 = vld [vmem:[%s785 + $0x88] sm:$0xf]
        %v7603 = vld [vmem:[%s785 + $0x8c] sm:$0x1]
        %v7604 = vld [vmem:[%s785 + $0x90] sm:$0xe]
        %v7605 = vld [vmem:[%s785 + $0x94] sm:$0xf]
        %v7606 = vld [vmem:[%s785 + $0x98] sm:$0x1]
        %v7607 = vld [vmem:[%s785 + $0x9c] sm:$0xe]
        %v7608 = vld [vmem:[%s785 + $0xa0] sm:$0xf]
        %v7609 = vld [vmem:[%s785 + $0xa4] sm:$0x1]
        %v7610 = vld [vmem:[%s785 + $0xa8] sm:$0xe]
        %v7611 = vld [vmem:[%s785 + $0xac] sm:$0xf]
        %v7612 = vld [vmem:[%s785 + $0xb0] sm:$0x1]
        %v7613 = vld [vmem:[%s785 + $0xb4] sm:$0xe]
        %v7614 = vld [vmem:[%s785 + $0xb8] sm:$0xf]
        %v7615 = vld [vmem:[%s785 + $0xbc] sm:$0x1]
        %v7664 = vrot.slane %v7568, 5
        %v7665 = vrot.slane %v7664, 4
        %v7666 = vrot.slane %v7569, 5
        %v7667 = vsel %vm1561, %v7665, %v7666
        %v7668 = vrot.slane %v7666, 4
        %v7669 = vrot.slane %v7570, 5
        %v7670 = vsel %vm1561, %v7668, %v7669
        %v7671 = vrot.slane %v7571, 5
        %v7672 = vrot.slane %v7671, 4
        %v7673 = vrot.slane %v7572, 5
        %v7674 = vsel %vm1561, %v7672, %v7673
        %v7675 = vrot.slane %v7673, 4
        %v7676 = vrot.slane %v7573, 5
        %v7677 = vsel %vm1561, %v7675, %v7676
        %v7678 = vrot.slane %v7574, 5
        %v7679 = vrot.slane %v7678, 4
        %v7680 = vrot.slane %v7575, 5
        %v7681 = vsel %vm1561, %v7679, %v7680
        %v7682 = vrot.slane %v7680, 4
        %v7683 = vrot.slane %v7576, 5
        %v7684 = vsel %vm1561, %v7682, %v7683
        %v7685 = vrot.slane %v7577, 5
        %v7686 = vrot.slane %v7685, 4
        %v7687 = vrot.slane %v7578, 5
        %v7688 = vsel %vm1561, %v7686, %v7687
        %v7689 = vrot.slane %v7687, 4
        %v7690 = vrot.slane %v7579, 5
        %v7691 = vsel %vm1561, %v7689, %v7690
        %v7692 = vrot.slane %v7580, 5
        %v7693 = vrot.slane %v7692, 4
        %v7694 = vrot.slane %v7581, 5
        %v7695 = vsel %vm1561, %v7693, %v7694
        %v7696 = vrot.slane %v7694, 4
        %v7697 = vrot.slane %v7582, 5
        %v7698 = vsel %vm1561, %v7696, %v7697
        %v7699 = vrot.slane %v7583, 5
        %v7700 = vrot.slane %v7699, 4
        %v7701 = vrot.slane %v7584, 5
        %v7702 = vsel %vm1561, %v7700, %v7701
        %v7703 = vrot.slane %v7701, 4
        %v7704 = vrot.slane %v7585, 5
        %v7705 = vsel %vm1561, %v7703, %v7704
        %v7706 = vrot.slane %v7586, 5
        %v7707 = vrot.slane %v7706, 4
        %v7708 = vrot.slane %v7587, 5
        %v7709 = vsel %vm1561, %v7707, %v7708
        %v7710 = vrot.slane %v7708, 4
        %v7711 = vrot.slane %v7588, 5
        %v7712 = vsel %vm1561, %v7710, %v7711
        %v7713 = vrot.slane %v7589, 5
        %v7714 = vrot.slane %v7713, 4
        %v7715 = vrot.slane %v7590, 5
        %v7716 = vsel %vm1561, %v7714, %v7715
        %v7717 = vrot.slane %v7715, 4
        %v7718 = vrot.slane %v7591, 5
        %v7719 = vsel %vm1561, %v7717, %v7718
        %v7720 = vrot.slane %v7592, 5
        %v7721 = vrot.slane %v7720, 4
        %v7722 = vrot.slane %v7593, 5
        %v7723 = vsel %vm1561, %v7721, %v7722
        %v7724 = vrot.slane %v7722, 4
        %v7725 = vrot.slane %v7594, 5
        %v7726 = vsel %vm1561, %v7724, %v7725
        %v7727 = vrot.slane %v7595, 5
        %v7728 = vrot.slane %v7727, 4
        %v7729 = vrot.slane %v7596, 5
        %v7730 = vsel %vm1561, %v7728, %v7729
        %v7731 = vrot.slane %v7729, 4
        %v7732 = vrot.slane %v7597, 5
        %v7733 = vsel %vm1561, %v7731, %v7732
        %v7734 = vrot.slane %v7598, 5
        %v7735 = vrot.slane %v7734, 4
        %v7736 = vrot.slane %v7599, 5
        %v7737 = vsel %vm1561, %v7735, %v7736
        %v7738 = vrot.slane %v7736, 4
        %v7739 = vrot.slane %v7600, 5
        %v7740 = vsel %vm1561, %v7738, %v7739
        %v7741 = vrot.slane %v7601, 5
        %v7742 = vrot.slane %v7741, 4
        %v7743 = vrot.slane %v7602, 5
        %v7744 = vsel %vm1561, %v7742, %v7743
        %v7745 = vrot.slane %v7743, 4
        %v7746 = vrot.slane %v7603, 5
        %v7747 = vsel %vm1561, %v7745, %v7746
        %v7748 = vrot.slane %v7604, 5
        %v7749 = vrot.slane %v7748, 4
        %v7750 = vrot.slane %v7605, 5
        %v7751 = vsel %vm1561, %v7749, %v7750
        %v7752 = vrot.slane %v7750, 4
        %v7753 = vrot.slane %v7606, 5
        %v7754 = vsel %vm1561, %v7752, %v7753
        %v7755 = vrot.slane %v7607, 5
        %v7756 = vrot.slane %v7755, 4
        %v7757 = vrot.slane %v7608, 5
        %v7758 = vsel %vm1561, %v7756, %v7757
        %v7759 = vrot.slane %v7757, 4
        %v7760 = vrot.slane %v7609, 5
        %v7761 = vsel %vm1561, %v7759, %v7760
        %v7762 = vrot.slane %v7610, 5
        %v7763 = vrot.slane %v7762, 4
        %v7764 = vrot.slane %v7611, 5
        %v7765 = vsel %vm1561, %v7763, %v7764
        %v7766 = vrot.slane %v7764, 4
        %v7767 = vrot.slane %v7612, 5
        %v7768 = vsel %vm1561, %v7766, %v7767
        %v7769 = vrot.slane %v7613, 5
        %v7770 = vrot.slane %v7769, 4
        %v7771 = vrot.slane %v7614, 5
        %v7772 = vsel %vm1561, %v7770, %v7771
        %v7773 = vrot.slane %v7771, 4
        %v7774 = vrot.slane %v7615, 5
        %v7775 = vsel %vm1561, %v7773, %v7774
        %7808 = vst [vmem:[#allocation3 + $0x14] sm:$0xf] %v7667
        %7809 = vst [vmem:[#allocation3 + $0x38] sm:$0xf] %v7670
        %7810 = vst [vmem:[#allocation3 + $0x5c] sm:$0xf] %v7674
        %7811 = vst [vmem:[#allocation3 + $0x80] sm:$0xf] %v7677
        %7812 = vst [vmem:[#allocation3 + $0xa4] sm:$0xf] %v7681
        %7813 = vst [vmem:[#allocation3 + $0xc8] sm:$0xf] %v7684
        %7814 = vst [vmem:[#allocation3 + $0xec] sm:$0xf] %v7688
        %7815 = vst [vmem:[#allocation3 + $0x110] sm:$0xf] %v7691
        %7816 = vst [vmem:[#allocation3 + $0x134] sm:$0xf] %v7695
        %7817 = vst [vmem:[#allocation3 + $0x158] sm:$0xf] %v7698
        %7818 = vst [vmem:[#allocation3 + $0x17c] sm:$0xf] %v7702
        %7819 = vst [vmem:[#allocation3 + $0x1a0] sm:$0xf] %v7705
        %7820 = vst [vmem:[#allocation3 + $0x1c4] sm:$0xf] %v7709
        %7821 = vst [vmem:[#allocation3 + $0x1e8] sm:$0xf] %v7712
        %7822 = vst [vmem:[#allocation3 + $0x20c] sm:$0xf] %v7716
        %7823 = vst [vmem:[#allocation3 + $0x230] sm:$0xf] %v7719
        %7824 = vst [vmem:[#allocation3 + $0x254] sm:$0xf] %v7723
        %7825 = vst [vmem:[#allocation3 + $0x278] sm:$0xf] %v7726
        %7826 = vst [vmem:[#allocation3 + $0x29c] sm:$0xf] %v7730
        %7827 = vst [vmem:[#allocation3 + $0x2c0] sm:$0xf] %v7733
        %7828 = vst [vmem:[#allocation3 + $0x2e4] sm:$0xf] %v7737
        %7829 = vst [vmem:[#allocation3 + $0x308] sm:$0xf] %v7740
        %7830 = vst [vmem:[#allocation3 + $0x32c] sm:$0xf] %v7744
        %7831 = vst [vmem:[#allocation3 + $0x350] sm:$0xf] %v7747
        %7832 = vst [vmem:[#allocation3 + $0x374] sm:$0xf] %v7751
        %7833 = vst [vmem:[#allocation3 + $0x398] sm:$0xf] %v7754
        %7834 = vst [vmem:[#allocation3 + $0x3bc] sm:$0xf] %v7758
        %7835 = vst [vmem:[#allocation3 + $0x3e0] sm:$0xf] %v7761
        %7836 = vst [vmem:[#allocation3 + $0x404] sm:$0xf] %v7765
        %7837 = vst [vmem:[#allocation3 + $0x428] sm:$0xf] %v7768
        %7838 = vst [vmem:[#allocation3 + $0x44c] sm:$0xf] %v7772
        %7839 = vst [vmem:[#allocation3 + $0x470] sm:$0xf] %v7775
        %v7840 = vld [vmem:[%s2570] sm:$0xf]
        %v7841 = vld [vmem:[%s2570 + $0x4] sm:$0xf]
        %v7842 = vld [vmem:[%s2570 + $0xc] sm:$0xf]
        %v7843 = vld [vmem:[%s2570 + $0x10] sm:$0xf]
        %v7844 = vld [vmem:[%s2570 + $0x18] sm:$0xf]
        %v7845 = vld [vmem:[%s2570 + $0x1c] sm:$0xf]
        %v7846 = vld [vmem:[%s2570 + $0x24] sm:$0xf]
        %v7847 = vld [vmem:[%s2570 + $0x28] sm:$0xf]
        %v7848 = vld [vmem:[%s2570 + $0x30] sm:$0xf]
        %v7849 = vld [vmem:[%s2570 + $0x34] sm:$0xf]
        %v7850 = vld [vmem:[%s2570 + $0x3c] sm:$0xf]
        %v7851 = vld [vmem:[%s2570 + $0x40] sm:$0xf]
        %v7852 = vld [vmem:[%s2570 + $0x48] sm:$0xf]
        %v7853 = vld [vmem:[%s2570 + $0x4c] sm:$0xf]
        %v7854 = vld [vmem:[%s2570 + $0x54] sm:$0xf]
        %v7855 = vld [vmem:[%s2570 + $0x58] sm:$0xf]
        %v7856 = vld [vmem:[%s2570 + $0x60] sm:$0xf]
        %v7857 = vld [vmem:[%s2570 + $0x64] sm:$0xf]
        %v7858 = vld [vmem:[%s2570 + $0x6c] sm:$0xf]
        %v7859 = vld [vmem:[%s2570 + $0x70] sm:$0xf]
        %v7860 = vld [vmem:[%s2570 + $0x78] sm:$0xf]
        %v7861 = vld [vmem:[%s2570 + $0x7c] sm:$0xf]
        %v7862 = vld [vmem:[%s2570 + $0x84] sm:$0xf]
        %v7863 = vld [vmem:[%s2570 + $0x88] sm:$0xf]
        %v7864 = vld [vmem:[%s2570 + $0x90] sm:$0xf]
        %v7865 = vld [vmem:[%s2570 + $0x94] sm:$0xf]
        %v7866 = vld [vmem:[%s2570 + $0x9c] sm:$0xf]
        %v7867 = vld [vmem:[%s2570 + $0xa0] sm:$0xf]
        %v7868 = vld [vmem:[%s2570 + $0xa8] sm:$0xf]
        %v7869 = vld [vmem:[%s2570 + $0xac] sm:$0xf]
        %v7870 = vld [vmem:[%s2570 + $0xb4] sm:$0xf]
        %v7871 = vld [vmem:[%s2570 + $0xb8] sm:$0xf]
        %7872 = vst [vmem:[#allocation3 + $0x18] sm:$0xf] %v7840
        %7873 = vst [vmem:[#allocation3 + $0x3c] sm:$0xf] %v7841
        %7874 = vst [vmem:[#allocation3 + $0x60] sm:$0xf] %v7842
        %7875 = vst [vmem:[#allocation3 + $0x84] sm:$0xf] %v7843
        %7876 = vst [vmem:[#allocation3 + $0xa8] sm:$0xf] %v7844
        %7877 = vst [vmem:[#allocation3 + $0xcc] sm:$0xf] %v7845
        %7878 = vst [vmem:[#allocation3 + $0xf0] sm:$0xf] %v7846
        %7879 = vst [vmem:[#allocation3 + $0x114] sm:$0xf] %v7847
        %7880 = vst [vmem:[#allocation3 + $0x138] sm:$0xf] %v7848
        %7881 = vst [vmem:[#allocation3 + $0x15c] sm:$0xf] %v7849
        %7882 = vst [vmem:[#allocation3 + $0x180] sm:$0xf] %v7850
        %7883 = vst [vmem:[#allocation3 + $0x1a4] sm:$0xf] %v7851
        %7884 = vst [vmem:[#allocation3 + $0x1c8] sm:$0xf] %v7852
        %7885 = vst [vmem:[#allocation3 + $0x1ec] sm:$0xf] %v7853
        %7886 = vst [vmem:[#allocation3 + $0x210] sm:$0xf] %v7854
        %7887 = vst [vmem:[#allocation3 + $0x234] sm:$0xf] %v7855
        %7888 = vst [vmem:[#allocation3 + $0x258] sm:$0xf] %v7856
        %7889 = vst [vmem:[#allocation3 + $0x27c] sm:$0xf] %v7857
        %7890 = vst [vmem:[#allocation3 + $0x2a0] sm:$0xf] %v7858
        %7891 = vst [vmem:[#allocation3 + $0x2c4] sm:$0xf] %v7859
        %7892 = vst [vmem:[#allocation3 + $0x2e8] sm:$0xf] %v7860
        %7893 = vst [vmem:[#allocation3 + $0x30c] sm:$0xf] %v7861
        %7894 = vst [vmem:[#allocation3 + $0x330] sm:$0xf] %v7862
        %7895 = vst [vmem:[#allocation3 + $0x354] sm:$0xf] %v7863
        %7896 = vst [vmem:[#allocation3 + $0x378] sm:$0xf] %v7864
        %7897 = vst [vmem:[#allocation3 + $0x39c] sm:$0xf] %v7865
        %7898 = vst [vmem:[#allocation3 + $0x3c0] sm:$0xf] %v7866
        %7899 = vst [vmem:[#allocation3 + $0x3e4] sm:$0xf] %v7867
        %7900 = vst [vmem:[#allocation3 + $0x408] sm:$0xf] %v7868
        %7901 = vst [vmem:[#allocation3 + $0x42c] sm:$0xf] %v7869
        %7902 = vst [vmem:[#allocation3 + $0x450] sm:$0xf] %v7870
        %7903 = vst [vmem:[#allocation3 + $0x474] sm:$0xf] %v7871
        %v7904 = vld [vmem:[%s2570] sm:$0xf]
        %v7905 = vld [vmem:[%s2570 + $0x4] sm:$0xf]
        %v7906 = vld [vmem:[%s2570 + $0x8] sm:$0x1]
        %v7907 = vld [vmem:[%s2570 + $0xc] sm:$0xf]
        %v7908 = vld [vmem:[%s2570 + $0x10] sm:$0xf]
        %v7909 = vld [vmem:[%s2570 + $0x14] sm:$0x1]
        %v7910 = vld [vmem:[%s2570 + $0x18] sm:$0xf]
        %v7911 = vld [vmem:[%s2570 + $0x1c] sm:$0xf]
        %v7912 = vld [vmem:[%s2570 + $0x20] sm:$0x1]
        %v7913 = vld [vmem:[%s2570 + $0x24] sm:$0xf]
        %v7914 = vld [vmem:[%s2570 + $0x28] sm:$0xf]
        %v7915 = vld [vmem:[%s2570 + $0x2c] sm:$0x1]
        %v7916 = vld [vmem:[%s2570 + $0x30] sm:$0xf]
        %v7917 = vld [vmem:[%s2570 + $0x34] sm:$0xf]
        %v7918 = vld [vmem:[%s2570 + $0x38] sm:$0x1]
        %v7919 = vld [vmem:[%s2570 + $0x3c] sm:$0xf]
        %v7920 = vld [vmem:[%s2570 + $0x40] sm:$0xf]
        %v7921 = vld [vmem:[%s2570 + $0x44] sm:$0x1]
        %v7922 = vld [vmem:[%s2570 + $0x48] sm:$0xf]
        %v7923 = vld [vmem:[%s2570 + $0x4c] sm:$0xf]
        %v7924 = vld [vmem:[%s2570 + $0x50] sm:$0x1]
        %v7925 = vld [vmem:[%s2570 + $0x54] sm:$0xf]
        %v7926 = vld [vmem:[%s2570 + $0x58] sm:$0xf]
        %v7927 = vld [vmem:[%s2570 + $0x5c] sm:$0x1]
        %v7928 = vld [vmem:[%s2570 + $0x60] sm:$0xf]
        %v7929 = vld [vmem:[%s2570 + $0x64] sm:$0xf]
        %v7930 = vld [vmem:[%s2570 + $0x68] sm:$0x1]
        %v7931 = vld [vmem:[%s2570 + $0x6c] sm:$0xf]
        %v7932 = vld [vmem:[%s2570 + $0x70] sm:$0xf]
        %v7933 = vld [vmem:[%s2570 + $0x74] sm:$0x1]
        %v7934 = vld [vmem:[%s2570 + $0x78] sm:$0xf]
        %v7935 = vld [vmem:[%s2570 + $0x7c] sm:$0xf]
        %v7936 = vld [vmem:[%s2570 + $0x80] sm:$0x1]
        %v7937 = vld [vmem:[%s2570 + $0x84] sm:$0xf]
        %v7938 = vld [vmem:[%s2570 + $0x88] sm:$0xf]
        %v7939 = vld [vmem:[%s2570 + $0x8c] sm:$0x1]
        %v7940 = vld [vmem:[%s2570 + $0x90] sm:$0xf]
        %v7941 = vld [vmem:[%s2570 + $0x94] sm:$0xf]
        %v7942 = vld [vmem:[%s2570 + $0x98] sm:$0x1]
        %v7943 = vld [vmem:[%s2570 + $0x9c] sm:$0xf]
        %v7944 = vld [vmem:[%s2570 + $0xa0] sm:$0xf]
        %v7945 = vld [vmem:[%s2570 + $0xa4] sm:$0x1]
        %v7946 = vld [vmem:[%s2570 + $0xa8] sm:$0xf]
        %v7947 = vld [vmem:[%s2570 + $0xac] sm:$0xf]
        %v7948 = vld [vmem:[%s2570 + $0xb0] sm:$0x1]
        %v7949 = vld [vmem:[%s2570 + $0xb4] sm:$0xf]
        %v7950 = vld [vmem:[%s2570 + $0xb8] sm:$0xf]
        %v7951 = vld [vmem:[%s2570 + $0xbc] sm:$0x1]
        %v7953 = vshrl.u32 %v7904, 16
        %v7955 = vrot.slane %v7953, 4
        %v7956 = vshll.u32 %v7904, 16
        %v7958 = vrot.slane %v7956, 5
        %v7959 = vor.u32 %v7955, %v7958
        %v7960 = vrot.slane %v7959, 4
        %v7962 = vshll.u32 %v7905, 16
        %v7964 = vrot.slane %v7962, 5
        %v7965 = vsel %vm1014, %v7960, %v7964
        %v7966 = vshrl.u32 %v7905, 16
        %v7968 = vrot.slane %v7966, 4
        %v7969 = vor.u32 %v7968, %v7964
        %v7970 = vrot.slane %v7969, 4
        %v7972 = vshll.u32 %v7906, 16
        %v7974 = vrot.slane %v7972, 5
        %v7975 = vsel %vm1014, %v7970, %v7974
        %v7977 = vshrl.u32 %v7907, 16
        %v7979 = vrot.slane %v7977, 4
        %v7980 = vshll.u32 %v7907, 16
        %v7982 = vrot.slane %v7980, 5
        %v7983 = vor.u32 %v7979, %v7982
        %v7984 = vrot.slane %v7983, 4
        %v7986 = vshll.u32 %v7908, 16
        %v7988 = vrot.slane %v7986, 5
        %v7989 = vsel %vm1014, %v7984, %v7988
        %v7990 = vshrl.u32 %v7908, 16
        %v7992 = vrot.slane %v7990, 4
        %v7993 = vor.u32 %v7992, %v7988
        %v7994 = vrot.slane %v7993, 4
        %v7996 = vshll.u32 %v7909, 16
        %v7998 = vrot.slane %v7996, 5
        %v7999 = vsel %vm1014, %v7994, %v7998
        %v8001 = vshrl.u32 %v7910, 16
        %v8003 = vrot.slane %v8001, 4
        %v8004 = vshll.u32 %v7910, 16
        %v8006 = vrot.slane %v8004, 5
        %v8007 = vor.u32 %v8003, %v8006
        %v8008 = vrot.slane %v8007, 4
        %v8010 = vshll.u32 %v7911, 16
        %v8012 = vrot.slane %v8010, 5
        %v8013 = vsel %vm1014, %v8008, %v8012
        %v8014 = vshrl.u32 %v7911, 16
        %v8016 = vrot.slane %v8014, 4
        %v8017 = vor.u32 %v8016, %v8012
        %v8018 = vrot.slane %v8017, 4
        %v8020 = vshll.u32 %v7912, 16
        %v8022 = vrot.slane %v8020, 5
        %v8023 = vsel %vm1014, %v8018, %v8022
        %v8025 = vshrl.u32 %v7913, 16
        %v8027 = vrot.slane %v8025, 4
        %v8028 = vshll.u32 %v7913, 16
        %v8030 = vrot.slane %v8028, 5
        %v8031 = vor.u32 %v8027, %v8030
        %v8032 = vrot.slane %v8031, 4
        %v8034 = vshll.u32 %v7914, 16
        %v8036 = vrot.slane %v8034, 5
        %v8037 = vsel %vm1014, %v8032, %v8036
        %v8038 = vshrl.u32 %v7914, 16
        %v8040 = vrot.slane %v8038, 4
        %v8041 = vor.u32 %v8040, %v8036
        %v8042 = vrot.slane %v8041, 4
        %v8044 = vshll.u32 %v7915, 16
        %v8046 = vrot.slane %v8044, 5
        %v8047 = vsel %vm1014, %v8042, %v8046
        %v8049 = vshrl.u32 %v7916, 16
        %v8051 = vrot.slane %v8049, 4
        %v8052 = vshll.u32 %v7916, 16
        %v8054 = vrot.slane %v8052, 5
        %v8055 = vor.u32 %v8051, %v8054
        %v8056 = vrot.slane %v8055, 4
        %v8058 = vshll.u32 %v7917, 16
        %v8060 = vrot.slane %v8058, 5
        %v8061 = vsel %vm1014, %v8056, %v8060
        %v8062 = vshrl.u32 %v7917, 16
        %v8064 = vrot.slane %v8062, 4
        %v8065 = vor.u32 %v8064, %v8060
        %v8066 = vrot.slane %v8065, 4
        %v8068 = vshll.u32 %v7918, 16
        %v8070 = vrot.slane %v8068, 5
        %v8071 = vsel %vm1014, %v8066, %v8070
        %v8073 = vshrl.u32 %v7919, 16
        %v8075 = vrot.slane %v8073, 4
        %v8076 = vshll.u32 %v7919, 16
        %v8078 = vrot.slane %v8076, 5
        %v8079 = vor.u32 %v8075, %v8078
        %v8080 = vrot.slane %v8079, 4
        %v8082 = vshll.u32 %v7920, 16
        %v8084 = vrot.slane %v8082, 5
        %v8085 = vsel %vm1014, %v8080, %v8084
        %v8086 = vshrl.u32 %v7920, 16
        %v8088 = vrot.slane %v8086, 4
        %v8089 = vor.u32 %v8088, %v8084
        %v8090 = vrot.slane %v8089, 4
        %v8092 = vshll.u32 %v7921, 16
        %v8094 = vrot.slane %v8092, 5
        %v8095 = vsel %vm1014, %v8090, %v8094
        %v8097 = vshrl.u32 %v7922, 16
        %v8099 = vrot.slane %v8097, 4
        %v8100 = vshll.u32 %v7922, 16
        %v8102 = vrot.slane %v8100, 5
        %v8103 = vor.u32 %v8099, %v8102
        %v8104 = vrot.slane %v8103, 4
        %v8106 = vshll.u32 %v7923, 16
        %v8108 = vrot.slane %v8106, 5
        %v8109 = vsel %vm1014, %v8104, %v8108
        %v8110 = vshrl.u32 %v7923, 16
        %v8112 = vrot.slane %v8110, 4
        %v8113 = vor.u32 %v8112, %v8108
        %v8114 = vrot.slane %v8113, 4
        %v8116 = vshll.u32 %v7924, 16
        %v8118 = vrot.slane %v8116, 5
        %v8119 = vsel %vm1014, %v8114, %v8118
        %v8121 = vshrl.u32 %v7925, 16
        %v8123 = vrot.slane %v8121, 4
        %v8124 = vshll.u32 %v7925, 16
        %v8126 = vrot.slane %v8124, 5
        %v8127 = vor.u32 %v8123, %v8126
        %v8128 = vrot.slane %v8127, 4
        %v8130 = vshll.u32 %v7926, 16
        %v8132 = vrot.slane %v8130, 5
        %v8133 = vsel %vm1014, %v8128, %v8132
        %v8134 = vshrl.u32 %v7926, 16
        %v8136 = vrot.slane %v8134, 4
        %v8137 = vor.u32 %v8136, %v8132
        %v8138 = vrot.slane %v8137, 4
        %v8140 = vshll.u32 %v7927, 16
        %v8142 = vrot.slane %v8140, 5
        %v8143 = vsel %vm1014, %v8138, %v8142
        %v8145 = vshrl.u32 %v7928, 16
        %v8147 = vrot.slane %v8145, 4
        %v8148 = vshll.u32 %v7928, 16
        %v8150 = vrot.slane %v8148, 5
        %v8151 = vor.u32 %v8147, %v8150
        %v8152 = vrot.slane %v8151, 4
        %v8154 = vshll.u32 %v7929, 16
        %v8156 = vrot.slane %v8154, 5
        %v8157 = vsel %vm1014, %v8152, %v8156
        %v8158 = vshrl.u32 %v7929, 16
        %v8160 = vrot.slane %v8158, 4
        %v8161 = vor.u32 %v8160, %v8156
        %v8162 = vrot.slane %v8161, 4
        %v8164 = vshll.u32 %v7930, 16
        %v8166 = vrot.slane %v8164, 5
        %v8167 = vsel %vm1014, %v8162, %v8166
        %v8169 = vshrl.u32 %v7931, 16
        %v8171 = vrot.slane %v8169, 4
        %v8172 = vshll.u32 %v7931, 16
        %v8174 = vrot.slane %v8172, 5
        %v8175 = vor.u32 %v8171, %v8174
        %v8176 = vrot.slane %v8175, 4
        %v8178 = vshll.u32 %v7932, 16
        %v8180 = vrot.slane %v8178, 5
        %v8181 = vsel %vm1014, %v8176, %v8180
        %v8182 = vshrl.u32 %v7932, 16
        %v8184 = vrot.slane %v8182, 4
        %v8185 = vor.u32 %v8184, %v8180
        %v8186 = vrot.slane %v8185, 4
        %v8188 = vshll.u32 %v7933, 16
        %v8190 = vrot.slane %v8188, 5
        %v8191 = vsel %vm1014, %v8186, %v8190
        %v8193 = vshrl.u32 %v7934, 16
        %v8195 = vrot.slane %v8193, 4
        %v8196 = vshll.u32 %v7934, 16
        %v8198 = vrot.slane %v8196, 5
        %v8199 = vor.u32 %v8195, %v8198
        %v8200 = vrot.slane %v8199, 4
        %v8202 = vshll.u32 %v7935, 16
        %v8204 = vrot.slane %v8202, 5
        %v8205 = vsel %vm1014, %v8200, %v8204
        %v8206 = vshrl.u32 %v7935, 16
        %v8208 = vrot.slane %v8206, 4
        %v8209 = vor.u32 %v8208, %v8204
        %v8210 = vrot.slane %v8209, 4
        %v8212 = vshll.u32 %v7936, 16
        %v8214 = vrot.slane %v8212, 5
        %v8215 = vsel %vm1014, %v8210, %v8214
        %v8217 = vshrl.u32 %v7937, 16
        %v8219 = vrot.slane %v8217, 4
        %v8220 = vshll.u32 %v7937, 16
        %v8222 = vrot.slane %v8220, 5
        %v8223 = vor.u32 %v8219, %v8222
        %v8224 = vrot.slane %v8223, 4
        %v8226 = vshll.u32 %v7938, 16
        %v8228 = vrot.slane %v8226, 5
        %v8229 = vsel %vm1014, %v8224, %v8228
        %v8230 = vshrl.u32 %v7938, 16
        %v8232 = vrot.slane %v8230, 4
        %v8233 = vor.u32 %v8232, %v8228
        %v8234 = vrot.slane %v8233, 4
        %v8236 = vshll.u32 %v7939, 16
        %v8238 = vrot.slane %v8236, 5
        %v8239 = vsel %vm1014, %v8234, %v8238
        %v8241 = vshrl.u32 %v7940, 16
        %v8243 = vrot.slane %v8241, 4
        %v8244 = vshll.u32 %v7940, 16
        %v8246 = vrot.slane %v8244, 5
        %v8247 = vor.u32 %v8243, %v8246
        %v8248 = vrot.slane %v8247, 4
        %v8250 = vshll.u32 %v7941, 16
        %v8252 = vrot.slane %v8250, 5
        %v8253 = vsel %vm1014, %v8248, %v8252
        %v8254 = vshrl.u32 %v7941, 16
        %v8256 = vrot.slane %v8254, 4
        %v8257 = vor.u32 %v8256, %v8252
        %v8258 = vrot.slane %v8257, 4
        %v8260 = vshll.u32 %v7942, 16
        %v8262 = vrot.slane %v8260, 5
        %v8263 = vsel %vm1014, %v8258, %v8262
        %v8265 = vshrl.u32 %v7943, 16
        %v8267 = vrot.slane %v8265, 4
        %v8268 = vshll.u32 %v7943, 16
        %v8270 = vrot.slane %v8268, 5
        %v8271 = vor.u32 %v8267, %v8270
        %v8272 = vrot.slane %v8271, 4
        %v8274 = vshll.u32 %v7944, 16
        %v8276 = vrot.slane %v8274, 5
        %v8277 = vsel %vm1014, %v8272, %v8276
        %v8278 = vshrl.u32 %v7944, 16
        %v8280 = vrot.slane %v8278, 4
        %v8281 = vor.u32 %v8280, %v8276
        %v8282 = vrot.slane %v8281, 4
        %v8284 = vshll.u32 %v7945, 16
        %v8286 = vrot.slane %v8284, 5
        %v8287 = vsel %vm1014, %v8282, %v8286
        %v8289 = vshrl.u32 %v7946, 16
        %v8291 = vrot.slane %v8289, 4
        %v8292 = vshll.u32 %v7946, 16
        %v8294 = vrot.slane %v8292, 5
        %v8295 = vor.u32 %v8291, %v8294
        %v8296 = vrot.slane %v8295, 4
        %v8298 = vshll.u32 %v7947, 16
        %v8300 = vrot.slane %v8298, 5
        %v8301 = vsel %vm1014, %v8296, %v8300
        %v8302 = vshrl.u32 %v7947, 16
        %v8304 = vrot.slane %v8302, 4
        %v8305 = vor.u32 %v8304, %v8300
        %v8306 = vrot.slane %v8305, 4
        %v8308 = vshll.u32 %v7948, 16
        %v8310 = vrot.slane %v8308, 5
        %v8311 = vsel %vm1014, %v8306, %v8310
        %v8313 = vshrl.u32 %v7949, 16
        %v8315 = vrot.slane %v8313, 4
        %v8316 = vshll.u32 %v7949, 16
        %v8318 = vrot.slane %v8316, 5
        %v8319 = vor.u32 %v8315, %v8318
        %v8320 = vrot.slane %v8319, 4
        %v8322 = vshll.u32 %v7950, 16
        %v8324 = vrot.slane %v8322, 5
        %v8325 = vsel %vm1014, %v8320, %v8324
        %v8326 = vshrl.u32 %v7950, 16
        %v8328 = vrot.slane %v8326, 4
        %v8329 = vor.u32 %v8328, %v8324
        %v8330 = vrot.slane %v8329, 4
        %v8332 = vshll.u32 %v7951, 16
        %v8334 = vrot.slane %v8332, 5
        %v8335 = vsel %vm1014, %v8330, %v8334
        %8368 = vst [vmem:[#allocation3 + $0x1c] sm:$0xf] %v7965
        %8369 = vst [vmem:[#allocation3 + $0x40] sm:$0xf] %v7975
        %8370 = vst [vmem:[#allocation3 + $0x64] sm:$0xf] %v7989
        %8371 = vst [vmem:[#allocation3 + $0x88] sm:$0xf] %v7999
        %8372 = vst [vmem:[#allocation3 + $0xac] sm:$0xf] %v8013
        %8373 = vst [vmem:[#allocation3 + $0xd0] sm:$0xf] %v8023
        %8374 = vst [vmem:[#allocation3 + $0xf4] sm:$0xf] %v8037
        %8375 = vst [vmem:[#allocation3 + $0x118] sm:$0xf] %v8047
        %8376 = vst [vmem:[#allocation3 + $0x13c] sm:$0xf] %v8061
        %8377 = vst [vmem:[#allocation3 + $0x160] sm:$0xf] %v8071
        %8378 = vst [vmem:[#allocation3 + $0x184] sm:$0xf] %v8085
        %8379 = vst [vmem:[#allocation3 + $0x1a8] sm:$0xf] %v8095
        %8380 = vst [vmem:[#allocation3 + $0x1cc] sm:$0xf] %v8109
        %8381 = vst [vmem:[#allocation3 + $0x1f0] sm:$0xf] %v8119
        %8382 = vst [vmem:[#allocation3 + $0x214] sm:$0xf] %v8133
        %8383 = vst [vmem:[#allocation3 + $0x238] sm:$0xf] %v8143
        %8384 = vst [vmem:[#allocation3 + $0x25c] sm:$0xf] %v8157
        %8385 = vst [vmem:[#allocation3 + $0x280] sm:$0xf] %v8167
        %8386 = vst [vmem:[#allocation3 + $0x2a4] sm:$0xf] %v8181
        %8387 = vst [vmem:[#allocation3 + $0x2c8] sm:$0xf] %v8191
        %8388 = vst [vmem:[#allocation3 + $0x2ec] sm:$0xf] %v8205
        %8389 = vst [vmem:[#allocation3 + $0x310] sm:$0xf] %v8215
        %8390 = vst [vmem:[#allocation3 + $0x334] sm:$0xf] %v8229
        %8391 = vst [vmem:[#allocation3 + $0x358] sm:$0xf] %v8239
        %8392 = vst [vmem:[#allocation3 + $0x37c] sm:$0xf] %v8253
        %8393 = vst [vmem:[#allocation3 + $0x3a0] sm:$0xf] %v8263
        %8394 = vst [vmem:[#allocation3 + $0x3c4] sm:$0xf] %v8277
        %8395 = vst [vmem:[#allocation3 + $0x3e8] sm:$0xf] %v8287
        %8396 = vst [vmem:[#allocation3 + $0x40c] sm:$0xf] %v8301
        %8397 = vst [vmem:[#allocation3 + $0x430] sm:$0xf] %v8311
        %8398 = vst [vmem:[#allocation3 + $0x454] sm:$0xf] %v8325
        %8399 = vst [vmem:[#allocation3 + $0x478] sm:$0xf] %v8335
        %v8400 = vld [vmem:[%s2570] sm:$0xe]
        %v8401 = vld [vmem:[%s2570 + $0x4] sm:$0xf]
        %v8402 = vld [vmem:[%s2570 + $0x8] sm:$0x1]
        %v8403 = vld [vmem:[%s2570 + $0xc] sm:$0xe]
        %v8404 = vld [vmem:[%s2570 + $0x10] sm:$0xf]
        %v8405 = vld [vmem:[%s2570 + $0x14] sm:$0x1]
        %v8406 = vld [vmem:[%s2570 + $0x18] sm:$0xe]
        %v8407 = vld [vmem:[%s2570 + $0x1c] sm:$0xf]
        %v8408 = vld [vmem:[%s2570 + $0x20] sm:$0x1]
        %v8409 = vld [vmem:[%s2570 + $0x24] sm:$0xe]
        %v8410 = vld [vmem:[%s2570 + $0x28] sm:$0xf]
        %v8411 = vld [vmem:[%s2570 + $0x2c] sm:$0x1]
        %v8412 = vld [vmem:[%s2570 + $0x30] sm:$0xe]
        %v8413 = vld [vmem:[%s2570 + $0x34] sm:$0xf]
        %v8414 = vld [vmem:[%s2570 + $0x38] sm:$0x1]
        %v8415 = vld [vmem:[%s2570 + $0x3c] sm:$0xe]
        %v8416 = vld [vmem:[%s2570 + $0x40] sm:$0xf]
        %v8417 = vld [vmem:[%s2570 + $0x44] sm:$0x1]
        %v8418 = vld [vmem:[%s2570 + $0x48] sm:$0xe]
        %v8419 = vld [vmem:[%s2570 + $0x4c] sm:$0xf]
        %v8420 = vld [vmem:[%s2570 + $0x50] sm:$0x1]
        %v8421 = vld [vmem:[%s2570 + $0x54] sm:$0xe]
        %v8422 = vld [vmem:[%s2570 + $0x58] sm:$0xf]
        %v8423 = vld [vmem:[%s2570 + $0x5c] sm:$0x1]
        %v8424 = vld [vmem:[%s2570 + $0x60] sm:$0xe]
        %v8425 = vld [vmem:[%s2570 + $0x64] sm:$0xf]
        %v8426 = vld [vmem:[%s2570 + $0x68] sm:$0x1]
        %v8427 = vld [vmem:[%s2570 + $0x6c] sm:$0xe]
        %v8428 = vld [vmem:[%s2570 + $0x70] sm:$0xf]
        %v8429 = vld [vmem:[%s2570 + $0x74] sm:$0x1]
        %v8430 = vld [vmem:[%s2570 + $0x78] sm:$0xe]
        %v8431 = vld [vmem:[%s2570 + $0x7c] sm:$0xf]
        %v8432 = vld [vmem:[%s2570 + $0x80] sm:$0x1]
        %v8433 = vld [vmem:[%s2570 + $0x84] sm:$0xe]
        %v8434 = vld [vmem:[%s2570 + $0x88] sm:$0xf]
        %v8435 = vld [vmem:[%s2570 + $0x8c] sm:$0x1]
        %v8436 = vld [vmem:[%s2570 + $0x90] sm:$0xe]
        %v8437 = vld [vmem:[%s2570 + $0x94] sm:$0xf]
        %v8438 = vld [vmem:[%s2570 + $0x98] sm:$0x1]
        %v8439 = vld [vmem:[%s2570 + $0x9c] sm:$0xe]
        %v8440 = vld [vmem:[%s2570 + $0xa0] sm:$0xf]
        %v8441 = vld [vmem:[%s2570 + $0xa4] sm:$0x1]
        %v8442 = vld [vmem:[%s2570 + $0xa8] sm:$0xe]
        %v8443 = vld [vmem:[%s2570 + $0xac] sm:$0xf]
        %v8444 = vld [vmem:[%s2570 + $0xb0] sm:$0x1]
        %v8445 = vld [vmem:[%s2570 + $0xb4] sm:$0xe]
        %v8446 = vld [vmem:[%s2570 + $0xb8] sm:$0xf]
        %v8447 = vld [vmem:[%s2570 + $0xbc] sm:$0x1]
        %v8496 = vrot.slane %v8400, 5
        %v8497 = vrot.slane %v8496, 4
        %v8498 = vrot.slane %v8401, 5
        %v8499 = vsel %vm1561, %v8497, %v8498
        %v8500 = vrot.slane %v8498, 4
        %v8501 = vrot.slane %v8402, 5
        %v8502 = vsel %vm1561, %v8500, %v8501
        %v8503 = vrot.slane %v8403, 5
        %v8504 = vrot.slane %v8503, 4
        %v8505 = vrot.slane %v8404, 5
        %v8506 = vsel %vm1561, %v8504, %v8505
        %v8507 = vrot.slane %v8505, 4
        %v8508 = vrot.slane %v8405, 5
        %v8509 = vsel %vm1561, %v8507, %v8508
        %v8510 = vrot.slane %v8406, 5
        %v8511 = vrot.slane %v8510, 4
        %v8512 = vrot.slane %v8407, 5
        %v8513 = vsel %vm1561, %v8511, %v8512
        %v8514 = vrot.slane %v8512, 4
        %v8515 = vrot.slane %v8408, 5
        %v8516 = vsel %vm1561, %v8514, %v8515
        %v8517 = vrot.slane %v8409, 5
        %v8518 = vrot.slane %v8517, 4
        %v8519 = vrot.slane %v8410, 5
        %v8520 = vsel %vm1561, %v8518, %v8519
        %v8521 = vrot.slane %v8519, 4
        %v8522 = vrot.slane %v8411, 5
        %v8523 = vsel %vm1561, %v8521, %v8522
        %v8524 = vrot.slane %v8412, 5
        %v8525 = vrot.slane %v8524, 4
        %v8526 = vrot.slane %v8413, 5
        %v8527 = vsel %vm1561, %v8525, %v8526
        %v8528 = vrot.slane %v8526, 4
        %v8529 = vrot.slane %v8414, 5
        %v8530 = vsel %vm1561, %v8528, %v8529
        %v8531 = vrot.slane %v8415, 5
        %v8532 = vrot.slane %v8531, 4
        %v8533 = vrot.slane %v8416, 5
        %v8534 = vsel %vm1561, %v8532, %v8533
        %v8535 = vrot.slane %v8533, 4
        %v8536 = vrot.slane %v8417, 5
        %v8537 = vsel %vm1561, %v8535, %v8536
        %v8538 = vrot.slane %v8418, 5
        %v8539 = vrot.slane %v8538, 4
        %v8540 = vrot.slane %v8419, 5
        %v8541 = vsel %vm1561, %v8539, %v8540
        %v8542 = vrot.slane %v8540, 4
        %v8543 = vrot.slane %v8420, 5
        %v8544 = vsel %vm1561, %v8542, %v8543
        %v8545 = vrot.slane %v8421, 5
        %v8546 = vrot.slane %v8545, 4
        %v8547 = vrot.slane %v8422, 5
        %v8548 = vsel %vm1561, %v8546, %v8547
        %v8549 = vrot.slane %v8547, 4
        %v8550 = vrot.slane %v8423, 5
        %v8551 = vsel %vm1561, %v8549, %v8550
        %v8552 = vrot.slane %v8424, 5
        %v8553 = vrot.slane %v8552, 4
        %v8554 = vrot.slane %v8425, 5
        %v8555 = vsel %vm1561, %v8553, %v8554
        %v8556 = vrot.slane %v8554, 4
        %v8557 = vrot.slane %v8426, 5
        %v8558 = vsel %vm1561, %v8556, %v8557
        %v8559 = vrot.slane %v8427, 5
        %v8560 = vrot.slane %v8559, 4
        %v8561 = vrot.slane %v8428, 5
        %v8562 = vsel %vm1561, %v8560, %v8561
        %v8563 = vrot.slane %v8561, 4
        %v8564 = vrot.slane %v8429, 5
        %v8565 = vsel %vm1561, %v8563, %v8564
        %v8566 = vrot.slane %v8430, 5
        %v8567 = vrot.slane %v8566, 4
        %v8568 = vrot.slane %v8431, 5
        %v8569 = vsel %vm1561, %v8567, %v8568
        %v8570 = vrot.slane %v8568, 4
        %v8571 = vrot.slane %v8432, 5
        %v8572 = vsel %vm1561, %v8570, %v8571
        %v8573 = vrot.slane %v8433, 5
        %v8574 = vrot.slane %v8573, 4
        %v8575 = vrot.slane %v8434, 5
        %v8576 = vsel %vm1561, %v8574, %v8575
        %v8577 = vrot.slane %v8575, 4
        %v8578 = vrot.slane %v8435, 5
        %v8579 = vsel %vm1561, %v8577, %v8578
        %v8580 = vrot.slane %v8436, 5
        %v8581 = vrot.slane %v8580, 4
        %v8582 = vrot.slane %v8437, 5
        %v8583 = vsel %vm1561, %v8581, %v8582
        %v8584 = vrot.slane %v8582, 4
        %v8585 = vrot.slane %v8438, 5
        %v8586 = vsel %vm1561, %v8584, %v8585
        %v8587 = vrot.slane %v8439, 5
        %v8588 = vrot.slane %v8587, 4
        %v8589 = vrot.slane %v8440, 5
        %v8590 = vsel %vm1561, %v8588, %v8589
        %v8591 = vrot.slane %v8589, 4
        %v8592 = vrot.slane %v8441, 5
        %v8593 = vsel %vm1561, %v8591, %v8592
        %v8594 = vrot.slane %v8442, 5
        %v8595 = vrot.slane %v8594, 4
        %v8596 = vrot.slane %v8443, 5
        %v8597 = vsel %vm1561, %v8595, %v8596
        %v8598 = vrot.slane %v8596, 4
        %v8599 = vrot.slane %v8444, 5
        %v8600 = vsel %vm1561, %v8598, %v8599
        %v8601 = vrot.slane %v8445, 5
        %v8602 = vrot.slane %v8601, 4
        %v8603 = vrot.slane %v8446, 5
        %v8604 = vsel %vm1561, %v8602, %v8603
        %v8605 = vrot.slane %v8603, 4
        %v8606 = vrot.slane %v8447, 5
        %v8607 = vsel %vm1561, %v8605, %v8606
        %8640 = vst [vmem:[#allocation3 + $0x20] sm:$0xf] %v8499
        %8641 = vst [vmem:[#allocation3 + $0x44] sm:$0xf] %v8502
        %8642 = vst [vmem:[#allocation3 + $0x68] sm:$0xf] %v8506
        %8643 = vst [vmem:[#allocation3 + $0x8c] sm:$0xf] %v8509
        %8644 = vst [vmem:[#allocation3 + $0xb0] sm:$0xf] %v8513
        %8645 = vst [vmem:[#allocation3 + $0xd4] sm:$0xf] %v8516
        %8646 = vst [vmem:[#allocation3 + $0xf8] sm:$0xf] %v8520
        %8647 = vst [vmem:[#allocation3 + $0x11c] sm:$0xf] %v8523
        %8648 = vst [vmem:[#allocation3 + $0x140] sm:$0xf] %v8527
        %8649 = vst [vmem:[#allocation3 + $0x164] sm:$0xf] %v8530
        %8650 = vst [vmem:[#allocation3 + $0x188] sm:$0xf] %v8534
        %8651 = vst [vmem:[#allocation3 + $0x1ac] sm:$0xf] %v8537
        %8652 = vst [vmem:[#allocation3 + $0x1d0] sm:$0xf] %v8541
        %8653 = vst [vmem:[#allocation3 + $0x1f4] sm:$0xf] %v8544
        %8654 = vst [vmem:[#allocation3 + $0x218] sm:$0xf] %v8548
        %8655 = vst [vmem:[#allocation3 + $0x23c] sm:$0xf] %v8551
        %8656 = vst [vmem:[#allocation3 + $0x260] sm:$0xf] %v8555
        %8657 = vst [vmem:[#allocation3 + $0x284] sm:$0xf] %v8558
        %8658 = vst [vmem:[#allocation3 + $0x2a8] sm:$0xf] %v8562
        %8659 = vst [vmem:[#allocation3 + $0x2cc] sm:$0xf] %v8565
        %8660 = vst [vmem:[#allocation3 + $0x2f0] sm:$0xf] %v8569
        %8661 = vst [vmem:[#allocation3 + $0x314] sm:$0xf] %v8572
        %8662 = vst [vmem:[#allocation3 + $0x338] sm:$0xf] %v8576
        %8663 = vst [vmem:[#allocation3 + $0x35c] sm:$0xf] %v8579
        %8664 = vst [vmem:[#allocation3 + $0x380] sm:$0xf] %v8583
        %8665 = vst [vmem:[#allocation3 + $0x3a4] sm:$0xf] %v8586
        %8666 = vst [vmem:[#allocation3 + $0x3c8] sm:$0xf] %v8590
        %8667 = vst [vmem:[#allocation3 + $0x3ec] sm:$0xf] %v8593
        %8668 = vst [vmem:[#allocation3 + $0x410] sm:$0xf] %v8597
        %8669 = vst [vmem:[#allocation3 + $0x434] sm:$0xf] %v8600
        %8670 = vst [vmem:[#allocation3 + $0x458] sm:$0xf] %v8604
        %8671 = vst [vmem:[#allocation3 + $0x47c] sm:$0xf] %v8607
        %v8672 = vld [vmem:[#allocation3] sm:$0xff]
        %v8673 = vld [vmem:[#allocation3 + $0x8] sm:$0xff]
        %v8674 = vld [vmem:[#allocation3 + $0x10] sm:$0xff]
        %v8675 = vld [vmem:[#allocation3 + $0x18] sm:$0xff]
        %v8676 = vld [vmem:[#allocation3 + $0x20] sm:$0xf]
        %v8677 = vld [vmem:[#allocation3 + $0x24] sm:$0xff]
        %v8678 = vld [vmem:[#allocation3 + $0x2c] sm:$0xff]
        %v8679 = vld [vmem:[#allocation3 + $0x34] sm:$0xff]
        %v8680 = vld [vmem:[#allocation3 + $0x3c] sm:$0xff]
        %v8681 = vld [vmem:[#allocation3 + $0x44] sm:$0xf]
        %v8682 = vld [vmem:[#allocation3 + $0x48] sm:$0xff]
        %v8683 = vld [vmem:[#allocation3 + $0x50] sm:$0xff]
        %v8684 = vld [vmem:[#allocation3 + $0x58] sm:$0xff]
        %v8685 = vld [vmem:[#allocation3 + $0x60] sm:$0xff]
        %v8686 = vld [vmem:[#allocation3 + $0x68] sm:$0xf]
        %v8687 = vld [vmem:[#allocation3 + $0x6c] sm:$0xff]
        %v8688 = vld [vmem:[#allocation3 + $0x74] sm:$0xff]
        %v8689 = vld [vmem:[#allocation3 + $0x7c] sm:$0xff]
        %v8690 = vld [vmem:[#allocation3 + $0x84] sm:$0xff]
        %v8691 = vld [vmem:[#allocation3 + $0x8c] sm:$0xf]
        %v8692 = vld [vmem:[#allocation3 + $0x90] sm:$0xff]
        %v8693 = vld [vmem:[#allocation3 + $0x98] sm:$0xff]
        %v8694 = vld [vmem:[#allocation3 + $0xa0] sm:$0xff]
        %v8695 = vld [vmem:[#allocation3 + $0xa8] sm:$0xff]
        %v8696 = vld [vmem:[#allocation3 + $0xb0] sm:$0xf]
        %v8697 = vld [vmem:[#allocation3 + $0xb4] sm:$0xff]
        %v8698 = vld [vmem:[#allocation3 + $0xbc] sm:$0xff]
        %v8699 = vld [vmem:[#allocation3 + $0xc4] sm:$0xff]
        %v8700 = vld [vmem:[#allocation3 + $0xcc] sm:$0xff]
        %v8701 = vld [vmem:[#allocation3 + $0xd4] sm:$0xf]
        %v8702 = vld [vmem:[#allocation3 + $0xd8] sm:$0xff]
        %v8703 = vld [vmem:[#allocation3 + $0xe0] sm:$0xff]
        %v8704 = vld [vmem:[#allocation3 + $0xe8] sm:$0xff]
        %v8705 = vld [vmem:[#allocation3 + $0xf0] sm:$0xff]
        %v8706 = vld [vmem:[#allocation3 + $0xf8] sm:$0xf]
        %v8707 = vld [vmem:[#allocation3 + $0xfc] sm:$0xff]
        %v8708 = vld [vmem:[#allocation3 + $0x104] sm:$0xff]
        %v8709 = vld [vmem:[#allocation3 + $0x10c] sm:$0xff]
        %v8710 = vld [vmem:[#allocation3 + $0x114] sm:$0xff]
        %v8711 = vld [vmem:[#allocation3 + $0x11c] sm:$0xf]
        %v8712 = vld [vmem:[#allocation3 + $0x120] sm:$0xff]
        %v8713 = vld [vmem:[#allocation3 + $0x128] sm:$0xff]
        %v8714 = vld [vmem:[#allocation3 + $0x130] sm:$0xff]
        %v8715 = vld [vmem:[#allocation3 + $0x138] sm:$0xff]
        %v8716 = vld [vmem:[#allocation3 + $0x140] sm:$0xf]
        %v8717 = vld [vmem:[#allocation3 + $0x144] sm:$0xff]
        %v8718 = vld [vmem:[#allocation3 + $0x14c] sm:$0xff]
        %v8719 = vld [vmem:[#allocation3 + $0x154] sm:$0xff]
        %v8720 = vld [vmem:[#allocation3 + $0x15c] sm:$0xff]
        %v8721 = vld [vmem:[#allocation3 + $0x164] sm:$0xf]
        %v8722 = vld [vmem:[#allocation3 + $0x168] sm:$0xff]
        %v8723 = vld [vmem:[#allocation3 + $0x170] sm:$0xff]
        %v8724 = vld [vmem:[#allocation3 + $0x178] sm:$0xff]
        %v8725 = vld [vmem:[#allocation3 + $0x180] sm:$0xff]
        %v8726 = vld [vmem:[#allocation3 + $0x188] sm:$0xf]
        %v8727 = vld [vmem:[#allocation3 + $0x18c] sm:$0xff]
        %v8728 = vld [vmem:[#allocation3 + $0x194] sm:$0xff]
        %v8729 = vld [vmem:[#allocation3 + $0x19c] sm:$0xff]
        %v8730 = vld [vmem:[#allocation3 + $0x1a4] sm:$0xff]
        %v8731 = vld [vmem:[#allocation3 + $0x1ac] sm:$0xf]
        %v8732 = vld [vmem:[#allocation3 + $0x1b0] sm:$0xff]
        %v8733 = vld [vmem:[#allocation3 + $0x1b8] sm:$0xff]
        %v8734 = vld [vmem:[#allocation3 + $0x1c0] sm:$0xff]
        %v8735 = vld [vmem:[#allocation3 + $0x1c8] sm:$0xff]
        %v8736 = vld [vmem:[#allocation3 + $0x1d0] sm:$0xf]
        %v8737 = vld [vmem:[#allocation3 + $0x1d4] sm:$0xff]
        %v8738 = vld [vmem:[#allocation3 + $0x1dc] sm:$0xff]
        %v8739 = vld [vmem:[#allocation3 + $0x1e4] sm:$0xff]
        %v8740 = vld [vmem:[#allocation3 + $0x1ec] sm:$0xff]
        %v8741 = vld [vmem:[#allocation3 + $0x1f4] sm:$0xf]
        %v8742 = vld [vmem:[#allocation3 + $0x1f8] sm:$0xff]
        %v8743 = vld [vmem:[#allocation3 + $0x200] sm:$0xff]
        %v8744 = vld [vmem:[#allocation3 + $0x208] sm:$0xff]
        %v8745 = vld [vmem:[#allocation3 + $0x210] sm:$0xff]
        %v8746 = vld [vmem:[#allocation3 + $0x218] sm:$0xf]
        %v8747 = vld [vmem:[#allocation3 + $0x21c] sm:$0xff]
        %v8748 = vld [vmem:[#allocation3 + $0x224] sm:$0xff]
        %v8749 = vld [vmem:[#allocation3 + $0x22c] sm:$0xff]
        %v8750 = vld [vmem:[#allocation3 + $0x234] sm:$0xff]
        %v8751 = vld [vmem:[#allocation3 + $0x23c] sm:$0xf]
        %v8752 = vld [vmem:[#allocation3 + $0x240] sm:$0xff]
        %v8753 = vld [vmem:[#allocation3 + $0x248] sm:$0xff]
        %v8754 = vld [vmem:[#allocation3 + $0x250] sm:$0xff]
        %v8755 = vld [vmem:[#allocation3 + $0x258] sm:$0xff]
        %v8756 = vld [vmem:[#allocation3 + $0x260] sm:$0xf]
        %v8757 = vld [vmem:[#allocation3 + $0x264] sm:$0xff]
        %v8758 = vld [vmem:[#allocation3 + $0x26c] sm:$0xff]
        %v8759 = vld [vmem:[#allocation3 + $0x274] sm:$0xff]
        %v8760 = vld [vmem:[#allocation3 + $0x27c] sm:$0xff]
        %v8761 = vld [vmem:[#allocation3 + $0x284] sm:$0xf]
        %v8762 = vld [vmem:[#allocation3 + $0x288] sm:$0xff]
        %v8763 = vld [vmem:[#allocation3 + $0x290] sm:$0xff]
        %v8764 = vld [vmem:[#allocation3 + $0x298] sm:$0xff]
        %v8765 = vld [vmem:[#allocation3 + $0x2a0] sm:$0xff]
        %v8766 = vld [vmem:[#allocation3 + $0x2a8] sm:$0xf]
        %v8767 = vld [vmem:[#allocation3 + $0x2ac] sm:$0xff]
        %v8768 = vld [vmem:[#allocation3 + $0x2b4] sm:$0xff]
        %v8769 = vld [vmem:[#allocation3 + $0x2bc] sm:$0xff]
        %v8770 = vld [vmem:[#allocation3 + $0x2c4] sm:$0xff]
        %v8771 = vld [vmem:[#allocation3 + $0x2cc] sm:$0xf]
        %v8772 = vld [vmem:[#allocation3 + $0x2d0] sm:$0xff]
        %v8773 = vld [vmem:[#allocation3 + $0x2d8] sm:$0xff]
        %v8774 = vld [vmem:[#allocation3 + $0x2e0] sm:$0xff]
        %v8775 = vld [vmem:[#allocation3 + $0x2e8] sm:$0xff]
        %v8776 = vld [vmem:[#allocation3 + $0x2f0] sm:$0xf]
        %v8777 = vld [vmem:[#allocation3 + $0x2f4] sm:$0xff]
        %v8778 = vld [vmem:[#allocation3 + $0x2fc] sm:$0xff]
        %v8779 = vld [vmem:[#allocation3 + $0x304] sm:$0xff]
        %v8780 = vld [vmem:[#allocation3 + $0x30c] sm:$0xff]
        %v8781 = vld [vmem:[#allocation3 + $0x314] sm:$0xf]
        %v8782 = vld [vmem:[#allocation3 + $0x318] sm:$0xff]
        %v8783 = vld [vmem:[#allocation3 + $0x320] sm:$0xff]
        %v8784 = vld [vmem:[#allocation3 + $0x328] sm:$0xff]
        %v8785 = vld [vmem:[#allocation3 + $0x330] sm:$0xff]
        %v8786 = vld [vmem:[#allocation3 + $0x338] sm:$0xf]
        %v8787 = vld [vmem:[#allocation3 + $0x33c] sm:$0xff]
        %v8788 = vld [vmem:[#allocation3 + $0x344] sm:$0xff]
        %v8789 = vld [vmem:[#allocation3 + $0x34c] sm:$0xff]
        %v8790 = vld [vmem:[#allocation3 + $0x354] sm:$0xff]
        %v8791 = vld [vmem:[#allocation3 + $0x35c] sm:$0xf]
        %v8792 = vld [vmem:[#allocation3 + $0x360] sm:$0xff]
        %v8793 = vld [vmem:[#allocation3 + $0x368] sm:$0xff]
        %v8794 = vld [vmem:[#allocation3 + $0x370] sm:$0xff]
        %v8795 = vld [vmem:[#allocation3 + $0x378] sm:$0xff]
        %v8796 = vld [vmem:[#allocation3 + $0x380] sm:$0xf]
        %v8797 = vld [vmem:[#allocation3 + $0x384] sm:$0xff]
        %v8798 = vld [vmem:[#allocation3 + $0x38c] sm:$0xff]
        %v8799 = vld [vmem:[#allocation3 + $0x394] sm:$0xff]
        %v8800 = vld [vmem:[#allocation3 + $0x39c] sm:$0xff]
        %v8801 = vld [vmem:[#allocation3 + $0x3a4] sm:$0xf]
        %v8802 = vld [vmem:[#allocation3 + $0x3a8] sm:$0xff]
        %v8803 = vld [vmem:[#allocation3 + $0x3b0] sm:$0xff]
        %v8804 = vld [vmem:[#allocation3 + $0x3b8] sm:$0xff]
        %v8805 = vld [vmem:[#allocation3 + $0x3c0] sm:$0xff]
        %v8806 = vld [vmem:[#allocation3 + $0x3c8] sm:$0xf]
        %v8807 = vld [vmem:[#allocation3 + $0x3cc] sm:$0xff]
        %v8808 = vld [vmem:[#allocation3 + $0x3d4] sm:$0xff]
        %v8809 = vld [vmem:[#allocation3 + $0x3dc] sm:$0xff]
        %v8810 = vld [vmem:[#allocation3 + $0x3e4] sm:$0xff]
        %v8811 = vld [vmem:[#allocation3 + $0x3ec] sm:$0xf]
        %v8812 = vld [vmem:[#allocation3 + $0x3f0] sm:$0xff]
        %v8813 = vld [vmem:[#allocation3 + $0x3f8] sm:$0xff]
        %v8814 = vld [vmem:[#allocation3 + $0x400] sm:$0xff]
        %v8815 = vld [vmem:[#allocation3 + $0x408] sm:$0xff]
        %v8816 = vld [vmem:[#allocation3 + $0x410] sm:$0xf]
        %v8817 = vld [vmem:[#allocation3 + $0x414] sm:$0xff]
        %v8818 = vld [vmem:[#allocation3 + $0x41c] sm:$0xff]
        %v8819 = vld [vmem:[#allocation3 + $0x424] sm:$0xff]
        %v8820 = vld [vmem:[#allocation3 + $0x42c] sm:$0xff]
        %v8821 = vld [vmem:[#allocation3 + $0x434] sm:$0xf]
        %v8822 = vld [vmem:[#allocation3 + $0x438] sm:$0xff]
        %v8823 = vld [vmem:[#allocation3 + $0x440] sm:$0xff]
        %v8824 = vld [vmem:[#allocation3 + $0x448] sm:$0xff]
        %v8825 = vld [vmem:[#allocation3 + $0x450] sm:$0xff]
        %v8826 = vld [vmem:[#allocation3 + $0x458] sm:$0xf]
        %v8827 = vld [vmem:[#allocation3 + $0x45c] sm:$0xff]
        %v8828 = vld [vmem:[#allocation3 + $0x464] sm:$0xff]
        %v8829 = vld [vmem:[#allocation3 + $0x46c] sm:$0xff]
        %v8830 = vld [vmem:[#allocation3 + $0x474] sm:$0xff]
        %v8831 = vld [vmem:[#allocation3 + $0x47c] sm:$0xf]
        %v8832 = vld [vmem:[#allocation9] sm:$0xf]
        %v8833 = vld [vmem:[#allocation9 + $0x4] sm:$0xf]
        %v8834 = vld [vmem:[#allocation9 + $0x8] sm:$0xf]
        %v8835 = vld [vmem:[#allocation9 + $0xc] sm:$0xf]
        %v8836 = vld [vmem:[#allocation9 + $0x10] sm:$0xf]
        %v8837 = vld [vmem:[#allocation9 + $0x14] sm:$0xf]
        %v8838 = vld [vmem:[#allocation9 + $0x18] sm:$0xf]
        %v8839 = vld [vmem:[#allocation9 + $0x1c] sm:$0xf]
        %v8840 = vld [vmem:[#allocation9 + $0x20] sm:$0xf]
        %v8841 = vld [vmem:[#allocation9 + $0x24] sm:$0xf]
        %v8842 = vld [vmem:[#allocation9 + $0x28] sm:$0xf]
        %v8843 = vld [vmem:[#allocation9 + $0x2c] sm:$0xf]
        %v8844 = vld [vmem:[#allocation9 + $0x30] sm:$0xf]
        %v8845 = vld [vmem:[#allocation9 + $0x34] sm:$0xf]
        %v8846 = vld [vmem:[#allocation9 + $0x38] sm:$0xf]
        %v8847 = vld [vmem:[#allocation9 + $0x3c] sm:$0xf]
        %v8848 = vld [vmem:[#allocation9 + $0x40] sm:$0xf]
        %v8849 = vld [vmem:[#allocation9 + $0x44] sm:$0xf]
        %v8850 = vld [vmem:[#allocation9 + $0x48] sm:$0xf]
        %v8851 = vld [vmem:[#allocation9 + $0x4c] sm:$0xf]
        %v8852 = vld [vmem:[#allocation9 + $0x50] sm:$0xf]
        %v8853 = vld [vmem:[#allocation9 + $0x54] sm:$0xf]
        %v8854 = vld [vmem:[#allocation9 + $0x58] sm:$0xf]
        %v8855 = vld [vmem:[#allocation9 + $0x5c] sm:$0xf]
        %v8856 = vld [vmem:[#allocation9 + $0x60] sm:$0xf]
        %v8857 = vld [vmem:[#allocation9 + $0x64] sm:$0xf]
        %v8858 = vld [vmem:[#allocation9 + $0x68] sm:$0xf]
        %v8859 = vld [vmem:[#allocation9 + $0x6c] sm:$0xf]
        %v8860 = vld [vmem:[#allocation9 + $0x70] sm:$0xf]
        %v8861 = vld [vmem:[#allocation9 + $0x74] sm:$0xf]
        %v8862 = vld [vmem:[#allocation9 + $0x78] sm:$0xf]
        %v8863 = vld [vmem:[#allocation9 + $0x7c] sm:$0xf]
        %v8864 = vld [vmem:[#allocation9 + $0x80] sm:$0xf]
        %v8865 = vld [vmem:[#allocation9 + $0x84] sm:$0xf]
        %v8866 = vld [vmem:[#allocation9 + $0x88] sm:$0xf]
        %v8867 = vld [vmem:[#allocation9 + $0x8c] sm:$0xf]
        %v8868 = vld [vmem:[#allocation9 + $0x90] sm:$0xf]
        %v8869 = vld [vmem:[#allocation9 + $0x94] sm:$0xf]
        %v8870 = vld [vmem:[#allocation9 + $0x98] sm:$0xf]
        %v8871 = vld [vmem:[#allocation9 + $0x9c] sm:$0xf]
        %v8872 = vld [vmem:[#allocation9 + $0xa0] sm:$0xf]
        %v8873 = vld [vmem:[#allocation9 + $0xa4] sm:$0xf]
        %v8874 = vld [vmem:[#allocation9 + $0xa8] sm:$0xf]
        %v8875 = vld [vmem:[#allocation9 + $0xac] sm:$0xf]
        %v8876 = vld [vmem:[#allocation9 + $0xb0] sm:$0xf]
        %v8877 = vld [vmem:[#allocation9 + $0xb4] sm:$0xf]
        %v8878 = vld [vmem:[#allocation9 + $0xb8] sm:$0xf]
        %v8879 = vld [vmem:[#allocation9 + $0xbc] sm:$0xf]
        %v8880 = vld [vmem:[#allocation9 + $0xc0] sm:$0xf]
        %v8881 = vld [vmem:[#allocation9 + $0xc4] sm:$0xf]
        %v8882 = vld [vmem:[#allocation9 + $0xc8] sm:$0xf]
        %v8883 = vld [vmem:[#allocation9 + $0xcc] sm:$0xf]
        %v8884 = vld [vmem:[#allocation9 + $0xd0] sm:$0xf]
        %v8885 = vld [vmem:[#allocation9 + $0xd4] sm:$0xf]
        %v8886 = vld [vmem:[#allocation9 + $0xd8] sm:$0xf]
        %v8887 = vld [vmem:[#allocation9 + $0xdc] sm:$0xf]
        %v8888 = vld [vmem:[#allocation9 + $0xe0] sm:$0xf]
        %v8889 = vld [vmem:[#allocation9 + $0xe4] sm:$0xf]
        %v8890 = vld [vmem:[#allocation9 + $0xe8] sm:$0xf]
        %v8891 = vld [vmem:[#allocation9 + $0xec] sm:$0xf]
        %v8892 = vld [vmem:[#allocation9 + $0xf0] sm:$0xf]
        %v8893 = vld [vmem:[#allocation9 + $0xf4] sm:$0xf]
        %v8894 = vld [vmem:[#allocation9 + $0xf8] sm:$0xf]
        %v8895 = vld [vmem:[#allocation9 + $0xfc] sm:$0xf]
        %v8896 = vld [vmem:[#allocation9 + $0x100] sm:$0xf]
        %v8897 = vld [vmem:[#allocation9 + $0x104] sm:$0xf]
        %v8898 = vld [vmem:[#allocation9 + $0x108] sm:$0xf]
        %v8899 = vld [vmem:[#allocation9 + $0x10c] sm:$0xf]
        %v8900 = vld [vmem:[#allocation9 + $0x110] sm:$0xf]
        %v8901 = vld [vmem:[#allocation9 + $0x114] sm:$0xf]
        %v8902 = vld [vmem:[#allocation9 + $0x118] sm:$0xf]
        %v8903 = vld [vmem:[#allocation9 + $0x11c] sm:$0xf]
        %v8904 = vld [vmem:[#allocation9 + $0x120] sm:$0xf]
        %v8905 = vld [vmem:[#allocation9 + $0x124] sm:$0xf]
        %v8906 = vld [vmem:[#allocation9 + $0x128] sm:$0xf]
        %v8907 = vld [vmem:[#allocation9 + $0x12c] sm:$0xf]
        %v8908 = vld [vmem:[#allocation9 + $0x130] sm:$0xf]
        %v8909 = vld [vmem:[#allocation9 + $0x134] sm:$0xf]
        %v8910 = vld [vmem:[#allocation9 + $0x138] sm:$0xf]
        %v8911 = vld [vmem:[#allocation9 + $0x13c] sm:$0xf]
        %v8912 = vld [vmem:[#allocation9 + $0x140] sm:$0xf]
        %v8913 = vld [vmem:[#allocation9 + $0x144] sm:$0xf]
        %v8914 = vld [vmem:[#allocation9 + $0x148] sm:$0xf]
        %v8915 = vld [vmem:[#allocation9 + $0x14c] sm:$0xf]
        %v8916 = vld [vmem:[#allocation9 + $0x150] sm:$0xf]
        %v8917 = vld [vmem:[#allocation9 + $0x154] sm:$0xf]
        %v8918 = vld [vmem:[#allocation9 + $0x158] sm:$0xf]
        %v8919 = vld [vmem:[#allocation9 + $0x15c] sm:$0xf]
        %v8920 = vld [vmem:[#allocation9 + $0x160] sm:$0xf]
        %v8921 = vld [vmem:[#allocation9 + $0x164] sm:$0xf]
        %v8922 = vld [vmem:[#allocation9 + $0x168] sm:$0xf]
        %v8923 = vld [vmem:[#allocation9 + $0x16c] sm:$0xf]
        %v8924 = vld [vmem:[#allocation9 + $0x170] sm:$0xf]
        %v8925 = vld [vmem:[#allocation9 + $0x174] sm:$0xf]
        %v8926 = vld [vmem:[#allocation9 + $0x178] sm:$0xf]
        %v8927 = vld [vmem:[#allocation9 + $0x17c] sm:$0xf]
        %v8928 = vld [vmem:[#allocation9 + $0x180] sm:$0xf]
        %v8929 = vld [vmem:[#allocation9 + $0x184] sm:$0xf]
        %v8930 = vld [vmem:[#allocation9 + $0x188] sm:$0xf]
        %v8931 = vld [vmem:[#allocation9 + $0x18c] sm:$0xf]
        %v8932 = vld [vmem:[#allocation9 + $0x190] sm:$0xf]
        %v8933 = vld [vmem:[#allocation9 + $0x194] sm:$0xf]
        %v8934 = vld [vmem:[#allocation9 + $0x198] sm:$0xf]
        %v8935 = vld [vmem:[#allocation9 + $0x19c] sm:$0xf]
        %v8936 = vld [vmem:[#allocation9 + $0x1a0] sm:$0xf]
        %v8937 = vld [vmem:[#allocation9 + $0x1a4] sm:$0xf]
        %v8938 = vld [vmem:[#allocation9 + $0x1a8] sm:$0xf]
        %v8939 = vld [vmem:[#allocation9 + $0x1ac] sm:$0xf]
        %v8940 = vld [vmem:[#allocation9 + $0x1b0] sm:$0xf]
        %v8941 = vld [vmem:[#allocation9 + $0x1b4] sm:$0xf]
        %v8942 = vld [vmem:[#allocation9 + $0x1b8] sm:$0xf]
        %v8943 = vld [vmem:[#allocation9 + $0x1bc] sm:$0xf]
        %v8944 = vld [vmem:[#allocation9 + $0x1c0] sm:$0xf]
        %v8945 = vld [vmem:[#allocation9 + $0x1c4] sm:$0xf]
        %v8946 = vld [vmem:[#allocation9 + $0x1c8] sm:$0xf]
        %v8947 = vld [vmem:[#allocation9 + $0x1cc] sm:$0xf]
        %v8948 = vld [vmem:[#allocation9 + $0x1d0] sm:$0xf]
        %v8949 = vld [vmem:[#allocation9 + $0x1d4] sm:$0xf]
        %v8950 = vld [vmem:[#allocation9 + $0x1d8] sm:$0xf]
        %v8951 = vld [vmem:[#allocation9 + $0x1dc] sm:$0xf]
        %v8952 = vld [vmem:[#allocation9 + $0x1e0] sm:$0xf]
        %v8953 = vld [vmem:[#allocation9 + $0x1e4] sm:$0xf]
        %v8954 = vld [vmem:[#allocation9 + $0x1e8] sm:$0xf]
        %v8955 = vld [vmem:[#allocation9 + $0x1ec] sm:$0xf]
        %v8956 = vld [vmem:[#allocation9 + $0x1f0] sm:$0xf]
        %v8957 = vld [vmem:[#allocation9 + $0x1f4] sm:$0xf]
        %v8958 = vld [vmem:[#allocation9 + $0x1f8] sm:$0xf]
        %v8959 = vld [vmem:[#allocation9 + $0x1fc] sm:$0xf]
        %v8960 = vld [vmem:[#allocation9 + $0x200] sm:$0xf]
        %v8961 = vld [vmem:[#allocation9 + $0x204] sm:$0xf]
        %v8962 = vld [vmem:[#allocation9 + $0x208] sm:$0xf]
        %v8963 = vld [vmem:[#allocation9 + $0x20c] sm:$0xf]
        %v8964 = vld [vmem:[#allocation9 + $0x210] sm:$0xf]
        %v8965 = vld [vmem:[#allocation9 + $0x214] sm:$0xf]
        %v8966 = vld [vmem:[#allocation9 + $0x218] sm:$0xf]
        %v8967 = vld [vmem:[#allocation9 + $0x21c] sm:$0xf]
        %v8968 = vld [vmem:[#allocation9 + $0x220] sm:$0xf]
        %v8969 = vld [vmem:[#allocation9 + $0x224] sm:$0xf]
        %v8970 = vld [vmem:[#allocation9 + $0x228] sm:$0xf]
        %v8971 = vld [vmem:[#allocation9 + $0x22c] sm:$0xf]
        %v8972 = vld [vmem:[#allocation9 + $0x230] sm:$0xf]
        %v8973 = vld [vmem:[#allocation9 + $0x234] sm:$0xf]
        %v8974 = vld [vmem:[#allocation9 + $0x238] sm:$0xf]
        %v8975 = vld [vmem:[#allocation9 + $0x23c] sm:$0xf]
        %v8976 = vld [vmem:[%s4] sm:$0x1]
        %v8978 = vperm.slane %v8976, 0
        %v9140 = vunpack.c.l.b16 %v8672
        %v9141 = vunpack.c.h.b16 %v8672
        %v9142 = vunpack.c.l.b16 %v8673
        %v9143 = vunpack.c.h.b16 %v8673
        %v9144 = vunpack.c.l.b16 %v8674
        %v9145 = vunpack.c.h.b16 %v8674
        %v9146 = vunpack.c.l.b16 %v8675
        %v9147 = vunpack.c.h.b16 %v8675
        %v9148 = vunpack.c.l.b16 %v8676
        %v9149 = vunpack.c.l.b16 %v8677
        %v9150 = vunpack.c.h.b16 %v8677
        %v9151 = vunpack.c.l.b16 %v8678
        %v9152 = vunpack.c.h.b16 %v8678
        %v9153 = vunpack.c.l.b16 %v8679
        %v9154 = vunpack.c.h.b16 %v8679
        %v9155 = vunpack.c.l.b16 %v8680
        %v9156 = vunpack.c.h.b16 %v8680
        %v9157 = vunpack.c.l.b16 %v8681
        %v9158 = vunpack.c.l.b16 %v8682
        %v9159 = vunpack.c.h.b16 %v8682
        %v9160 = vunpack.c.l.b16 %v8683
        %v9161 = vunpack.c.h.b16 %v8683
        %v9162 = vunpack.c.l.b16 %v8684
        %v9163 = vunpack.c.h.b16 %v8684
        %v9164 = vunpack.c.l.b16 %v8685
        %v9165 = vunpack.c.h.b16 %v8685
        %v9166 = vunpack.c.l.b16 %v8686
        %v9167 = vunpack.c.l.b16 %v8687
        %v9168 = vunpack.c.h.b16 %v8687
        %v9169 = vunpack.c.l.b16 %v8688
        %v9170 = vunpack.c.h.b16 %v8688
        %v9171 = vunpack.c.l.b16 %v8689
        %v9172 = vunpack.c.h.b16 %v8689
        %v9173 = vunpack.c.l.b16 %v8690
        %v9174 = vunpack.c.h.b16 %v8690
        %v9175 = vunpack.c.l.b16 %v8691
        %v9176 = vunpack.c.l.b16 %v8692
        %v9177 = vunpack.c.h.b16 %v8692
        %v9178 = vunpack.c.l.b16 %v8693
        %v9179 = vunpack.c.h.b16 %v8693
        %v9180 = vunpack.c.l.b16 %v8694
        %v9181 = vunpack.c.h.b16 %v8694
        %v9182 = vunpack.c.l.b16 %v8695
        %v9183 = vunpack.c.h.b16 %v8695
        %v9184 = vunpack.c.l.b16 %v8696
        %v9185 = vunpack.c.l.b16 %v8697
        %v9186 = vunpack.c.h.b16 %v8697
        %v9187 = vunpack.c.l.b16 %v8698
        %v9188 = vunpack.c.h.b16 %v8698
        %v9189 = vunpack.c.l.b16 %v8699
        %v9190 = vunpack.c.h.b16 %v8699
        %v9191 = vunpack.c.l.b16 %v8700
        %v9192 = vunpack.c.h.b16 %v8700
        %v9193 = vunpack.c.l.b16 %v8701
        %v9194 = vunpack.c.l.b16 %v8702
        %v9195 = vunpack.c.h.b16 %v8702
        %v9196 = vunpack.c.l.b16 %v8703
        %v9197 = vunpack.c.h.b16 %v8703
        %v9198 = vunpack.c.l.b16 %v8704
        %v9199 = vunpack.c.h.b16 %v8704
        %v9200 = vunpack.c.l.b16 %v8705
        %v9201 = vunpack.c.h.b16 %v8705
        %v9202 = vunpack.c.l.b16 %v8706
        %v9203 = vunpack.c.l.b16 %v8707
        %v9204 = vunpack.c.h.b16 %v8707
        %v9205 = vunpack.c.l.b16 %v8708
        %v9206 = vunpack.c.h.b16 %v8708
        %v9207 = vunpack.c.l.b16 %v8709
        %v9208 = vunpack.c.h.b16 %v8709
        %v9209 = vunpack.c.l.b16 %v8710
        %v9210 = vunpack.c.h.b16 %v8710
        %v9211 = vunpack.c.l.b16 %v8711
        %v9212 = vunpack.c.l.b16 %v8712
        %v9213 = vunpack.c.h.b16 %v8712
        %v9214 = vunpack.c.l.b16 %v8713
        %v9215 = vunpack.c.h.b16 %v8713
        %v9216 = vunpack.c.l.b16 %v8714
        %v9217 = vunpack.c.h.b16 %v8714
        %v9218 = vunpack.c.l.b16 %v8715
        %v9219 = vunpack.c.h.b16 %v8715
        %v9220 = vunpack.c.l.b16 %v8716
        %v9221 = vunpack.c.l.b16 %v8717
        %v9222 = vunpack.c.h.b16 %v8717
        %v9223 = vunpack.c.l.b16 %v8718
        %v9224 = vunpack.c.h.b16 %v8718
        %v9225 = vunpack.c.l.b16 %v8719
        %v9226 = vunpack.c.h.b16 %v8719
        %v9227 = vunpack.c.l.b16 %v8720
        %v9228 = vunpack.c.h.b16 %v8720
        %v9229 = vunpack.c.l.b16 %v8721
        %v9230 = vunpack.c.l.b16 %v8722
        %v9231 = vunpack.c.h.b16 %v8722
        %v9232 = vunpack.c.l.b16 %v8723
        %v9233 = vunpack.c.h.b16 %v8723
        %v9234 = vunpack.c.l.b16 %v8724
        %v9235 = vunpack.c.h.b16 %v8724
        %v9236 = vunpack.c.l.b16 %v8725
        %v9237 = vunpack.c.h.b16 %v8725
        %v9238 = vunpack.c.l.b16 %v8726
        %v9239 = vunpack.c.l.b16 %v8727
        %v9240 = vunpack.c.h.b16 %v8727
        %v9241 = vunpack.c.l.b16 %v8728
        %v9242 = vunpack.c.h.b16 %v8728
        %v9243 = vunpack.c.l.b16 %v8729
        %v9244 = vunpack.c.h.b16 %v8729
        %v9245 = vunpack.c.l.b16 %v8730
        %v9246 = vunpack.c.h.b16 %v8730
        %v9247 = vunpack.c.l.b16 %v8731
        %v9248 = vunpack.c.l.b16 %v8732
        %v9249 = vunpack.c.h.b16 %v8732
        %v9250 = vunpack.c.l.b16 %v8733
        %v9251 = vunpack.c.h.b16 %v8733
        %v9252 = vunpack.c.l.b16 %v8734
        %v9253 = vunpack.c.h.b16 %v8734
        %v9254 = vunpack.c.l.b16 %v8735
        %v9255 = vunpack.c.h.b16 %v8735
        %v9256 = vunpack.c.l.b16 %v8736
        %v9257 = vunpack.c.l.b16 %v8737
        %v9258 = vunpack.c.h.b16 %v8737
        %v9259 = vunpack.c.l.b16 %v8738
        %v9260 = vunpack.c.h.b16 %v8738
        %v9261 = vunpack.c.l.b16 %v8739
        %v9262 = vunpack.c.h.b16 %v8739
        %v9263 = vunpack.c.l.b16 %v8740
        %v9264 = vunpack.c.h.b16 %v8740
        %v9265 = vunpack.c.l.b16 %v8741
        %v9266 = vunpack.c.l.b16 %v8742
        %v9267 = vunpack.c.h.b16 %v8742
        %v9268 = vunpack.c.l.b16 %v8743
        %v9269 = vunpack.c.h.b16 %v8743
        %v9270 = vunpack.c.l.b16 %v8744
        %v9271 = vunpack.c.h.b16 %v8744
        %v9272 = vunpack.c.l.b16 %v8745
        %v9273 = vunpack.c.h.b16 %v8745
        %v9274 = vunpack.c.l.b16 %v8746
        %v9275 = vunpack.c.l.b16 %v8747
        %v9276 = vunpack.c.h.b16 %v8747
        %v9277 = vunpack.c.l.b16 %v8748
        %v9278 = vunpack.c.h.b16 %v8748
        %v9279 = vunpack.c.l.b16 %v8749
        %v9280 = vunpack.c.h.b16 %v8749
        %v9281 = vunpack.c.l.b16 %v8750
        %v9282 = vunpack.c.h.b16 %v8750
        %v9283 = vunpack.c.l.b16 %v8751
        %v9284 = vunpack.c.l.b16 %v8752
        %v9285 = vunpack.c.h.b16 %v8752
        %v9286 = vunpack.c.l.b16 %v8753
        %v9287 = vunpack.c.h.b16 %v8753
        %v9288 = vunpack.c.l.b16 %v8754
        %v9289 = vunpack.c.h.b16 %v8754
        %v9290 = vunpack.c.l.b16 %v8755
        %v9291 = vunpack.c.h.b16 %v8755
        %v9292 = vunpack.c.l.b16 %v8756
        %v9293 = vunpack.c.l.b16 %v8757
        %v9294 = vunpack.c.h.b16 %v8757
        %v9295 = vunpack.c.l.b16 %v8758
        %v9296 = vunpack.c.h.b16 %v8758
        %v9297 = vunpack.c.l.b16 %v8759
        %v9298 = vunpack.c.h.b16 %v8759
        %v9299 = vunpack.c.l.b16 %v8760
        %v9300 = vunpack.c.h.b16 %v8760
        %v9301 = vunpack.c.l.b16 %v8761
        %v9302 = vunpack.c.l.b16 %v8762
        %v9303 = vunpack.c.h.b16 %v8762
        %v9304 = vunpack.c.l.b16 %v8763
        %v9305 = vunpack.c.h.b16 %v8763
        %v9306 = vunpack.c.l.b16 %v8764
        %v9307 = vunpack.c.h.b16 %v8764
        %v9308 = vunpack.c.l.b16 %v8765
        %v9309 = vunpack.c.h.b16 %v8765
        %v9310 = vunpack.c.l.b16 %v8766
        %v9311 = vunpack.c.l.b16 %v8767
        %v9312 = vunpack.c.h.b16 %v8767
        %v9313 = vunpack.c.l.b16 %v8768
        %v9314 = vunpack.c.h.b16 %v8768
        %v9315 = vunpack.c.l.b16 %v8769
        %v9316 = vunpack.c.h.b16 %v8769
        %v9317 = vunpack.c.l.b16 %v8770
        %v9318 = vunpack.c.h.b16 %v8770
        %v9319 = vunpack.c.l.b16 %v8771
        %v9320 = vunpack.c.l.b16 %v8772
        %v9321 = vunpack.c.h.b16 %v8772
        %v9322 = vunpack.c.l.b16 %v8773
        %v9323 = vunpack.c.h.b16 %v8773
        %v9324 = vunpack.c.l.b16 %v8774
        %v9325 = vunpack.c.h.b16 %v8774
        %v9326 = vunpack.c.l.b16 %v8775
        %v9327 = vunpack.c.h.b16 %v8775
        %v9328 = vunpack.c.l.b16 %v8776
        %v9329 = vunpack.c.l.b16 %v8777
        %v9330 = vunpack.c.h.b16 %v8777
        %v9331 = vunpack.c.l.b16 %v8778
        %v9332 = vunpack.c.h.b16 %v8778
        %v9333 = vunpack.c.l.b16 %v8779
        %v9334 = vunpack.c.h.b16 %v8779
        %v9335 = vunpack.c.l.b16 %v8780
        %v9336 = vunpack.c.h.b16 %v8780
        %v9337 = vunpack.c.l.b16 %v8781
        %v9338 = vunpack.c.l.b16 %v8782
        %v9339 = vunpack.c.h.b16 %v8782
        %v9340 = vunpack.c.l.b16 %v8783
        %v9341 = vunpack.c.h.b16 %v8783
        %v9342 = vunpack.c.l.b16 %v8784
        %v9343 = vunpack.c.h.b16 %v8784
        %v9344 = vunpack.c.l.b16 %v8785
        %v9345 = vunpack.c.h.b16 %v8785
        %v9346 = vunpack.c.l.b16 %v8786
        %v9347 = vunpack.c.l.b16 %v8787
        %v9348 = vunpack.c.h.b16 %v8787
        %v9349 = vunpack.c.l.b16 %v8788
        %v9350 = vunpack.c.h.b16 %v8788
        %v9351 = vunpack.c.l.b16 %v8789
        %v9352 = vunpack.c.h.b16 %v8789
        %v9353 = vunpack.c.l.b16 %v8790
        %v9354 = vunpack.c.h.b16 %v8790
        %v9355 = vunpack.c.l.b16 %v8791
        %v9356 = vunpack.c.l.b16 %v8792
        %v9357 = vunpack.c.h.b16 %v8792
        %v9358 = vunpack.c.l.b16 %v8793
        %v9359 = vunpack.c.h.b16 %v8793
        %v9360 = vunpack.c.l.b16 %v8794
        %v9361 = vunpack.c.h.b16 %v8794
        %v9362 = vunpack.c.l.b16 %v8795
        %v9363 = vunpack.c.h.b16 %v8795
        %v9364 = vunpack.c.l.b16 %v8796
        %v9365 = vunpack.c.l.b16 %v8797
        %v9366 = vunpack.c.h.b16 %v8797
        %v9367 = vunpack.c.l.b16 %v8798
        %v9368 = vunpack.c.h.b16 %v8798
        %v9369 = vunpack.c.l.b16 %v8799
        %v9370 = vunpack.c.h.b16 %v8799
        %v9371 = vunpack.c.l.b16 %v8800
        %v9372 = vunpack.c.h.b16 %v8800
        %v9373 = vunpack.c.l.b16 %v8801
        %v9374 = vunpack.c.l.b16 %v8802
        %v9375 = vunpack.c.h.b16 %v8802
        %v9376 = vunpack.c.l.b16 %v8803
        %v9377 = vunpack.c.h.b16 %v8803
        %v9378 = vunpack.c.l.b16 %v8804
        %v9379 = vunpack.c.h.b16 %v8804
        %v9380 = vunpack.c.l.b16 %v8805
        %v9381 = vunpack.c.h.b16 %v8805
        %v9382 = vunpack.c.l.b16 %v8806
        %v9383 = vunpack.c.l.b16 %v8807
        %v9384 = vunpack.c.h.b16 %v8807
        %v9385 = vunpack.c.l.b16 %v8808
        %v9386 = vunpack.c.h.b16 %v8808
        %v9387 = vunpack.c.l.b16 %v8809
        %v9388 = vunpack.c.h.b16 %v8809
        %v9389 = vunpack.c.l.b16 %v8810
        %v9390 = vunpack.c.h.b16 %v8810
        %v9391 = vunpack.c.l.b16 %v8811
        %v9392 = vunpack.c.l.b16 %v8812
        %v9393 = vunpack.c.h.b16 %v8812
        %v9394 = vunpack.c.l.b16 %v8813
        %v9395 = vunpack.c.h.b16 %v8813
        %v9396 = vunpack.c.l.b16 %v8814
        %v9397 = vunpack.c.h.b16 %v8814
        %v9398 = vunpack.c.l.b16 %v8815
        %v9399 = vunpack.c.h.b16 %v8815
        %v9400 = vunpack.c.l.b16 %v8816
        %v9401 = vunpack.c.l.b16 %v8817
        %v9402 = vunpack.c.h.b16 %v8817
        %v9403 = vunpack.c.l.b16 %v8818
        %v9404 = vunpack.c.h.b16 %v8818
        %v9405 = vunpack.c.l.b16 %v8819
        %v9406 = vunpack.c.h.b16 %v8819
        %v9407 = vunpack.c.l.b16 %v8820
        %v9408 = vunpack.c.h.b16 %v8820
        %v9409 = vunpack.c.l.b16 %v8821
        %v9410 = vunpack.c.l.b16 %v8822
        %v9411 = vunpack.c.h.b16 %v8822
        %v9412 = vunpack.c.l.b16 %v8823
        %v9413 = vunpack.c.h.b16 %v8823
        %v9414 = vunpack.c.l.b16 %v8824
        %v9415 = vunpack.c.h.b16 %v8824
        %v9416 = vunpack.c.l.b16 %v8825
        %v9417 = vunpack.c.h.b16 %v8825
        %v9418 = vunpack.c.l.b16 %v8826
        %v9419 = vunpack.c.l.b16 %v8827
        %v9420 = vunpack.c.h.b16 %v8827
        %v9421 = vunpack.c.l.b16 %v8828
        %v9422 = vunpack.c.h.b16 %v8828
        %v9423 = vunpack.c.l.b16 %v8829
        %v9424 = vunpack.c.h.b16 %v8829
        %v9425 = vunpack.c.l.b16 %v8830
        %v9426 = vunpack.c.h.b16 %v8830
        %v9427 = vunpack.c.l.b16 %v8831
        %v9428 = vpack.c.b16 %v9149, %v9140
        %v9429 = vpack.c.b16 %v9150, %v9141
        %v9430 = vpack.c.b16 %v9151, %v9142
        %v9431 = vpack.c.b16 %v9152, %v9143
        %v9432 = vpack.c.b16 %v9153, %v9144
        %v9433 = vpack.c.b16 %v9154, %v9145
        %v9434 = vpack.c.b16 %v9155, %v9146
        %v9435 = vpack.c.b16 %v9156, %v9147
        %v9436 = vpack.c.b16 %v9157, %v9148
        %v9437 = vpack.c.b16 %v9167, %v9158
        %v9438 = vpack.c.b16 %v9168, %v9159
        %v9439 = vpack.c.b16 %v9169, %v9160
        %v9440 = vpack.c.b16 %v9170, %v9161
        %v9441 = vpack.c.b16 %v9171, %v9162
        %v9442 = vpack.c.b16 %v9172, %v9163
        %v9443 = vpack.c.b16 %v9173, %v9164
        %v9444 = vpack.c.b16 %v9174, %v9165
        %v9445 = vpack.c.b16 %v9175, %v9166
        %v9446 = vpack.c.b16 %v9185, %v9176
        %v9447 = vpack.c.b16 %v9186, %v9177
        %v9448 = vpack.c.b16 %v9187, %v9178
        %v9449 = vpack.c.b16 %v9188, %v9179
        %v9450 = vpack.c.b16 %v9189, %v9180
        %v9451 = vpack.c.b16 %v9190, %v9181
        %v9452 = vpack.c.b16 %v9191, %v9182
        %v9453 = vpack.c.b16 %v9192, %v9183
        %v9454 = vpack.c.b16 %v9193, %v9184
        %v9455 = vpack.c.b16 %v9203, %v9194
        %v9456 = vpack.c.b16 %v9204, %v9195
        %v9457 = vpack.c.b16 %v9205, %v9196
        %v9458 = vpack.c.b16 %v9206, %v9197
        %v9459 = vpack.c.b16 %v9207, %v9198
        %v9460 = vpack.c.b16 %v9208, %v9199
        %v9461 = vpack.c.b16 %v9209, %v9200
        %v9462 = vpack.c.b16 %v9210, %v9201
        %v9463 = vpack.c.b16 %v9211, %v9202
        %v9464 = vpack.c.b16 %v9221, %v9212
        %v9465 = vpack.c.b16 %v9222, %v9213
        %v9466 = vpack.c.b16 %v9223, %v9214
        %v9467 = vpack.c.b16 %v9224, %v9215
        %v9468 = vpack.c.b16 %v9225, %v9216
        %v9469 = vpack.c.b16 %v9226, %v9217
        %v9470 = vpack.c.b16 %v9227, %v9218
        %v9471 = vpack.c.b16 %v9228, %v9219
        %v9472 = vpack.c.b16 %v9229, %v9220
        %v9473 = vpack.c.b16 %v9239, %v9230
        %v9474 = vpack.c.b16 %v9240, %v9231
        %v9475 = vpack.c.b16 %v9241, %v9232
        %v9476 = vpack.c.b16 %v9242, %v9233
        %v9477 = vpack.c.b16 %v9243, %v9234
        %v9478 = vpack.c.b16 %v9244, %v9235
        %v9479 = vpack.c.b16 %v9245, %v9236
        %v9480 = vpack.c.b16 %v9246, %v9237
        %v9481 = vpack.c.b16 %v9247, %v9238
        %v9482 = vpack.c.b16 %v9257, %v9248
        %v9483 = vpack.c.b16 %v9258, %v9249
        %v9484 = vpack.c.b16 %v9259, %v9250
        %v9485 = vpack.c.b16 %v9260, %v9251
        %v9486 = vpack.c.b16 %v9261, %v9252
        %v9487 = vpack.c.b16 %v9262, %v9253
        %v9488 = vpack.c.b16 %v9263, %v9254
        %v9489 = vpack.c.b16 %v9264, %v9255
        %v9490 = vpack.c.b16 %v9265, %v9256
        %v9491 = vpack.c.b16 %v9275, %v9266
        %v9492 = vpack.c.b16 %v9276, %v9267
        %v9493 = vpack.c.b16 %v9277, %v9268
        %v9494 = vpack.c.b16 %v9278, %v9269
        %v9495 = vpack.c.b16 %v9279, %v9270
        %v9496 = vpack.c.b16 %v9280, %v9271
        %v9497 = vpack.c.b16 %v9281, %v9272
        %v9498 = vpack.c.b16 %v9282, %v9273
        %v9499 = vpack.c.b16 %v9283, %v9274
        %v9500 = vpack.c.b16 %v9293, %v9284
        %v9501 = vpack.c.b16 %v9294, %v9285
        %v9502 = vpack.c.b16 %v9295, %v9286
        %v9503 = vpack.c.b16 %v9296, %v9287
        %v9504 = vpack.c.b16 %v9297, %v9288
        %v9505 = vpack.c.b16 %v9298, %v9289
        %v9506 = vpack.c.b16 %v9299, %v9290
        %v9507 = vpack.c.b16 %v9300, %v9291
        %v9508 = vpack.c.b16 %v9301, %v9292
        %v9509 = vpack.c.b16 %v9311, %v9302
        %v9510 = vpack.c.b16 %v9312, %v9303
        %v9511 = vpack.c.b16 %v9313, %v9304
        %v9512 = vpack.c.b16 %v9314, %v9305
        %v9513 = vpack.c.b16 %v9315, %v9306
        %v9514 = vpack.c.b16 %v9316, %v9307
        %v9515 = vpack.c.b16 %v9317, %v9308
        %v9516 = vpack.c.b16 %v9318, %v9309
        %v9517 = vpack.c.b16 %v9319, %v9310
        %v9518 = vpack.c.b16 %v9329, %v9320
        %v9519 = vpack.c.b16 %v9330, %v9321
        %v9520 = vpack.c.b16 %v9331, %v9322
        %v9521 = vpack.c.b16 %v9332, %v9323
        %v9522 = vpack.c.b16 %v9333, %v9324
        %v9523 = vpack.c.b16 %v9334, %v9325
        %v9524 = vpack.c.b16 %v9335, %v9326
        %v9525 = vpack.c.b16 %v9336, %v9327
        %v9526 = vpack.c.b16 %v9337, %v9328
        %v9527 = vpack.c.b16 %v9347, %v9338
        %v9528 = vpack.c.b16 %v9348, %v9339
        %v9529 = vpack.c.b16 %v9349, %v9340
        %v9530 = vpack.c.b16 %v9350, %v9341
        %v9531 = vpack.c.b16 %v9351, %v9342
        %v9532 = vpack.c.b16 %v9352, %v9343
        %v9533 = vpack.c.b16 %v9353, %v9344
        %v9534 = vpack.c.b16 %v9354, %v9345
        %v9535 = vpack.c.b16 %v9355, %v9346
        %v9536 = vpack.c.b16 %v9365, %v9356
        %v9537 = vpack.c.b16 %v9366, %v9357
        %v9538 = vpack.c.b16 %v9367, %v9358
        %v9539 = vpack.c.b16 %v9368, %v9359
        %v9540 = vpack.c.b16 %v9369, %v9360
        %v9541 = vpack.c.b16 %v9370, %v9361
        %v9542 = vpack.c.b16 %v9371, %v9362
        %v9543 = vpack.c.b16 %v9372, %v9363
        %v9544 = vpack.c.b16 %v9373, %v9364
        %v9545 = vpack.c.b16 %v9383, %v9374
        %v9546 = vpack.c.b16 %v9384, %v9375
        %v9547 = vpack.c.b16 %v9385, %v9376
        %v9548 = vpack.c.b16 %v9386, %v9377
        %v9549 = vpack.c.b16 %v9387, %v9378
        %v9550 = vpack.c.b16 %v9388, %v9379
        %v9551 = vpack.c.b16 %v9389, %v9380
        %v9552 = vpack.c.b16 %v9390, %v9381
        %v9553 = vpack.c.b16 %v9391, %v9382
        %v9554 = vpack.c.b16 %v9401, %v9392
        %v9555 = vpack.c.b16 %v9402, %v9393
        %v9556 = vpack.c.b16 %v9403, %v9394
        %v9557 = vpack.c.b16 %v9404, %v9395
        %v9558 = vpack.c.b16 %v9405, %v9396
        %v9559 = vpack.c.b16 %v9406, %v9397
        %v9560 = vpack.c.b16 %v9407, %v9398
        %v9561 = vpack.c.b16 %v9408, %v9399
        %v9562 = vpack.c.b16 %v9409, %v9400
        %v9563 = vpack.c.b16 %v9419, %v9410
        %v9564 = vpack.c.b16 %v9420, %v9411
        %v9565 = vpack.c.b16 %v9421, %v9412
        %v9566 = vpack.c.b16 %v9422, %v9413
        %v9567 = vpack.c.b16 %v9423, %v9414
        %v9568 = vpack.c.b16 %v9424, %v9415
        %v9569 = vpack.c.b16 %v9425, %v9416
        %v9570 = vpack.c.b16 %v9426, %v9417
        %v9571 = vpack.c.b16 %v9427, %v9418
        %v9860 = vunpack.c.l.b16 %v8832
        %v9861 = vunpack.c.l.b16 %v8833
        %v9862 = vunpack.c.l.b16 %v8834
        %v9863 = vunpack.c.l.b16 %v8835
        %v9864 = vunpack.c.l.b16 %v8836
        %v9865 = vunpack.c.l.b16 %v8837
        %v9866 = vunpack.c.l.b16 %v8838
        %v9867 = vunpack.c.l.b16 %v8839
        %v9868 = vunpack.c.l.b16 %v8840
        %v9869 = vunpack.c.l.b16 %v8841
        %v9870 = vunpack.c.l.b16 %v8842
        %v9871 = vunpack.c.l.b16 %v8843
        %v9872 = vunpack.c.l.b16 %v8844
        %v9873 = vunpack.c.l.b16 %v8845
        %v9874 = vunpack.c.l.b16 %v8846
        %v9875 = vunpack.c.l.b16 %v8847
        %v9876 = vunpack.c.l.b16 %v8848
        %v9877 = vunpack.c.l.b16 %v8849
        %v9878 = vunpack.c.l.b16 %v8850
        %v9879 = vunpack.c.l.b16 %v8851
        %v9880 = vunpack.c.l.b16 %v8852
        %v9881 = vunpack.c.l.b16 %v8853
        %v9882 = vunpack.c.l.b16 %v8854
        %v9883 = vunpack.c.l.b16 %v8855
        %v9884 = vunpack.c.l.b16 %v8856
        %v9885 = vunpack.c.l.b16 %v8857
        %v9886 = vunpack.c.l.b16 %v8858
        %v9887 = vunpack.c.l.b16 %v8859
        %v9888 = vunpack.c.l.b16 %v8860
        %v9889 = vunpack.c.l.b16 %v8861
        %v9890 = vunpack.c.l.b16 %v8862
        %v9891 = vunpack.c.l.b16 %v8863
        %v9892 = vunpack.c.l.b16 %v8864
        %v9893 = vunpack.c.l.b16 %v8865
        %v9894 = vunpack.c.l.b16 %v8866
        %v9895 = vunpack.c.l.b16 %v8867
        %v9896 = vunpack.c.l.b16 %v8868
        %v9897 = vunpack.c.l.b16 %v8869
        %v9898 = vunpack.c.l.b16 %v8870
        %v9899 = vunpack.c.l.b16 %v8871
        %v9900 = vunpack.c.l.b16 %v8872
        %v9901 = vunpack.c.l.b16 %v8873
        %v9902 = vunpack.c.l.b16 %v8874
        %v9903 = vunpack.c.l.b16 %v8875
        %v9904 = vunpack.c.l.b16 %v8876
        %v9905 = vunpack.c.l.b16 %v8877
        %v9906 = vunpack.c.l.b16 %v8878
        %v9907 = vunpack.c.l.b16 %v8879
        %v9908 = vunpack.c.l.b16 %v8880
        %v9909 = vunpack.c.l.b16 %v8881
        %v9910 = vunpack.c.l.b16 %v8882
        %v9911 = vunpack.c.l.b16 %v8883
        %v9912 = vunpack.c.l.b16 %v8884
        %v9913 = vunpack.c.l.b16 %v8885
        %v9914 = vunpack.c.l.b16 %v8886
        %v9915 = vunpack.c.l.b16 %v8887
        %v9916 = vunpack.c.l.b16 %v8888
        %v9917 = vunpack.c.l.b16 %v8889
        %v9918 = vunpack.c.l.b16 %v8890
        %v9919 = vunpack.c.l.b16 %v8891
        %v9920 = vunpack.c.l.b16 %v8892
        %v9921 = vunpack.c.l.b16 %v8893
        %v9922 = vunpack.c.l.b16 %v8894
        %v9923 = vunpack.c.l.b16 %v8895
        %v9924 = vunpack.c.l.b16 %v8896
        %v9925 = vunpack.c.l.b16 %v8897
        %v9926 = vunpack.c.l.b16 %v8898
        %v9927 = vunpack.c.l.b16 %v8899
        %v9928 = vunpack.c.l.b16 %v8900
        %v9929 = vunpack.c.l.b16 %v8901
        %v9930 = vunpack.c.l.b16 %v8902
        %v9931 = vunpack.c.l.b16 %v8903
        %v9932 = vunpack.c.l.b16 %v8904
        %v9933 = vunpack.c.l.b16 %v8905
        %v9934 = vunpack.c.l.b16 %v8906
        %v9935 = vunpack.c.l.b16 %v8907
        %v9936 = vunpack.c.l.b16 %v8908
        %v9937 = vunpack.c.l.b16 %v8909
        %v9938 = vunpack.c.l.b16 %v8910
        %v9939 = vunpack.c.l.b16 %v8911
        %v9940 = vunpack.c.l.b16 %v8912
        %v9941 = vunpack.c.l.b16 %v8913
        %v9942 = vunpack.c.l.b16 %v8914
        %v9943 = vunpack.c.l.b16 %v8915
        %v9944 = vunpack.c.l.b16 %v8916
        %v9945 = vunpack.c.l.b16 %v8917
        %v9946 = vunpack.c.l.b16 %v8918
        %v9947 = vunpack.c.l.b16 %v8919
        %v9948 = vunpack.c.l.b16 %v8920
        %v9949 = vunpack.c.l.b16 %v8921
        %v9950 = vunpack.c.l.b16 %v8922
        %v9951 = vunpack.c.l.b16 %v8923
        %v9952 = vunpack.c.l.b16 %v8924
        %v9953 = vunpack.c.l.b16 %v8925
        %v9954 = vunpack.c.l.b16 %v8926
        %v9955 = vunpack.c.l.b16 %v8927
        %v9956 = vunpack.c.l.b16 %v8928
        %v9957 = vunpack.c.l.b16 %v8929
        %v9958 = vunpack.c.l.b16 %v8930
        %v9959 = vunpack.c.l.b16 %v8931
        %v9960 = vunpack.c.l.b16 %v8932
        %v9961 = vunpack.c.l.b16 %v8933
        %v9962 = vunpack.c.l.b16 %v8934
        %v9963 = vunpack.c.l.b16 %v8935
        %v9964 = vunpack.c.l.b16 %v8936
        %v9965 = vunpack.c.l.b16 %v8937
        %v9966 = vunpack.c.l.b16 %v8938
        %v9967 = vunpack.c.l.b16 %v8939
        %v9968 = vunpack.c.l.b16 %v8940
        %v9969 = vunpack.c.l.b16 %v8941
        %v9970 = vunpack.c.l.b16 %v8942
        %v9971 = vunpack.c.l.b16 %v8943
        %v9972 = vunpack.c.l.b16 %v8944
        %v9973 = vunpack.c.l.b16 %v8945
        %v9974 = vunpack.c.l.b16 %v8946
        %v9975 = vunpack.c.l.b16 %v8947
        %v9976 = vunpack.c.l.b16 %v8948
        %v9977 = vunpack.c.l.b16 %v8949
        %v9978 = vunpack.c.l.b16 %v8950
        %v9979 = vunpack.c.l.b16 %v8951
        %v9980 = vunpack.c.l.b16 %v8952
        %v9981 = vunpack.c.l.b16 %v8953
        %v9982 = vunpack.c.l.b16 %v8954
        %v9983 = vunpack.c.l.b16 %v8955
        %v9984 = vunpack.c.l.b16 %v8956
        %v9985 = vunpack.c.l.b16 %v8957
        %v9986 = vunpack.c.l.b16 %v8958
        %v9987 = vunpack.c.l.b16 %v8959
        %v9988 = vunpack.c.l.b16 %v8960
        %v9989 = vunpack.c.l.b16 %v8961
        %v9990 = vunpack.c.l.b16 %v8962
        %v9991 = vunpack.c.l.b16 %v8963
        %v9992 = vunpack.c.l.b16 %v8964
        %v9993 = vunpack.c.l.b16 %v8965
        %v9994 = vunpack.c.l.b16 %v8966
        %v9995 = vunpack.c.l.b16 %v8967
        %v9996 = vunpack.c.l.b16 %v8968
        %v9997 = vunpack.c.l.b16 %v8969
        %v9998 = vunpack.c.l.b16 %v8970
        %v9999 = vunpack.c.l.b16 %v8971
        %v10000 = vunpack.c.l.b16 %v8972
        %v10001 = vunpack.c.l.b16 %v8973
        %v10002 = vunpack.c.l.b16 %v8974
        %v10003 = vunpack.c.l.b16 %v8975
        %v10004 = vpack.c.b16 %v9861, %v9860
        %v10005 = vpack.c.b16 %v9863, %v9862
        %v10006 = vpack.c.b16 %v9865, %v9864
        %v10007 = vpack.c.b16 %v9867, %v9866
        %v10008 = vpack.c.b16 %v9869, %v9868
        %v10009 = vpack.c.b16 %v9871, %v9870
        %v10010 = vpack.c.b16 %v9873, %v9872
        %v10011 = vpack.c.b16 %v9875, %v9874
        %v10012 = vpack.c.b16 %v9877, %v9876
        %v10013 = vpack.c.b16 %v9879, %v9878
        %v10014 = vpack.c.b16 %v9881, %v9880
        %v10015 = vpack.c.b16 %v9883, %v9882
        %v10016 = vpack.c.b16 %v9885, %v9884
        %v10017 = vpack.c.b16 %v9887, %v9886
        %v10018 = vpack.c.b16 %v9889, %v9888
        %v10019 = vpack.c.b16 %v9891, %v9890
        %v10020 = vpack.c.b16 %v9893, %v9892
        %v10021 = vpack.c.b16 %v9895, %v9894
        %v10022 = vpack.c.b16 %v9897, %v9896
        %v10023 = vpack.c.b16 %v9899, %v9898
        %v10024 = vpack.c.b16 %v9901, %v9900
        %v10025 = vpack.c.b16 %v9903, %v9902
        %v10026 = vpack.c.b16 %v9905, %v9904
        %v10027 = vpack.c.b16 %v9907, %v9906
        %v10028 = vpack.c.b16 %v9909, %v9908
        %v10029 = vpack.c.b16 %v9911, %v9910
        %v10030 = vpack.c.b16 %v9913, %v9912
        %v10031 = vpack.c.b16 %v9915, %v9914
        %v10032 = vpack.c.b16 %v9917, %v9916
        %v10033 = vpack.c.b16 %v9919, %v9918
        %v10034 = vpack.c.b16 %v9921, %v9920
        %v10035 = vpack.c.b16 %v9923, %v9922
        %v10036 = vpack.c.b16 %v9925, %v9924
        %v10037 = vpack.c.b16 %v9927, %v9926
        %v10038 = vpack.c.b16 %v9929, %v9928
        %v10039 = vpack.c.b16 %v9931, %v9930
        %v10040 = vpack.c.b16 %v9933, %v9932
        %v10041 = vpack.c.b16 %v9935, %v9934
        %v10042 = vpack.c.b16 %v9937, %v9936
        %v10043 = vpack.c.b16 %v9939, %v9938
        %v10044 = vpack.c.b16 %v9941, %v9940
        %v10045 = vpack.c.b16 %v9943, %v9942
        %v10046 = vpack.c.b16 %v9945, %v9944
        %v10047 = vpack.c.b16 %v9947, %v9946
        %v10048 = vpack.c.b16 %v9949, %v9948
        %v10049 = vpack.c.b16 %v9951, %v9950
        %v10050 = vpack.c.b16 %v9953, %v9952
        %v10051 = vpack.c.b16 %v9955, %v9954
        %v10052 = vpack.c.b16 %v9957, %v9956
        %v10053 = vpack.c.b16 %v9959, %v9958
        %v10054 = vpack.c.b16 %v9961, %v9960
        %v10055 = vpack.c.b16 %v9963, %v9962
        %v10056 = vpack.c.b16 %v9965, %v9964
        %v10057 = vpack.c.b16 %v9967, %v9966
        %v10058 = vpack.c.b16 %v9969, %v9968
        %v10059 = vpack.c.b16 %v9971, %v9970
        %v10060 = vpack.c.b16 %v9973, %v9972
        %v10061 = vpack.c.b16 %v9975, %v9974
        %v10062 = vpack.c.b16 %v9977, %v9976
        %v10063 = vpack.c.b16 %v9979, %v9978
        %v10064 = vpack.c.b16 %v9981, %v9980
        %v10065 = vpack.c.b16 %v9983, %v9982
        %v10066 = vpack.c.b16 %v9985, %v9984
        %v10067 = vpack.c.b16 %v9987, %v9986
        %v10068 = vpack.c.b16 %v9989, %v9988
        %v10069 = vpack.c.b16 %v9991, %v9990
        %v10070 = vpack.c.b16 %v9993, %v9992
        %v10071 = vpack.c.b16 %v9995, %v9994
        %v10072 = vpack.c.b16 %v9997, %v9996
        %v10073 = vpack.c.b16 %v9999, %v9998
        %v10074 = vpack.c.b16 %v10001, %v10000
        %v10075 = vpack.c.b16 %v10003, %v10002
        %10148 = vmatpush.bf16.msra.mxu0 %v10011
        %10149 = vmatpush.bf16.msra.mxu0 %v10010
        %10150 = vmatpush.bf16.msra.mxu0 %v10009
        %10151 = vmatpush.bf16.msra.mxu0 %v10008
        %10152 = vmatpush.bf16.msra.mxu0 %v10007
        %10153 = vmatpush.bf16.msra.mxu0 %v10006
        %10154 = vmatpush.bf16.msra.mxu0 %v10005
        %10155 = vmatpush.bf16.msra.mxu0 %v10004
        %10156 = vmatmul.bf16.gmra.mxu0 %v9428
        %v10157 = vpop.f32.mrf.mxu0
        %v10158 = vadd.f32 %v8978, %v10157
        %v10159 = vpop.f32.mrf.mxu0
        %v10160 = vadd.f32 %v8978, %v10159
        %10161 = vmatmul.bf16.gmra.mxu0 %v9437
        %v10162 = vpop.f32.mrf.mxu0
        %v10163 = vadd.f32 %v8978, %v10162
        %v10164 = vpop.f32.mrf.mxu0
        %v10165 = vadd.f32 %v8978, %v10164
        %10166 = vmatmul.bf16.gmra.mxu0 %v9446
        %v10167 = vpop.f32.mrf.mxu0
        %v10168 = vadd.f32 %v8978, %v10167
        %v10169 = vpop.f32.mrf.mxu0
        %v10170 = vadd.f32 %v8978, %v10169
        %10171 = vmatmul.bf16.gmra.mxu0 %v9455
        %v10172 = vpop.f32.mrf.mxu0
        %v10173 = vadd.f32 %v8978, %v10172
        %v10174 = vpop.f32.mrf.mxu0
        %v10175 = vadd.f32 %v8978, %v10174
        %10176 = vmatmul.bf16.gmra.mxu0 %v9464
        %v10177 = vpop.f32.mrf.mxu0
        %v10178 = vadd.f32 %v8978, %v10177
        %v10179 = vpop.f32.mrf.mxu0
        %v10180 = vadd.f32 %v8978, %v10179
        %10181 = vmatmul.bf16.gmra.mxu0 %v9473
        %v10182 = vpop.f32.mrf.mxu0
        %v10183 = vadd.f32 %v8978, %v10182
        %v10184 = vpop.f32.mrf.mxu0
        %v10185 = vadd.f32 %v8978, %v10184
        %10186 = vmatmul.bf16.gmra.mxu0 %v9482
        %v10187 = vpop.f32.mrf.mxu0
        %v10188 = vadd.f32 %v8978, %v10187
        %v10189 = vpop.f32.mrf.mxu0
        %v10190 = vadd.f32 %v8978, %v10189
        %10191 = vmatmul.bf16.gmra.mxu0 %v9491
        %v10192 = vpop.f32.mrf.mxu0
        %v10193 = vadd.f32 %v8978, %v10192
        %v10194 = vpop.f32.mrf.mxu0
        %v10195 = vadd.f32 %v8978, %v10194
        %10196 = vmatmul.bf16.gmra.mxu0 %v9500
        %v10197 = vpop.f32.mrf.mxu0
        %v10198 = vadd.f32 %v8978, %v10197
        %v10199 = vpop.f32.mrf.mxu0
        %v10200 = vadd.f32 %v8978, %v10199
        %10201 = vmatmul.bf16.gmra.mxu0 %v9509
        %v10202 = vpop.f32.mrf.mxu0
        %v10203 = vadd.f32 %v8978, %v10202
        %v10204 = vpop.f32.mrf.mxu0
        %v10205 = vadd.f32 %v8978, %v10204
        %10206 = vmatmul.bf16.gmra.mxu0 %v9518
        %v10207 = vpop.f32.mrf.mxu0
        %v10208 = vadd.f32 %v8978, %v10207
        %v10209 = vpop.f32.mrf.mxu0
        %v10210 = vadd.f32 %v8978, %v10209
        %10211 = vmatmul.bf16.gmra.mxu0 %v9527
        %v10212 = vpop.f32.mrf.mxu0
        %v10213 = vadd.f32 %v8978, %v10212
        %v10214 = vpop.f32.mrf.mxu0
        %v10215 = vadd.f32 %v8978, %v10214
        %10216 = vmatmul.bf16.gmra.mxu0 %v9536
        %v10217 = vpop.f32.mrf.mxu0
        %v10218 = vadd.f32 %v8978, %v10217
        %v10219 = vpop.f32.mrf.mxu0
        %v10220 = vadd.f32 %v8978, %v10219
        %10221 = vmatmul.bf16.gmra.mxu0 %v9545
        %v10222 = vpop.f32.mrf.mxu0
        %v10223 = vadd.f32 %v8978, %v10222
        %v10224 = vpop.f32.mrf.mxu0
        %v10225 = vadd.f32 %v8978, %v10224
        %10226 = vmatmul.bf16.gmra.mxu0 %v9554
        %v10227 = vpop.f32.mrf.mxu0
        %v10228 = vadd.f32 %v8978, %v10227
        %v10229 = vpop.f32.mrf.mxu0
        %v10230 = vadd.f32 %v8978, %v10229
        %10231 = vmatmul.bf16.gmra.mxu0 %v9563
        %v10232 = vpop.f32.mrf.mxu0
        %v10233 = vadd.f32 %v8978, %v10232
        %v10234 = vpop.f32.mrf.mxu0
        %v10235 = vadd.f32 %v8978, %v10234
        %10236 = vdwg.mxu0
        %10237 = vmatpush.bf16.msra.mxu0 %v10019
        %10238 = vmatpush.bf16.msra.mxu0 %v10018
        %10239 = vmatpush.bf16.msra.mxu0 %v10017
        %10240 = vmatpush.bf16.msra.mxu0 %v10016
        %10241 = vmatpush.bf16.msra.mxu0 %v10015
        %10242 = vmatpush.bf16.msra.mxu0 %v10014
        %10243 = vmatpush.bf16.msra.mxu0 %v10013
        %10244 = vmatpush.bf16.msra.mxu0 %v10012
        %10245 = vmatmul.bf16.gmra.mxu0 %v9429
        %v10246 = vpop.f32.mrf.mxu0
        %v10247 = vadd.f32 %v10158, %v10246
        %v10248 = vpop.f32.mrf.mxu0
        %v10249 = vadd.f32 %v10160, %v10248
        %10250 = vmatmul.bf16.gmra.mxu0 %v9438
        %v10251 = vpop.f32.mrf.mxu0
        %v10252 = vadd.f32 %v10163, %v10251
        %v10253 = vpop.f32.mrf.mxu0
        %v10254 = vadd.f32 %v10165, %v10253
        %10255 = vmatmul.bf16.gmra.mxu0 %v9447
        %v10256 = vpop.f32.mrf.mxu0
        %v10257 = vadd.f32 %v10168, %v10256
        %v10258 = vpop.f32.mrf.mxu0
        %v10259 = vadd.f32 %v10170, %v10258
        %10260 = vmatmul.bf16.gmra.mxu0 %v9456
        %v10261 = vpop.f32.mrf.mxu0
        %v10262 = vadd.f32 %v10173, %v10261
        %v10263 = vpop.f32.mrf.mxu0
        %v10264 = vadd.f32 %v10175, %v10263
        %10265 = vmatmul.bf16.gmra.mxu0 %v9465
        %v10266 = vpop.f32.mrf.mxu0
        %v10267 = vadd.f32 %v10178, %v10266
        %v10268 = vpop.f32.mrf.mxu0
        %v10269 = vadd.f32 %v10180, %v10268
        %10270 = vmatmul.bf16.gmra.mxu0 %v9474
        %v10271 = vpop.f32.mrf.mxu0
        %v10272 = vadd.f32 %v10183, %v10271
        %v10273 = vpop.f32.mrf.mxu0
        %v10274 = vadd.f32 %v10185, %v10273
        %10275 = vmatmul.bf16.gmra.mxu0 %v9483
        %v10276 = vpop.f32.mrf.mxu0
        %v10277 = vadd.f32 %v10188, %v10276
        %v10278 = vpop.f32.mrf.mxu0
        %v10279 = vadd.f32 %v10190, %v10278
        %10280 = vmatmul.bf16.gmra.mxu0 %v9492
        %v10281 = vpop.f32.mrf.mxu0
        %v10282 = vadd.f32 %v10193, %v10281
        %v10283 = vpop.f32.mrf.mxu0
        %v10284 = vadd.f32 %v10195, %v10283
        %10285 = vmatmul.bf16.gmra.mxu0 %v9501
        %v10286 = vpop.f32.mrf.mxu0
        %v10287 = vadd.f32 %v10198, %v10286
        %v10288 = vpop.f32.mrf.mxu0
        %v10289 = vadd.f32 %v10200, %v10288
        %10290 = vmatmul.bf16.gmra.mxu0 %v9510
        %v10291 = vpop.f32.mrf.mxu0
        %v10292 = vadd.f32 %v10203, %v10291
        %v10293 = vpop.f32.mrf.mxu0
        %v10294 = vadd.f32 %v10205, %v10293
        %10295 = vmatmul.bf16.gmra.mxu0 %v9519
        %v10296 = vpop.f32.mrf.mxu0
        %v10297 = vadd.f32 %v10208, %v10296
        %v10298 = vpop.f32.mrf.mxu0
        %v10299 = vadd.f32 %v10210, %v10298
        %10300 = vmatmul.bf16.gmra.mxu0 %v9528
        %v10301 = vpop.f32.mrf.mxu0
        %v10302 = vadd.f32 %v10213, %v10301
        %v10303 = vpop.f32.mrf.mxu0
        %v10304 = vadd.f32 %v10215, %v10303
        %10305 = vmatmul.bf16.gmra.mxu0 %v9537
        %v10306 = vpop.f32.mrf.mxu0
        %v10307 = vadd.f32 %v10218, %v10306
        %v10308 = vpop.f32.mrf.mxu0
        %v10309 = vadd.f32 %v10220, %v10308
        %10310 = vmatmul.bf16.gmra.mxu0 %v9546
        %v10311 = vpop.f32.mrf.mxu0
        %v10312 = vadd.f32 %v10223, %v10311
        %v10313 = vpop.f32.mrf.mxu0
        %v10314 = vadd.f32 %v10225, %v10313
        %10315 = vmatmul.bf16.gmra.mxu0 %v9555
        %v10316 = vpop.f32.mrf.mxu0
        %v10317 = vadd.f32 %v10228, %v10316
        %v10318 = vpop.f32.mrf.mxu0
        %v10319 = vadd.f32 %v10230, %v10318
        %10320 = vmatmul.bf16.gmra.mxu0 %v9564
        %v10321 = vpop.f32.mrf.mxu0
        %v10322 = vadd.f32 %v10233, %v10321
        %v10323 = vpop.f32.mrf.mxu0
        %v10324 = vadd.f32 %v10235, %v10323
        %10325 = vdwg.mxu0
        %10326 = vmatpush.bf16.msra.mxu0 %v10027
        %10327 = vmatpush.bf16.msra.mxu0 %v10026
        %10328 = vmatpush.bf16.msra.mxu0 %v10025
        %10329 = vmatpush.bf16.msra.mxu0 %v10024
        %10330 = vmatpush.bf16.msra.mxu0 %v10023
        %10331 = vmatpush.bf16.msra.mxu0 %v10022
        %10332 = vmatpush.bf16.msra.mxu0 %v10021
        %10333 = vmatpush.bf16.msra.mxu0 %v10020
        %10334 = vmatmul.bf16.gmra.mxu0 %v9430
        %v10335 = vpop.f32.mrf.mxu0
        %v10336 = vadd.f32 %v10247, %v10335
        %v10337 = vpop.f32.mrf.mxu0
        %v10338 = vadd.f32 %v10249, %v10337
        %10339 = vmatmul.bf16.gmra.mxu0 %v9439
        %v10340 = vpop.f32.mrf.mxu0
        %v10341 = vadd.f32 %v10252, %v10340
        %v10342 = vpop.f32.mrf.mxu0
        %v10343 = vadd.f32 %v10254, %v10342
        %10344 = vmatmul.bf16.gmra.mxu0 %v9448
        %v10345 = vpop.f32.mrf.mxu0
        %v10346 = vadd.f32 %v10257, %v10345
        %v10347 = vpop.f32.mrf.mxu0
        %v10348 = vadd.f32 %v10259, %v10347
        %10349 = vmatmul.bf16.gmra.mxu0 %v9457
        %v10350 = vpop.f32.mrf.mxu0
        %v10351 = vadd.f32 %v10262, %v10350
        %v10352 = vpop.f32.mrf.mxu0
        %v10353 = vadd.f32 %v10264, %v10352
        %10354 = vmatmul.bf16.gmra.mxu0 %v9466
        %v10355 = vpop.f32.mrf.mxu0
        %v10356 = vadd.f32 %v10267, %v10355
        %v10357 = vpop.f32.mrf.mxu0
        %v10358 = vadd.f32 %v10269, %v10357
        %10359 = vmatmul.bf16.gmra.mxu0 %v9475
        %v10360 = vpop.f32.mrf.mxu0
        %v10361 = vadd.f32 %v10272, %v10360
        %v10362 = vpop.f32.mrf.mxu0
        %v10363 = vadd.f32 %v10274, %v10362
        %10364 = vmatmul.bf16.gmra.mxu0 %v9484
        %v10365 = vpop.f32.mrf.mxu0
        %v10366 = vadd.f32 %v10277, %v10365
        %v10367 = vpop.f32.mrf.mxu0
        %v10368 = vadd.f32 %v10279, %v10367
        %10369 = vmatmul.bf16.gmra.mxu0 %v9493
        %v10370 = vpop.f32.mrf.mxu0
        %v10371 = vadd.f32 %v10282, %v10370
        %v10372 = vpop.f32.mrf.mxu0
        %v10373 = vadd.f32 %v10284, %v10372
        %10374 = vmatmul.bf16.gmra.mxu0 %v9502
        %v10375 = vpop.f32.mrf.mxu0
        %v10376 = vadd.f32 %v10287, %v10375
        %v10377 = vpop.f32.mrf.mxu0
        %v10378 = vadd.f32 %v10289, %v10377
        %10379 = vmatmul.bf16.gmra.mxu0 %v9511
        %v10380 = vpop.f32.mrf.mxu0
        %v10381 = vadd.f32 %v10292, %v10380
        %v10382 = vpop.f32.mrf.mxu0
        %v10383 = vadd.f32 %v10294, %v10382
        %10384 = vmatmul.bf16.gmra.mxu0 %v9520
        %v10385 = vpop.f32.mrf.mxu0
        %v10386 = vadd.f32 %v10297, %v10385
        %v10387 = vpop.f32.mrf.mxu0
        %v10388 = vadd.f32 %v10299, %v10387
        %10389 = vmatmul.bf16.gmra.mxu0 %v9529
        %v10390 = vpop.f32.mrf.mxu0
        %v10391 = vadd.f32 %v10302, %v10390
        %v10392 = vpop.f32.mrf.mxu0
        %v10393 = vadd.f32 %v10304, %v10392
        %10394 = vmatmul.bf16.gmra.mxu0 %v9538
        %v10395 = vpop.f32.mrf.mxu0
        %v10396 = vadd.f32 %v10307, %v10395
        %v10397 = vpop.f32.mrf.mxu0
        %v10398 = vadd.f32 %v10309, %v10397
        %10399 = vmatmul.bf16.gmra.mxu0 %v9547
        %v10400 = vpop.f32.mrf.mxu0
        %v10401 = vadd.f32 %v10312, %v10400
        %v10402 = vpop.f32.mrf.mxu0
        %v10403 = vadd.f32 %v10314, %v10402
        %10404 = vmatmul.bf16.gmra.mxu0 %v9556
        %v10405 = vpop.f32.mrf.mxu0
        %v10406 = vadd.f32 %v10317, %v10405
        %v10407 = vpop.f32.mrf.mxu0
        %v10408 = vadd.f32 %v10319, %v10407
        %10409 = vmatmul.bf16.gmra.mxu0 %v9565
        %v10410 = vpop.f32.mrf.mxu0
        %v10411 = vadd.f32 %v10322, %v10410
        %v10412 = vpop.f32.mrf.mxu0
        %v10413 = vadd.f32 %v10324, %v10412
        %10414 = vdwg.mxu0
        %10415 = vmatpush.bf16.msra.mxu0 %v10035
        %10416 = vmatpush.bf16.msra.mxu0 %v10034
        %10417 = vmatpush.bf16.msra.mxu0 %v10033
        %10418 = vmatpush.bf16.msra.mxu0 %v10032
        %10419 = vmatpush.bf16.msra.mxu0 %v10031
        %10420 = vmatpush.bf16.msra.mxu0 %v10030
        %10421 = vmatpush.bf16.msra.mxu0 %v10029
        %10422 = vmatpush.bf16.msra.mxu0 %v10028
        %10423 = vmatmul.bf16.gmra.mxu0 %v9431
        %v10424 = vpop.f32.mrf.mxu0
        %v10425 = vadd.f32 %v10336, %v10424
        %v10426 = vpop.f32.mrf.mxu0
        %v10427 = vadd.f32 %v10338, %v10426
        %10428 = vmatmul.bf16.gmra.mxu0 %v9440
        %v10429 = vpop.f32.mrf.mxu0
        %v10430 = vadd.f32 %v10341, %v10429
        %v10431 = vpop.f32.mrf.mxu0
        %v10432 = vadd.f32 %v10343, %v10431
        %10433 = vmatmul.bf16.gmra.mxu0 %v9449
        %v10434 = vpop.f32.mrf.mxu0
        %v10435 = vadd.f32 %v10346, %v10434
        %v10436 = vpop.f32.mrf.mxu0
        %v10437 = vadd.f32 %v10348, %v10436
        %10438 = vmatmul.bf16.gmra.mxu0 %v9458
        %v10439 = vpop.f32.mrf.mxu0
        %v10440 = vadd.f32 %v10351, %v10439
        %v10441 = vpop.f32.mrf.mxu0
        %v10442 = vadd.f32 %v10353, %v10441
        %10443 = vmatmul.bf16.gmra.mxu0 %v9467
        %v10444 = vpop.f32.mrf.mxu0
        %v10445 = vadd.f32 %v10356, %v10444
        %v10446 = vpop.f32.mrf.mxu0
        %v10447 = vadd.f32 %v10358, %v10446
        %10448 = vmatmul.bf16.gmra.mxu0 %v9476
        %v10449 = vpop.f32.mrf.mxu0
        %v10450 = vadd.f32 %v10361, %v10449
        %v10451 = vpop.f32.mrf.mxu0
        %v10452 = vadd.f32 %v10363, %v10451
        %10453 = vmatmul.bf16.gmra.mxu0 %v9485
        %v10454 = vpop.f32.mrf.mxu0
        %v10455 = vadd.f32 %v10366, %v10454
        %v10456 = vpop.f32.mrf.mxu0
        %v10457 = vadd.f32 %v10368, %v10456
        %10458 = vmatmul.bf16.gmra.mxu0 %v9494
        %v10459 = vpop.f32.mrf.mxu0
        %v10460 = vadd.f32 %v10371, %v10459
        %v10461 = vpop.f32.mrf.mxu0
        %v10462 = vadd.f32 %v10373, %v10461
        %10463 = vmatmul.bf16.gmra.mxu0 %v9503
        %v10464 = vpop.f32.mrf.mxu0
        %v10465 = vadd.f32 %v10376, %v10464
        %v10466 = vpop.f32.mrf.mxu0
        %v10467 = vadd.f32 %v10378, %v10466
        %10468 = vmatmul.bf16.gmra.mxu0 %v9512
        %v10469 = vpop.f32.mrf.mxu0
        %v10470 = vadd.f32 %v10381, %v10469
        %v10471 = vpop.f32.mrf.mxu0
        %v10472 = vadd.f32 %v10383, %v10471
        %10473 = vmatmul.bf16.gmra.mxu0 %v9521
        %v10474 = vpop.f32.mrf.mxu0
        %v10475 = vadd.f32 %v10386, %v10474
        %v10476 = vpop.f32.mrf.mxu0
        %v10477 = vadd.f32 %v10388, %v10476
        %10478 = vmatmul.bf16.gmra.mxu0 %v9530
        %v10479 = vpop.f32.mrf.mxu0
        %v10480 = vadd.f32 %v10391, %v10479
        %v10481 = vpop.f32.mrf.mxu0
        %v10482 = vadd.f32 %v10393, %v10481
        %10483 = vmatmul.bf16.gmra.mxu0 %v9539
        %v10484 = vpop.f32.mrf.mxu0
        %v10485 = vadd.f32 %v10396, %v10484
        %v10486 = vpop.f32.mrf.mxu0
        %v10487 = vadd.f32 %v10398, %v10486
        %10488 = vmatmul.bf16.gmra.mxu0 %v9548
        %v10489 = vpop.f32.mrf.mxu0
        %v10490 = vadd.f32 %v10401, %v10489
        %v10491 = vpop.f32.mrf.mxu0
        %v10492 = vadd.f32 %v10403, %v10491
        %10493 = vmatmul.bf16.gmra.mxu0 %v9557
        %v10494 = vpop.f32.mrf.mxu0
        %v10495 = vadd.f32 %v10406, %v10494
        %v10496 = vpop.f32.mrf.mxu0
        %v10497 = vadd.f32 %v10408, %v10496
        %10498 = vmatmul.bf16.gmra.mxu0 %v9566
        %v10499 = vpop.f32.mrf.mxu0
        %v10500 = vadd.f32 %v10411, %v10499
        %v10501 = vpop.f32.mrf.mxu0
        %v10502 = vadd.f32 %v10413, %v10501
        %10503 = vdwg.mxu0
        %10504 = vmatpush.bf16.msra.mxu0 %v10043
        %10505 = vmatpush.bf16.msra.mxu0 %v10042
        %10506 = vmatpush.bf16.msra.mxu0 %v10041
        %10507 = vmatpush.bf16.msra.mxu0 %v10040
        %10508 = vmatpush.bf16.msra.mxu0 %v10039
        %10509 = vmatpush.bf16.msra.mxu0 %v10038
        %10510 = vmatpush.bf16.msra.mxu0 %v10037
        %10511 = vmatpush.bf16.msra.mxu0 %v10036
        %10512 = vmatmul.bf16.gmra.mxu0 %v9432
        %v10513 = vpop.f32.mrf.mxu0
        %v10514 = vadd.f32 %v10425, %v10513
        %v10515 = vpop.f32.mrf.mxu0
        %v10516 = vadd.f32 %v10427, %v10515
        %10517 = vmatmul.bf16.gmra.mxu0 %v9441
        %v10518 = vpop.f32.mrf.mxu0
        %v10519 = vadd.f32 %v10430, %v10518
        %v10520 = vpop.f32.mrf.mxu0
        %v10521 = vadd.f32 %v10432, %v10520
        %10522 = vmatmul.bf16.gmra.mxu0 %v9450
        %v10523 = vpop.f32.mrf.mxu0
        %v10524 = vadd.f32 %v10435, %v10523
        %v10525 = vpop.f32.mrf.mxu0
        %v10526 = vadd.f32 %v10437, %v10525
        %10527 = vmatmul.bf16.gmra.mxu0 %v9459
        %v10528 = vpop.f32.mrf.mxu0
        %v10529 = vadd.f32 %v10440, %v10528
        %v10530 = vpop.f32.mrf.mxu0
        %v10531 = vadd.f32 %v10442, %v10530
        %10532 = vmatmul.bf16.gmra.mxu0 %v9468
        %v10533 = vpop.f32.mrf.mxu0
        %v10534 = vadd.f32 %v10445, %v10533
        %v10535 = vpop.f32.mrf.mxu0
        %v10536 = vadd.f32 %v10447, %v10535
        %10537 = vmatmul.bf16.gmra.mxu0 %v9477
        %v10538 = vpop.f32.mrf.mxu0
        %v10539 = vadd.f32 %v10450, %v10538
        %v10540 = vpop.f32.mrf.mxu0
        %v10541 = vadd.f32 %v10452, %v10540
        %10542 = vmatmul.bf16.gmra.mxu0 %v9486
        %v10543 = vpop.f32.mrf.mxu0
        %v10544 = vadd.f32 %v10455, %v10543
        %v10545 = vpop.f32.mrf.mxu0
        %v10546 = vadd.f32 %v10457, %v10545
        %10547 = vmatmul.bf16.gmra.mxu0 %v9495
        %v10548 = vpop.f32.mrf.mxu0
        %v10549 = vadd.f32 %v10460, %v10548
        %v10550 = vpop.f32.mrf.mxu0
        %v10551 = vadd.f32 %v10462, %v10550
        %10552 = vmatmul.bf16.gmra.mxu0 %v9504
        %v10553 = vpop.f32.mrf.mxu0
        %v10554 = vadd.f32 %v10465, %v10553
        %v10555 = vpop.f32.mrf.mxu0
        %v10556 = vadd.f32 %v10467, %v10555
        %10557 = vmatmul.bf16.gmra.mxu0 %v9513
        %v10558 = vpop.f32.mrf.mxu0
        %v10559 = vadd.f32 %v10470, %v10558
        %v10560 = vpop.f32.mrf.mxu0
        %v10561 = vadd.f32 %v10472, %v10560
        %10562 = vmatmul.bf16.gmra.mxu0 %v9522
        %v10563 = vpop.f32.mrf.mxu0
        %v10564 = vadd.f32 %v10475, %v10563
        %v10565 = vpop.f32.mrf.mxu0
        %v10566 = vadd.f32 %v10477, %v10565
        %10567 = vmatmul.bf16.gmra.mxu0 %v9531
        %v10568 = vpop.f32.mrf.mxu0
        %v10569 = vadd.f32 %v10480, %v10568
        %v10570 = vpop.f32.mrf.mxu0
        %v10571 = vadd.f32 %v10482, %v10570
        %10572 = vmatmul.bf16.gmra.mxu0 %v9540
        %v10573 = vpop.f32.mrf.mxu0
        %v10574 = vadd.f32 %v10485, %v10573
        %v10575 = vpop.f32.mrf.mxu0
        %v10576 = vadd.f32 %v10487, %v10575
        %10577 = vmatmul.bf16.gmra.mxu0 %v9549
        %v10578 = vpop.f32.mrf.mxu0
        %v10579 = vadd.f32 %v10490, %v10578
        %v10580 = vpop.f32.mrf.mxu0
        %v10581 = vadd.f32 %v10492, %v10580
        %10582 = vmatmul.bf16.gmra.mxu0 %v9558
        %v10583 = vpop.f32.mrf.mxu0
        %v10584 = vadd.f32 %v10495, %v10583
        %v10585 = vpop.f32.mrf.mxu0
        %v10586 = vadd.f32 %v10497, %v10585
        %10587 = vmatmul.bf16.gmra.mxu0 %v9567
        %v10588 = vpop.f32.mrf.mxu0
        %v10589 = vadd.f32 %v10500, %v10588
        %v10590 = vpop.f32.mrf.mxu0
        %v10591 = vadd.f32 %v10502, %v10590
        %10592 = vdwg.mxu0
        %10593 = vmatpush.bf16.msra.mxu0 %v10051
        %10594 = vmatpush.bf16.msra.mxu0 %v10050
        %10595 = vmatpush.bf16.msra.mxu0 %v10049
        %10596 = vmatpush.bf16.msra.mxu0 %v10048
        %10597 = vmatpush.bf16.msra.mxu0 %v10047
        %10598 = vmatpush.bf16.msra.mxu0 %v10046
        %10599 = vmatpush.bf16.msra.mxu0 %v10045
        %10600 = vmatpush.bf16.msra.mxu0 %v10044
        %10601 = vmatmul.bf16.gmra.mxu0 %v9433
        %v10602 = vpop.f32.mrf.mxu0
        %v10603 = vadd.f32 %v10514, %v10602
        %v10604 = vpop.f32.mrf.mxu0
        %v10605 = vadd.f32 %v10516, %v10604
        %10606 = vmatmul.bf16.gmra.mxu0 %v9442
        %v10607 = vpop.f32.mrf.mxu0
        %v10608 = vadd.f32 %v10519, %v10607
        %v10609 = vpop.f32.mrf.mxu0
        %v10610 = vadd.f32 %v10521, %v10609
        %10611 = vmatmul.bf16.gmra.mxu0 %v9451
        %v10612 = vpop.f32.mrf.mxu0
        %v10613 = vadd.f32 %v10524, %v10612
        %v10614 = vpop.f32.mrf.mxu0
        %v10615 = vadd.f32 %v10526, %v10614
        %10616 = vmatmul.bf16.gmra.mxu0 %v9460
        %v10617 = vpop.f32.mrf.mxu0
        %v10618 = vadd.f32 %v10529, %v10617
        %v10619 = vpop.f32.mrf.mxu0
        %v10620 = vadd.f32 %v10531, %v10619
        %10621 = vmatmul.bf16.gmra.mxu0 %v9469
        %v10622 = vpop.f32.mrf.mxu0
        %v10623 = vadd.f32 %v10534, %v10622
        %v10624 = vpop.f32.mrf.mxu0
        %v10625 = vadd.f32 %v10536, %v10624
        %10626 = vmatmul.bf16.gmra.mxu0 %v9478
        %v10627 = vpop.f32.mrf.mxu0
        %v10628 = vadd.f32 %v10539, %v10627
        %v10629 = vpop.f32.mrf.mxu0
        %v10630 = vadd.f32 %v10541, %v10629
        %10631 = vmatmul.bf16.gmra.mxu0 %v9487
        %v10632 = vpop.f32.mrf.mxu0
        %v10633 = vadd.f32 %v10544, %v10632
        %v10634 = vpop.f32.mrf.mxu0
        %v10635 = vadd.f32 %v10546, %v10634
        %10636 = vmatmul.bf16.gmra.mxu0 %v9496
        %v10637 = vpop.f32.mrf.mxu0
        %v10638 = vadd.f32 %v10549, %v10637
        %v10639 = vpop.f32.mrf.mxu0
        %v10640 = vadd.f32 %v10551, %v10639
        %10641 = vmatmul.bf16.gmra.mxu0 %v9505
        %v10642 = vpop.f32.mrf.mxu0
        %v10643 = vadd.f32 %v10554, %v10642
        %v10644 = vpop.f32.mrf.mxu0
        %v10645 = vadd.f32 %v10556, %v10644
        %10646 = vmatmul.bf16.gmra.mxu0 %v9514
        %v10647 = vpop.f32.mrf.mxu0
        %v10648 = vadd.f32 %v10559, %v10647
        %v10649 = vpop.f32.mrf.mxu0
        %v10650 = vadd.f32 %v10561, %v10649
        %10651 = vmatmul.bf16.gmra.mxu0 %v9523
        %v10652 = vpop.f32.mrf.mxu0
        %v10653 = vadd.f32 %v10564, %v10652
        %v10654 = vpop.f32.mrf.mxu0
        %v10655 = vadd.f32 %v10566, %v10654
        %10656 = vmatmul.bf16.gmra.mxu0 %v9532
        %v10657 = vpop.f32.mrf.mxu0
        %v10658 = vadd.f32 %v10569, %v10657
        %v10659 = vpop.f32.mrf.mxu0
        %v10660 = vadd.f32 %v10571, %v10659
        %10661 = vmatmul.bf16.gmra.mxu0 %v9541
        %v10662 = vpop.f32.mrf.mxu0
        %v10663 = vadd.f32 %v10574, %v10662
        %v10664 = vpop.f32.mrf.mxu0
        %v10665 = vadd.f32 %v10576, %v10664
        %10666 = vmatmul.bf16.gmra.mxu0 %v9550
        %v10667 = vpop.f32.mrf.mxu0
        %v10668 = vadd.f32 %v10579, %v10667
        %v10669 = vpop.f32.mrf.mxu0
        %v10670 = vadd.f32 %v10581, %v10669
        %10671 = vmatmul.bf16.gmra.mxu0 %v9559
        %v10672 = vpop.f32.mrf.mxu0
        %v10673 = vadd.f32 %v10584, %v10672
        %v10674 = vpop.f32.mrf.mxu0
        %v10675 = vadd.f32 %v10586, %v10674
        %10676 = vmatmul.bf16.gmra.mxu0 %v9568
        %v10677 = vpop.f32.mrf.mxu0
        %v10678 = vadd.f32 %v10589, %v10677
        %v10679 = vpop.f32.mrf.mxu0
        %v10680 = vadd.f32 %v10591, %v10679
        %10681 = vdwg.mxu0
        %10682 = vmatpush.bf16.msra.mxu0 %v10059
        %10683 = vmatpush.bf16.msra.mxu0 %v10058
        %10684 = vmatpush.bf16.msra.mxu0 %v10057
        %10685 = vmatpush.bf16.msra.mxu0 %v10056
        %10686 = vmatpush.bf16.msra.mxu0 %v10055
        %10687 = vmatpush.bf16.msra.mxu0 %v10054
        %10688 = vmatpush.bf16.msra.mxu0 %v10053
        %10689 = vmatpush.bf16.msra.mxu0 %v10052
        %10690 = vmatmul.bf16.gmra.mxu0 %v9434
        %v10691 = vpop.f32.mrf.mxu0
        %v10692 = vadd.f32 %v10603, %v10691
        %v10693 = vpop.f32.mrf.mxu0
        %v10694 = vadd.f32 %v10605, %v10693
        %10695 = vmatmul.bf16.gmra.mxu0 %v9443
        %v10696 = vpop.f32.mrf.mxu0
        %v10697 = vadd.f32 %v10608, %v10696
        %v10698 = vpop.f32.mrf.mxu0
        %v10699 = vadd.f32 %v10610, %v10698
        %10700 = vmatmul.bf16.gmra.mxu0 %v9452
        %v10701 = vpop.f32.mrf.mxu0
        %v10702 = vadd.f32 %v10613, %v10701
        %v10703 = vpop.f32.mrf.mxu0
        %v10704 = vadd.f32 %v10615, %v10703
        %10705 = vmatmul.bf16.gmra.mxu0 %v9461
        %v10706 = vpop.f32.mrf.mxu0
        %v10707 = vadd.f32 %v10618, %v10706
        %v10708 = vpop.f32.mrf.mxu0
        %v10709 = vadd.f32 %v10620, %v10708
        %10710 = vmatmul.bf16.gmra.mxu0 %v9470
        %v10711 = vpop.f32.mrf.mxu0
        %v10712 = vadd.f32 %v10623, %v10711
        %v10713 = vpop.f32.mrf.mxu0
        %v10714 = vadd.f32 %v10625, %v10713
        %10715 = vmatmul.bf16.gmra.mxu0 %v9479
        %v10716 = vpop.f32.mrf.mxu0
        %v10717 = vadd.f32 %v10628, %v10716
        %v10718 = vpop.f32.mrf.mxu0
        %v10719 = vadd.f32 %v10630, %v10718
        %10720 = vmatmul.bf16.gmra.mxu0 %v9488
        %v10721 = vpop.f32.mrf.mxu0
        %v10722 = vadd.f32 %v10633, %v10721
        %v10723 = vpop.f32.mrf.mxu0
        %v10724 = vadd.f32 %v10635, %v10723
        %10725 = vmatmul.bf16.gmra.mxu0 %v9497
        %v10726 = vpop.f32.mrf.mxu0
        %v10727 = vadd.f32 %v10638, %v10726
        %v10728 = vpop.f32.mrf.mxu0
        %v10729 = vadd.f32 %v10640, %v10728
        %10730 = vmatmul.bf16.gmra.mxu0 %v9506
        %v10731 = vpop.f32.mrf.mxu0
        %v10732 = vadd.f32 %v10643, %v10731
        %v10733 = vpop.f32.mrf.mxu0
        %v10734 = vadd.f32 %v10645, %v10733
        %10735 = vmatmul.bf16.gmra.mxu0 %v9515
        %v10736 = vpop.f32.mrf.mxu0
        %v10737 = vadd.f32 %v10648, %v10736
        %v10738 = vpop.f32.mrf.mxu0
        %v10739 = vadd.f32 %v10650, %v10738
        %10740 = vmatmul.bf16.gmra.mxu0 %v9524
        %v10741 = vpop.f32.mrf.mxu0
        %v10742 = vadd.f32 %v10653, %v10741
        %v10743 = vpop.f32.mrf.mxu0
        %v10744 = vadd.f32 %v10655, %v10743
        %10745 = vmatmul.bf16.gmra.mxu0 %v9533
        %v10746 = vpop.f32.mrf.mxu0
        %v10747 = vadd.f32 %v10658, %v10746
        %v10748 = vpop.f32.mrf.mxu0
        %v10749 = vadd.f32 %v10660, %v10748
        %10750 = vmatmul.bf16.gmra.mxu0 %v9542
        %v10751 = vpop.f32.mrf.mxu0
        %v10752 = vadd.f32 %v10663, %v10751
        %v10753 = vpop.f32.mrf.mxu0
        %v10754 = vadd.f32 %v10665, %v10753
        %10755 = vmatmul.bf16.gmra.mxu0 %v9551
        %v10756 = vpop.f32.mrf.mxu0
        %v10757 = vadd.f32 %v10668, %v10756
        %v10758 = vpop.f32.mrf.mxu0
        %v10759 = vadd.f32 %v10670, %v10758
        %10760 = vmatmul.bf16.gmra.mxu0 %v9560
        %v10761 = vpop.f32.mrf.mxu0
        %v10762 = vadd.f32 %v10673, %v10761
        %v10763 = vpop.f32.mrf.mxu0
        %v10764 = vadd.f32 %v10675, %v10763
        %10765 = vmatmul.bf16.gmra.mxu0 %v9569
        %v10766 = vpop.f32.mrf.mxu0
        %v10767 = vadd.f32 %v10678, %v10766
        %v10768 = vpop.f32.mrf.mxu0
        %v10769 = vadd.f32 %v10680, %v10768
        %10770 = vdwg.mxu0
        %10771 = vmatpush.bf16.msra.mxu0 %v10067
        %10772 = vmatpush.bf16.msra.mxu0 %v10066
        %10773 = vmatpush.bf16.msra.mxu0 %v10065
        %10774 = vmatpush.bf16.msra.mxu0 %v10064
        %10775 = vmatpush.bf16.msra.mxu0 %v10063
        %10776 = vmatpush.bf16.msra.mxu0 %v10062
        %10777 = vmatpush.bf16.msra.mxu0 %v10061
        %10778 = vmatpush.bf16.msra.mxu0 %v10060
        %10779 = vmatmul.bf16.gmra.mxu0 %v9435
        %v10780 = vpop.f32.mrf.mxu0
        %v10781 = vadd.f32 %v10692, %v10780
        %v10782 = vpop.f32.mrf.mxu0
        %v10783 = vadd.f32 %v10694, %v10782
        %10784 = vmatmul.bf16.gmra.mxu0 %v9444
        %v10785 = vpop.f32.mrf.mxu0
        %v10786 = vadd.f32 %v10697, %v10785
        %v10787 = vpop.f32.mrf.mxu0
        %v10788 = vadd.f32 %v10699, %v10787
        %10789 = vmatmul.bf16.gmra.mxu0 %v9453
        %v10790 = vpop.f32.mrf.mxu0
        %v10791 = vadd.f32 %v10702, %v10790
        %v10792 = vpop.f32.mrf.mxu0
        %v10793 = vadd.f32 %v10704, %v10792
        %10794 = vmatmul.bf16.gmra.mxu0 %v9462
        %v10795 = vpop.f32.mrf.mxu0
        %v10796 = vadd.f32 %v10707, %v10795
        %v10797 = vpop.f32.mrf.mxu0
        %v10798 = vadd.f32 %v10709, %v10797
        %10799 = vmatmul.bf16.gmra.mxu0 %v9471
        %v10800 = vpop.f32.mrf.mxu0
        %v10801 = vadd.f32 %v10712, %v10800
        %v10802 = vpop.f32.mrf.mxu0
        %v10803 = vadd.f32 %v10714, %v10802
        %10804 = vmatmul.bf16.gmra.mxu0 %v9480
        %v10805 = vpop.f32.mrf.mxu0
        %v10806 = vadd.f32 %v10717, %v10805
        %v10807 = vpop.f32.mrf.mxu0
        %v10808 = vadd.f32 %v10719, %v10807
        %10809 = vmatmul.bf16.gmra.mxu0 %v9489
        %v10810 = vpop.f32.mrf.mxu0
        %v10811 = vadd.f32 %v10722, %v10810
        %v10812 = vpop.f32.mrf.mxu0
        %v10813 = vadd.f32 %v10724, %v10812
        %10814 = vmatmul.bf16.gmra.mxu0 %v9498
        %v10815 = vpop.f32.mrf.mxu0
        %v10816 = vadd.f32 %v10727, %v10815
        %v10817 = vpop.f32.mrf.mxu0
        %v10818 = vadd.f32 %v10729, %v10817
        %10819 = vmatmul.bf16.gmra.mxu0 %v9507
        %v10820 = vpop.f32.mrf.mxu0
        %v10821 = vadd.f32 %v10732, %v10820
        %v10822 = vpop.f32.mrf.mxu0
        %v10823 = vadd.f32 %v10734, %v10822
        %10824 = vmatmul.bf16.gmra.mxu0 %v9516
        %v10825 = vpop.f32.mrf.mxu0
        %v10826 = vadd.f32 %v10737, %v10825
        %v10827 = vpop.f32.mrf.mxu0
        %v10828 = vadd.f32 %v10739, %v10827
        %10829 = vmatmul.bf16.gmra.mxu0 %v9525
        %v10830 = vpop.f32.mrf.mxu0
        %v10831 = vadd.f32 %v10742, %v10830
        %v10832 = vpop.f32.mrf.mxu0
        %v10833 = vadd.f32 %v10744, %v10832
        %10834 = vmatmul.bf16.gmra.mxu0 %v9534
        %v10835 = vpop.f32.mrf.mxu0
        %v10836 = vadd.f32 %v10747, %v10835
        %v10837 = vpop.f32.mrf.mxu0
        %v10838 = vadd.f32 %v10749, %v10837
        %10839 = vmatmul.bf16.gmra.mxu0 %v9543
        %v10840 = vpop.f32.mrf.mxu0
        %v10841 = vadd.f32 %v10752, %v10840
        %v10842 = vpop.f32.mrf.mxu0
        %v10843 = vadd.f32 %v10754, %v10842
        %10844 = vmatmul.bf16.gmra.mxu0 %v9552
        %v10845 = vpop.f32.mrf.mxu0
        %v10846 = vadd.f32 %v10757, %v10845
        %v10847 = vpop.f32.mrf.mxu0
        %v10848 = vadd.f32 %v10759, %v10847
        %10849 = vmatmul.bf16.gmra.mxu0 %v9561
        %v10850 = vpop.f32.mrf.mxu0
        %v10851 = vadd.f32 %v10762, %v10850
        %v10852 = vpop.f32.mrf.mxu0
        %v10853 = vadd.f32 %v10764, %v10852
        %10854 = vmatmul.bf16.gmra.mxu0 %v9570
        %v10855 = vpop.f32.mrf.mxu0
        %v10856 = vadd.f32 %v10767, %v10855
        %v10857 = vpop.f32.mrf.mxu0
        %v10858 = vadd.f32 %v10769, %v10857
        %10859 = vdwg.mxu0
        %10860 = vmatpush.bf16.msra.mxu0 %v10075
        %10861 = vmatpush.bf16.msra.mxu0 %v10074
        %10862 = vmatpush.bf16.msra.mxu0 %v10073
        %10863 = vmatpush.bf16.msra.mxu0 %v10072
        %10864 = vmatpush.bf16.msra.mxu0 %v10071
        %10865 = vmatpush.bf16.msra.mxu0 %v10070
        %10866 = vmatpush.bf16.msra.mxu0 %v10069
        %10867 = vmatpush.bf16.msra.mxu0 %v10068
        %10868 = vmatmul.bf16.gmra.mxu0 %v9436
        %v10869 = vpop.f32.mrf.mxu0
        %v10870 = vadd.f32 %v10781, %v10869
        %v10871 = vpop.f32.mrf.mxu0
        %v10872 = vadd.f32 %v10783, %v10871
        %10873 = vmatmul.bf16.gmra.mxu0 %v9445
        %v10874 = vpop.f32.mrf.mxu0
        %v10875 = vadd.f32 %v10786, %v10874
        %v10876 = vpop.f32.mrf.mxu0
        %v10877 = vadd.f32 %v10788, %v10876
        %10878 = vmatmul.bf16.gmra.mxu0 %v9454
        %v10879 = vpop.f32.mrf.mxu0
        %v10880 = vadd.f32 %v10791, %v10879
        %v10881 = vpop.f32.mrf.mxu0
        %v10882 = vadd.f32 %v10793, %v10881
        %10883 = vmatmul.bf16.gmra.mxu0 %v9463
        %v10884 = vpop.f32.mrf.mxu0
        %v10885 = vadd.f32 %v10796, %v10884
        %v10886 = vpop.f32.mrf.mxu0
        %v10887 = vadd.f32 %v10798, %v10886
        %10888 = vmatmul.bf16.gmra.mxu0 %v9472
        %v10889 = vpop.f32.mrf.mxu0
        %v10890 = vadd.f32 %v10801, %v10889
        %v10891 = vpop.f32.mrf.mxu0
        %v10892 = vadd.f32 %v10803, %v10891
        %10893 = vmatmul.bf16.gmra.mxu0 %v9481
        %v10894 = vpop.f32.mrf.mxu0
        %v10895 = vadd.f32 %v10806, %v10894
        %v10896 = vpop.f32.mrf.mxu0
        %v10897 = vadd.f32 %v10808, %v10896
        %10898 = vmatmul.bf16.gmra.mxu0 %v9490
        %v10899 = vpop.f32.mrf.mxu0
        %v10900 = vadd.f32 %v10811, %v10899
        %v10901 = vpop.f32.mrf.mxu0
        %v10902 = vadd.f32 %v10813, %v10901
        %10903 = vmatmul.bf16.gmra.mxu0 %v9499
        %v10904 = vpop.f32.mrf.mxu0
        %v10905 = vadd.f32 %v10816, %v10904
        %v10906 = vpop.f32.mrf.mxu0
        %v10907 = vadd.f32 %v10818, %v10906
        %10908 = vmatmul.bf16.gmra.mxu0 %v9508
        %v10909 = vpop.f32.mrf.mxu0
        %v10910 = vadd.f32 %v10821, %v10909
        %v10911 = vpop.f32.mrf.mxu0
        %v10912 = vadd.f32 %v10823, %v10911
        %10913 = vmatmul.bf16.gmra.mxu0 %v9517
        %v10914 = vpop.f32.mrf.mxu0
        %v10915 = vadd.f32 %v10826, %v10914
        %v10916 = vpop.f32.mrf.mxu0
        %v10917 = vadd.f32 %v10828, %v10916
        %10918 = vmatmul.bf16.gmra.mxu0 %v9526
        %v10919 = vpop.f32.mrf.mxu0
        %v10920 = vadd.f32 %v10831, %v10919
        %v10921 = vpop.f32.mrf.mxu0
        %v10922 = vadd.f32 %v10833, %v10921
        %10923 = vmatmul.bf16.gmra.mxu0 %v9535
        %v10924 = vpop.f32.mrf.mxu0
        %v10925 = vadd.f32 %v10836, %v10924
        %v10926 = vpop.f32.mrf.mxu0
        %v10927 = vadd.f32 %v10838, %v10926
        %10928 = vmatmul.bf16.gmra.mxu0 %v9544
        %v10929 = vpop.f32.mrf.mxu0
        %v10930 = vadd.f32 %v10841, %v10929
        %v10931 = vpop.f32.mrf.mxu0
        %v10932 = vadd.f32 %v10843, %v10931
        %10933 = vmatmul.bf16.gmra.mxu0 %v9553
        %v10934 = vpop.f32.mrf.mxu0
        %v10935 = vadd.f32 %v10846, %v10934
        %v10936 = vpop.f32.mrf.mxu0
        %v10937 = vadd.f32 %v10848, %v10936
        %10938 = vmatmul.bf16.gmra.mxu0 %v9562
        %v10939 = vpop.f32.mrf.mxu0
        %v10940 = vadd.f32 %v10851, %v10939
        %v10941 = vpop.f32.mrf.mxu0
        %v10942 = vadd.f32 %v10853, %v10941
        %10943 = vmatmul.bf16.gmra.mxu0 %v9571
        %v10944 = vpop.f32.mrf.mxu0
        %v10945 = vadd.f32 %v10856, %v10944
        %v10946 = vpop.f32.mrf.mxu0
        %v10947 = vadd.f32 %v10858, %v10946
        %10948 = vdwg.mxu0
        %v10949 = vld [vmem:[%s240] sm:$0xff]
        %v10950 = vld [vmem:[%s240 + $0x8] sm:$0xff]
        %v10951 = vld [vmem:[%s240 + $0x10] sm:$0xff]
        %v10952 = vld [vmem:[%s240 + $0x18] sm:$0xff]
        %v10953 = vld [vmem:[%s240 + $0x20] sm:$0xff]
        %v10954 = vld [vmem:[%s240 + $0x28] sm:$0xff]
        %v10955 = vld [vmem:[%s240 + $0x30] sm:$0xff]
        %v10956 = vld [vmem:[%s240 + $0x38] sm:$0xff]
        %v10957 = vld [vmem:[%s240 + $0x40] sm:$0xff]
        %v10958 = vld [vmem:[%s240 + $0x48] sm:$0xff]
        %v10959 = vld [vmem:[%s240 + $0x50] sm:$0xff]
        %v10960 = vld [vmem:[%s240 + $0x58] sm:$0xff]
        %v10961 = vld [vmem:[%s240 + $0x60] sm:$0xff]
        %v10962 = vld [vmem:[%s240 + $0x68] sm:$0xff]
        %v10963 = vld [vmem:[%s240 + $0x70] sm:$0xff]
        %v10964 = vld [vmem:[%s240 + $0x78] sm:$0xff]
        %v10965 = vld [vmem:[%s240 + $0x80] sm:$0xff]
        %v10966 = vld [vmem:[%s240 + $0x88] sm:$0xff]
        %v10967 = vld [vmem:[%s240 + $0x90] sm:$0xff]
        %v10968 = vld [vmem:[%s240 + $0x98] sm:$0xff]
        %v10969 = vld [vmem:[%s240 + $0xa0] sm:$0xff]
        %v10970 = vld [vmem:[%s240 + $0xa8] sm:$0xff]
        %v10971 = vld [vmem:[%s240 + $0xb0] sm:$0xff]
        %v10972 = vld [vmem:[%s240 + $0xb8] sm:$0xff]
        %v10973 = vld [vmem:[%s240 + $0xc0] sm:$0xff]
        %v10974 = vld [vmem:[%s240 + $0xc8] sm:$0xff]
        %v10975 = vld [vmem:[%s240 + $0xd0] sm:$0xff]
        %v10976 = vld [vmem:[%s240 + $0xd8] sm:$0xff]
        %v10977 = vld [vmem:[%s240 + $0xe0] sm:$0xff]
        %v10978 = vld [vmem:[%s240 + $0xe8] sm:$0xff]
        %v10979 = vld [vmem:[%s240 + $0xf0] sm:$0xff]
        %v10980 = vld [vmem:[%s240 + $0xf8] sm:$0xff]
        %v10981 = vadd.f32 %v10870, %v10949
        %v10982 = vadd.f32 %v10872, %v10950
        %v10983 = vadd.f32 %v10875, %v10951
        %v10984 = vadd.f32 %v10877, %v10952
        %v10985 = vadd.f32 %v10880, %v10953
        %v10986 = vadd.f32 %v10882, %v10954
        %v10987 = vadd.f32 %v10885, %v10955
        %v10988 = vadd.f32 %v10887, %v10956
        %v10989 = vadd.f32 %v10890, %v10957
        %v10990 = vadd.f32 %v10892, %v10958
        %v10991 = vadd.f32 %v10895, %v10959
        %v10992 = vadd.f32 %v10897, %v10960
        %v10993 = vadd.f32 %v10900, %v10961
        %v10994 = vadd.f32 %v10902, %v10962
        %v10995 = vadd.f32 %v10905, %v10963
        %v10996 = vadd.f32 %v10907, %v10964
        %v10997 = vadd.f32 %v10910, %v10965
        %v10998 = vadd.f32 %v10912, %v10966
        %v10999 = vadd.f32 %v10915, %v10967
        %v11000 = vadd.f32 %v10917, %v10968
        %v11001 = vadd.f32 %v10920, %v10969
        %v11002 = vadd.f32 %v10922, %v10970
        %v11003 = vadd.f32 %v10925, %v10971
        %v11004 = vadd.f32 %v10927, %v10972
        %v11005 = vadd.f32 %v10930, %v10973
        %v11006 = vadd.f32 %v10932, %v10974
        %v11007 = vadd.f32 %v10935, %v10975
        %v11008 = vadd.f32 %v10937, %v10976
        %v11009 = vadd.f32 %v10940, %v10977
        %v11010 = vadd.f32 %v10942, %v10978
        %v11011 = vadd.f32 %v10945, %v10979
        %v11012 = vadd.f32 %v10947, %v10980
        %v11013 = vmax.f32 %v10981, 0.0
        %v11014 = vmax.f32 %v10982, 0.0
        %v11015 = vmax.f32 %v10983, 0.0
        %v11016 = vmax.f32 %v10984, 0.0
        %v11017 = vmax.f32 %v10985, 0.0
        %v11018 = vmax.f32 %v10986, 0.0
        %v11019 = vmax.f32 %v10987, 0.0
        %v11020 = vmax.f32 %v10988, 0.0
        %v11021 = vmax.f32 %v10989, 0.0
        %v11022 = vmax.f32 %v10990, 0.0
        %v11023 = vmax.f32 %v10991, 0.0
        %v11024 = vmax.f32 %v10992, 0.0
        %v11025 = vmax.f32 %v10993, 0.0
        %v11026 = vmax.f32 %v10994, 0.0
        %v11027 = vmax.f32 %v10995, 0.0
        %v11028 = vmax.f32 %v10996, 0.0
        %v11029 = vmax.f32 %v10997, 0.0
        %v11030 = vmax.f32 %v10998, 0.0
        %v11031 = vmax.f32 %v10999, 0.0
        %v11032 = vmax.f32 %v11000, 0.0
        %v11033 = vmax.f32 %v11001, 0.0
        %v11034 = vmax.f32 %v11002, 0.0
        %v11035 = vmax.f32 %v11003, 0.0
        %v11036 = vmax.f32 %v11004, 0.0
        %v11037 = vmax.f32 %v11005, 0.0
        %v11038 = vmax.f32 %v11006, 0.0
        %v11039 = vmax.f32 %v11007, 0.0
        %v11040 = vmax.f32 %v11008, 0.0
        %v11041 = vmax.f32 %v11009, 0.0
        %v11042 = vmax.f32 %v11010, 0.0
        %v11043 = vmax.f32 %v11011, 0.0
        %v11044 = vmax.f32 %v11012, 0.0
        %11045 = vst [vmem:[%s277] sm:$0xff] %v11013
        %11046 = vst [vmem:[%s277 + $0x8] sm:$0xff] %v11014
        %11047 = vst [vmem:[%s277 + $0x10] sm:$0xff] %v11015
        %11048 = vst [vmem:[%s277 + $0x18] sm:$0xff] %v11016
        %11049 = vst [vmem:[%s277 + $0x20] sm:$0xff] %v11017
        %11050 = vst [vmem:[%s277 + $0x28] sm:$0xff] %v11018
        %11051 = vst [vmem:[%s277 + $0x30] sm:$0xff] %v11019
        %11052 = vst [vmem:[%s277 + $0x38] sm:$0xff] %v11020
        %11053 = vst [vmem:[%s277 + $0x40] sm:$0xff] %v11021
        %11054 = vst [vmem:[%s277 + $0x48] sm:$0xff] %v11022
        %11055 = vst [vmem:[%s277 + $0x50] sm:$0xff] %v11023
        %11056 = vst [vmem:[%s277 + $0x58] sm:$0xff] %v11024
        %11057 = vst [vmem:[%s277 + $0x60] sm:$0xff] %v11025
        %11058 = vst [vmem:[%s277 + $0x68] sm:$0xff] %v11026
        %11059 = vst [vmem:[%s277 + $0x70] sm:$0xff] %v11027
        %11060 = vst [vmem:[%s277 + $0x78] sm:$0xff] %v11028
        %11061 = vst [vmem:[%s277 + $0x80] sm:$0xff] %v11029
        %11062 = vst [vmem:[%s277 + $0x88] sm:$0xff] %v11030
        %11063 = vst [vmem:[%s277 + $0x90] sm:$0xff] %v11031
        %11064 = vst [vmem:[%s277 + $0x98] sm:$0xff] %v11032
        %11065 = vst [vmem:[%s277 + $0xa0] sm:$0xff] %v11033
        %11066 = vst [vmem:[%s277 + $0xa8] sm:$0xff] %v11034
        %11067 = vst [vmem:[%s277 + $0xb0] sm:$0xff] %v11035
        %11068 = vst [vmem:[%s277 + $0xb8] sm:$0xff] %v11036
        %11069 = vst [vmem:[%s277 + $0xc0] sm:$0xff] %v11037
        %11070 = vst [vmem:[%s277 + $0xc8] sm:$0xff] %v11038
        %11071 = vst [vmem:[%s277 + $0xd0] sm:$0xff] %v11039
        %11072 = vst [vmem:[%s277 + $0xd8] sm:$0xff] %v11040
        %11073 = vst [vmem:[%s277 + $0xe0] sm:$0xff] %v11041
        %11074 = vst [vmem:[%s277 + $0xe8] sm:$0xff] %v11042
        %11075 = vst [vmem:[%s277 + $0xf0] sm:$0xff] %v11043
        %11076 = vst [vmem:[%s277 + $0xf8] sm:$0xff] %v11044
        %s11077 = sand.u32 %s141, 1
        %s11078 = scalar_lea.sflag [#allocation6], %s11077
        %s11079 = sand.u32 %s141, 1
        %s11080 = smul.addr %s11079, 256
        %s11081 = scalar_lea.vmem [#allocation10], %s11080
        // Predicated region
        $region53: #{tpu_custom_call.1} parent=39 // pred_check
          %p11082 = pneg %p151
        $region54: #{tpu_custom_call.1} parent=39 // pred_check_branch
          %11084 = sbr.rel (%p11082) target = $region56
        $region55: #{tpu_custom_call.1} parent=39 // pred_region
          %11086 = vsyncadd %s11078, 0
          %s11087 = smul.addr %s23, 32
          %s11088 = smul.addr %s11087, 8
          %s11089 = scalar_lea.hbm %s5, %s11088
          %s11090 = sshll.u32 %s11081, 4
          %s11091 = int_to_ptr.vmem [resolvable:$true] %s11090
          %s11092 = sshll.u32 %s11089, 4
          %s11093 = int_to_ptr.hbm [resolvable:$true] %s11092
          %11098 = dma.vmem_to_hbm [thread:$0]  %s11091, 4096, %s11093, %s11078, 128, 128, 8
        $region56: #{tpu_custom_call.1} parent=39 // pred_fallthru
          _
      $region40: #{tpu_custom_call.1} parent=5 // pred_fallthru
        _
      %p11099 = scmp.le.s32.totalorder 2, %s18
      // Predicated region
      $region57: #{tpu_custom_call.1} parent=5 // pred_check
        %p11100 = pneg %p11099
      $region58: #{tpu_custom_call.1} parent=5 // pred_check_branch
        %11102 = sbr.rel (%p11100) target = $region60
      $region59: #{tpu_custom_call.1} parent=5 // pred_region
        %s11103 = ssub.s32 %s18, 2
        // Predicated region
        $region61: #{tpu_custom_call.1} parent=59 // pred_check
          %p11104 = pneg %p157
        $region62: #{tpu_custom_call.1} parent=59 // pred_check_branch
          %11106 = sbr.rel (%p11104) target = $region64
        $region63: #{tpu_custom_call.1} parent=59 // pred_region
          %s11107 = sand.u32 %s142, 1
          %s11108 = scalar_lea.sflag [#allocation6], %s11107
          %s11109 = sand.u32 %s142, 1
          %s11110 = smul.addr %s11109, 256
          %s11111 = scalar_lea.vmem [#allocation10], %s11110
          %11113 = dma.done %s11108, 4096
        $region64: #{tpu_custom_call.1} parent=59 // pred_fallthru
          _
      $region60: #{tpu_custom_call.1} parent=5 // pred_fallthru
        _
    $region6: #{tpu_custom_call.1} parent=1 // loop_footer
      %s22 = sadd.s32 1, %s18
    $region7: #{tpu_custom_call.1} parent=1 // loop_footer_branch
      %17 = sbr.rel target = $region3
    $region8: #{tpu_custom_call.1} parent=1 // loop_exit
      _
    %11114 = vsyncpa [#allocation5], 1
    %s11115 = scalar_lea.sflag [#allocation5], 1
    %11116 = vsyncpa %s11115, 1
    %11117 = vsyncpa [#allocation8], 1
    %11118 = vsyncpa [#allocation6], 1
    %s11119 = scalar_lea.sflag [#allocation6], 1
    %11120 = vsyncpa %s11119, 1

</llo_original>
